<compile_context>
chip_gen: v5e
topology: v5e:2x2
jax: 0.10.0
libtpu: 0.0.40
codegen_flags: <defaults>
</compile_context>

<pallas_src>
import jax
import jax.numpy as jnp
from jax import lax
from jax.experimental import pallas as pl
from jax.experimental.pallas import tpu as pltpu

IN_FEATURES = 196608      # = 3 * 256 * 256, fixed by the module's __init__
OUT_FEATURES = 10
TK = 32768                # K tile; 196608 / 32768 = 6 K-steps total
N_SPLIT = 2               # leading "parallel" axis -> both TCs on v7x


def linear_kernel(x_ref, w_ref, o_ref):
    # x_ref: (B, TK)  f32
    # w_ref: (N, TK)  f32  -- PyTorch-native (out, in) layout, K on the lane axis
    # o_ref: (B, N)   f32  -- partial accumulator for this K-half (resident over k)
    k = pl.program_id(1)

    @pl.when(k == 0)
    def _init():
        o_ref[...] = jnp.zeros_like(o_ref)

    # x @ W^T: contract the K (lane) axis of both operands.
    o_ref[...] += lax.dot_general(
        x_ref[...],
        w_ref[...],
        dimension_numbers=(((1,), (1,)), ((), ())),
        preferred_element_type=jnp.float32,
    )


def my_neural_forward(x, weight_nk, bias):
    """x: (B, K) f32, weight_nk: (N, K) f32 (PyTorch layout), bias: (N,) f32 -> (B, N)."""
    B, K = x.shape
    N, Kw = weight_nk.shape
    assert K == Kw == IN_FEATURES and N == OUT_FEATURES
    assert K % TK == 0
    n_k = K // TK
    assert n_k % N_SPLIT == 0
    k_per_split = n_k // N_SPLIT

    cost = pl.CostEstimate(
        flops=2 * B * K * N,
        transcendentals=0,
        bytes_accessed=(B * K + N * K + N_SPLIT * B * N) * 4,
    )

    partials = pl.pallas_call(
        linear_kernel,
        out_shape=jax.ShapeDtypeStruct((N_SPLIT, B, N), jnp.float32),
        grid_spec=pltpu.PrefetchScalarGridSpec(
            num_scalar_prefetch=0,
            grid=(N_SPLIT, k_per_split),
            in_specs=[
                # x tile: (B, TK); lane axis (TK) dense, B equals full dim.
                pl.BlockSpec((B, TK), lambda c, k: (0, c * k_per_split + k)),
                # weight tile: (N, TK); lane axis (TK) dense, N equals full dim.
                pl.BlockSpec((N, TK), lambda c, k: (0, c * k_per_split + k)),
            ],
            # One resident (B, N) partial accumulator per split (leading dim squeezed).
            out_specs=pl.BlockSpec((None, B, N), lambda c, k: (c, 0, 0)),
        ),
        compiler_params=pltpu.CompilerParams(
            dimension_semantics=("parallel", "arbitrary"),
            vmem_limit_bytes=32 * 1024 * 1024,
        ),
        cost_estimate=cost,
    )(x, weight_nk)

    # Tiny (N_SPLIT, B, N) reduction + bias add; negligible vs. the HBM stream.
    return partials.sum(axis=0) + bias[None, :]


def init_params(key):
    """Deterministic init matching PyTorch Linear's U(-1/sqrt(K), 1/sqrt(K))."""
    kw, kb = jax.random.split(key)
    bound = 1.0 / jnp.sqrt(jnp.float32(IN_FEATURES))
    # PyTorch-native (out_features, in_features) layout.
    weight_nk = jax.random.uniform(
        kw, (OUT_FEATURES, IN_FEATURES), jnp.float32, -bound, bound
    )
    bias = jax.random.uniform(kb, (OUT_FEATURES,), jnp.float32, -bound, bound)
    return weight_nk, bias


if __name__ == "__main__":
    key = jax.random.PRNGKey(0)
    k_in, k_params = jax.random.split(key)

    B = 2
    x = jax.random.normal(k_in, (B, IN_FEATURES), jnp.float32)
    weight_nk, bias = init_params(k_params)

    out = my_neural_forward(x, weight_nk, bias)
    out = jax.block_until_ready(out)

    # Sanity check against plain-JAX reference (PyTorch semantics: x @ W^T + b).
    ref = x @ weight_nk.T + bias[None, :]
    assert out.shape == (B, OUT_FEATURES)
    assert jnp.allclose(out, ref, atol=1e-3, rtol=1e-3)

    print("KERNEL_OK")
</pallas_src>

<mosaic_0001>
module attributes {stable_mosaic.version = 11 : i64} {
  func.func @linear_kernel(%arg0: i32, %arg1: i32, %arg2: memref<2x32768xf32, #tpu.memory_space<vmem>>, %arg3: memref<10x32768xf32, #tpu.memory_space<vmem>>, %arg4: memref<1x2x10xf32, #tpu.memory_space<vmem>>) attributes {dimension_semantics = [#tpu.dimension_semantics<parallel>, #tpu.dimension_semantics<arbitrary>], iteration_bounds = array<i64: 2, 3>, scalar_prefetch = 0 : i64, scratch_operands = 0 : i64, tpu.core_type = #tpu.core_type<tc>, window_params = [{transform_indices = @transform_0, window_bounds = array<i64: 2, 32768>}, {transform_indices = @transform_1, window_bounds = array<i64: 10, 32768>}, {transform_indices = @transform_2, window_bounds = array<i64: 1, 2, 10>}]} {
    %c0_i32 = arith.constant 0 : i32
    %0 = arith.cmpi eq, %arg1, %c0_i32 : i32
    %1 = arith.extui %0 : i1 to i32
    %c0_i32_0 = arith.constant 0 : i32
    %2 = arith.cmpi ne, %1, %c0_i32_0 : i32
    scf.if %2 {
      %cst_10 = arith.constant 0.000000e+00 : f32
      %12 = vector.broadcast %cst_10 : f32 to vector<2x10xf32>
      %c0_11 = arith.constant 0 : index
      %c0_12 = arith.constant 0 : index
      %c0_13 = arith.constant 0 : index
      %13 = vector.load %arg4[%c0_11, %c0_12, %c0_13] : memref<1x2x10xf32, #tpu.memory_space<vmem>>, vector<1x2x10xf32>
      %14 = vector.shape_cast %13 : vector<1x2x10xf32> to vector<2x10xf32>
      %15 = vector.shape_cast %12 : vector<2x10xf32> to vector<1x2x10xf32>
      tpu.vector_store %arg4[%c0_11, %c0_12, %c0_13], %15 {strides = array<i32>} : memref<1x2x10xf32, #tpu.memory_space<vmem>>, vector<1x2x10xf32>,
    } else {
    }
    %c0 = arith.constant 0 : index
    %c0_1 = arith.constant 0 : index
    %c0_2 = arith.constant 0 : index
    %3 = vector.load %arg4[%c0, %c0_1, %c0_2] : memref<1x2x10xf32, #tpu.memory_space<vmem>>, vector<1x2x10xf32>
    %4 = vector.shape_cast %3 : vector<1x2x10xf32> to vector<2x10xf32>
    %c0_3 = arith.constant 0 : index
    %c0_4 = arith.constant 0 : index
    %5 = vector.load %arg2[%c0_3, %c0_4] : memref<2x32768xf32, #tpu.memory_space<vmem>>, vector<2x32768xf32>
    %c0_5 = arith.constant 0 : index
    %c0_6 = arith.constant 0 : index
    %6 = vector.load %arg3[%c0_5, %c0_6] : memref<10x32768xf32, #tpu.memory_space<vmem>>, vector<10x32768xf32>
    %cst = arith.constant dense<0.000000e+00> : vector<2x10xf32>
    %7 = tpu.matmul %5, %6, %cst {dimension_numbers = #tpu.dot_dimension_numbers<[1], [1], [0], [0], [0, 0, 1, 0], [], []>} : vector<2x32768xf32>, vector<10x32768xf32>, vector<2x10xf32> -> vector<2x10xf32>
    %8 = arith.addf %4, %7 : vector<2x10xf32>
    %c0_7 = arith.constant 0 : index
    %c0_8 = arith.constant 0 : index
    %c0_9 = arith.constant 0 : index
    %9 = vector.load %arg4[%c0_7, %c0_8, %c0_9] : memref<1x2x10xf32, #tpu.memory_space<vmem>>, vector<1x2x10xf32>
    %10 = vector.shape_cast %9 : vector<1x2x10xf32> to vector<2x10xf32>
    %11 = vector.shape_cast %8 : vector<2x10xf32> to vector<1x2x10xf32>
    tpu.vector_store %arg4[%c0_7, %c0_8, %c0_9], %11 {strides = array<i32>} : memref<1x2x10xf32, #tpu.memory_space<vmem>>, vector<1x2x10xf32>,
    return
  }
  func.func @transform_0(%arg0: i32, %arg1: i32) -> (i32, i32) {
    %c3_i32 = arith.constant 3 : i32
    %0 = arith.muli %arg0, %c3_i32 : i32
    %1 = arith.addi %0, %arg1 : i32
    %c0_i32 = arith.constant 0 : i32
    %c0_i32_0 = arith.constant 0 : i32
    return %c0_i32, %1 : i32, i32
  }
  func.func @transform_1(%arg0: i32, %arg1: i32) -> (i32, i32) {
    %c3_i32 = arith.constant 3 : i32
    %0 = arith.muli %arg0, %c3_i32 : i32
    %1 = arith.addi %0, %arg1 : i32
    %c0_i32 = arith.constant 0 : i32
    %c0_i32_0 = arith.constant 0 : i32
    return %c0_i32, %1 : i32, i32
  }
  func.func @transform_2(%arg0: i32, %arg1: i32) -> (i32, i32, i32) {
    %c0_i32 = arith.constant 0 : i32
    %c0_i32_0 = arith.constant 0 : i32
    %c0_i32_1 = arith.constant 0 : i32
    return %arg0, %c0_i32, %c0_i32_0 : i32, i32, i32
  }
}

</mosaic_0001>

<llo_original>
// kernel: tpu_custom_call.1
$region0: #{tpu_custom_call.1}
  #allocation0 [shape = 'u32[]', space=smem, size = 0x4, offset = 0x4, fixed_abs, tag = 'smem constant byte address 0x4 - core index']
  #allocation1 [shape = 'u32[72,128]{1,0:T(1,128)}', space=vmem, size = 0x9000, scoped, tag = 'internal scratch']
  %s0 = inlined_call_operand.hbm [shape: f32[2,196608], index: 0, kind: input, shape index: {}]
  %s1 = inlined_call_operand.hbm [shape: f32[10,196608], index: 1, kind: input, shape index: {}]
  %s2 = inlined_call_operand.hbm [shape: f32[2,2,10], index: 2, kind: output, shape index: {}]
  %s3 = sld [smem:[#allocation0]]
  $region53: #{tpu_custom_call.1} parent=0
    _
  %s5 = ssub.s32 1, %s3
  %s6 = scalar_select 0, %s5, %s3
  $region1: #{tpu_custom_call.1} parent=0
    #allocation2 [shape = 'u8[524288]{0}', space=vmem, size = 0x80000, scoped, tag = 'input window, operand 0']
    #allocation3 [shape = 's32[2]{0}', space=sflag, size = 0x8, scoped, tag = 'scoped memory for tpu_custom_call.1']
    #allocation4 [shape = 's32[2]{0}', space=sflag, size = 0x8, scoped, tag = 'scoped memory for tpu_custom_call.1']
    #allocation5 [shape = 'u8[4194304]{0}', space=vmem, size = 0x400000, scoped, tag = 'input window, operand 1']
    #allocation6 [shape = 's32[2]{0}', space=sflag, size = 0x8, scoped, tag = 'scoped memory for tpu_custom_call.1']
    #allocation7 [shape = 'u8[2048]{0}', space=vmem, size = 0x800, scoped, tag = 'output window, operand 0']
    %7 = vsyncpa [#allocation3], 0
    %s8 = scalar_lea.sflag [#allocation3], 1
    %9 = vsyncpa %s8, 0
    %10 = vsyncpa [#allocation6], 0
    %s11 = scalar_lea.sflag [#allocation6], 1
    %12 = vsyncpa %s11, 0
    %13 = vsyncpa [#allocation4], 0
    %s14 = scalar_lea.sflag [#allocation4], 1
    %15 = vsyncpa %s14, 0
    loop: start=0, step=1, limit=8
    $region2: #{tpu_custom_call.1} parent=1 // loop_pre_header
      _
    $region3: #{tpu_custom_call.1} parent=1 // loop_header
      %s17 = sphi 0, %s21
      %p18 = scmp.ge.s32.totalorder %s17, 8
      %s24 = sphi 0, %s36
      %s25 = sphi 0, %s32
      %s26 = sphi 0, %s24
      %s27 = sphi 0, %s25
      %s28 = sphi 0, %s26
      %s29 = sphi 0, %s27
      %s43 = sphi 0, %s45
      %s46 = sphi 0, %s43
      %s47 = sphi 0, %s46
      %s63 = sphi 0, %s47
      %s73 = sphi 0, %s75
      %s76 = sphi 0, %s73
      %s77 = sphi 0, %s76
      %s93 = sphi 0, %s77
      %s99 = sphi 0, %s101
      %s102 = sphi 0, %s99
      %s103 = sphi 0, %s102
      %s119 = sphi 0, %s103
    $region4: #{tpu_custom_call.1} parent=1 // loop_header_branch
      %20 = sbr.rel (%p18) target = $region8
    $region5: #{tpu_custom_call.1} parent=1 // loop_body
      %s22 = ssub.s32 %s17, 1
      %s23 = ssub.s32 %s17, 2
      %s30 = sadd.s32 1, %s25
      %p31 = scmp.ge.s32.totalorder %s30, 3
      %s32 = scalar_select %p31, 0, %s30
      %s33 = sadd.s32 1, %s24
      %s34 = scalar_select %p31, %s33, %s24
      %p35 = scmp.ge.s32.totalorder %s34, 2
      %s36 = scalar_select %p35, 0, %s34
      %s37 = smul.u32 %s24, 3
      %s38 = sadd.s32 %s37, %s25
      %s39 = smul.u32 %s36, 3
      %s40 = sadd.s32 %s39, %s32
      %s41 = ssub.s32 %s38, %s40
      %p42 = scmp.eq.s32.totalorder %s41, 0
      %s44 = sadd.s32 %s43, 1
      %s45 = scalar_select %p42, %s43, %s44
      %p48 = pneg %p42
      %p49 = scmp.eq.s32.totalorder %s17, 5
      %p50 = por %p48, %p49
      %p51 = scmp.ne.s32.totalorder %s43, %s46
      %p52 = scmp.eq.s32.totalorder %s17, 0
      %p53 = por %p51, %p52
      %p54 = scmp.ne.s32.totalorder %s43, %s46
      %p55 = scmp.eq.s32.totalorder %s22, 5
      %p56 = por %p54, %p55
      %p57 = scmp.ne.s32.totalorder %s46, %s47
      %p58 = scmp.eq.s32.totalorder %s22, 0
      %p59 = por %p57, %p58
      %p60 = scmp.ne.s32.totalorder %s46, %s47
      %p61 = scmp.eq.s32.totalorder %s23, 5
      %p62 = por %p60, %p61
      %p64 = scmp.ne.s32.totalorder %s47, %s63
      %p65 = scmp.eq.s32.totalorder %s23, 0
      %p66 = por %p64, %p65
      %s67 = smul.u32 %s24, 3
      %s68 = sadd.s32 %s67, %s25
      %s69 = smul.u32 %s36, 3
      %s70 = sadd.s32 %s69, %s32
      %s71 = ssub.s32 %s68, %s70
      %p72 = scmp.eq.s32.totalorder %s71, 0
      %s74 = sadd.s32 %s73, 1
      %s75 = scalar_select %p72, %s73, %s74
      %p78 = pneg %p72
      %p79 = scmp.eq.s32.totalorder %s17, 5
      %p80 = por %p78, %p79
      %p81 = scmp.ne.s32.totalorder %s73, %s76
      %p82 = scmp.eq.s32.totalorder %s17, 0
      %p83 = por %p81, %p82
      %p84 = scmp.ne.s32.totalorder %s73, %s76
      %p85 = scmp.eq.s32.totalorder %s22, 5
      %p86 = por %p84, %p85
      %p87 = scmp.ne.s32.totalorder %s76, %s77
      %p88 = scmp.eq.s32.totalorder %s22, 0
      %p89 = por %p87, %p88
      %p90 = scmp.ne.s32.totalorder %s76, %s77
      %p91 = scmp.eq.s32.totalorder %s23, 5
      %p92 = por %p90, %p91
      %p94 = scmp.ne.s32.totalorder %s77, %s93
      %p95 = scmp.eq.s32.totalorder %s23, 0
      %p96 = por %p94, %p95
      %s97 = ssub.s32 %s24, %s36
      %p98 = scmp.eq.s32.totalorder %s97, 0
      %s100 = sadd.s32 %s99, 1
      %s101 = scalar_select %p98, %s99, %s100
      %p104 = pneg %p98
      %p105 = scmp.eq.s32.totalorder %s17, 5
      %p106 = por %p104, %p105
      %p107 = scmp.ne.s32.totalorder %s99, %s102
      %p108 = scmp.eq.s32.totalorder %s17, 0
      %p109 = por %p107, %p108
      %p110 = scmp.ne.s32.totalorder %s99, %s102
      %p111 = scmp.eq.s32.totalorder %s22, 5
      %p112 = por %p110, %p111
      %p113 = scmp.ne.s32.totalorder %s102, %s103
      %p114 = scmp.eq.s32.totalorder %s22, 0
      %p115 = por %p113, %p114
      %p116 = scmp.ne.s32.totalorder %s102, %s103
      %p117 = scmp.eq.s32.totalorder %s23, 5
      %p118 = por %p116, %p117
      %p120 = scmp.ne.s32.totalorder %s103, %s119
      %p121 = scmp.eq.s32.totalorder %s23, 0
      %p122 = por %p120, %p121
      %p123 = scmp.le.s32.totalorder 1, %s17
      %p124 = scmp.lt.s32.totalorder %s17, 7
      %p125 = pnand %p123, %p124
      %p126 = pneg %p125
      // Predicated region
      $region9: #{tpu_custom_call.1} parent=5 // pred_check
        _
      $region10: #{tpu_custom_call.1} parent=5 // pred_check_branch
        %128 = sbr.rel (%p125) target = $region12
      $region11: #{tpu_custom_call.1} parent=5 // pred_region
        %s129 = ssub.s32 %s17, 1
      $region12: #{tpu_custom_call.1} parent=5 // pred_fallthru
        _
      %p130 = scmp.lt.s32.totalorder %s17, 6
      // Predicated region
      $region13: #{tpu_custom_call.1} parent=5 // pred_check
        %p131 = pneg %p130
      $region14: #{tpu_custom_call.1} parent=5 // pred_check_branch
        %133 = sbr.rel (%p131) target = $region16
      $region15: #{tpu_custom_call.1} parent=5 // pred_region
        // Predicated region
        $region17: #{tpu_custom_call.1} parent=15 // pred_check
          %p134 = pneg %p53
        $region18: #{tpu_custom_call.1} parent=15 // pred_check_branch
          %136 = sbr.rel (%p134) target = $region20
        $region19: #{tpu_custom_call.1} parent=15 // pred_region
          %s137 = sand.u32 %s43, 1
          %s138 = scalar_lea.sflag [#allocation3], %s137
          %s139 = sand.u32 %s43, 1
          %s140 = smul.addr %s139, 512
          %s141 = scalar_lea.vmem [#allocation2], %s140
          %s142 = smul.u32 %s24, 3
          %s143 = sadd.s32 %s142, %s25
          %s144 = smul.u32 256, %s143
          %146 = vsyncadd %s138, 0
          %s147 = smul.addr %s144, 2
          %s148 = scalar_lea.hbm %s0, %s147
          %s150 = sshll.u32 %s148, 4
          %s151 = int_to_ptr.hbm [resolvable:$true] %s150
          %s152 = sshll.u32 %s141, 4
          %s153 = int_to_ptr.vmem [resolvable:$true] %s152
          %155 = dma.hbm_to_vmem [thread:$0]  %s151, 8192, %s153, %s138
        $region20: #{tpu_custom_call.1} parent=15 // pred_fallthru
          _
        // Predicated region
        $region21: #{tpu_custom_call.1} parent=15 // pred_check
          %p156 = pneg %p83
        $region22: #{tpu_custom_call.1} parent=15 // pred_check_branch
          %158 = sbr.rel (%p156) target = $region24
        $region23: #{tpu_custom_call.1} parent=15 // pred_region
          %s159 = sand.u32 %s73, 1
          %s160 = scalar_lea.sflag [#allocation6], %s159
          %s161 = sand.u32 %s73, 1
          %s162 = smul.addr %s161, 4096
          %s163 = scalar_lea.vmem [#allocation5], %s162
          %s164 = smul.u32 %s24, 3
          %s165 = sadd.s32 %s164, %s25
          %s166 = smul.u32 256, %s165
          %168 = vsyncadd %s160, 0
          %s169 = smul.addr %s166, 8
          %s170 = scalar_lea.hbm %s1, %s169
          %s171 = sshll.u32 %s170, 4
          %s172 = int_to_ptr.hbm [resolvable:$true] %s171
          %s173 = sshll.u32 %s163, 4
          %s174 = int_to_ptr.vmem [resolvable:$true] %s173
          %179 = dma.hbm_to_vmem [thread:$0]  %s172, 65536, %s174, %s160, 196608, 32768, 2048
        $region24: #{tpu_custom_call.1} parent=15 // pred_fallthru
          _
      $region16: #{tpu_custom_call.1} parent=5 // pred_fallthru
        _
      %p180 = scmp.le.s32.totalorder 1, %s17
      %p181 = scmp.lt.s32.totalorder %s17, 7
      %p182 = pnand %p180, %p181
      %p183 = pneg %p182
      // Predicated region
      $region25: #{tpu_custom_call.1} parent=5 // pred_check
        _
      $region26: #{tpu_custom_call.1} parent=5 // pred_check_branch
        %185 = sbr.rel (%p182) target = $region28
      $region27: #{tpu_custom_call.1} parent=5 // pred_region
        %s186 = ssub.s32 %s17, 1
        %s187 = sand.u32 %s46, 1
        %s188 = scalar_lea.sflag [#allocation3], %s187
        %s189 = sand.u32 %s46, 1
        %s190 = smul.addr %s189, 512
        %s191 = scalar_lea.vmem [#allocation2], %s190
        // Predicated region
        $region29: #{tpu_custom_call.1} parent=27 // pred_check
          %p192 = pneg %p59
        $region30: #{tpu_custom_call.1} parent=27 // pred_check_branch
          %194 = sbr.rel (%p192) target = $region32
        $region31: #{tpu_custom_call.1} parent=27 // pred_region
          %196 = dma.done %s188, 8192
        $region32: #{tpu_custom_call.1} parent=27 // pred_fallthru
          _
        %s197 = sand.u32 %s76, 1
        %s198 = scalar_lea.sflag [#allocation6], %s197
        %s199 = sand.u32 %s76, 1
        %s200 = smul.addr %s199, 4096
        %s201 = scalar_lea.vmem [#allocation5], %s200
        // Predicated region
        $region33: #{tpu_custom_call.1} parent=27 // pred_check
          %p202 = pneg %p89
        $region34: #{tpu_custom_call.1} parent=27 // pred_check_branch
          %204 = sbr.rel (%p202) target = $region36
        $region35: #{tpu_custom_call.1} parent=27 // pred_region
          %206 = dma.done %s198, 65536
        $region36: #{tpu_custom_call.1} parent=27 // pred_fallthru
          _
        %s207 = sand.u32 %s46, 1
        %s208 = scalar_lea.sflag [#allocation3], %s207
        %s209 = sand.u32 %s46, 1
        %s210 = smul.addr %s209, 512
        %s211 = scalar_lea.vmem [#allocation2], %s210
        %p212 = pneg %p59
        %p213 = pneg %p56
        %s214 = sand.u32 %s76, 1
        %s215 = scalar_lea.sflag [#allocation6], %s214
        %s216 = sand.u32 %s76, 1
        %s217 = smul.addr %s216, 4096
        %s218 = scalar_lea.vmem [#allocation5], %s217
        %p219 = pneg %p89
        %p220 = pneg %p86
        %p221 = pneg %p115
        %p222 = pneg %p112
        %s223 = sand.u32 %s102, 1
        %s224 = scalar_lea.sflag [#allocation4], %s223
        %s225 = sand.u32 %s102, 1
        %s226 = smul.addr %s225, 2
        %s227 = scalar_lea.vmem [#allocation7], %s226
        %s228 = smul.u32 %s26, 3
        %s229 = sadd.s32 %s228, %s27
        %s230 = smul.u32 256, %s229
        %s231 = smul.u32 %s26, 3
        %s232 = sadd.s32 %s231, %s27
        %s233 = smul.u32 256, %s232
        %p234 = scmp.eq.s32.totalorder %s27, 0
        // Predicated region
        $region37: #{tpu_custom_call.1} parent=27 // pred_check
          %p235 = pneg %p234
        $region38: #{tpu_custom_call.1} parent=27 // pred_check_branch
          %237 = sbr.rel (%p235) target = $region40
        $region39: #{tpu_custom_call.1} parent=27 // pred_region
          %vm238 = vcmask 74752
          %239 = vst.msk [vmem:[%s227] sm:$0x3] %vm238, 0.0
        $region40: #{tpu_custom_call.1} parent=27 // pred_fallthru
          _
        %v240 = vld [vmem:[%s227] sm:$0x3]
        %v241 = vld [vmem:[%s191] sm:$0xff]
        %v242 = vld [vmem:[%s191 + $0x8] sm:$0xff]
        %v243 = vld [vmem:[%s191 + $0x10] sm:$0xff]
        %v244 = vld [vmem:[%s191 + $0x18] sm:$0xff]
        %v245 = vld [vmem:[%s191 + $0x20] sm:$0xff]
        %v246 = vld [vmem:[%s191 + $0x28] sm:$0xff]
        %v247 = vld [vmem:[%s191 + $0x30] sm:$0xff]
        %v248 = vld [vmem:[%s191 + $0x38] sm:$0xff]
        %v249 = vld [vmem:[%s191 + $0x40] sm:$0xff]
        %v250 = vld [vmem:[%s191 + $0x48] sm:$0xff]
        %v251 = vld [vmem:[%s191 + $0x50] sm:$0xff]
        %v252 = vld [vmem:[%s191 + $0x58] sm:$0xff]
        %v253 = vld [vmem:[%s191 + $0x60] sm:$0xff]
        %v254 = vld [vmem:[%s191 + $0x68] sm:$0xff]
        %v255 = vld [vmem:[%s191 + $0x70] sm:$0xff]
        %v256 = vld [vmem:[%s191 + $0x78] sm:$0xff]
        %v257 = vld [vmem:[%s191 + $0x80] sm:$0xff]
        %v258 = vld [vmem:[%s191 + $0x88] sm:$0xff]
        %v259 = vld [vmem:[%s191 + $0x90] sm:$0xff]
        %v260 = vld [vmem:[%s191 + $0x98] sm:$0xff]
        %v261 = vld [vmem:[%s191 + $0xa0] sm:$0xff]
        %v262 = vld [vmem:[%s191 + $0xa8] sm:$0xff]
        %v263 = vld [vmem:[%s191 + $0xb0] sm:$0xff]
        %v264 = vld [vmem:[%s191 + $0xb8] sm:$0xff]
        %v265 = vld [vmem:[%s191 + $0xc0] sm:$0xff]
        %v266 = vld [vmem:[%s191 + $0xc8] sm:$0xff]
        %v267 = vld [vmem:[%s191 + $0xd0] sm:$0xff]
        %v268 = vld [vmem:[%s191 + $0xd8] sm:$0xff]
        %v269 = vld [vmem:[%s191 + $0xe0] sm:$0xff]
        %v270 = vld [vmem:[%s191 + $0xe8] sm:$0xff]
        %v271 = vld [vmem:[%s191 + $0xf0] sm:$0xff]
        %v272 = vld [vmem:[%s191 + $0xf8] sm:$0xff]
        %v273 = vld [vmem:[%s191 + $0x100] sm:$0xff]
        %v274 = vld [vmem:[%s191 + $0x108] sm:$0xff]
        %v275 = vld [vmem:[%s191 + $0x110] sm:$0xff]
        %v276 = vld [vmem:[%s191 + $0x118] sm:$0xff]
        %v277 = vld [vmem:[%s191 + $0x120] sm:$0xff]
        %v278 = vld [vmem:[%s191 + $0x128] sm:$0xff]
        %v279 = vld [vmem:[%s191 + $0x130] sm:$0xff]
        %v280 = vld [vmem:[%s191 + $0x138] sm:$0xff]
        %v281 = vld [vmem:[%s191 + $0x140] sm:$0xff]
        %v282 = vld [vmem:[%s191 + $0x148] sm:$0xff]
        %v283 = vld [vmem:[%s191 + $0x150] sm:$0xff]
        %v284 = vld [vmem:[%s191 + $0x158] sm:$0xff]
        %v285 = vld [vmem:[%s191 + $0x160] sm:$0xff]
        %v286 = vld [vmem:[%s191 + $0x168] sm:$0xff]
        %v287 = vld [vmem:[%s191 + $0x170] sm:$0xff]
        %v288 = vld [vmem:[%s191 + $0x178] sm:$0xff]
        %v289 = vld [vmem:[%s191 + $0x180] sm:$0xff]
        %v290 = vld [vmem:[%s191 + $0x188] sm:$0xff]
        %v291 = vld [vmem:[%s191 + $0x190] sm:$0xff]
        %v292 = vld [vmem:[%s191 + $0x198] sm:$0xff]
        %v293 = vld [vmem:[%s191 + $0x1a0] sm:$0xff]
        %v294 = vld [vmem:[%s191 + $0x1a8] sm:$0xff]
        %v295 = vld [vmem:[%s191 + $0x1b0] sm:$0xff]
        %v296 = vld [vmem:[%s191 + $0x1b8] sm:$0xff]
        %v297 = vld [vmem:[%s191 + $0x1c0] sm:$0xff]
        %v298 = vld [vmem:[%s191 + $0x1c8] sm:$0xff]
        %v299 = vld [vmem:[%s191 + $0x1d0] sm:$0xff]
        %v300 = vld [vmem:[%s191 + $0x1d8] sm:$0xff]
        %v301 = vld [vmem:[%s191 + $0x1e0] sm:$0xff]
        %v302 = vld [vmem:[%s191 + $0x1e8] sm:$0xff]
        %v303 = vld [vmem:[%s191 + $0x1f0] sm:$0xff]
        %v304 = vld [vmem:[%s191 + $0x1f8] sm:$0xff]
        %v305 = vld [vmem:[%s201] sm:$0xff]
        %v306 = vld [vmem:[%s201 + $0x8] sm:$0xff]
        %v307 = vld [vmem:[%s201 + $0x10] sm:$0xff]
        %v308 = vld [vmem:[%s201 + $0x18] sm:$0xff]
        %v309 = vld [vmem:[%s201 + $0x20] sm:$0xff]
        %v310 = vld [vmem:[%s201 + $0x28] sm:$0xff]
        %v311 = vld [vmem:[%s201 + $0x30] sm:$0xff]
        %v312 = vld [vmem:[%s201 + $0x38] sm:$0xff]
        %v313 = vld [vmem:[%s201 + $0x40] sm:$0xff]
        %v314 = vld [vmem:[%s201 + $0x48] sm:$0xff]
        %v315 = vld [vmem:[%s201 + $0x50] sm:$0xff]
        %v316 = vld [vmem:[%s201 + $0x58] sm:$0xff]
        %v317 = vld [vmem:[%s201 + $0x60] sm:$0xff]
        %v318 = vld [vmem:[%s201 + $0x68] sm:$0xff]
        %v319 = vld [vmem:[%s201 + $0x70] sm:$0xff]
        %v320 = vld [vmem:[%s201 + $0x78] sm:$0xff]
        %v321 = vld [vmem:[%s201 + $0x80] sm:$0xff]
        %v322 = vld [vmem:[%s201 + $0x88] sm:$0xff]
        %v323 = vld [vmem:[%s201 + $0x90] sm:$0xff]
        %v324 = vld [vmem:[%s201 + $0x98] sm:$0xff]
        %v325 = vld [vmem:[%s201 + $0xa0] sm:$0xff]
        %v326 = vld [vmem:[%s201 + $0xa8] sm:$0xff]
        %v327 = vld [vmem:[%s201 + $0xb0] sm:$0xff]
        %v328 = vld [vmem:[%s201 + $0xb8] sm:$0xff]
        %v329 = vld [vmem:[%s201 + $0xc0] sm:$0xff]
        %v330 = vld [vmem:[%s201 + $0xc8] sm:$0xff]
        %v331 = vld [vmem:[%s201 + $0xd0] sm:$0xff]
        %v332 = vld [vmem:[%s201 + $0xd8] sm:$0xff]
        %v333 = vld [vmem:[%s201 + $0xe0] sm:$0xff]
        %v334 = vld [vmem:[%s201 + $0xe8] sm:$0xff]
        %v335 = vld [vmem:[%s201 + $0xf0] sm:$0xff]
        %v336 = vld [vmem:[%s201 + $0xf8] sm:$0xff]
        %v337 = vld [vmem:[%s201 + $0x100] sm:$0xff]
        %v338 = vld [vmem:[%s201 + $0x108] sm:$0xff]
        %v339 = vld [vmem:[%s201 + $0x110] sm:$0xff]
        %v340 = vld [vmem:[%s201 + $0x118] sm:$0xff]
        %v341 = vld [vmem:[%s201 + $0x120] sm:$0xff]
        %v342 = vld [vmem:[%s201 + $0x128] sm:$0xff]
        %v343 = vld [vmem:[%s201 + $0x130] sm:$0xff]
        %v344 = vld [vmem:[%s201 + $0x138] sm:$0xff]
        %v345 = vld [vmem:[%s201 + $0x140] sm:$0xff]
        %v346 = vld [vmem:[%s201 + $0x148] sm:$0xff]
        %v347 = vld [vmem:[%s201 + $0x150] sm:$0xff]
        %v348 = vld [vmem:[%s201 + $0x158] sm:$0xff]
        %v349 = vld [vmem:[%s201 + $0x160] sm:$0xff]
        %v350 = vld [vmem:[%s201 + $0x168] sm:$0xff]
        %v351 = vld [vmem:[%s201 + $0x170] sm:$0xff]
        %v352 = vld [vmem:[%s201 + $0x178] sm:$0xff]
        %v353 = vld [vmem:[%s201 + $0x180] sm:$0xff]
        %v354 = vld [vmem:[%s201 + $0x188] sm:$0xff]
        %v355 = vld [vmem:[%s201 + $0x190] sm:$0xff]
        %v356 = vld [vmem:[%s201 + $0x198] sm:$0xff]
        %v357 = vld [vmem:[%s201 + $0x1a0] sm:$0xff]
        %v358 = vld [vmem:[%s201 + $0x1a8] sm:$0xff]
        %v359 = vld [vmem:[%s201 + $0x1b0] sm:$0xff]
        %v360 = vld [vmem:[%s201 + $0x1b8] sm:$0xff]
        %v361 = vld [vmem:[%s201 + $0x1c0] sm:$0xff]
        %v362 = vld [vmem:[%s201 + $0x1c8] sm:$0xff]
        %v363 = vld [vmem:[%s201 + $0x1d0] sm:$0xff]
        %v364 = vld [vmem:[%s201 + $0x1d8] sm:$0xff]
        %v365 = vld [vmem:[%s201 + $0x1e0] sm:$0xff]
        %v366 = vld [vmem:[%s201 + $0x1e8] sm:$0xff]
        %v367 = vld [vmem:[%s201 + $0x1f0] sm:$0xff]
        %v368 = vld [vmem:[%s201 + $0x1f8] sm:$0xff]
        %v369 = vld [vmem:[%s201 + $0x200] sm:$0xff]
        %v370 = vld [vmem:[%s201 + $0x208] sm:$0xff]
        %v371 = vld [vmem:[%s201 + $0x210] sm:$0xff]
        %v372 = vld [vmem:[%s201 + $0x218] sm:$0xff]
        %v373 = vld [vmem:[%s201 + $0x220] sm:$0xff]
        %v374 = vld [vmem:[%s201 + $0x228] sm:$0xff]
        %v375 = vld [vmem:[%s201 + $0x230] sm:$0xff]
        %v376 = vld [vmem:[%s201 + $0x238] sm:$0xff]
        %v377 = vld [vmem:[%s201 + $0x240] sm:$0xff]
        %v378 = vld [vmem:[%s201 + $0x248] sm:$0xff]
        %v379 = vld [vmem:[%s201 + $0x250] sm:$0xff]
        %v380 = vld [vmem:[%s201 + $0x258] sm:$0xff]
        %v381 = vld [vmem:[%s201 + $0x260] sm:$0xff]
        %v382 = vld [vmem:[%s201 + $0x268] sm:$0xff]
        %v383 = vld [vmem:[%s201 + $0x270] sm:$0xff]
        %v384 = vld [vmem:[%s201 + $0x278] sm:$0xff]
        %v385 = vld [vmem:[%s201 + $0x280] sm:$0xff]
        %v386 = vld [vmem:[%s201 + $0x288] sm:$0xff]
        %v387 = vld [vmem:[%s201 + $0x290] sm:$0xff]
        %v388 = vld [vmem:[%s201 + $0x298] sm:$0xff]
        %v389 = vld [vmem:[%s201 + $0x2a0] sm:$0xff]
        %v390 = vld [vmem:[%s201 + $0x2a8] sm:$0xff]
        %v391 = vld [vmem:[%s201 + $0x2b0] sm:$0xff]
        %v392 = vld [vmem:[%s201 + $0x2b8] sm:$0xff]
        %v393 = vld [vmem:[%s201 + $0x2c0] sm:$0xff]
        %v394 = vld [vmem:[%s201 + $0x2c8] sm:$0xff]
        %v395 = vld [vmem:[%s201 + $0x2d0] sm:$0xff]
        %v396 = vld [vmem:[%s201 + $0x2d8] sm:$0xff]
        %v397 = vld [vmem:[%s201 + $0x2e0] sm:$0xff]
        %v398 = vld [vmem:[%s201 + $0x2e8] sm:$0xff]
        %v399 = vld [vmem:[%s201 + $0x2f0] sm:$0xff]
        %v400 = vld [vmem:[%s201 + $0x2f8] sm:$0xff]
        %v401 = vld [vmem:[%s201 + $0x300] sm:$0xff]
        %v402 = vld [vmem:[%s201 + $0x308] sm:$0xff]
        %v403 = vld [vmem:[%s201 + $0x310] sm:$0xff]
        %v404 = vld [vmem:[%s201 + $0x318] sm:$0xff]
        %v405 = vld [vmem:[%s201 + $0x320] sm:$0xff]
        %v406 = vld [vmem:[%s201 + $0x328] sm:$0xff]
        %v407 = vld [vmem:[%s201 + $0x330] sm:$0xff]
        %v408 = vld [vmem:[%s201 + $0x338] sm:$0xff]
        %v409 = vld [vmem:[%s201 + $0x340] sm:$0xff]
        %v410 = vld [vmem:[%s201 + $0x348] sm:$0xff]
        %v411 = vld [vmem:[%s201 + $0x350] sm:$0xff]
        %v412 = vld [vmem:[%s201 + $0x358] sm:$0xff]
        %v413 = vld [vmem:[%s201 + $0x360] sm:$0xff]
        %v414 = vld [vmem:[%s201 + $0x368] sm:$0xff]
        %v415 = vld [vmem:[%s201 + $0x370] sm:$0xff]
        %v416 = vld [vmem:[%s201 + $0x378] sm:$0xff]
        %v417 = vld [vmem:[%s201 + $0x380] sm:$0xff]
        %v418 = vld [vmem:[%s201 + $0x388] sm:$0xff]
        %v419 = vld [vmem:[%s201 + $0x390] sm:$0xff]
        %v420 = vld [vmem:[%s201 + $0x398] sm:$0xff]
        %v421 = vld [vmem:[%s201 + $0x3a0] sm:$0xff]
        %v422 = vld [vmem:[%s201 + $0x3a8] sm:$0xff]
        %v423 = vld [vmem:[%s201 + $0x3b0] sm:$0xff]
        %v424 = vld [vmem:[%s201 + $0x3b8] sm:$0xff]
        %v425 = vld [vmem:[%s201 + $0x3c0] sm:$0xff]
        %v426 = vld [vmem:[%s201 + $0x3c8] sm:$0xff]
        %v427 = vld [vmem:[%s201 + $0x3d0] sm:$0xff]
        %v428 = vld [vmem:[%s201 + $0x3d8] sm:$0xff]
        %v429 = vld [vmem:[%s201 + $0x3e0] sm:$0xff]
        %v430 = vld [vmem:[%s201 + $0x3e8] sm:$0xff]
        %v431 = vld [vmem:[%s201 + $0x3f0] sm:$0xff]
        %v432 = vld [vmem:[%s201 + $0x3f8] sm:$0xff]
        %v433 = vld [vmem:[%s201 + $0x400] sm:$0xff]
        %v434 = vld [vmem:[%s201 + $0x408] sm:$0xff]
        %v435 = vld [vmem:[%s201 + $0x410] sm:$0xff]
        %v436 = vld [vmem:[%s201 + $0x418] sm:$0xff]
        %v437 = vld [vmem:[%s201 + $0x420] sm:$0xff]
        %v438 = vld [vmem:[%s201 + $0x428] sm:$0xff]
        %v439 = vld [vmem:[%s201 + $0x430] sm:$0xff]
        %v440 = vld [vmem:[%s201 + $0x438] sm:$0xff]
        %v441 = vld [vmem:[%s201 + $0x440] sm:$0xff]
        %v442 = vld [vmem:[%s201 + $0x448] sm:$0xff]
        %v443 = vld [vmem:[%s201 + $0x450] sm:$0xff]
        %v444 = vld [vmem:[%s201 + $0x458] sm:$0xff]
        %v445 = vld [vmem:[%s201 + $0x460] sm:$0xff]
        %v446 = vld [vmem:[%s201 + $0x468] sm:$0xff]
        %v447 = vld [vmem:[%s201 + $0x470] sm:$0xff]
        %v448 = vld [vmem:[%s201 + $0x478] sm:$0xff]
        %v449 = vld [vmem:[%s201 + $0x480] sm:$0xff]
        %v450 = vld [vmem:[%s201 + $0x488] sm:$0xff]
        %v451 = vld [vmem:[%s201 + $0x490] sm:$0xff]
        %v452 = vld [vmem:[%s201 + $0x498] sm:$0xff]
        %v453 = vld [vmem:[%s201 + $0x4a0] sm:$0xff]
        %v454 = vld [vmem:[%s201 + $0x4a8] sm:$0xff]
        %v455 = vld [vmem:[%s201 + $0x4b0] sm:$0xff]
        %v456 = vld [vmem:[%s201 + $0x4b8] sm:$0xff]
        %v457 = vld [vmem:[%s201 + $0x4c0] sm:$0xff]
        %v458 = vld [vmem:[%s201 + $0x4c8] sm:$0xff]
        %v459 = vld [vmem:[%s201 + $0x4d0] sm:$0xff]
        %v460 = vld [vmem:[%s201 + $0x4d8] sm:$0xff]
        %v461 = vld [vmem:[%s201 + $0x4e0] sm:$0xff]
        %v462 = vld [vmem:[%s201 + $0x4e8] sm:$0xff]
        %v463 = vld [vmem:[%s201 + $0x4f0] sm:$0xff]
        %v464 = vld [vmem:[%s201 + $0x4f8] sm:$0xff]
        %v465 = vld [vmem:[%s201 + $0x500] sm:$0xff]
        %v466 = vld [vmem:[%s201 + $0x508] sm:$0xff]
        %v467 = vld [vmem:[%s201 + $0x510] sm:$0xff]
        %v468 = vld [vmem:[%s201 + $0x518] sm:$0xff]
        %v469 = vld [vmem:[%s201 + $0x520] sm:$0xff]
        %v470 = vld [vmem:[%s201 + $0x528] sm:$0xff]
        %v471 = vld [vmem:[%s201 + $0x530] sm:$0xff]
        %v472 = vld [vmem:[%s201 + $0x538] sm:$0xff]
        %v473 = vld [vmem:[%s201 + $0x540] sm:$0xff]
        %v474 = vld [vmem:[%s201 + $0x548] sm:$0xff]
        %v475 = vld [vmem:[%s201 + $0x550] sm:$0xff]
        %v476 = vld [vmem:[%s201 + $0x558] sm:$0xff]
        %v477 = vld [vmem:[%s201 + $0x560] sm:$0xff]
        %v478 = vld [vmem:[%s201 + $0x568] sm:$0xff]
        %v479 = vld [vmem:[%s201 + $0x570] sm:$0xff]
        %v480 = vld [vmem:[%s201 + $0x578] sm:$0xff]
        %v481 = vld [vmem:[%s201 + $0x580] sm:$0xff]
        %v482 = vld [vmem:[%s201 + $0x588] sm:$0xff]
        %v483 = vld [vmem:[%s201 + $0x590] sm:$0xff]
        %v484 = vld [vmem:[%s201 + $0x598] sm:$0xff]
        %v485 = vld [vmem:[%s201 + $0x5a0] sm:$0xff]
        %v486 = vld [vmem:[%s201 + $0x5a8] sm:$0xff]
        %v487 = vld [vmem:[%s201 + $0x5b0] sm:$0xff]
        %v488 = vld [vmem:[%s201 + $0x5b8] sm:$0xff]
        %v489 = vld [vmem:[%s201 + $0x5c0] sm:$0xff]
        %v490 = vld [vmem:[%s201 + $0x5c8] sm:$0xff]
        %v491 = vld [vmem:[%s201 + $0x5d0] sm:$0xff]
        %v492 = vld [vmem:[%s201 + $0x5d8] sm:$0xff]
        %v493 = vld [vmem:[%s201 + $0x5e0] sm:$0xff]
        %v494 = vld [vmem:[%s201 + $0x5e8] sm:$0xff]
        %v495 = vld [vmem:[%s201 + $0x5f0] sm:$0xff]
        %v496 = vld [vmem:[%s201 + $0x5f8] sm:$0xff]
        %v497 = vld [vmem:[%s201 + $0x600] sm:$0xff]
        %v498 = vld [vmem:[%s201 + $0x608] sm:$0xff]
        %v499 = vld [vmem:[%s201 + $0x610] sm:$0xff]
        %v500 = vld [vmem:[%s201 + $0x618] sm:$0xff]
        %v501 = vld [vmem:[%s201 + $0x620] sm:$0xff]
        %v502 = vld [vmem:[%s201 + $0x628] sm:$0xff]
        %v503 = vld [vmem:[%s201 + $0x630] sm:$0xff]
        %v504 = vld [vmem:[%s201 + $0x638] sm:$0xff]
        %v505 = vld [vmem:[%s201 + $0x640] sm:$0xff]
        %v506 = vld [vmem:[%s201 + $0x648] sm:$0xff]
        %v507 = vld [vmem:[%s201 + $0x650] sm:$0xff]
        %v508 = vld [vmem:[%s201 + $0x658] sm:$0xff]
        %v509 = vld [vmem:[%s201 + $0x660] sm:$0xff]
        %v510 = vld [vmem:[%s201 + $0x668] sm:$0xff]
        %v511 = vld [vmem:[%s201 + $0x670] sm:$0xff]
        %v512 = vld [vmem:[%s201 + $0x678] sm:$0xff]
        %v513 = vld [vmem:[%s201 + $0x680] sm:$0xff]
        %v514 = vld [vmem:[%s201 + $0x688] sm:$0xff]
        %v515 = vld [vmem:[%s201 + $0x690] sm:$0xff]
        %v516 = vld [vmem:[%s201 + $0x698] sm:$0xff]
        %v517 = vld [vmem:[%s201 + $0x6a0] sm:$0xff]
        %v518 = vld [vmem:[%s201 + $0x6a8] sm:$0xff]
        %v519 = vld [vmem:[%s201 + $0x6b0] sm:$0xff]
        %v520 = vld [vmem:[%s201 + $0x6b8] sm:$0xff]
        %v521 = vld [vmem:[%s201 + $0x6c0] sm:$0xff]
        %v522 = vld [vmem:[%s201 + $0x6c8] sm:$0xff]
        %v523 = vld [vmem:[%s201 + $0x6d0] sm:$0xff]
        %v524 = vld [vmem:[%s201 + $0x6d8] sm:$0xff]
        %v525 = vld [vmem:[%s201 + $0x6e0] sm:$0xff]
        %v526 = vld [vmem:[%s201 + $0x6e8] sm:$0xff]
        %v527 = vld [vmem:[%s201 + $0x6f0] sm:$0xff]
        %v528 = vld [vmem:[%s201 + $0x6f8] sm:$0xff]
        %v529 = vld [vmem:[%s201 + $0x700] sm:$0xff]
        %v530 = vld [vmem:[%s201 + $0x708] sm:$0xff]
        %v531 = vld [vmem:[%s201 + $0x710] sm:$0xff]
        %v532 = vld [vmem:[%s201 + $0x718] sm:$0xff]
        %v533 = vld [vmem:[%s201 + $0x720] sm:$0xff]
        %v534 = vld [vmem:[%s201 + $0x728] sm:$0xff]
        %v535 = vld [vmem:[%s201 + $0x730] sm:$0xff]
        %v536 = vld [vmem:[%s201 + $0x738] sm:$0xff]
        %v537 = vld [vmem:[%s201 + $0x740] sm:$0xff]
        %v538 = vld [vmem:[%s201 + $0x748] sm:$0xff]
        %v539 = vld [vmem:[%s201 + $0x750] sm:$0xff]
        %v540 = vld [vmem:[%s201 + $0x758] sm:$0xff]
        %v541 = vld [vmem:[%s201 + $0x760] sm:$0xff]
        %v542 = vld [vmem:[%s201 + $0x768] sm:$0xff]
        %v543 = vld [vmem:[%s201 + $0x770] sm:$0xff]
        %v544 = vld [vmem:[%s201 + $0x778] sm:$0xff]
        %v545 = vld [vmem:[%s201 + $0x780] sm:$0xff]
        %v546 = vld [vmem:[%s201 + $0x788] sm:$0xff]
        %v547 = vld [vmem:[%s201 + $0x790] sm:$0xff]
        %v548 = vld [vmem:[%s201 + $0x798] sm:$0xff]
        %v549 = vld [vmem:[%s201 + $0x7a0] sm:$0xff]
        %v550 = vld [vmem:[%s201 + $0x7a8] sm:$0xff]
        %v551 = vld [vmem:[%s201 + $0x7b0] sm:$0xff]
        %v552 = vld [vmem:[%s201 + $0x7b8] sm:$0xff]
        %v553 = vld [vmem:[%s201 + $0x7c0] sm:$0xff]
        %v554 = vld [vmem:[%s201 + $0x7c8] sm:$0xff]
        %v555 = vld [vmem:[%s201 + $0x7d0] sm:$0xff]
        %v556 = vld [vmem:[%s201 + $0x7d8] sm:$0xff]
        %v557 = vld [vmem:[%s201 + $0x7e0] sm:$0xff]
        %v558 = vld [vmem:[%s201 + $0x7e8] sm:$0xff]
        %v559 = vld [vmem:[%s201 + $0x7f0] sm:$0xff]
        %v560 = vld [vmem:[%s201 + $0x7f8] sm:$0xff]
        %v561 = vld [vmem:[%s201 + $0x800] sm:$0x3]
        %v562 = vld [vmem:[%s201 + $0x808] sm:$0x3]
        %v563 = vld [vmem:[%s201 + $0x810] sm:$0x3]
        %v564 = vld [vmem:[%s201 + $0x818] sm:$0x3]
        %v565 = vld [vmem:[%s201 + $0x820] sm:$0x3]
        %v566 = vld [vmem:[%s201 + $0x828] sm:$0x3]
        %v567 = vld [vmem:[%s201 + $0x830] sm:$0x3]
        %v568 = vld [vmem:[%s201 + $0x838] sm:$0x3]
        %v569 = vld [vmem:[%s201 + $0x840] sm:$0x3]
        %v570 = vld [vmem:[%s201 + $0x848] sm:$0x3]
        %v571 = vld [vmem:[%s201 + $0x850] sm:$0x3]
        %v572 = vld [vmem:[%s201 + $0x858] sm:$0x3]
        %v573 = vld [vmem:[%s201 + $0x860] sm:$0x3]
        %v574 = vld [vmem:[%s201 + $0x868] sm:$0x3]
        %v575 = vld [vmem:[%s201 + $0x870] sm:$0x3]
        %v576 = vld [vmem:[%s201 + $0x878] sm:$0x3]
        %v577 = vld [vmem:[%s201 + $0x880] sm:$0x3]
        %v578 = vld [vmem:[%s201 + $0x888] sm:$0x3]
        %v579 = vld [vmem:[%s201 + $0x890] sm:$0x3]
        %v580 = vld [vmem:[%s201 + $0x898] sm:$0x3]
        %v581 = vld [vmem:[%s201 + $0x8a0] sm:$0x3]
        %v582 = vld [vmem:[%s201 + $0x8a8] sm:$0x3]
        %v583 = vld [vmem:[%s201 + $0x8b0] sm:$0x3]
        %v584 = vld [vmem:[%s201 + $0x8b8] sm:$0x3]
        %v585 = vld [vmem:[%s201 + $0x8c0] sm:$0x3]
        %v586 = vld [vmem:[%s201 + $0x8c8] sm:$0x3]
        %v587 = vld [vmem:[%s201 + $0x8d0] sm:$0x3]
        %v588 = vld [vmem:[%s201 + $0x8d8] sm:$0x3]
        %v589 = vld [vmem:[%s201 + $0x8e0] sm:$0x3]
        %v590 = vld [vmem:[%s201 + $0x8e8] sm:$0x3]
        %v591 = vld [vmem:[%s201 + $0x8f0] sm:$0x3]
        %v592 = vld [vmem:[%s201 + $0x8f8] sm:$0x3]
        %v593 = vld [vmem:[%s201 + $0x900] sm:$0x3]
        %v594 = vld [vmem:[%s201 + $0x908] sm:$0x3]
        %v595 = vld [vmem:[%s201 + $0x910] sm:$0x3]
        %v596 = vld [vmem:[%s201 + $0x918] sm:$0x3]
        %v597 = vld [vmem:[%s201 + $0x920] sm:$0x3]
        %v598 = vld [vmem:[%s201 + $0x928] sm:$0x3]
        %v599 = vld [vmem:[%s201 + $0x930] sm:$0x3]
        %v600 = vld [vmem:[%s201 + $0x938] sm:$0x3]
        %v601 = vld [vmem:[%s201 + $0x940] sm:$0x3]
        %v602 = vld [vmem:[%s201 + $0x948] sm:$0x3]
        %v603 = vld [vmem:[%s201 + $0x950] sm:$0x3]
        %v604 = vld [vmem:[%s201 + $0x958] sm:$0x3]
        %v605 = vld [vmem:[%s201 + $0x960] sm:$0x3]
        %v606 = vld [vmem:[%s201 + $0x968] sm:$0x3]
        %v607 = vld [vmem:[%s201 + $0x970] sm:$0x3]
        %v608 = vld [vmem:[%s201 + $0x978] sm:$0x3]
        %v609 = vld [vmem:[%s201 + $0x980] sm:$0x3]
        %v610 = vld [vmem:[%s201 + $0x988] sm:$0x3]
        %v611 = vld [vmem:[%s201 + $0x990] sm:$0x3]
        %v612 = vld [vmem:[%s201 + $0x998] sm:$0x3]
        %v613 = vld [vmem:[%s201 + $0x9a0] sm:$0x3]
        %v614 = vld [vmem:[%s201 + $0x9a8] sm:$0x3]
        %v615 = vld [vmem:[%s201 + $0x9b0] sm:$0x3]
        %v616 = vld [vmem:[%s201 + $0x9b8] sm:$0x3]
        %v617 = vld [vmem:[%s201 + $0x9c0] sm:$0x3]
        %v618 = vld [vmem:[%s201 + $0x9c8] sm:$0x3]
        %v619 = vld [vmem:[%s201 + $0x9d0] sm:$0x3]
        %v620 = vld [vmem:[%s201 + $0x9d8] sm:$0x3]
        %v621 = vld [vmem:[%s201 + $0x9e0] sm:$0x3]
        %v622 = vld [vmem:[%s201 + $0x9e8] sm:$0x3]
        %v623 = vld [vmem:[%s201 + $0x9f0] sm:$0x3]
        %v624 = vld [vmem:[%s201 + $0x9f8] sm:$0x3]
        %v625 = vld [vmem:[%s201 + $0xa00] sm:$0x3]
        %v626 = vld [vmem:[%s201 + $0xa08] sm:$0x3]
        %v627 = vld [vmem:[%s201 + $0xa10] sm:$0x3]
        %v628 = vld [vmem:[%s201 + $0xa18] sm:$0x3]
        %v629 = vld [vmem:[%s201 + $0xa20] sm:$0x3]
        %v630 = vld [vmem:[%s201 + $0xa28] sm:$0x3]
        %v631 = vld [vmem:[%s201 + $0xa30] sm:$0x3]
        %v632 = vld [vmem:[%s201 + $0xa38] sm:$0x3]
        %v633 = vld [vmem:[%s201 + $0xa40] sm:$0x3]
        %v634 = vld [vmem:[%s201 + $0xa48] sm:$0x3]
        %v635 = vld [vmem:[%s201 + $0xa50] sm:$0x3]
        %v636 = vld [vmem:[%s201 + $0xa58] sm:$0x3]
        %v637 = vld [vmem:[%s201 + $0xa60] sm:$0x3]
        %v638 = vld [vmem:[%s201 + $0xa68] sm:$0x3]
        %v639 = vld [vmem:[%s201 + $0xa70] sm:$0x3]
        %v640 = vld [vmem:[%s201 + $0xa78] sm:$0x3]
        %v641 = vld [vmem:[%s201 + $0xa80] sm:$0x3]
        %v642 = vld [vmem:[%s201 + $0xa88] sm:$0x3]
        %v643 = vld [vmem:[%s201 + $0xa90] sm:$0x3]
        %v644 = vld [vmem:[%s201 + $0xa98] sm:$0x3]
        %v645 = vld [vmem:[%s201 + $0xaa0] sm:$0x3]
        %v646 = vld [vmem:[%s201 + $0xaa8] sm:$0x3]
        %v647 = vld [vmem:[%s201 + $0xab0] sm:$0x3]
        %v648 = vld [vmem:[%s201 + $0xab8] sm:$0x3]
        %v649 = vld [vmem:[%s201 + $0xac0] sm:$0x3]
        %v650 = vld [vmem:[%s201 + $0xac8] sm:$0x3]
        %v651 = vld [vmem:[%s201 + $0xad0] sm:$0x3]
        %v652 = vld [vmem:[%s201 + $0xad8] sm:$0x3]
        %v653 = vld [vmem:[%s201 + $0xae0] sm:$0x3]
        %v654 = vld [vmem:[%s201 + $0xae8] sm:$0x3]
        %v655 = vld [vmem:[%s201 + $0xaf0] sm:$0x3]
        %v656 = vld [vmem:[%s201 + $0xaf8] sm:$0x3]
        %v657 = vld [vmem:[%s201 + $0xb00] sm:$0x3]
        %v658 = vld [vmem:[%s201 + $0xb08] sm:$0x3]
        %v659 = vld [vmem:[%s201 + $0xb10] sm:$0x3]
        %v660 = vld [vmem:[%s201 + $0xb18] sm:$0x3]
        %v661 = vld [vmem:[%s201 + $0xb20] sm:$0x3]
        %v662 = vld [vmem:[%s201 + $0xb28] sm:$0x3]
        %v663 = vld [vmem:[%s201 + $0xb30] sm:$0x3]
        %v664 = vld [vmem:[%s201 + $0xb38] sm:$0x3]
        %v665 = vld [vmem:[%s201 + $0xb40] sm:$0x3]
        %v666 = vld [vmem:[%s201 + $0xb48] sm:$0x3]
        %v667 = vld [vmem:[%s201 + $0xb50] sm:$0x3]
        %v668 = vld [vmem:[%s201 + $0xb58] sm:$0x3]
        %v669 = vld [vmem:[%s201 + $0xb60] sm:$0x3]
        %v670 = vld [vmem:[%s201 + $0xb68] sm:$0x3]
        %v671 = vld [vmem:[%s201 + $0xb70] sm:$0x3]
        %v672 = vld [vmem:[%s201 + $0xb78] sm:$0x3]
        %v673 = vld [vmem:[%s201 + $0xb80] sm:$0x3]
        %v674 = vld [vmem:[%s201 + $0xb88] sm:$0x3]
        %v675 = vld [vmem:[%s201 + $0xb90] sm:$0x3]
        %v676 = vld [vmem:[%s201 + $0xb98] sm:$0x3]
        %v677 = vld [vmem:[%s201 + $0xba0] sm:$0x3]
        %v678 = vld [vmem:[%s201 + $0xba8] sm:$0x3]
        %v679 = vld [vmem:[%s201 + $0xbb0] sm:$0x3]
        %v680 = vld [vmem:[%s201 + $0xbb8] sm:$0x3]
        %v681 = vld [vmem:[%s201 + $0xbc0] sm:$0x3]
        %v682 = vld [vmem:[%s201 + $0xbc8] sm:$0x3]
        %v683 = vld [vmem:[%s201 + $0xbd0] sm:$0x3]
        %v684 = vld [vmem:[%s201 + $0xbd8] sm:$0x3]
        %v685 = vld [vmem:[%s201 + $0xbe0] sm:$0x3]
        %v686 = vld [vmem:[%s201 + $0xbe8] sm:$0x3]
        %v687 = vld [vmem:[%s201 + $0xbf0] sm:$0x3]
        %v688 = vld [vmem:[%s201 + $0xbf8] sm:$0x3]
        %v689 = vld [vmem:[%s201 + $0xc00] sm:$0x3]
        %v690 = vld [vmem:[%s201 + $0xc08] sm:$0x3]
        %v691 = vld [vmem:[%s201 + $0xc10] sm:$0x3]
        %v692 = vld [vmem:[%s201 + $0xc18] sm:$0x3]
        %v693 = vld [vmem:[%s201 + $0xc20] sm:$0x3]
        %v694 = vld [vmem:[%s201 + $0xc28] sm:$0x3]
        %v695 = vld [vmem:[%s201 + $0xc30] sm:$0x3]
        %v696 = vld [vmem:[%s201 + $0xc38] sm:$0x3]
        %v697 = vld [vmem:[%s201 + $0xc40] sm:$0x3]
        %v698 = vld [vmem:[%s201 + $0xc48] sm:$0x3]
        %v699 = vld [vmem:[%s201 + $0xc50] sm:$0x3]
        %v700 = vld [vmem:[%s201 + $0xc58] sm:$0x3]
        %v701 = vld [vmem:[%s201 + $0xc60] sm:$0x3]
        %v702 = vld [vmem:[%s201 + $0xc68] sm:$0x3]
        %v703 = vld [vmem:[%s201 + $0xc70] sm:$0x3]
        %v704 = vld [vmem:[%s201 + $0xc78] sm:$0x3]
        %v705 = vld [vmem:[%s201 + $0xc80] sm:$0x3]
        %v706 = vld [vmem:[%s201 + $0xc88] sm:$0x3]
        %v707 = vld [vmem:[%s201 + $0xc90] sm:$0x3]
        %v708 = vld [vmem:[%s201 + $0xc98] sm:$0x3]
        %v709 = vld [vmem:[%s201 + $0xca0] sm:$0x3]
        %v710 = vld [vmem:[%s201 + $0xca8] sm:$0x3]
        %v711 = vld [vmem:[%s201 + $0xcb0] sm:$0x3]
        %v712 = vld [vmem:[%s201 + $0xcb8] sm:$0x3]
        %v713 = vld [vmem:[%s201 + $0xcc0] sm:$0x3]
        %v714 = vld [vmem:[%s201 + $0xcc8] sm:$0x3]
        %v715 = vld [vmem:[%s201 + $0xcd0] sm:$0x3]
        %v716 = vld [vmem:[%s201 + $0xcd8] sm:$0x3]
        %v717 = vld [vmem:[%s201 + $0xce0] sm:$0x3]
        %v718 = vld [vmem:[%s201 + $0xce8] sm:$0x3]
        %v719 = vld [vmem:[%s201 + $0xcf0] sm:$0x3]
        %v720 = vld [vmem:[%s201 + $0xcf8] sm:$0x3]
        %v721 = vld [vmem:[%s201 + $0xd00] sm:$0x3]
        %v722 = vld [vmem:[%s201 + $0xd08] sm:$0x3]
        %v723 = vld [vmem:[%s201 + $0xd10] sm:$0x3]
        %v724 = vld [vmem:[%s201 + $0xd18] sm:$0x3]
        %v725 = vld [vmem:[%s201 + $0xd20] sm:$0x3]
        %v726 = vld [vmem:[%s201 + $0xd28] sm:$0x3]
        %v727 = vld [vmem:[%s201 + $0xd30] sm:$0x3]
        %v728 = vld [vmem:[%s201 + $0xd38] sm:$0x3]
        %v729 = vld [vmem:[%s201 + $0xd40] sm:$0x3]
        %v730 = vld [vmem:[%s201 + $0xd48] sm:$0x3]
        %v731 = vld [vmem:[%s201 + $0xd50] sm:$0x3]
        %v732 = vld [vmem:[%s201 + $0xd58] sm:$0x3]
        %v733 = vld [vmem:[%s201 + $0xd60] sm:$0x3]
        %v734 = vld [vmem:[%s201 + $0xd68] sm:$0x3]
        %v735 = vld [vmem:[%s201 + $0xd70] sm:$0x3]
        %v736 = vld [vmem:[%s201 + $0xd78] sm:$0x3]
        %v737 = vld [vmem:[%s201 + $0xd80] sm:$0x3]
        %v738 = vld [vmem:[%s201 + $0xd88] sm:$0x3]
        %v739 = vld [vmem:[%s201 + $0xd90] sm:$0x3]
        %v740 = vld [vmem:[%s201 + $0xd98] sm:$0x3]
        %v741 = vld [vmem:[%s201 + $0xda0] sm:$0x3]
        %v742 = vld [vmem:[%s201 + $0xda8] sm:$0x3]
        %v743 = vld [vmem:[%s201 + $0xdb0] sm:$0x3]
        %v744 = vld [vmem:[%s201 + $0xdb8] sm:$0x3]
        %v745 = vld [vmem:[%s201 + $0xdc0] sm:$0x3]
        %v746 = vld [vmem:[%s201 + $0xdc8] sm:$0x3]
        %v747 = vld [vmem:[%s201 + $0xdd0] sm:$0x3]
        %v748 = vld [vmem:[%s201 + $0xdd8] sm:$0x3]
        %v749 = vld [vmem:[%s201 + $0xde0] sm:$0x3]
        %v750 = vld [vmem:[%s201 + $0xde8] sm:$0x3]
        %v751 = vld [vmem:[%s201 + $0xdf0] sm:$0x3]
        %v752 = vld [vmem:[%s201 + $0xdf8] sm:$0x3]
        %v753 = vld [vmem:[%s201 + $0xe00] sm:$0x3]
        %v754 = vld [vmem:[%s201 + $0xe08] sm:$0x3]
        %v755 = vld [vmem:[%s201 + $0xe10] sm:$0x3]
        %v756 = vld [vmem:[%s201 + $0xe18] sm:$0x3]
        %v757 = vld [vmem:[%s201 + $0xe20] sm:$0x3]
        %v758 = vld [vmem:[%s201 + $0xe28] sm:$0x3]
        %v759 = vld [vmem:[%s201 + $0xe30] sm:$0x3]
        %v760 = vld [vmem:[%s201 + $0xe38] sm:$0x3]
        %v761 = vld [vmem:[%s201 + $0xe40] sm:$0x3]
        %v762 = vld [vmem:[%s201 + $0xe48] sm:$0x3]
        %v763 = vld [vmem:[%s201 + $0xe50] sm:$0x3]
        %v764 = vld [vmem:[%s201 + $0xe58] sm:$0x3]
        %v765 = vld [vmem:[%s201 + $0xe60] sm:$0x3]
        %v766 = vld [vmem:[%s201 + $0xe68] sm:$0x3]
        %v767 = vld [vmem:[%s201 + $0xe70] sm:$0x3]
        %v768 = vld [vmem:[%s201 + $0xe78] sm:$0x3]
        %v769 = vld [vmem:[%s201 + $0xe80] sm:$0x3]
        %v770 = vld [vmem:[%s201 + $0xe88] sm:$0x3]
        %v771 = vld [vmem:[%s201 + $0xe90] sm:$0x3]
        %v772 = vld [vmem:[%s201 + $0xe98] sm:$0x3]
        %v773 = vld [vmem:[%s201 + $0xea0] sm:$0x3]
        %v774 = vld [vmem:[%s201 + $0xea8] sm:$0x3]
        %v775 = vld [vmem:[%s201 + $0xeb0] sm:$0x3]
        %v776 = vld [vmem:[%s201 + $0xeb8] sm:$0x3]
        %v777 = vld [vmem:[%s201 + $0xec0] sm:$0x3]
        %v778 = vld [vmem:[%s201 + $0xec8] sm:$0x3]
        %v779 = vld [vmem:[%s201 + $0xed0] sm:$0x3]
        %v780 = vld [vmem:[%s201 + $0xed8] sm:$0x3]
        %v781 = vld [vmem:[%s201 + $0xee0] sm:$0x3]
        %v782 = vld [vmem:[%s201 + $0xee8] sm:$0x3]
        %v783 = vld [vmem:[%s201 + $0xef0] sm:$0x3]
        %v784 = vld [vmem:[%s201 + $0xef8] sm:$0x3]
        %v785 = vld [vmem:[%s201 + $0xf00] sm:$0x3]
        %v786 = vld [vmem:[%s201 + $0xf08] sm:$0x3]
        %v787 = vld [vmem:[%s201 + $0xf10] sm:$0x3]
        %v788 = vld [vmem:[%s201 + $0xf18] sm:$0x3]
        %v789 = vld [vmem:[%s201 + $0xf20] sm:$0x3]
        %v790 = vld [vmem:[%s201 + $0xf28] sm:$0x3]
        %v791 = vld [vmem:[%s201 + $0xf30] sm:$0x3]
        %v792 = vld [vmem:[%s201 + $0xf38] sm:$0x3]
        %v793 = vld [vmem:[%s201 + $0xf40] sm:$0x3]
        %v794 = vld [vmem:[%s201 + $0xf48] sm:$0x3]
        %v795 = vld [vmem:[%s201 + $0xf50] sm:$0x3]
        %v796 = vld [vmem:[%s201 + $0xf58] sm:$0x3]
        %v797 = vld [vmem:[%s201 + $0xf60] sm:$0x3]
        %v798 = vld [vmem:[%s201 + $0xf68] sm:$0x3]
        %v799 = vld [vmem:[%s201 + $0xf70] sm:$0x3]
        %v800 = vld [vmem:[%s201 + $0xf78] sm:$0x3]
        %v801 = vld [vmem:[%s201 + $0xf80] sm:$0x3]
        %v802 = vld [vmem:[%s201 + $0xf88] sm:$0x3]
        %v803 = vld [vmem:[%s201 + $0xf90] sm:$0x3]
        %v804 = vld [vmem:[%s201 + $0xf98] sm:$0x3]
        %v805 = vld [vmem:[%s201 + $0xfa0] sm:$0x3]
        %v806 = vld [vmem:[%s201 + $0xfa8] sm:$0x3]
        %v807 = vld [vmem:[%s201 + $0xfb0] sm:$0x3]
        %v808 = vld [vmem:[%s201 + $0xfb8] sm:$0x3]
        %v809 = vld [vmem:[%s201 + $0xfc0] sm:$0x3]
        %v810 = vld [vmem:[%s201 + $0xfc8] sm:$0x3]
        %v811 = vld [vmem:[%s201 + $0xfd0] sm:$0x3]
        %v812 = vld [vmem:[%s201 + $0xfd8] sm:$0x3]
        %v813 = vld [vmem:[%s201 + $0xfe0] sm:$0x3]
        %v814 = vld [vmem:[%s201 + $0xfe8] sm:$0x3]
        %v815 = vld [vmem:[%s201 + $0xff0] sm:$0x3]
        %v816 = vld [vmem:[%s201 + $0xff8] sm:$0x3]
        %881 = vst [vmem:[#allocation1] ss:$4 sm:$0xff] %v241
        %s882 = scalar_lea.vmem [#allocation1], 32
        %883 = vst [vmem:[%s882] ss:$4 sm:$0xff] %v242
        %v884 = vld.sshfl [vmem:[#allocation1] sm:$0xff pattern:$0x73625140]
        %v885 = vld.sshfl [vmem:[#allocation1 + $0x8] sm:$0xff pattern:$0x73625140]
        %v886 = vld.sshfl [vmem:[#allocation1 + $0x10] sm:$0xff pattern:$0x73625140]
        %v887 = vld.sshfl [vmem:[#allocation1 + $0x18] sm:$0xff pattern:$0x73625140]
        %v888 = vld.sshfl [vmem:[#allocation1 + $0x20] sm:$0xff pattern:$0x73625140]
        %v889 = vld.sshfl [vmem:[#allocation1 + $0x28] sm:$0xff pattern:$0x73625140]
        %v890 = vld.sshfl [vmem:[#allocation1 + $0x30] sm:$0xff pattern:$0x73625140]
        %v891 = vld.sshfl [vmem:[#allocation1 + $0x38] sm:$0xff pattern:$0x73625140]
        %892 = vst [vmem:[#allocation1] ss:$4 sm:$0xff] %v243
        %893 = vst [vmem:[%s882] ss:$4 sm:$0xff] %v244
        %v894 = vld.sshfl [vmem:[#allocation1] sm:$0xff pattern:$0x73625140]
        %v895 = vld.sshfl [vmem:[#allocation1 + $0x8] sm:$0xff pattern:$0x73625140]
        %v896 = vld.sshfl [vmem:[#allocation1 + $0x10] sm:$0xff pattern:$0x73625140]
        %v897 = vld.sshfl [vmem:[#allocation1 + $0x18] sm:$0xff pattern:$0x73625140]
        %v898 = vld.sshfl [vmem:[#allocation1 + $0x20] sm:$0xff pattern:$0x73625140]
        %v899 = vld.sshfl [vmem:[#allocation1 + $0x28] sm:$0xff pattern:$0x73625140]
        %v900 = vld.sshfl [vmem:[#allocation1 + $0x30] sm:$0xff pattern:$0x73625140]
        %v901 = vld.sshfl [vmem:[#allocation1 + $0x38] sm:$0xff pattern:$0x73625140]
        %902 = vst [vmem:[#allocation1] ss:$4 sm:$0xff] %v245
        %903 = vst [vmem:[%s882] ss:$4 sm:$0xff] %v246
        %v904 = vld.sshfl [vmem:[#allocation1] sm:$0xff pattern:$0x73625140]
        %v905 = vld.sshfl [vmem:[#allocation1 + $0x8] sm:$0xff pattern:$0x73625140]
        %v906 = vld.sshfl [vmem:[#allocation1 + $0x10] sm:$0xff pattern:$0x73625140]
        %v907 = vld.sshfl [vmem:[#allocation1 + $0x18] sm:$0xff pattern:$0x73625140]
        %v908 = vld.sshfl [vmem:[#allocation1 + $0x20] sm:$0xff pattern:$0x73625140]
        %v909 = vld.sshfl [vmem:[#allocation1 + $0x28] sm:$0xff pattern:$0x73625140]
        %v910 = vld.sshfl [vmem:[#allocation1 + $0x30] sm:$0xff pattern:$0x73625140]
        %v911 = vld.sshfl [vmem:[#allocation1 + $0x38] sm:$0xff pattern:$0x73625140]
        %912 = vst [vmem:[#allocation1] ss:$4 sm:$0xff] %v247
        %913 = vst [vmem:[%s882] ss:$4 sm:$0xff] %v248
        %v914 = vld.sshfl [vmem:[#allocation1] sm:$0xff pattern:$0x73625140]
        %v915 = vld.sshfl [vmem:[#allocation1 + $0x8] sm:$0xff pattern:$0x73625140]
        %v916 = vld.sshfl [vmem:[#allocation1 + $0x10] sm:$0xff pattern:$0x73625140]
        %v917 = vld.sshfl [vmem:[#allocation1 + $0x18] sm:$0xff pattern:$0x73625140]
        %v918 = vld.sshfl [vmem:[#allocation1 + $0x20] sm:$0xff pattern:$0x73625140]
        %v919 = vld.sshfl [vmem:[#allocation1 + $0x28] sm:$0xff pattern:$0x73625140]
        %v920 = vld.sshfl [vmem:[#allocation1 + $0x30] sm:$0xff pattern:$0x73625140]
        %v921 = vld.sshfl [vmem:[#allocation1 + $0x38] sm:$0xff pattern:$0x73625140]
        %922 = vst [vmem:[#allocation1] ss:$4 sm:$0xff] %v249
        %923 = vst [vmem:[%s882] ss:$4 sm:$0xff] %v250
        %v924 = vld.sshfl [vmem:[#allocation1] sm:$0xff pattern:$0x73625140]
        %v925 = vld.sshfl [vmem:[#allocation1 + $0x8] sm:$0xff pattern:$0x73625140]
        %v926 = vld.sshfl [vmem:[#allocation1 + $0x10] sm:$0xff pattern:$0x73625140]
        %v927 = vld.sshfl [vmem:[#allocation1 + $0x18] sm:$0xff pattern:$0x73625140]
        %v928 = vld.sshfl [vmem:[#allocation1 + $0x20] sm:$0xff pattern:$0x73625140]
        %v929 = vld.sshfl [vmem:[#allocation1 + $0x28] sm:$0xff pattern:$0x73625140]
        %v930 = vld.sshfl [vmem:[#allocation1 + $0x30] sm:$0xff pattern:$0x73625140]
        %v931 = vld.sshfl [vmem:[#allocation1 + $0x38] sm:$0xff pattern:$0x73625140]
        %932 = vst [vmem:[#allocation1] ss:$4 sm:$0xff] %v251
        %933 = vst [vmem:[%s882] ss:$4 sm:$0xff] %v252
        %v934 = vld.sshfl [vmem:[#allocation1] sm:$0xff pattern:$0x73625140]
        %v935 = vld.sshfl [vmem:[#allocation1 + $0x8] sm:$0xff pattern:$0x73625140]
        %v936 = vld.sshfl [vmem:[#allocation1 + $0x10] sm:$0xff pattern:$0x73625140]
        %v937 = vld.sshfl [vmem:[#allocation1 + $0x18] sm:$0xff pattern:$0x73625140]
        %v938 = vld.sshfl [vmem:[#allocation1 + $0x20] sm:$0xff pattern:$0x73625140]
        %v939 = vld.sshfl [vmem:[#allocation1 + $0x28] sm:$0xff pattern:$0x73625140]
        %v940 = vld.sshfl [vmem:[#allocation1 + $0x30] sm:$0xff pattern:$0x73625140]
        %v941 = vld.sshfl [vmem:[#allocation1 + $0x38] sm:$0xff pattern:$0x73625140]
        %942 = vst [vmem:[#allocation1] ss:$4 sm:$0xff] %v253
        %943 = vst [vmem:[%s882] ss:$4 sm:$0xff] %v254
        %v944 = vld.sshfl [vmem:[#allocation1] sm:$0xff pattern:$0x73625140]
        %v945 = vld.sshfl [vmem:[#allocation1 + $0x8] sm:$0xff pattern:$0x73625140]
        %v946 = vld.sshfl [vmem:[#allocation1 + $0x10] sm:$0xff pattern:$0x73625140]
        %v947 = vld.sshfl [vmem:[#allocation1 + $0x18] sm:$0xff pattern:$0x73625140]
        %v948 = vld.sshfl [vmem:[#allocation1 + $0x20] sm:$0xff pattern:$0x73625140]
        %v949 = vld.sshfl [vmem:[#allocation1 + $0x28] sm:$0xff pattern:$0x73625140]
        %v950 = vld.sshfl [vmem:[#allocation1 + $0x30] sm:$0xff pattern:$0x73625140]
        %v951 = vld.sshfl [vmem:[#allocation1 + $0x38] sm:$0xff pattern:$0x73625140]
        %952 = vst [vmem:[#allocation1] ss:$4 sm:$0xff] %v255
        %953 = vst [vmem:[%s882] ss:$4 sm:$0xff] %v256
        %v954 = vld.sshfl [vmem:[#allocation1] sm:$0xff pattern:$0x73625140]
        %v955 = vld.sshfl [vmem:[#allocation1 + $0x8] sm:$0xff pattern:$0x73625140]
        %v956 = vld.sshfl [vmem:[#allocation1 + $0x10] sm:$0xff pattern:$0x73625140]
        %v957 = vld.sshfl [vmem:[#allocation1 + $0x18] sm:$0xff pattern:$0x73625140]
        %v958 = vld.sshfl [vmem:[#allocation1 + $0x20] sm:$0xff pattern:$0x73625140]
        %v959 = vld.sshfl [vmem:[#allocation1 + $0x28] sm:$0xff pattern:$0x73625140]
        %v960 = vld.sshfl [vmem:[#allocation1 + $0x30] sm:$0xff pattern:$0x73625140]
        %v961 = vld.sshfl [vmem:[#allocation1 + $0x38] sm:$0xff pattern:$0x73625140]
        %962 = vst [vmem:[#allocation1] ss:$4 sm:$0xff] %v257
        %963 = vst [vmem:[%s882] ss:$4 sm:$0xff] %v258
        %v964 = vld.sshfl [vmem:[#allocation1] sm:$0xff pattern:$0x73625140]
        %v965 = vld.sshfl [vmem:[#allocation1 + $0x8] sm:$0xff pattern:$0x73625140]
        %v966 = vld.sshfl [vmem:[#allocation1 + $0x10] sm:$0xff pattern:$0x73625140]
        %v967 = vld.sshfl [vmem:[#allocation1 + $0x18] sm:$0xff pattern:$0x73625140]
        %v968 = vld.sshfl [vmem:[#allocation1 + $0x20] sm:$0xff pattern:$0x73625140]
        %v969 = vld.sshfl [vmem:[#allocation1 + $0x28] sm:$0xff pattern:$0x73625140]
        %v970 = vld.sshfl [vmem:[#allocation1 + $0x30] sm:$0xff pattern:$0x73625140]
        %v971 = vld.sshfl [vmem:[#allocation1 + $0x38] sm:$0xff pattern:$0x73625140]
        %972 = vst [vmem:[#allocation1] ss:$4 sm:$0xff] %v259
        %973 = vst [vmem:[%s882] ss:$4 sm:$0xff] %v260
        %v974 = vld.sshfl [vmem:[#allocation1] sm:$0xff pattern:$0x73625140]
        %v975 = vld.sshfl [vmem:[#allocation1 + $0x8] sm:$0xff pattern:$0x73625140]
        %v976 = vld.sshfl [vmem:[#allocation1 + $0x10] sm:$0xff pattern:$0x73625140]
        %v977 = vld.sshfl [vmem:[#allocation1 + $0x18] sm:$0xff pattern:$0x73625140]
        %v978 = vld.sshfl [vmem:[#allocation1 + $0x20] sm:$0xff pattern:$0x73625140]
        %v979 = vld.sshfl [vmem:[#allocation1 + $0x28] sm:$0xff pattern:$0x73625140]
        %v980 = vld.sshfl [vmem:[#allocation1 + $0x30] sm:$0xff pattern:$0x73625140]
        %v981 = vld.sshfl [vmem:[#allocation1 + $0x38] sm:$0xff pattern:$0x73625140]
        %982 = vst [vmem:[#allocation1] ss:$4 sm:$0xff] %v261
        %983 = vst [vmem:[%s882] ss:$4 sm:$0xff] %v262
        %v984 = vld.sshfl [vmem:[#allocation1] sm:$0xff pattern:$0x73625140]
        %v985 = vld.sshfl [vmem:[#allocation1 + $0x8] sm:$0xff pattern:$0x73625140]
        %v986 = vld.sshfl [vmem:[#allocation1 + $0x10] sm:$0xff pattern:$0x73625140]
        %v987 = vld.sshfl [vmem:[#allocation1 + $0x18] sm:$0xff pattern:$0x73625140]
        %v988 = vld.sshfl [vmem:[#allocation1 + $0x20] sm:$0xff pattern:$0x73625140]
        %v989 = vld.sshfl [vmem:[#allocation1 + $0x28] sm:$0xff pattern:$0x73625140]
        %v990 = vld.sshfl [vmem:[#allocation1 + $0x30] sm:$0xff pattern:$0x73625140]
        %v991 = vld.sshfl [vmem:[#allocation1 + $0x38] sm:$0xff pattern:$0x73625140]
        %992 = vst [vmem:[#allocation1] ss:$4 sm:$0xff] %v263
        %993 = vst [vmem:[%s882] ss:$4 sm:$0xff] %v264
        %v994 = vld.sshfl [vmem:[#allocation1] sm:$0xff pattern:$0x73625140]
        %v995 = vld.sshfl [vmem:[#allocation1 + $0x8] sm:$0xff pattern:$0x73625140]
        %v996 = vld.sshfl [vmem:[#allocation1 + $0x10] sm:$0xff pattern:$0x73625140]
        %v997 = vld.sshfl [vmem:[#allocation1 + $0x18] sm:$0xff pattern:$0x73625140]
        %v998 = vld.sshfl [vmem:[#allocation1 + $0x20] sm:$0xff pattern:$0x73625140]
        %v999 = vld.sshfl [vmem:[#allocation1 + $0x28] sm:$0xff pattern:$0x73625140]
        %v1000 = vld.sshfl [vmem:[#allocation1 + $0x30] sm:$0xff pattern:$0x73625140]
        %v1001 = vld.sshfl [vmem:[#allocation1 + $0x38] sm:$0xff pattern:$0x73625140]
        %1002 = vst [vmem:[#allocation1] ss:$4 sm:$0xff] %v265
        %1003 = vst [vmem:[%s882] ss:$4 sm:$0xff] %v266
        %v1004 = vld.sshfl [vmem:[#allocation1] sm:$0xff pattern:$0x73625140]
        %v1005 = vld.sshfl [vmem:[#allocation1 + $0x8] sm:$0xff pattern:$0x73625140]
        %v1006 = vld.sshfl [vmem:[#allocation1 + $0x10] sm:$0xff pattern:$0x73625140]
        %v1007 = vld.sshfl [vmem:[#allocation1 + $0x18] sm:$0xff pattern:$0x73625140]
        %v1008 = vld.sshfl [vmem:[#allocation1 + $0x20] sm:$0xff pattern:$0x73625140]
        %v1009 = vld.sshfl [vmem:[#allocation1 + $0x28] sm:$0xff pattern:$0x73625140]
        %v1010 = vld.sshfl [vmem:[#allocation1 + $0x30] sm:$0xff pattern:$0x73625140]
        %v1011 = vld.sshfl [vmem:[#allocation1 + $0x38] sm:$0xff pattern:$0x73625140]
        %1012 = vst [vmem:[#allocation1] ss:$4 sm:$0xff] %v267
        %1013 = vst [vmem:[%s882] ss:$4 sm:$0xff] %v268
        %v1014 = vld.sshfl [vmem:[#allocation1] sm:$0xff pattern:$0x73625140]
        %v1015 = vld.sshfl [vmem:[#allocation1 + $0x8] sm:$0xff pattern:$0x73625140]
        %v1016 = vld.sshfl [vmem:[#allocation1 + $0x10] sm:$0xff pattern:$0x73625140]
        %v1017 = vld.sshfl [vmem:[#allocation1 + $0x18] sm:$0xff pattern:$0x73625140]
        %v1018 = vld.sshfl [vmem:[#allocation1 + $0x20] sm:$0xff pattern:$0x73625140]
        %v1019 = vld.sshfl [vmem:[#allocation1 + $0x28] sm:$0xff pattern:$0x73625140]
        %v1020 = vld.sshfl [vmem:[#allocation1 + $0x30] sm:$0xff pattern:$0x73625140]
        %v1021 = vld.sshfl [vmem:[#allocation1 + $0x38] sm:$0xff pattern:$0x73625140]
        %1022 = vst [vmem:[#allocation1] ss:$4 sm:$0xff] %v269
        %1023 = vst [vmem:[%s882] ss:$4 sm:$0xff] %v270
        %v1024 = vld.sshfl [vmem:[#allocation1] sm:$0xff pattern:$0x73625140]
        %v1025 = vld.sshfl [vmem:[#allocation1 + $0x8] sm:$0xff pattern:$0x73625140]
        %v1026 = vld.sshfl [vmem:[#allocation1 + $0x10] sm:$0xff pattern:$0x73625140]
        %v1027 = vld.sshfl [vmem:[#allocation1 + $0x18] sm:$0xff pattern:$0x73625140]
        %v1028 = vld.sshfl [vmem:[#allocation1 + $0x20] sm:$0xff pattern:$0x73625140]
        %v1029 = vld.sshfl [vmem:[#allocation1 + $0x28] sm:$0xff pattern:$0x73625140]
        %v1030 = vld.sshfl [vmem:[#allocation1 + $0x30] sm:$0xff pattern:$0x73625140]
        %v1031 = vld.sshfl [vmem:[#allocation1 + $0x38] sm:$0xff pattern:$0x73625140]
        %1032 = vst [vmem:[#allocation1] ss:$4 sm:$0xff] %v271
        %1033 = vst [vmem:[%s882] ss:$4 sm:$0xff] %v272
        %v1034 = vld.sshfl [vmem:[#allocation1] sm:$0xff pattern:$0x73625140]
        %v1035 = vld.sshfl [vmem:[#allocation1 + $0x8] sm:$0xff pattern:$0x73625140]
        %v1036 = vld.sshfl [vmem:[#allocation1 + $0x10] sm:$0xff pattern:$0x73625140]
        %v1037 = vld.sshfl [vmem:[#allocation1 + $0x18] sm:$0xff pattern:$0x73625140]
        %v1038 = vld.sshfl [vmem:[#allocation1 + $0x20] sm:$0xff pattern:$0x73625140]
        %v1039 = vld.sshfl [vmem:[#allocation1 + $0x28] sm:$0xff pattern:$0x73625140]
        %v1040 = vld.sshfl [vmem:[#allocation1 + $0x30] sm:$0xff pattern:$0x73625140]
        %v1041 = vld.sshfl [vmem:[#allocation1 + $0x38] sm:$0xff pattern:$0x73625140]
        %1042 = vst [vmem:[#allocation1] ss:$4 sm:$0xff] %v273
        %1043 = vst [vmem:[%s882] ss:$4 sm:$0xff] %v274
        %v1044 = vld.sshfl [vmem:[#allocation1] sm:$0xff pattern:$0x73625140]
        %v1045 = vld.sshfl [vmem:[#allocation1 + $0x8] sm:$0xff pattern:$0x73625140]
        %v1046 = vld.sshfl [vmem:[#allocation1 + $0x10] sm:$0xff pattern:$0x73625140]
        %v1047 = vld.sshfl [vmem:[#allocation1 + $0x18] sm:$0xff pattern:$0x73625140]
        %v1048 = vld.sshfl [vmem:[#allocation1 + $0x20] sm:$0xff pattern:$0x73625140]
        %v1049 = vld.sshfl [vmem:[#allocation1 + $0x28] sm:$0xff pattern:$0x73625140]
        %v1050 = vld.sshfl [vmem:[#allocation1 + $0x30] sm:$0xff pattern:$0x73625140]
        %v1051 = vld.sshfl [vmem:[#allocation1 + $0x38] sm:$0xff pattern:$0x73625140]
        %1052 = vst [vmem:[#allocation1] ss:$4 sm:$0xff] %v275
        %1053 = vst [vmem:[%s882] ss:$4 sm:$0xff] %v276
        %v1054 = vld.sshfl [vmem:[#allocation1] sm:$0xff pattern:$0x73625140]
        %v1055 = vld.sshfl [vmem:[#allocation1 + $0x8] sm:$0xff pattern:$0x73625140]
        %v1056 = vld.sshfl [vmem:[#allocation1 + $0x10] sm:$0xff pattern:$0x73625140]
        %v1057 = vld.sshfl [vmem:[#allocation1 + $0x18] sm:$0xff pattern:$0x73625140]
        %v1058 = vld.sshfl [vmem:[#allocation1 + $0x20] sm:$0xff pattern:$0x73625140]
        %v1059 = vld.sshfl [vmem:[#allocation1 + $0x28] sm:$0xff pattern:$0x73625140]
        %v1060 = vld.sshfl [vmem:[#allocation1 + $0x30] sm:$0xff pattern:$0x73625140]
        %v1061 = vld.sshfl [vmem:[#allocation1 + $0x38] sm:$0xff pattern:$0x73625140]
        %1062 = vst [vmem:[#allocation1] ss:$4 sm:$0xff] %v277
        %1063 = vst [vmem:[%s882] ss:$4 sm:$0xff] %v278
        %v1064 = vld.sshfl [vmem:[#allocation1] sm:$0xff pattern:$0x73625140]
        %v1065 = vld.sshfl [vmem:[#allocation1 + $0x8] sm:$0xff pattern:$0x73625140]
        %v1066 = vld.sshfl [vmem:[#allocation1 + $0x10] sm:$0xff pattern:$0x73625140]
        %v1067 = vld.sshfl [vmem:[#allocation1 + $0x18] sm:$0xff pattern:$0x73625140]
        %v1068 = vld.sshfl [vmem:[#allocation1 + $0x20] sm:$0xff pattern:$0x73625140]
        %v1069 = vld.sshfl [vmem:[#allocation1 + $0x28] sm:$0xff pattern:$0x73625140]
        %v1070 = vld.sshfl [vmem:[#allocation1 + $0x30] sm:$0xff pattern:$0x73625140]
        %v1071 = vld.sshfl [vmem:[#allocation1 + $0x38] sm:$0xff pattern:$0x73625140]
        %1072 = vst [vmem:[#allocation1] ss:$4 sm:$0xff] %v279
        %1073 = vst [vmem:[%s882] ss:$4 sm:$0xff] %v280
        %v1074 = vld.sshfl [vmem:[#allocation1] sm:$0xff pattern:$0x73625140]
        %v1075 = vld.sshfl [vmem:[#allocation1 + $0x8] sm:$0xff pattern:$0x73625140]
        %v1076 = vld.sshfl [vmem:[#allocation1 + $0x10] sm:$0xff pattern:$0x73625140]
        %v1077 = vld.sshfl [vmem:[#allocation1 + $0x18] sm:$0xff pattern:$0x73625140]
        %v1078 = vld.sshfl [vmem:[#allocation1 + $0x20] sm:$0xff pattern:$0x73625140]
        %v1079 = vld.sshfl [vmem:[#allocation1 + $0x28] sm:$0xff pattern:$0x73625140]
        %v1080 = vld.sshfl [vmem:[#allocation1 + $0x30] sm:$0xff pattern:$0x73625140]
        %v1081 = vld.sshfl [vmem:[#allocation1 + $0x38] sm:$0xff pattern:$0x73625140]
        %1082 = vst [vmem:[#allocation1] ss:$4 sm:$0xff] %v281
        %1083 = vst [vmem:[%s882] ss:$4 sm:$0xff] %v282
        %v1084 = vld.sshfl [vmem:[#allocation1] sm:$0xff pattern:$0x73625140]
        %v1085 = vld.sshfl [vmem:[#allocation1 + $0x8] sm:$0xff pattern:$0x73625140]
        %v1086 = vld.sshfl [vmem:[#allocation1 + $0x10] sm:$0xff pattern:$0x73625140]
        %v1087 = vld.sshfl [vmem:[#allocation1 + $0x18] sm:$0xff pattern:$0x73625140]
        %v1088 = vld.sshfl [vmem:[#allocation1 + $0x20] sm:$0xff pattern:$0x73625140]
        %v1089 = vld.sshfl [vmem:[#allocation1 + $0x28] sm:$0xff pattern:$0x73625140]
        %v1090 = vld.sshfl [vmem:[#allocation1 + $0x30] sm:$0xff pattern:$0x73625140]
        %v1091 = vld.sshfl [vmem:[#allocation1 + $0x38] sm:$0xff pattern:$0x73625140]
        %1092 = vst [vmem:[#allocation1] ss:$4 sm:$0xff] %v283
        %1093 = vst [vmem:[%s882] ss:$4 sm:$0xff] %v284
        %v1094 = vld.sshfl [vmem:[#allocation1] sm:$0xff pattern:$0x73625140]
        %v1095 = vld.sshfl [vmem:[#allocation1 + $0x8] sm:$0xff pattern:$0x73625140]
        %v1096 = vld.sshfl [vmem:[#allocation1 + $0x10] sm:$0xff pattern:$0x73625140]
        %v1097 = vld.sshfl [vmem:[#allocation1 + $0x18] sm:$0xff pattern:$0x73625140]
        %v1098 = vld.sshfl [vmem:[#allocation1 + $0x20] sm:$0xff pattern:$0x73625140]
        %v1099 = vld.sshfl [vmem:[#allocation1 + $0x28] sm:$0xff pattern:$0x73625140]
        %v1100 = vld.sshfl [vmem:[#allocation1 + $0x30] sm:$0xff pattern:$0x73625140]
        %v1101 = vld.sshfl [vmem:[#allocation1 + $0x38] sm:$0xff pattern:$0x73625140]
        %1102 = vst [vmem:[#allocation1] ss:$4 sm:$0xff] %v285
        %1103 = vst [vmem:[%s882] ss:$4 sm:$0xff] %v286
        %v1104 = vld.sshfl [vmem:[#allocation1] sm:$0xff pattern:$0x73625140]
        %v1105 = vld.sshfl [vmem:[#allocation1 + $0x8] sm:$0xff pattern:$0x73625140]
        %v1106 = vld.sshfl [vmem:[#allocation1 + $0x10] sm:$0xff pattern:$0x73625140]
        %v1107 = vld.sshfl [vmem:[#allocation1 + $0x18] sm:$0xff pattern:$0x73625140]
        %v1108 = vld.sshfl [vmem:[#allocation1 + $0x20] sm:$0xff pattern:$0x73625140]
        %v1109 = vld.sshfl [vmem:[#allocation1 + $0x28] sm:$0xff pattern:$0x73625140]
        %v1110 = vld.sshfl [vmem:[#allocation1 + $0x30] sm:$0xff pattern:$0x73625140]
        %v1111 = vld.sshfl [vmem:[#allocation1 + $0x38] sm:$0xff pattern:$0x73625140]
        %1112 = vst [vmem:[#allocation1] ss:$4 sm:$0xff] %v287
        %1113 = vst [vmem:[%s882] ss:$4 sm:$0xff] %v288
        %v1114 = vld.sshfl [vmem:[#allocation1] sm:$0xff pattern:$0x73625140]
        %v1115 = vld.sshfl [vmem:[#allocation1 + $0x8] sm:$0xff pattern:$0x73625140]
        %v1116 = vld.sshfl [vmem:[#allocation1 + $0x10] sm:$0xff pattern:$0x73625140]
        %v1117 = vld.sshfl [vmem:[#allocation1 + $0x18] sm:$0xff pattern:$0x73625140]
        %v1118 = vld.sshfl [vmem:[#allocation1 + $0x20] sm:$0xff pattern:$0x73625140]
        %v1119 = vld.sshfl [vmem:[#allocation1 + $0x28] sm:$0xff pattern:$0x73625140]
        %v1120 = vld.sshfl [vmem:[#allocation1 + $0x30] sm:$0xff pattern:$0x73625140]
        %v1121 = vld.sshfl [vmem:[#allocation1 + $0x38] sm:$0xff pattern:$0x73625140]
        %1122 = vst [vmem:[#allocation1] ss:$4 sm:$0xff] %v289
        %1123 = vst [vmem:[%s882] ss:$4 sm:$0xff] %v290
        %v1124 = vld.sshfl [vmem:[#allocation1] sm:$0xff pattern:$0x73625140]
        %v1125 = vld.sshfl [vmem:[#allocation1 + $0x8] sm:$0xff pattern:$0x73625140]
        %v1126 = vld.sshfl [vmem:[#allocation1 + $0x10] sm:$0xff pattern:$0x73625140]
        %v1127 = vld.sshfl [vmem:[#allocation1 + $0x18] sm:$0xff pattern:$0x73625140]
        %v1128 = vld.sshfl [vmem:[#allocation1 + $0x20] sm:$0xff pattern:$0x73625140]
        %v1129 = vld.sshfl [vmem:[#allocation1 + $0x28] sm:$0xff pattern:$0x73625140]
        %v1130 = vld.sshfl [vmem:[#allocation1 + $0x30] sm:$0xff pattern:$0x73625140]
        %v1131 = vld.sshfl [vmem:[#allocation1 + $0x38] sm:$0xff pattern:$0x73625140]
        %1132 = vst [vmem:[#allocation1] ss:$4 sm:$0xff] %v291
        %1133 = vst [vmem:[%s882] ss:$4 sm:$0xff] %v292
        %v1134 = vld.sshfl [vmem:[#allocation1] sm:$0xff pattern:$0x73625140]
        %v1135 = vld.sshfl [vmem:[#allocation1 + $0x8] sm:$0xff pattern:$0x73625140]
        %v1136 = vld.sshfl [vmem:[#allocation1 + $0x10] sm:$0xff pattern:$0x73625140]
        %v1137 = vld.sshfl [vmem:[#allocation1 + $0x18] sm:$0xff pattern:$0x73625140]
        %v1138 = vld.sshfl [vmem:[#allocation1 + $0x20] sm:$0xff pattern:$0x73625140]
        %v1139 = vld.sshfl [vmem:[#allocation1 + $0x28] sm:$0xff pattern:$0x73625140]
        %v1140 = vld.sshfl [vmem:[#allocation1 + $0x30] sm:$0xff pattern:$0x73625140]
        %v1141 = vld.sshfl [vmem:[#allocation1 + $0x38] sm:$0xff pattern:$0x73625140]
        %1142 = vst [vmem:[#allocation1] ss:$4 sm:$0xff] %v293
        %1143 = vst [vmem:[%s882] ss:$4 sm:$0xff] %v294
        %v1144 = vld.sshfl [vmem:[#allocation1] sm:$0xff pattern:$0x73625140]
        %v1145 = vld.sshfl [vmem:[#allocation1 + $0x8] sm:$0xff pattern:$0x73625140]
        %v1146 = vld.sshfl [vmem:[#allocation1 + $0x10] sm:$0xff pattern:$0x73625140]
        %v1147 = vld.sshfl [vmem:[#allocation1 + $0x18] sm:$0xff pattern:$0x73625140]
        %v1148 = vld.sshfl [vmem:[#allocation1 + $0x20] sm:$0xff pattern:$0x73625140]
        %v1149 = vld.sshfl [vmem:[#allocation1 + $0x28] sm:$0xff pattern:$0x73625140]
        %v1150 = vld.sshfl [vmem:[#allocation1 + $0x30] sm:$0xff pattern:$0x73625140]
        %v1151 = vld.sshfl [vmem:[#allocation1 + $0x38] sm:$0xff pattern:$0x73625140]
        %1152 = vst [vmem:[#allocation1] ss:$4 sm:$0xff] %v295
        %1153 = vst [vmem:[%s882] ss:$4 sm:$0xff] %v296
        %v1154 = vld.sshfl [vmem:[#allocation1] sm:$0xff pattern:$0x73625140]
        %v1155 = vld.sshfl [vmem:[#allocation1 + $0x8] sm:$0xff pattern:$0x73625140]
        %v1156 = vld.sshfl [vmem:[#allocation1 + $0x10] sm:$0xff pattern:$0x73625140]
        %v1157 = vld.sshfl [vmem:[#allocation1 + $0x18] sm:$0xff pattern:$0x73625140]
        %v1158 = vld.sshfl [vmem:[#allocation1 + $0x20] sm:$0xff pattern:$0x73625140]
        %v1159 = vld.sshfl [vmem:[#allocation1 + $0x28] sm:$0xff pattern:$0x73625140]
        %v1160 = vld.sshfl [vmem:[#allocation1 + $0x30] sm:$0xff pattern:$0x73625140]
        %v1161 = vld.sshfl [vmem:[#allocation1 + $0x38] sm:$0xff pattern:$0x73625140]
        %1162 = vst [vmem:[#allocation1] ss:$4 sm:$0xff] %v297
        %1163 = vst [vmem:[%s882] ss:$4 sm:$0xff] %v298
        %v1164 = vld.sshfl [vmem:[#allocation1] sm:$0xff pattern:$0x73625140]
        %v1165 = vld.sshfl [vmem:[#allocation1 + $0x8] sm:$0xff pattern:$0x73625140]
        %v1166 = vld.sshfl [vmem:[#allocation1 + $0x10] sm:$0xff pattern:$0x73625140]
        %v1167 = vld.sshfl [vmem:[#allocation1 + $0x18] sm:$0xff pattern:$0x73625140]
        %v1168 = vld.sshfl [vmem:[#allocation1 + $0x20] sm:$0xff pattern:$0x73625140]
        %v1169 = vld.sshfl [vmem:[#allocation1 + $0x28] sm:$0xff pattern:$0x73625140]
        %v1170 = vld.sshfl [vmem:[#allocation1 + $0x30] sm:$0xff pattern:$0x73625140]
        %v1171 = vld.sshfl [vmem:[#allocation1 + $0x38] sm:$0xff pattern:$0x73625140]
        %1172 = vst [vmem:[#allocation1] ss:$4 sm:$0xff] %v299
        %1173 = vst [vmem:[%s882] ss:$4 sm:$0xff] %v300
        %v1174 = vld.sshfl [vmem:[#allocation1] sm:$0xff pattern:$0x73625140]
        %v1175 = vld.sshfl [vmem:[#allocation1 + $0x8] sm:$0xff pattern:$0x73625140]
        %v1176 = vld.sshfl [vmem:[#allocation1 + $0x10] sm:$0xff pattern:$0x73625140]
        %v1177 = vld.sshfl [vmem:[#allocation1 + $0x18] sm:$0xff pattern:$0x73625140]
        %v1178 = vld.sshfl [vmem:[#allocation1 + $0x20] sm:$0xff pattern:$0x73625140]
        %v1179 = vld.sshfl [vmem:[#allocation1 + $0x28] sm:$0xff pattern:$0x73625140]
        %v1180 = vld.sshfl [vmem:[#allocation1 + $0x30] sm:$0xff pattern:$0x73625140]
        %v1181 = vld.sshfl [vmem:[#allocation1 + $0x38] sm:$0xff pattern:$0x73625140]
        %1182 = vst [vmem:[#allocation1] ss:$4 sm:$0xff] %v301
        %1183 = vst [vmem:[%s882] ss:$4 sm:$0xff] %v302
        %v1184 = vld.sshfl [vmem:[#allocation1] sm:$0xff pattern:$0x73625140]
        %v1185 = vld.sshfl [vmem:[#allocation1 + $0x8] sm:$0xff pattern:$0x73625140]
        %v1186 = vld.sshfl [vmem:[#allocation1 + $0x10] sm:$0xff pattern:$0x73625140]
        %v1187 = vld.sshfl [vmem:[#allocation1 + $0x18] sm:$0xff pattern:$0x73625140]
        %v1188 = vld.sshfl [vmem:[#allocation1 + $0x20] sm:$0xff pattern:$0x73625140]
        %v1189 = vld.sshfl [vmem:[#allocation1 + $0x28] sm:$0xff pattern:$0x73625140]
        %v1190 = vld.sshfl [vmem:[#allocation1 + $0x30] sm:$0xff pattern:$0x73625140]
        %v1191 = vld.sshfl [vmem:[#allocation1 + $0x38] sm:$0xff pattern:$0x73625140]
        %1192 = vst [vmem:[#allocation1] ss:$4 sm:$0xff] %v303
        %1193 = vst [vmem:[%s882] ss:$4 sm:$0xff] %v304
        %v1194 = vld.sshfl [vmem:[#allocation1] sm:$0xff pattern:$0x73625140]
        %v1195 = vld.sshfl [vmem:[#allocation1 + $0x8] sm:$0xff pattern:$0x73625140]
        %v1196 = vld.sshfl [vmem:[#allocation1 + $0x10] sm:$0xff pattern:$0x73625140]
        %v1197 = vld.sshfl [vmem:[#allocation1 + $0x18] sm:$0xff pattern:$0x73625140]
        %v1198 = vld.sshfl [vmem:[#allocation1 + $0x20] sm:$0xff pattern:$0x73625140]
        %v1199 = vld.sshfl [vmem:[#allocation1 + $0x28] sm:$0xff pattern:$0x73625140]
        %v1200 = vld.sshfl [vmem:[#allocation1 + $0x30] sm:$0xff pattern:$0x73625140]
        %v1201 = vld.sshfl [vmem:[#allocation1 + $0x38] sm:$0xff pattern:$0x73625140]
        %1458 = vmatpush.xpose.msra.mxu0 0.0
        %1459 = vmatpush.xpose.msra.mxu0 0.0
        %1460 = vmatpush.xpose.msra.mxu0 0.0
        %1461 = vmatpush.xpose.msra.mxu0 0.0
        %1462 = vmatpush.xpose.msra.mxu0 0.0
        %1463 = vmatpush.xpose.msra.mxu0 0.0
        %1464 = vmatpush.xpose.msra.mxu0 0.0
        %1465 = vmatpush.xpose.msra.mxu0 0.0
        %1466 = vmatpush.xpose.msra.mxu0 0.0
        %1467 = vmatpush.xpose.msra.mxu0 0.0
        %1468 = vmatpush.xpose.msra.mxu0 0.0
        %1469 = vmatpush.xpose.msra.mxu0 0.0
        %1470 = vmatpush.xpose.msra.mxu0 0.0
        %1471 = vmatpush.xpose.msra.mxu0 0.0
        %1472 = vmatpush.xpose.msra.mxu0 %v561
        %1473 = vmatpush.xpose.msra.mxu0 %v305
        %1474 = vmatmul.f32.gmra.mxu0 %v884
        %v1475 = vpop.f32.mrf.mxu0
        %v1476 = vadd.f32 0.0, %v1475
        %1477 = vdwg.mxu0
        %1478 = vmatpush.xpose.msra.mxu0 0.0
        %1479 = vmatpush.xpose.msra.mxu0 0.0
        %1480 = vmatpush.xpose.msra.mxu0 0.0
        %1481 = vmatpush.xpose.msra.mxu0 0.0
        %1482 = vmatpush.xpose.msra.mxu0 0.0
        %1483 = vmatpush.xpose.msra.mxu0 0.0
        %1484 = vmatpush.xpose.msra.mxu0 0.0
        %1485 = vmatpush.xpose.msra.mxu0 0.0
        %1486 = vmatpush.xpose.msra.mxu0 0.0
        %1487 = vmatpush.xpose.msra.mxu0 0.0
        %1488 = vmatpush.xpose.msra.mxu0 0.0
        %1489 = vmatpush.xpose.msra.mxu0 0.0
        %1490 = vmatpush.xpose.msra.mxu0 0.0
        %1491 = vmatpush.xpose.msra.mxu0 0.0
        %1492 = vmatpush.xpose.msra.mxu0 %v562
        %1493 = vmatpush.xpose.msra.mxu0 %v306
        %1494 = vmatmul.f32.gmra.mxu0 %v885
        %v1495 = vpop.f32.mrf.mxu0
        %v1496 = vadd.f32 %v1476, %v1495
        %1497 = vdwg.mxu0
        %1498 = vmatpush.xpose.msra.mxu0 0.0
        %1499 = vmatpush.xpose.msra.mxu0 0.0
        %1500 = vmatpush.xpose.msra.mxu0 0.0
        %1501 = vmatpush.xpose.msra.mxu0 0.0
        %1502 = vmatpush.xpose.msra.mxu0 0.0
        %1503 = vmatpush.xpose.msra.mxu0 0.0
        %1504 = vmatpush.xpose.msra.mxu0 0.0
        %1505 = vmatpush.xpose.msra.mxu0 0.0
        %1506 = vmatpush.xpose.msra.mxu0 0.0
        %1507 = vmatpush.xpose.msra.mxu0 0.0
        %1508 = vmatpush.xpose.msra.mxu0 0.0
        %1509 = vmatpush.xpose.msra.mxu0 0.0
        %1510 = vmatpush.xpose.msra.mxu0 0.0
        %1511 = vmatpush.xpose.msra.mxu0 0.0
        %1512 = vmatpush.xpose.msra.mxu0 %v563
        %1513 = vmatpush.xpose.msra.mxu0 %v307
        %1514 = vmatmul.f32.gmra.mxu0 %v886
        %v1515 = vpop.f32.mrf.mxu0
        %v1516 = vadd.f32 %v1496, %v1515
        %1517 = vdwg.mxu0
        %1518 = vmatpush.xpose.msra.mxu0 0.0
        %1519 = vmatpush.xpose.msra.mxu0 0.0
        %1520 = vmatpush.xpose.msra.mxu0 0.0
        %1521 = vmatpush.xpose.msra.mxu0 0.0
        %1522 = vmatpush.xpose.msra.mxu0 0.0
        %1523 = vmatpush.xpose.msra.mxu0 0.0
        %1524 = vmatpush.xpose.msra.mxu0 0.0
        %1525 = vmatpush.xpose.msra.mxu0 0.0
        %1526 = vmatpush.xpose.msra.mxu0 0.0
        %1527 = vmatpush.xpose.msra.mxu0 0.0
        %1528 = vmatpush.xpose.msra.mxu0 0.0
        %1529 = vmatpush.xpose.msra.mxu0 0.0
        %1530 = vmatpush.xpose.msra.mxu0 0.0
        %1531 = vmatpush.xpose.msra.mxu0 0.0
        %1532 = vmatpush.xpose.msra.mxu0 %v564
        %1533 = vmatpush.xpose.msra.mxu0 %v308
        %1534 = vmatmul.f32.gmra.mxu0 %v887
        %v1535 = vpop.f32.mrf.mxu0
        %v1536 = vadd.f32 %v1516, %v1535
        %1537 = vdwg.mxu0
        %1538 = vmatpush.xpose.msra.mxu0 0.0
        %1539 = vmatpush.xpose.msra.mxu0 0.0
        %1540 = vmatpush.xpose.msra.mxu0 0.0
        %1541 = vmatpush.xpose.msra.mxu0 0.0
        %1542 = vmatpush.xpose.msra.mxu0 0.0
        %1543 = vmatpush.xpose.msra.mxu0 0.0
        %1544 = vmatpush.xpose.msra.mxu0 0.0
        %1545 = vmatpush.xpose.msra.mxu0 0.0
        %1546 = vmatpush.xpose.msra.mxu0 0.0
        %1547 = vmatpush.xpose.msra.mxu0 0.0
        %1548 = vmatpush.xpose.msra.mxu0 0.0
        %1549 = vmatpush.xpose.msra.mxu0 0.0
        %1550 = vmatpush.xpose.msra.mxu0 0.0
        %1551 = vmatpush.xpose.msra.mxu0 0.0
        %1552 = vmatpush.xpose.msra.mxu0 %v565
        %1553 = vmatpush.xpose.msra.mxu0 %v309
        %1554 = vmatmul.f32.gmra.mxu0 %v888
        %v1555 = vpop.f32.mrf.mxu0
        %v1556 = vadd.f32 %v1536, %v1555
        %1557 = vdwg.mxu0
        %1558 = vmatpush.xpose.msra.mxu0 0.0
        %1559 = vmatpush.xpose.msra.mxu0 0.0
        %1560 = vmatpush.xpose.msra.mxu0 0.0
        %1561 = vmatpush.xpose.msra.mxu0 0.0
        %1562 = vmatpush.xpose.msra.mxu0 0.0
        %1563 = vmatpush.xpose.msra.mxu0 0.0
        %1564 = vmatpush.xpose.msra.mxu0 0.0
        %1565 = vmatpush.xpose.msra.mxu0 0.0
        %1566 = vmatpush.xpose.msra.mxu0 0.0
        %1567 = vmatpush.xpose.msra.mxu0 0.0
        %1568 = vmatpush.xpose.msra.mxu0 0.0
        %1569 = vmatpush.xpose.msra.mxu0 0.0
        %1570 = vmatpush.xpose.msra.mxu0 0.0
        %1571 = vmatpush.xpose.msra.mxu0 0.0
        %1572 = vmatpush.xpose.msra.mxu0 %v566
        %1573 = vmatpush.xpose.msra.mxu0 %v310
        %1574 = vmatmul.f32.gmra.mxu0 %v889
        %v1575 = vpop.f32.mrf.mxu0
        %v1576 = vadd.f32 %v1556, %v1575
        %1577 = vdwg.mxu0
        %1578 = vmatpush.xpose.msra.mxu0 0.0
        %1579 = vmatpush.xpose.msra.mxu0 0.0
        %1580 = vmatpush.xpose.msra.mxu0 0.0
        %1581 = vmatpush.xpose.msra.mxu0 0.0
        %1582 = vmatpush.xpose.msra.mxu0 0.0
        %1583 = vmatpush.xpose.msra.mxu0 0.0
        %1584 = vmatpush.xpose.msra.mxu0 0.0
        %1585 = vmatpush.xpose.msra.mxu0 0.0
        %1586 = vmatpush.xpose.msra.mxu0 0.0
        %1587 = vmatpush.xpose.msra.mxu0 0.0
        %1588 = vmatpush.xpose.msra.mxu0 0.0
        %1589 = vmatpush.xpose.msra.mxu0 0.0
        %1590 = vmatpush.xpose.msra.mxu0 0.0
        %1591 = vmatpush.xpose.msra.mxu0 0.0
        %1592 = vmatpush.xpose.msra.mxu0 %v567
        %1593 = vmatpush.xpose.msra.mxu0 %v311
        %1594 = vmatmul.f32.gmra.mxu0 %v890
        %v1595 = vpop.f32.mrf.mxu0
        %v1596 = vadd.f32 %v1576, %v1595
        %1597 = vdwg.mxu0
        %1598 = vmatpush.xpose.msra.mxu0 0.0
        %1599 = vmatpush.xpose.msra.mxu0 0.0
        %1600 = vmatpush.xpose.msra.mxu0 0.0
        %1601 = vmatpush.xpose.msra.mxu0 0.0
        %1602 = vmatpush.xpose.msra.mxu0 0.0
        %1603 = vmatpush.xpose.msra.mxu0 0.0
        %1604 = vmatpush.xpose.msra.mxu0 0.0
        %1605 = vmatpush.xpose.msra.mxu0 0.0
        %1606 = vmatpush.xpose.msra.mxu0 0.0
        %1607 = vmatpush.xpose.msra.mxu0 0.0
        %1608 = vmatpush.xpose.msra.mxu0 0.0
        %1609 = vmatpush.xpose.msra.mxu0 0.0
        %1610 = vmatpush.xpose.msra.mxu0 0.0
        %1611 = vmatpush.xpose.msra.mxu0 0.0
        %1612 = vmatpush.xpose.msra.mxu0 %v568
        %1613 = vmatpush.xpose.msra.mxu0 %v312
        %1614 = vmatmul.f32.gmra.mxu0 %v891
        %v1615 = vpop.f32.mrf.mxu0
        %v1616 = vadd.f32 %v1596, %v1615
        %1617 = vdwg.mxu0
        %1618 = vmatpush.xpose.msra.mxu0 0.0
        %1619 = vmatpush.xpose.msra.mxu0 0.0
        %1620 = vmatpush.xpose.msra.mxu0 0.0
        %1621 = vmatpush.xpose.msra.mxu0 0.0
        %1622 = vmatpush.xpose.msra.mxu0 0.0
        %1623 = vmatpush.xpose.msra.mxu0 0.0
        %1624 = vmatpush.xpose.msra.mxu0 0.0
        %1625 = vmatpush.xpose.msra.mxu0 0.0
        %1626 = vmatpush.xpose.msra.mxu0 0.0
        %1627 = vmatpush.xpose.msra.mxu0 0.0
        %1628 = vmatpush.xpose.msra.mxu0 0.0
        %1629 = vmatpush.xpose.msra.mxu0 0.0
        %1630 = vmatpush.xpose.msra.mxu0 0.0
        %1631 = vmatpush.xpose.msra.mxu0 0.0
        %1632 = vmatpush.xpose.msra.mxu0 %v569
        %1633 = vmatpush.xpose.msra.mxu0 %v313
        %1634 = vmatmul.f32.gmra.mxu0 %v894
        %v1635 = vpop.f32.mrf.mxu0
        %v1636 = vadd.f32 %v1616, %v1635
        %1637 = vdwg.mxu0
        %1638 = vmatpush.xpose.msra.mxu0 0.0
        %1639 = vmatpush.xpose.msra.mxu0 0.0
        %1640 = vmatpush.xpose.msra.mxu0 0.0
        %1641 = vmatpush.xpose.msra.mxu0 0.0
        %1642 = vmatpush.xpose.msra.mxu0 0.0
        %1643 = vmatpush.xpose.msra.mxu0 0.0
        %1644 = vmatpush.xpose.msra.mxu0 0.0
        %1645 = vmatpush.xpose.msra.mxu0 0.0
        %1646 = vmatpush.xpose.msra.mxu0 0.0
        %1647 = vmatpush.xpose.msra.mxu0 0.0
        %1648 = vmatpush.xpose.msra.mxu0 0.0
        %1649 = vmatpush.xpose.msra.mxu0 0.0
        %1650 = vmatpush.xpose.msra.mxu0 0.0
        %1651 = vmatpush.xpose.msra.mxu0 0.0
        %1652 = vmatpush.xpose.msra.mxu0 %v570
        %1653 = vmatpush.xpose.msra.mxu0 %v314
        %1654 = vmatmul.f32.gmra.mxu0 %v895
        %v1655 = vpop.f32.mrf.mxu0
        %v1656 = vadd.f32 %v1636, %v1655
        %1657 = vdwg.mxu0
        %1658 = vmatpush.xpose.msra.mxu0 0.0
        %1659 = vmatpush.xpose.msra.mxu0 0.0
        %1660 = vmatpush.xpose.msra.mxu0 0.0
        %1661 = vmatpush.xpose.msra.mxu0 0.0
        %1662 = vmatpush.xpose.msra.mxu0 0.0
        %1663 = vmatpush.xpose.msra.mxu0 0.0
        %1664 = vmatpush.xpose.msra.mxu0 0.0
        %1665 = vmatpush.xpose.msra.mxu0 0.0
        %1666 = vmatpush.xpose.msra.mxu0 0.0
        %1667 = vmatpush.xpose.msra.mxu0 0.0
        %1668 = vmatpush.xpose.msra.mxu0 0.0
        %1669 = vmatpush.xpose.msra.mxu0 0.0
        %1670 = vmatpush.xpose.msra.mxu0 0.0
        %1671 = vmatpush.xpose.msra.mxu0 0.0
        %1672 = vmatpush.xpose.msra.mxu0 %v571
        %1673 = vmatpush.xpose.msra.mxu0 %v315
        %1674 = vmatmul.f32.gmra.mxu0 %v896
        %v1675 = vpop.f32.mrf.mxu0
        %v1676 = vadd.f32 %v1656, %v1675
        %1677 = vdwg.mxu0
        %1678 = vmatpush.xpose.msra.mxu0 0.0
        %1679 = vmatpush.xpose.msra.mxu0 0.0
        %1680 = vmatpush.xpose.msra.mxu0 0.0
        %1681 = vmatpush.xpose.msra.mxu0 0.0
        %1682 = vmatpush.xpose.msra.mxu0 0.0
        %1683 = vmatpush.xpose.msra.mxu0 0.0
        %1684 = vmatpush.xpose.msra.mxu0 0.0
        %1685 = vmatpush.xpose.msra.mxu0 0.0
        %1686 = vmatpush.xpose.msra.mxu0 0.0
        %1687 = vmatpush.xpose.msra.mxu0 0.0
        %1688 = vmatpush.xpose.msra.mxu0 0.0
        %1689 = vmatpush.xpose.msra.mxu0 0.0
        %1690 = vmatpush.xpose.msra.mxu0 0.0
        %1691 = vmatpush.xpose.msra.mxu0 0.0
        %1692 = vmatpush.xpose.msra.mxu0 %v572
        %1693 = vmatpush.xpose.msra.mxu0 %v316
        %1694 = vmatmul.f32.gmra.mxu0 %v897
        %v1695 = vpop.f32.mrf.mxu0
        %v1696 = vadd.f32 %v1676, %v1695
        %1697 = vdwg.mxu0
        %1698 = vmatpush.xpose.msra.mxu0 0.0
        %1699 = vmatpush.xpose.msra.mxu0 0.0
        %1700 = vmatpush.xpose.msra.mxu0 0.0
        %1701 = vmatpush.xpose.msra.mxu0 0.0
        %1702 = vmatpush.xpose.msra.mxu0 0.0
        %1703 = vmatpush.xpose.msra.mxu0 0.0
        %1704 = vmatpush.xpose.msra.mxu0 0.0
        %1705 = vmatpush.xpose.msra.mxu0 0.0
        %1706 = vmatpush.xpose.msra.mxu0 0.0
        %1707 = vmatpush.xpose.msra.mxu0 0.0
        %1708 = vmatpush.xpose.msra.mxu0 0.0
        %1709 = vmatpush.xpose.msra.mxu0 0.0
        %1710 = vmatpush.xpose.msra.mxu0 0.0
        %1711 = vmatpush.xpose.msra.mxu0 0.0
        %1712 = vmatpush.xpose.msra.mxu0 %v573
        %1713 = vmatpush.xpose.msra.mxu0 %v317
        %1714 = vmatmul.f32.gmra.mxu0 %v898
        %v1715 = vpop.f32.mrf.mxu0
        %v1716 = vadd.f32 %v1696, %v1715
        %1717 = vdwg.mxu0
        %1718 = vmatpush.xpose.msra.mxu0 0.0
        %1719 = vmatpush.xpose.msra.mxu0 0.0
        %1720 = vmatpush.xpose.msra.mxu0 0.0
        %1721 = vmatpush.xpose.msra.mxu0 0.0
        %1722 = vmatpush.xpose.msra.mxu0 0.0
        %1723 = vmatpush.xpose.msra.mxu0 0.0
        %1724 = vmatpush.xpose.msra.mxu0 0.0
        %1725 = vmatpush.xpose.msra.mxu0 0.0
        %1726 = vmatpush.xpose.msra.mxu0 0.0
        %1727 = vmatpush.xpose.msra.mxu0 0.0
        %1728 = vmatpush.xpose.msra.mxu0 0.0
        %1729 = vmatpush.xpose.msra.mxu0 0.0
        %1730 = vmatpush.xpose.msra.mxu0 0.0
        %1731 = vmatpush.xpose.msra.mxu0 0.0
        %1732 = vmatpush.xpose.msra.mxu0 %v574
        %1733 = vmatpush.xpose.msra.mxu0 %v318
        %1734 = vmatmul.f32.gmra.mxu0 %v899
        %v1735 = vpop.f32.mrf.mxu0
        %v1736 = vadd.f32 %v1716, %v1735
        %1737 = vdwg.mxu0
        %1738 = vmatpush.xpose.msra.mxu0 0.0
        %1739 = vmatpush.xpose.msra.mxu0 0.0
        %1740 = vmatpush.xpose.msra.mxu0 0.0
        %1741 = vmatpush.xpose.msra.mxu0 0.0
        %1742 = vmatpush.xpose.msra.mxu0 0.0
        %1743 = vmatpush.xpose.msra.mxu0 0.0
        %1744 = vmatpush.xpose.msra.mxu0 0.0
        %1745 = vmatpush.xpose.msra.mxu0 0.0
        %1746 = vmatpush.xpose.msra.mxu0 0.0
        %1747 = vmatpush.xpose.msra.mxu0 0.0
        %1748 = vmatpush.xpose.msra.mxu0 0.0
        %1749 = vmatpush.xpose.msra.mxu0 0.0
        %1750 = vmatpush.xpose.msra.mxu0 0.0
        %1751 = vmatpush.xpose.msra.mxu0 0.0
        %1752 = vmatpush.xpose.msra.mxu0 %v575
        %1753 = vmatpush.xpose.msra.mxu0 %v319
        %1754 = vmatmul.f32.gmra.mxu0 %v900
        %v1755 = vpop.f32.mrf.mxu0
        %v1756 = vadd.f32 %v1736, %v1755
        %1757 = vdwg.mxu0
        %1758 = vmatpush.xpose.msra.mxu0 0.0
        %1759 = vmatpush.xpose.msra.mxu0 0.0
        %1760 = vmatpush.xpose.msra.mxu0 0.0
        %1761 = vmatpush.xpose.msra.mxu0 0.0
        %1762 = vmatpush.xpose.msra.mxu0 0.0
        %1763 = vmatpush.xpose.msra.mxu0 0.0
        %1764 = vmatpush.xpose.msra.mxu0 0.0
        %1765 = vmatpush.xpose.msra.mxu0 0.0
        %1766 = vmatpush.xpose.msra.mxu0 0.0
        %1767 = vmatpush.xpose.msra.mxu0 0.0
        %1768 = vmatpush.xpose.msra.mxu0 0.0
        %1769 = vmatpush.xpose.msra.mxu0 0.0
        %1770 = vmatpush.xpose.msra.mxu0 0.0
        %1771 = vmatpush.xpose.msra.mxu0 0.0
        %1772 = vmatpush.xpose.msra.mxu0 %v576
        %1773 = vmatpush.xpose.msra.mxu0 %v320
        %1774 = vmatmul.f32.gmra.mxu0 %v901
        %v1775 = vpop.f32.mrf.mxu0
        %v1776 = vadd.f32 %v1756, %v1775
        %1777 = vdwg.mxu0
        %1778 = vmatpush.xpose.msra.mxu0 0.0
        %1779 = vmatpush.xpose.msra.mxu0 0.0
        %1780 = vmatpush.xpose.msra.mxu0 0.0
        %1781 = vmatpush.xpose.msra.mxu0 0.0
        %1782 = vmatpush.xpose.msra.mxu0 0.0
        %1783 = vmatpush.xpose.msra.mxu0 0.0
        %1784 = vmatpush.xpose.msra.mxu0 0.0
        %1785 = vmatpush.xpose.msra.mxu0 0.0
        %1786 = vmatpush.xpose.msra.mxu0 0.0
        %1787 = vmatpush.xpose.msra.mxu0 0.0
        %1788 = vmatpush.xpose.msra.mxu0 0.0
        %1789 = vmatpush.xpose.msra.mxu0 0.0
        %1790 = vmatpush.xpose.msra.mxu0 0.0
        %1791 = vmatpush.xpose.msra.mxu0 0.0
        %1792 = vmatpush.xpose.msra.mxu0 %v577
        %1793 = vmatpush.xpose.msra.mxu0 %v321
        %1794 = vmatmul.f32.gmra.mxu0 %v904
        %v1795 = vpop.f32.mrf.mxu0
        %v1796 = vadd.f32 %v1776, %v1795
        %1797 = vdwg.mxu0
        %1798 = vmatpush.xpose.msra.mxu0 0.0
        %1799 = vmatpush.xpose.msra.mxu0 0.0
        %1800 = vmatpush.xpose.msra.mxu0 0.0
        %1801 = vmatpush.xpose.msra.mxu0 0.0
        %1802 = vmatpush.xpose.msra.mxu0 0.0
        %1803 = vmatpush.xpose.msra.mxu0 0.0
        %1804 = vmatpush.xpose.msra.mxu0 0.0
        %1805 = vmatpush.xpose.msra.mxu0 0.0
        %1806 = vmatpush.xpose.msra.mxu0 0.0
        %1807 = vmatpush.xpose.msra.mxu0 0.0
        %1808 = vmatpush.xpose.msra.mxu0 0.0
        %1809 = vmatpush.xpose.msra.mxu0 0.0
        %1810 = vmatpush.xpose.msra.mxu0 0.0
        %1811 = vmatpush.xpose.msra.mxu0 0.0
        %1812 = vmatpush.xpose.msra.mxu0 %v578
        %1813 = vmatpush.xpose.msra.mxu0 %v322
        %1814 = vmatmul.f32.gmra.mxu0 %v905
        %v1815 = vpop.f32.mrf.mxu0
        %v1816 = vadd.f32 %v1796, %v1815
        %1817 = vdwg.mxu0
        %1818 = vmatpush.xpose.msra.mxu0 0.0
        %1819 = vmatpush.xpose.msra.mxu0 0.0
        %1820 = vmatpush.xpose.msra.mxu0 0.0
        %1821 = vmatpush.xpose.msra.mxu0 0.0
        %1822 = vmatpush.xpose.msra.mxu0 0.0
        %1823 = vmatpush.xpose.msra.mxu0 0.0
        %1824 = vmatpush.xpose.msra.mxu0 0.0
        %1825 = vmatpush.xpose.msra.mxu0 0.0
        %1826 = vmatpush.xpose.msra.mxu0 0.0
        %1827 = vmatpush.xpose.msra.mxu0 0.0
        %1828 = vmatpush.xpose.msra.mxu0 0.0
        %1829 = vmatpush.xpose.msra.mxu0 0.0
        %1830 = vmatpush.xpose.msra.mxu0 0.0
        %1831 = vmatpush.xpose.msra.mxu0 0.0
        %1832 = vmatpush.xpose.msra.mxu0 %v579
        %1833 = vmatpush.xpose.msra.mxu0 %v323
        %1834 = vmatmul.f32.gmra.mxu0 %v906
        %v1835 = vpop.f32.mrf.mxu0
        %v1836 = vadd.f32 %v1816, %v1835
        %1837 = vdwg.mxu0
        %1838 = vmatpush.xpose.msra.mxu0 0.0
        %1839 = vmatpush.xpose.msra.mxu0 0.0
        %1840 = vmatpush.xpose.msra.mxu0 0.0
        %1841 = vmatpush.xpose.msra.mxu0 0.0
        %1842 = vmatpush.xpose.msra.mxu0 0.0
        %1843 = vmatpush.xpose.msra.mxu0 0.0
        %1844 = vmatpush.xpose.msra.mxu0 0.0
        %1845 = vmatpush.xpose.msra.mxu0 0.0
        %1846 = vmatpush.xpose.msra.mxu0 0.0
        %1847 = vmatpush.xpose.msra.mxu0 0.0
        %1848 = vmatpush.xpose.msra.mxu0 0.0
        %1849 = vmatpush.xpose.msra.mxu0 0.0
        %1850 = vmatpush.xpose.msra.mxu0 0.0
        %1851 = vmatpush.xpose.msra.mxu0 0.0
        %1852 = vmatpush.xpose.msra.mxu0 %v580
        %1853 = vmatpush.xpose.msra.mxu0 %v324
        %1854 = vmatmul.f32.gmra.mxu0 %v907
        %v1855 = vpop.f32.mrf.mxu0
        %v1856 = vadd.f32 %v1836, %v1855
        %1857 = vdwg.mxu0
        %1858 = vmatpush.xpose.msra.mxu0 0.0
        %1859 = vmatpush.xpose.msra.mxu0 0.0
        %1860 = vmatpush.xpose.msra.mxu0 0.0
        %1861 = vmatpush.xpose.msra.mxu0 0.0
        %1862 = vmatpush.xpose.msra.mxu0 0.0
        %1863 = vmatpush.xpose.msra.mxu0 0.0
        %1864 = vmatpush.xpose.msra.mxu0 0.0
        %1865 = vmatpush.xpose.msra.mxu0 0.0
        %1866 = vmatpush.xpose.msra.mxu0 0.0
        %1867 = vmatpush.xpose.msra.mxu0 0.0
        %1868 = vmatpush.xpose.msra.mxu0 0.0
        %1869 = vmatpush.xpose.msra.mxu0 0.0
        %1870 = vmatpush.xpose.msra.mxu0 0.0
        %1871 = vmatpush.xpose.msra.mxu0 0.0
        %1872 = vmatpush.xpose.msra.mxu0 %v581
        %1873 = vmatpush.xpose.msra.mxu0 %v325
        %1874 = vmatmul.f32.gmra.mxu0 %v908
        %v1875 = vpop.f32.mrf.mxu0
        %v1876 = vadd.f32 %v1856, %v1875
        %1877 = vdwg.mxu0
        %1878 = vmatpush.xpose.msra.mxu0 0.0
        %1879 = vmatpush.xpose.msra.mxu0 0.0
        %1880 = vmatpush.xpose.msra.mxu0 0.0
        %1881 = vmatpush.xpose.msra.mxu0 0.0
        %1882 = vmatpush.xpose.msra.mxu0 0.0
        %1883 = vmatpush.xpose.msra.mxu0 0.0
        %1884 = vmatpush.xpose.msra.mxu0 0.0
        %1885 = vmatpush.xpose.msra.mxu0 0.0
        %1886 = vmatpush.xpose.msra.mxu0 0.0
        %1887 = vmatpush.xpose.msra.mxu0 0.0
        %1888 = vmatpush.xpose.msra.mxu0 0.0
        %1889 = vmatpush.xpose.msra.mxu0 0.0
        %1890 = vmatpush.xpose.msra.mxu0 0.0
        %1891 = vmatpush.xpose.msra.mxu0 0.0
        %1892 = vmatpush.xpose.msra.mxu0 %v582
        %1893 = vmatpush.xpose.msra.mxu0 %v326
        %1894 = vmatmul.f32.gmra.mxu0 %v909
        %v1895 = vpop.f32.mrf.mxu0
        %v1896 = vadd.f32 %v1876, %v1895
        %1897 = vdwg.mxu0
        %1898 = vmatpush.xpose.msra.mxu0 0.0
        %1899 = vmatpush.xpose.msra.mxu0 0.0
        %1900 = vmatpush.xpose.msra.mxu0 0.0
        %1901 = vmatpush.xpose.msra.mxu0 0.0
        %1902 = vmatpush.xpose.msra.mxu0 0.0
        %1903 = vmatpush.xpose.msra.mxu0 0.0
        %1904 = vmatpush.xpose.msra.mxu0 0.0
        %1905 = vmatpush.xpose.msra.mxu0 0.0
        %1906 = vmatpush.xpose.msra.mxu0 0.0
        %1907 = vmatpush.xpose.msra.mxu0 0.0
        %1908 = vmatpush.xpose.msra.mxu0 0.0
        %1909 = vmatpush.xpose.msra.mxu0 0.0
        %1910 = vmatpush.xpose.msra.mxu0 0.0
        %1911 = vmatpush.xpose.msra.mxu0 0.0
        %1912 = vmatpush.xpose.msra.mxu0 %v583
        %1913 = vmatpush.xpose.msra.mxu0 %v327
        %1914 = vmatmul.f32.gmra.mxu0 %v910
        %v1915 = vpop.f32.mrf.mxu0
        %v1916 = vadd.f32 %v1896, %v1915
        %1917 = vdwg.mxu0
        %1918 = vmatpush.xpose.msra.mxu0 0.0
        %1919 = vmatpush.xpose.msra.mxu0 0.0
        %1920 = vmatpush.xpose.msra.mxu0 0.0
        %1921 = vmatpush.xpose.msra.mxu0 0.0
        %1922 = vmatpush.xpose.msra.mxu0 0.0
        %1923 = vmatpush.xpose.msra.mxu0 0.0
        %1924 = vmatpush.xpose.msra.mxu0 0.0
        %1925 = vmatpush.xpose.msra.mxu0 0.0
        %1926 = vmatpush.xpose.msra.mxu0 0.0
        %1927 = vmatpush.xpose.msra.mxu0 0.0
        %1928 = vmatpush.xpose.msra.mxu0 0.0
        %1929 = vmatpush.xpose.msra.mxu0 0.0
        %1930 = vmatpush.xpose.msra.mxu0 0.0
        %1931 = vmatpush.xpose.msra.mxu0 0.0
        %1932 = vmatpush.xpose.msra.mxu0 %v584
        %1933 = vmatpush.xpose.msra.mxu0 %v328
        %1934 = vmatmul.f32.gmra.mxu0 %v911
        %v1935 = vpop.f32.mrf.mxu0
        %v1936 = vadd.f32 %v1916, %v1935
        %1937 = vdwg.mxu0
        %1938 = vmatpush.xpose.msra.mxu0 0.0
        %1939 = vmatpush.xpose.msra.mxu0 0.0
        %1940 = vmatpush.xpose.msra.mxu0 0.0
        %1941 = vmatpush.xpose.msra.mxu0 0.0
        %1942 = vmatpush.xpose.msra.mxu0 0.0
        %1943 = vmatpush.xpose.msra.mxu0 0.0
        %1944 = vmatpush.xpose.msra.mxu0 0.0
        %1945 = vmatpush.xpose.msra.mxu0 0.0
        %1946 = vmatpush.xpose.msra.mxu0 0.0
        %1947 = vmatpush.xpose.msra.mxu0 0.0
        %1948 = vmatpush.xpose.msra.mxu0 0.0
        %1949 = vmatpush.xpose.msra.mxu0 0.0
        %1950 = vmatpush.xpose.msra.mxu0 0.0
        %1951 = vmatpush.xpose.msra.mxu0 0.0
        %1952 = vmatpush.xpose.msra.mxu0 %v585
        %1953 = vmatpush.xpose.msra.mxu0 %v329
        %1954 = vmatmul.f32.gmra.mxu0 %v914
        %v1955 = vpop.f32.mrf.mxu0
        %v1956 = vadd.f32 %v1936, %v1955
        %1957 = vdwg.mxu0
        %1958 = vmatpush.xpose.msra.mxu0 0.0
        %1959 = vmatpush.xpose.msra.mxu0 0.0
        %1960 = vmatpush.xpose.msra.mxu0 0.0
        %1961 = vmatpush.xpose.msra.mxu0 0.0
        %1962 = vmatpush.xpose.msra.mxu0 0.0
        %1963 = vmatpush.xpose.msra.mxu0 0.0
        %1964 = vmatpush.xpose.msra.mxu0 0.0
        %1965 = vmatpush.xpose.msra.mxu0 0.0
        %1966 = vmatpush.xpose.msra.mxu0 0.0
        %1967 = vmatpush.xpose.msra.mxu0 0.0
        %1968 = vmatpush.xpose.msra.mxu0 0.0
        %1969 = vmatpush.xpose.msra.mxu0 0.0
        %1970 = vmatpush.xpose.msra.mxu0 0.0
        %1971 = vmatpush.xpose.msra.mxu0 0.0
        %1972 = vmatpush.xpose.msra.mxu0 %v586
        %1973 = vmatpush.xpose.msra.mxu0 %v330
        %1974 = vmatmul.f32.gmra.mxu0 %v915
        %v1975 = vpop.f32.mrf.mxu0
        %v1976 = vadd.f32 %v1956, %v1975
        %1977 = vdwg.mxu0
        %1978 = vmatpush.xpose.msra.mxu0 0.0
        %1979 = vmatpush.xpose.msra.mxu0 0.0
        %1980 = vmatpush.xpose.msra.mxu0 0.0
        %1981 = vmatpush.xpose.msra.mxu0 0.0
        %1982 = vmatpush.xpose.msra.mxu0 0.0
        %1983 = vmatpush.xpose.msra.mxu0 0.0
        %1984 = vmatpush.xpose.msra.mxu0 0.0
        %1985 = vmatpush.xpose.msra.mxu0 0.0
        %1986 = vmatpush.xpose.msra.mxu0 0.0
        %1987 = vmatpush.xpose.msra.mxu0 0.0
        %1988 = vmatpush.xpose.msra.mxu0 0.0
        %1989 = vmatpush.xpose.msra.mxu0 0.0
        %1990 = vmatpush.xpose.msra.mxu0 0.0
        %1991 = vmatpush.xpose.msra.mxu0 0.0
        %1992 = vmatpush.xpose.msra.mxu0 %v587
        %1993 = vmatpush.xpose.msra.mxu0 %v331
        %1994 = vmatmul.f32.gmra.mxu0 %v916
        %v1995 = vpop.f32.mrf.mxu0
        %v1996 = vadd.f32 %v1976, %v1995
        %1997 = vdwg.mxu0
        %1998 = vmatpush.xpose.msra.mxu0 0.0
        %1999 = vmatpush.xpose.msra.mxu0 0.0
        %2000 = vmatpush.xpose.msra.mxu0 0.0
        %2001 = vmatpush.xpose.msra.mxu0 0.0
        %2002 = vmatpush.xpose.msra.mxu0 0.0
        %2003 = vmatpush.xpose.msra.mxu0 0.0
        %2004 = vmatpush.xpose.msra.mxu0 0.0
        %2005 = vmatpush.xpose.msra.mxu0 0.0
        %2006 = vmatpush.xpose.msra.mxu0 0.0
        %2007 = vmatpush.xpose.msra.mxu0 0.0
        %2008 = vmatpush.xpose.msra.mxu0 0.0
        %2009 = vmatpush.xpose.msra.mxu0 0.0
        %2010 = vmatpush.xpose.msra.mxu0 0.0
        %2011 = vmatpush.xpose.msra.mxu0 0.0
        %2012 = vmatpush.xpose.msra.mxu0 %v588
        %2013 = vmatpush.xpose.msra.mxu0 %v332
        %2014 = vmatmul.f32.gmra.mxu0 %v917
        %v2015 = vpop.f32.mrf.mxu0
        %v2016 = vadd.f32 %v1996, %v2015
        %2017 = vdwg.mxu0
        %2018 = vmatpush.xpose.msra.mxu0 0.0
        %2019 = vmatpush.xpose.msra.mxu0 0.0
        %2020 = vmatpush.xpose.msra.mxu0 0.0
        %2021 = vmatpush.xpose.msra.mxu0 0.0
        %2022 = vmatpush.xpose.msra.mxu0 0.0
        %2023 = vmatpush.xpose.msra.mxu0 0.0
        %2024 = vmatpush.xpose.msra.mxu0 0.0
        %2025 = vmatpush.xpose.msra.mxu0 0.0
        %2026 = vmatpush.xpose.msra.mxu0 0.0
        %2027 = vmatpush.xpose.msra.mxu0 0.0
        %2028 = vmatpush.xpose.msra.mxu0 0.0
        %2029 = vmatpush.xpose.msra.mxu0 0.0
        %2030 = vmatpush.xpose.msra.mxu0 0.0
        %2031 = vmatpush.xpose.msra.mxu0 0.0
        %2032 = vmatpush.xpose.msra.mxu0 %v589
        %2033 = vmatpush.xpose.msra.mxu0 %v333
        %2034 = vmatmul.f32.gmra.mxu0 %v918
        %v2035 = vpop.f32.mrf.mxu0
        %v2036 = vadd.f32 %v2016, %v2035
        %2037 = vdwg.mxu0
        %2038 = vmatpush.xpose.msra.mxu0 0.0
        %2039 = vmatpush.xpose.msra.mxu0 0.0
        %2040 = vmatpush.xpose.msra.mxu0 0.0
        %2041 = vmatpush.xpose.msra.mxu0 0.0
        %2042 = vmatpush.xpose.msra.mxu0 0.0
        %2043 = vmatpush.xpose.msra.mxu0 0.0
        %2044 = vmatpush.xpose.msra.mxu0 0.0
        %2045 = vmatpush.xpose.msra.mxu0 0.0
        %2046 = vmatpush.xpose.msra.mxu0 0.0
        %2047 = vmatpush.xpose.msra.mxu0 0.0
        %2048 = vmatpush.xpose.msra.mxu0 0.0
        %2049 = vmatpush.xpose.msra.mxu0 0.0
        %2050 = vmatpush.xpose.msra.mxu0 0.0
        %2051 = vmatpush.xpose.msra.mxu0 0.0
        %2052 = vmatpush.xpose.msra.mxu0 %v590
        %2053 = vmatpush.xpose.msra.mxu0 %v334
        %2054 = vmatmul.f32.gmra.mxu0 %v919
        %v2055 = vpop.f32.mrf.mxu0
        %v2056 = vadd.f32 %v2036, %v2055
        %2057 = vdwg.mxu0
        %2058 = vmatpush.xpose.msra.mxu0 0.0
        %2059 = vmatpush.xpose.msra.mxu0 0.0
        %2060 = vmatpush.xpose.msra.mxu0 0.0
        %2061 = vmatpush.xpose.msra.mxu0 0.0
        %2062 = vmatpush.xpose.msra.mxu0 0.0
        %2063 = vmatpush.xpose.msra.mxu0 0.0
        %2064 = vmatpush.xpose.msra.mxu0 0.0
        %2065 = vmatpush.xpose.msra.mxu0 0.0
        %2066 = vmatpush.xpose.msra.mxu0 0.0
        %2067 = vmatpush.xpose.msra.mxu0 0.0
        %2068 = vmatpush.xpose.msra.mxu0 0.0
        %2069 = vmatpush.xpose.msra.mxu0 0.0
        %2070 = vmatpush.xpose.msra.mxu0 0.0
        %2071 = vmatpush.xpose.msra.mxu0 0.0
        %2072 = vmatpush.xpose.msra.mxu0 %v591
        %2073 = vmatpush.xpose.msra.mxu0 %v335
        %2074 = vmatmul.f32.gmra.mxu0 %v920
        %v2075 = vpop.f32.mrf.mxu0
        %v2076 = vadd.f32 %v2056, %v2075
        %2077 = vdwg.mxu0
        %2078 = vmatpush.xpose.msra.mxu0 0.0
        %2079 = vmatpush.xpose.msra.mxu0 0.0
        %2080 = vmatpush.xpose.msra.mxu0 0.0
        %2081 = vmatpush.xpose.msra.mxu0 0.0
        %2082 = vmatpush.xpose.msra.mxu0 0.0
        %2083 = vmatpush.xpose.msra.mxu0 0.0
        %2084 = vmatpush.xpose.msra.mxu0 0.0
        %2085 = vmatpush.xpose.msra.mxu0 0.0
        %2086 = vmatpush.xpose.msra.mxu0 0.0
        %2087 = vmatpush.xpose.msra.mxu0 0.0
        %2088 = vmatpush.xpose.msra.mxu0 0.0
        %2089 = vmatpush.xpose.msra.mxu0 0.0
        %2090 = vmatpush.xpose.msra.mxu0 0.0
        %2091 = vmatpush.xpose.msra.mxu0 0.0
        %2092 = vmatpush.xpose.msra.mxu0 %v592
        %2093 = vmatpush.xpose.msra.mxu0 %v336
        %2094 = vmatmul.f32.gmra.mxu0 %v921
        %v2095 = vpop.f32.mrf.mxu0
        %v2096 = vadd.f32 %v2076, %v2095
        %2097 = vdwg.mxu0
        %2098 = vmatpush.xpose.msra.mxu0 0.0
        %2099 = vmatpush.xpose.msra.mxu0 0.0
        %2100 = vmatpush.xpose.msra.mxu0 0.0
        %2101 = vmatpush.xpose.msra.mxu0 0.0
        %2102 = vmatpush.xpose.msra.mxu0 0.0
        %2103 = vmatpush.xpose.msra.mxu0 0.0
        %2104 = vmatpush.xpose.msra.mxu0 0.0
        %2105 = vmatpush.xpose.msra.mxu0 0.0
        %2106 = vmatpush.xpose.msra.mxu0 0.0
        %2107 = vmatpush.xpose.msra.mxu0 0.0
        %2108 = vmatpush.xpose.msra.mxu0 0.0
        %2109 = vmatpush.xpose.msra.mxu0 0.0
        %2110 = vmatpush.xpose.msra.mxu0 0.0
        %2111 = vmatpush.xpose.msra.mxu0 0.0
        %2112 = vmatpush.xpose.msra.mxu0 %v593
        %2113 = vmatpush.xpose.msra.mxu0 %v337
        %2114 = vmatmul.f32.gmra.mxu0 %v924
        %v2115 = vpop.f32.mrf.mxu0
        %v2116 = vadd.f32 %v2096, %v2115
        %2117 = vdwg.mxu0
        %2118 = vmatpush.xpose.msra.mxu0 0.0
        %2119 = vmatpush.xpose.msra.mxu0 0.0
        %2120 = vmatpush.xpose.msra.mxu0 0.0
        %2121 = vmatpush.xpose.msra.mxu0 0.0
        %2122 = vmatpush.xpose.msra.mxu0 0.0
        %2123 = vmatpush.xpose.msra.mxu0 0.0
        %2124 = vmatpush.xpose.msra.mxu0 0.0
        %2125 = vmatpush.xpose.msra.mxu0 0.0
        %2126 = vmatpush.xpose.msra.mxu0 0.0
        %2127 = vmatpush.xpose.msra.mxu0 0.0
        %2128 = vmatpush.xpose.msra.mxu0 0.0
        %2129 = vmatpush.xpose.msra.mxu0 0.0
        %2130 = vmatpush.xpose.msra.mxu0 0.0
        %2131 = vmatpush.xpose.msra.mxu0 0.0
        %2132 = vmatpush.xpose.msra.mxu0 %v594
        %2133 = vmatpush.xpose.msra.mxu0 %v338
        %2134 = vmatmul.f32.gmra.mxu0 %v925
        %v2135 = vpop.f32.mrf.mxu0
        %v2136 = vadd.f32 %v2116, %v2135
        %2137 = vdwg.mxu0
        %2138 = vmatpush.xpose.msra.mxu0 0.0
        %2139 = vmatpush.xpose.msra.mxu0 0.0
        %2140 = vmatpush.xpose.msra.mxu0 0.0
        %2141 = vmatpush.xpose.msra.mxu0 0.0
        %2142 = vmatpush.xpose.msra.mxu0 0.0
        %2143 = vmatpush.xpose.msra.mxu0 0.0
        %2144 = vmatpush.xpose.msra.mxu0 0.0
        %2145 = vmatpush.xpose.msra.mxu0 0.0
        %2146 = vmatpush.xpose.msra.mxu0 0.0
        %2147 = vmatpush.xpose.msra.mxu0 0.0
        %2148 = vmatpush.xpose.msra.mxu0 0.0
        %2149 = vmatpush.xpose.msra.mxu0 0.0
        %2150 = vmatpush.xpose.msra.mxu0 0.0
        %2151 = vmatpush.xpose.msra.mxu0 0.0
        %2152 = vmatpush.xpose.msra.mxu0 %v595
        %2153 = vmatpush.xpose.msra.mxu0 %v339
        %2154 = vmatmul.f32.gmra.mxu0 %v926
        %v2155 = vpop.f32.mrf.mxu0
        %v2156 = vadd.f32 %v2136, %v2155
        %2157 = vdwg.mxu0
        %2158 = vmatpush.xpose.msra.mxu0 0.0
        %2159 = vmatpush.xpose.msra.mxu0 0.0
        %2160 = vmatpush.xpose.msra.mxu0 0.0
        %2161 = vmatpush.xpose.msra.mxu0 0.0
        %2162 = vmatpush.xpose.msra.mxu0 0.0
        %2163 = vmatpush.xpose.msra.mxu0 0.0
        %2164 = vmatpush.xpose.msra.mxu0 0.0
        %2165 = vmatpush.xpose.msra.mxu0 0.0
        %2166 = vmatpush.xpose.msra.mxu0 0.0
        %2167 = vmatpush.xpose.msra.mxu0 0.0
        %2168 = vmatpush.xpose.msra.mxu0 0.0
        %2169 = vmatpush.xpose.msra.mxu0 0.0
        %2170 = vmatpush.xpose.msra.mxu0 0.0
        %2171 = vmatpush.xpose.msra.mxu0 0.0
        %2172 = vmatpush.xpose.msra.mxu0 %v596
        %2173 = vmatpush.xpose.msra.mxu0 %v340
        %2174 = vmatmul.f32.gmra.mxu0 %v927
        %v2175 = vpop.f32.mrf.mxu0
        %v2176 = vadd.f32 %v2156, %v2175
        %2177 = vdwg.mxu0
        %2178 = vmatpush.xpose.msra.mxu0 0.0
        %2179 = vmatpush.xpose.msra.mxu0 0.0
        %2180 = vmatpush.xpose.msra.mxu0 0.0
        %2181 = vmatpush.xpose.msra.mxu0 0.0
        %2182 = vmatpush.xpose.msra.mxu0 0.0
        %2183 = vmatpush.xpose.msra.mxu0 0.0
        %2184 = vmatpush.xpose.msra.mxu0 0.0
        %2185 = vmatpush.xpose.msra.mxu0 0.0
        %2186 = vmatpush.xpose.msra.mxu0 0.0
        %2187 = vmatpush.xpose.msra.mxu0 0.0
        %2188 = vmatpush.xpose.msra.mxu0 0.0
        %2189 = vmatpush.xpose.msra.mxu0 0.0
        %2190 = vmatpush.xpose.msra.mxu0 0.0
        %2191 = vmatpush.xpose.msra.mxu0 0.0
        %2192 = vmatpush.xpose.msra.mxu0 %v597
        %2193 = vmatpush.xpose.msra.mxu0 %v341
        %2194 = vmatmul.f32.gmra.mxu0 %v928
        %v2195 = vpop.f32.mrf.mxu0
        %v2196 = vadd.f32 %v2176, %v2195
        %2197 = vdwg.mxu0
        %2198 = vmatpush.xpose.msra.mxu0 0.0
        %2199 = vmatpush.xpose.msra.mxu0 0.0
        %2200 = vmatpush.xpose.msra.mxu0 0.0
        %2201 = vmatpush.xpose.msra.mxu0 0.0
        %2202 = vmatpush.xpose.msra.mxu0 0.0
        %2203 = vmatpush.xpose.msra.mxu0 0.0
        %2204 = vmatpush.xpose.msra.mxu0 0.0
        %2205 = vmatpush.xpose.msra.mxu0 0.0
        %2206 = vmatpush.xpose.msra.mxu0 0.0
        %2207 = vmatpush.xpose.msra.mxu0 0.0
        %2208 = vmatpush.xpose.msra.mxu0 0.0
        %2209 = vmatpush.xpose.msra.mxu0 0.0
        %2210 = vmatpush.xpose.msra.mxu0 0.0
        %2211 = vmatpush.xpose.msra.mxu0 0.0
        %2212 = vmatpush.xpose.msra.mxu0 %v598
        %2213 = vmatpush.xpose.msra.mxu0 %v342
        %2214 = vmatmul.f32.gmra.mxu0 %v929
        %v2215 = vpop.f32.mrf.mxu0
        %v2216 = vadd.f32 %v2196, %v2215
        %2217 = vdwg.mxu0
        %2218 = vmatpush.xpose.msra.mxu0 0.0
        %2219 = vmatpush.xpose.msra.mxu0 0.0
        %2220 = vmatpush.xpose.msra.mxu0 0.0
        %2221 = vmatpush.xpose.msra.mxu0 0.0
        %2222 = vmatpush.xpose.msra.mxu0 0.0
        %2223 = vmatpush.xpose.msra.mxu0 0.0
        %2224 = vmatpush.xpose.msra.mxu0 0.0
        %2225 = vmatpush.xpose.msra.mxu0 0.0
        %2226 = vmatpush.xpose.msra.mxu0 0.0
        %2227 = vmatpush.xpose.msra.mxu0 0.0
        %2228 = vmatpush.xpose.msra.mxu0 0.0
        %2229 = vmatpush.xpose.msra.mxu0 0.0
        %2230 = vmatpush.xpose.msra.mxu0 0.0
        %2231 = vmatpush.xpose.msra.mxu0 0.0
        %2232 = vmatpush.xpose.msra.mxu0 %v599
        %2233 = vmatpush.xpose.msra.mxu0 %v343
        %2234 = vmatmul.f32.gmra.mxu0 %v930
        %v2235 = vpop.f32.mrf.mxu0
        %v2236 = vadd.f32 %v2216, %v2235
        %2237 = vdwg.mxu0
        %2238 = vmatpush.xpose.msra.mxu0 0.0
        %2239 = vmatpush.xpose.msra.mxu0 0.0
        %2240 = vmatpush.xpose.msra.mxu0 0.0
        %2241 = vmatpush.xpose.msra.mxu0 0.0
        %2242 = vmatpush.xpose.msra.mxu0 0.0
        %2243 = vmatpush.xpose.msra.mxu0 0.0
        %2244 = vmatpush.xpose.msra.mxu0 0.0
        %2245 = vmatpush.xpose.msra.mxu0 0.0
        %2246 = vmatpush.xpose.msra.mxu0 0.0
        %2247 = vmatpush.xpose.msra.mxu0 0.0
        %2248 = vmatpush.xpose.msra.mxu0 0.0
        %2249 = vmatpush.xpose.msra.mxu0 0.0
        %2250 = vmatpush.xpose.msra.mxu0 0.0
        %2251 = vmatpush.xpose.msra.mxu0 0.0
        %2252 = vmatpush.xpose.msra.mxu0 %v600
        %2253 = vmatpush.xpose.msra.mxu0 %v344
        %2254 = vmatmul.f32.gmra.mxu0 %v931
        %v2255 = vpop.f32.mrf.mxu0
        %v2256 = vadd.f32 %v2236, %v2255
        %2257 = vdwg.mxu0
        %2258 = vmatpush.xpose.msra.mxu0 0.0
        %2259 = vmatpush.xpose.msra.mxu0 0.0
        %2260 = vmatpush.xpose.msra.mxu0 0.0
        %2261 = vmatpush.xpose.msra.mxu0 0.0
        %2262 = vmatpush.xpose.msra.mxu0 0.0
        %2263 = vmatpush.xpose.msra.mxu0 0.0
        %2264 = vmatpush.xpose.msra.mxu0 0.0
        %2265 = vmatpush.xpose.msra.mxu0 0.0
        %2266 = vmatpush.xpose.msra.mxu0 0.0
        %2267 = vmatpush.xpose.msra.mxu0 0.0
        %2268 = vmatpush.xpose.msra.mxu0 0.0
        %2269 = vmatpush.xpose.msra.mxu0 0.0
        %2270 = vmatpush.xpose.msra.mxu0 0.0
        %2271 = vmatpush.xpose.msra.mxu0 0.0
        %2272 = vmatpush.xpose.msra.mxu0 %v601
        %2273 = vmatpush.xpose.msra.mxu0 %v345
        %2274 = vmatmul.f32.gmra.mxu0 %v934
        %v2275 = vpop.f32.mrf.mxu0
        %v2276 = vadd.f32 %v2256, %v2275
        %2277 = vdwg.mxu0
        %2278 = vmatpush.xpose.msra.mxu0 0.0
        %2279 = vmatpush.xpose.msra.mxu0 0.0
        %2280 = vmatpush.xpose.msra.mxu0 0.0
        %2281 = vmatpush.xpose.msra.mxu0 0.0
        %2282 = vmatpush.xpose.msra.mxu0 0.0
        %2283 = vmatpush.xpose.msra.mxu0 0.0
        %2284 = vmatpush.xpose.msra.mxu0 0.0
        %2285 = vmatpush.xpose.msra.mxu0 0.0
        %2286 = vmatpush.xpose.msra.mxu0 0.0
        %2287 = vmatpush.xpose.msra.mxu0 0.0
        %2288 = vmatpush.xpose.msra.mxu0 0.0
        %2289 = vmatpush.xpose.msra.mxu0 0.0
        %2290 = vmatpush.xpose.msra.mxu0 0.0
        %2291 = vmatpush.xpose.msra.mxu0 0.0
        %2292 = vmatpush.xpose.msra.mxu0 %v602
        %2293 = vmatpush.xpose.msra.mxu0 %v346
        %2294 = vmatmul.f32.gmra.mxu0 %v935
        %v2295 = vpop.f32.mrf.mxu0
        %v2296 = vadd.f32 %v2276, %v2295
        %2297 = vdwg.mxu0
        %2298 = vmatpush.xpose.msra.mxu0 0.0
        %2299 = vmatpush.xpose.msra.mxu0 0.0
        %2300 = vmatpush.xpose.msra.mxu0 0.0
        %2301 = vmatpush.xpose.msra.mxu0 0.0
        %2302 = vmatpush.xpose.msra.mxu0 0.0
        %2303 = vmatpush.xpose.msra.mxu0 0.0
        %2304 = vmatpush.xpose.msra.mxu0 0.0
        %2305 = vmatpush.xpose.msra.mxu0 0.0
        %2306 = vmatpush.xpose.msra.mxu0 0.0
        %2307 = vmatpush.xpose.msra.mxu0 0.0
        %2308 = vmatpush.xpose.msra.mxu0 0.0
        %2309 = vmatpush.xpose.msra.mxu0 0.0
        %2310 = vmatpush.xpose.msra.mxu0 0.0
        %2311 = vmatpush.xpose.msra.mxu0 0.0
        %2312 = vmatpush.xpose.msra.mxu0 %v603
        %2313 = vmatpush.xpose.msra.mxu0 %v347
        %2314 = vmatmul.f32.gmra.mxu0 %v936
        %v2315 = vpop.f32.mrf.mxu0
        %v2316 = vadd.f32 %v2296, %v2315
        %2317 = vdwg.mxu0
        %2318 = vmatpush.xpose.msra.mxu0 0.0
        %2319 = vmatpush.xpose.msra.mxu0 0.0
        %2320 = vmatpush.xpose.msra.mxu0 0.0
        %2321 = vmatpush.xpose.msra.mxu0 0.0
        %2322 = vmatpush.xpose.msra.mxu0 0.0
        %2323 = vmatpush.xpose.msra.mxu0 0.0
        %2324 = vmatpush.xpose.msra.mxu0 0.0
        %2325 = vmatpush.xpose.msra.mxu0 0.0
        %2326 = vmatpush.xpose.msra.mxu0 0.0
        %2327 = vmatpush.xpose.msra.mxu0 0.0
        %2328 = vmatpush.xpose.msra.mxu0 0.0
        %2329 = vmatpush.xpose.msra.mxu0 0.0
        %2330 = vmatpush.xpose.msra.mxu0 0.0
        %2331 = vmatpush.xpose.msra.mxu0 0.0
        %2332 = vmatpush.xpose.msra.mxu0 %v604
        %2333 = vmatpush.xpose.msra.mxu0 %v348
        %2334 = vmatmul.f32.gmra.mxu0 %v937
        %v2335 = vpop.f32.mrf.mxu0
        %v2336 = vadd.f32 %v2316, %v2335
        %2337 = vdwg.mxu0
        %2338 = vmatpush.xpose.msra.mxu0 0.0
        %2339 = vmatpush.xpose.msra.mxu0 0.0
        %2340 = vmatpush.xpose.msra.mxu0 0.0
        %2341 = vmatpush.xpose.msra.mxu0 0.0
        %2342 = vmatpush.xpose.msra.mxu0 0.0
        %2343 = vmatpush.xpose.msra.mxu0 0.0
        %2344 = vmatpush.xpose.msra.mxu0 0.0
        %2345 = vmatpush.xpose.msra.mxu0 0.0
        %2346 = vmatpush.xpose.msra.mxu0 0.0
        %2347 = vmatpush.xpose.msra.mxu0 0.0
        %2348 = vmatpush.xpose.msra.mxu0 0.0
        %2349 = vmatpush.xpose.msra.mxu0 0.0
        %2350 = vmatpush.xpose.msra.mxu0 0.0
        %2351 = vmatpush.xpose.msra.mxu0 0.0
        %2352 = vmatpush.xpose.msra.mxu0 %v605
        %2353 = vmatpush.xpose.msra.mxu0 %v349
        %2354 = vmatmul.f32.gmra.mxu0 %v938
        %v2355 = vpop.f32.mrf.mxu0
        %v2356 = vadd.f32 %v2336, %v2355
        %2357 = vdwg.mxu0
        %2358 = vmatpush.xpose.msra.mxu0 0.0
        %2359 = vmatpush.xpose.msra.mxu0 0.0
        %2360 = vmatpush.xpose.msra.mxu0 0.0
        %2361 = vmatpush.xpose.msra.mxu0 0.0
        %2362 = vmatpush.xpose.msra.mxu0 0.0
        %2363 = vmatpush.xpose.msra.mxu0 0.0
        %2364 = vmatpush.xpose.msra.mxu0 0.0
        %2365 = vmatpush.xpose.msra.mxu0 0.0
        %2366 = vmatpush.xpose.msra.mxu0 0.0
        %2367 = vmatpush.xpose.msra.mxu0 0.0
        %2368 = vmatpush.xpose.msra.mxu0 0.0
        %2369 = vmatpush.xpose.msra.mxu0 0.0
        %2370 = vmatpush.xpose.msra.mxu0 0.0
        %2371 = vmatpush.xpose.msra.mxu0 0.0
        %2372 = vmatpush.xpose.msra.mxu0 %v606
        %2373 = vmatpush.xpose.msra.mxu0 %v350
        %2374 = vmatmul.f32.gmra.mxu0 %v939
        %v2375 = vpop.f32.mrf.mxu0
        %v2376 = vadd.f32 %v2356, %v2375
        %2377 = vdwg.mxu0
        %2378 = vmatpush.xpose.msra.mxu0 0.0
        %2379 = vmatpush.xpose.msra.mxu0 0.0
        %2380 = vmatpush.xpose.msra.mxu0 0.0
        %2381 = vmatpush.xpose.msra.mxu0 0.0
        %2382 = vmatpush.xpose.msra.mxu0 0.0
        %2383 = vmatpush.xpose.msra.mxu0 0.0
        %2384 = vmatpush.xpose.msra.mxu0 0.0
        %2385 = vmatpush.xpose.msra.mxu0 0.0
        %2386 = vmatpush.xpose.msra.mxu0 0.0
        %2387 = vmatpush.xpose.msra.mxu0 0.0
        %2388 = vmatpush.xpose.msra.mxu0 0.0
        %2389 = vmatpush.xpose.msra.mxu0 0.0
        %2390 = vmatpush.xpose.msra.mxu0 0.0
        %2391 = vmatpush.xpose.msra.mxu0 0.0
        %2392 = vmatpush.xpose.msra.mxu0 %v607
        %2393 = vmatpush.xpose.msra.mxu0 %v351
        %2394 = vmatmul.f32.gmra.mxu0 %v940
        %v2395 = vpop.f32.mrf.mxu0
        %v2396 = vadd.f32 %v2376, %v2395
        %2397 = vdwg.mxu0
        %2398 = vmatpush.xpose.msra.mxu0 0.0
        %2399 = vmatpush.xpose.msra.mxu0 0.0
        %2400 = vmatpush.xpose.msra.mxu0 0.0
        %2401 = vmatpush.xpose.msra.mxu0 0.0
        %2402 = vmatpush.xpose.msra.mxu0 0.0
        %2403 = vmatpush.xpose.msra.mxu0 0.0
        %2404 = vmatpush.xpose.msra.mxu0 0.0
        %2405 = vmatpush.xpose.msra.mxu0 0.0
        %2406 = vmatpush.xpose.msra.mxu0 0.0
        %2407 = vmatpush.xpose.msra.mxu0 0.0
        %2408 = vmatpush.xpose.msra.mxu0 0.0
        %2409 = vmatpush.xpose.msra.mxu0 0.0
        %2410 = vmatpush.xpose.msra.mxu0 0.0
        %2411 = vmatpush.xpose.msra.mxu0 0.0
        %2412 = vmatpush.xpose.msra.mxu0 %v608
        %2413 = vmatpush.xpose.msra.mxu0 %v352
        %2414 = vmatmul.f32.gmra.mxu0 %v941
        %v2415 = vpop.f32.mrf.mxu0
        %v2416 = vadd.f32 %v2396, %v2415
        %2417 = vdwg.mxu0
        %2418 = vmatpush.xpose.msra.mxu0 0.0
        %2419 = vmatpush.xpose.msra.mxu0 0.0
        %2420 = vmatpush.xpose.msra.mxu0 0.0
        %2421 = vmatpush.xpose.msra.mxu0 0.0
        %2422 = vmatpush.xpose.msra.mxu0 0.0
        %2423 = vmatpush.xpose.msra.mxu0 0.0
        %2424 = vmatpush.xpose.msra.mxu0 0.0
        %2425 = vmatpush.xpose.msra.mxu0 0.0
        %2426 = vmatpush.xpose.msra.mxu0 0.0
        %2427 = vmatpush.xpose.msra.mxu0 0.0
        %2428 = vmatpush.xpose.msra.mxu0 0.0
        %2429 = vmatpush.xpose.msra.mxu0 0.0
        %2430 = vmatpush.xpose.msra.mxu0 0.0
        %2431 = vmatpush.xpose.msra.mxu0 0.0
        %2432 = vmatpush.xpose.msra.mxu0 %v609
        %2433 = vmatpush.xpose.msra.mxu0 %v353
        %2434 = vmatmul.f32.gmra.mxu0 %v944
        %v2435 = vpop.f32.mrf.mxu0
        %v2436 = vadd.f32 %v2416, %v2435
        %2437 = vdwg.mxu0
        %2438 = vmatpush.xpose.msra.mxu0 0.0
        %2439 = vmatpush.xpose.msra.mxu0 0.0
        %2440 = vmatpush.xpose.msra.mxu0 0.0
        %2441 = vmatpush.xpose.msra.mxu0 0.0
        %2442 = vmatpush.xpose.msra.mxu0 0.0
        %2443 = vmatpush.xpose.msra.mxu0 0.0
        %2444 = vmatpush.xpose.msra.mxu0 0.0
        %2445 = vmatpush.xpose.msra.mxu0 0.0
        %2446 = vmatpush.xpose.msra.mxu0 0.0
        %2447 = vmatpush.xpose.msra.mxu0 0.0
        %2448 = vmatpush.xpose.msra.mxu0 0.0
        %2449 = vmatpush.xpose.msra.mxu0 0.0
        %2450 = vmatpush.xpose.msra.mxu0 0.0
        %2451 = vmatpush.xpose.msra.mxu0 0.0
        %2452 = vmatpush.xpose.msra.mxu0 %v610
        %2453 = vmatpush.xpose.msra.mxu0 %v354
        %2454 = vmatmul.f32.gmra.mxu0 %v945
        %v2455 = vpop.f32.mrf.mxu0
        %v2456 = vadd.f32 %v2436, %v2455
        %2457 = vdwg.mxu0
        %2458 = vmatpush.xpose.msra.mxu0 0.0
        %2459 = vmatpush.xpose.msra.mxu0 0.0
        %2460 = vmatpush.xpose.msra.mxu0 0.0
        %2461 = vmatpush.xpose.msra.mxu0 0.0
        %2462 = vmatpush.xpose.msra.mxu0 0.0
        %2463 = vmatpush.xpose.msra.mxu0 0.0
        %2464 = vmatpush.xpose.msra.mxu0 0.0
        %2465 = vmatpush.xpose.msra.mxu0 0.0
        %2466 = vmatpush.xpose.msra.mxu0 0.0
        %2467 = vmatpush.xpose.msra.mxu0 0.0
        %2468 = vmatpush.xpose.msra.mxu0 0.0
        %2469 = vmatpush.xpose.msra.mxu0 0.0
        %2470 = vmatpush.xpose.msra.mxu0 0.0
        %2471 = vmatpush.xpose.msra.mxu0 0.0
        %2472 = vmatpush.xpose.msra.mxu0 %v611
        %2473 = vmatpush.xpose.msra.mxu0 %v355
        %2474 = vmatmul.f32.gmra.mxu0 %v946
        %v2475 = vpop.f32.mrf.mxu0
        %v2476 = vadd.f32 %v2456, %v2475
        %2477 = vdwg.mxu0
        %2478 = vmatpush.xpose.msra.mxu0 0.0
        %2479 = vmatpush.xpose.msra.mxu0 0.0
        %2480 = vmatpush.xpose.msra.mxu0 0.0
        %2481 = vmatpush.xpose.msra.mxu0 0.0
        %2482 = vmatpush.xpose.msra.mxu0 0.0
        %2483 = vmatpush.xpose.msra.mxu0 0.0
        %2484 = vmatpush.xpose.msra.mxu0 0.0
        %2485 = vmatpush.xpose.msra.mxu0 0.0
        %2486 = vmatpush.xpose.msra.mxu0 0.0
        %2487 = vmatpush.xpose.msra.mxu0 0.0
        %2488 = vmatpush.xpose.msra.mxu0 0.0
        %2489 = vmatpush.xpose.msra.mxu0 0.0
        %2490 = vmatpush.xpose.msra.mxu0 0.0
        %2491 = vmatpush.xpose.msra.mxu0 0.0
        %2492 = vmatpush.xpose.msra.mxu0 %v612
        %2493 = vmatpush.xpose.msra.mxu0 %v356
        %2494 = vmatmul.f32.gmra.mxu0 %v947
        %v2495 = vpop.f32.mrf.mxu0
        %v2496 = vadd.f32 %v2476, %v2495
        %2497 = vdwg.mxu0
        %2498 = vmatpush.xpose.msra.mxu0 0.0
        %2499 = vmatpush.xpose.msra.mxu0 0.0
        %2500 = vmatpush.xpose.msra.mxu0 0.0
        %2501 = vmatpush.xpose.msra.mxu0 0.0
        %2502 = vmatpush.xpose.msra.mxu0 0.0
        %2503 = vmatpush.xpose.msra.mxu0 0.0
        %2504 = vmatpush.xpose.msra.mxu0 0.0
        %2505 = vmatpush.xpose.msra.mxu0 0.0
        %2506 = vmatpush.xpose.msra.mxu0 0.0
        %2507 = vmatpush.xpose.msra.mxu0 0.0
        %2508 = vmatpush.xpose.msra.mxu0 0.0
        %2509 = vmatpush.xpose.msra.mxu0 0.0
        %2510 = vmatpush.xpose.msra.mxu0 0.0
        %2511 = vmatpush.xpose.msra.mxu0 0.0
        %2512 = vmatpush.xpose.msra.mxu0 %v613
        %2513 = vmatpush.xpose.msra.mxu0 %v357
        %2514 = vmatmul.f32.gmra.mxu0 %v948
        %v2515 = vpop.f32.mrf.mxu0
        %v2516 = vadd.f32 %v2496, %v2515
        %2517 = vdwg.mxu0
        %2518 = vmatpush.xpose.msra.mxu0 0.0
        %2519 = vmatpush.xpose.msra.mxu0 0.0
        %2520 = vmatpush.xpose.msra.mxu0 0.0
        %2521 = vmatpush.xpose.msra.mxu0 0.0
        %2522 = vmatpush.xpose.msra.mxu0 0.0
        %2523 = vmatpush.xpose.msra.mxu0 0.0
        %2524 = vmatpush.xpose.msra.mxu0 0.0
        %2525 = vmatpush.xpose.msra.mxu0 0.0
        %2526 = vmatpush.xpose.msra.mxu0 0.0
        %2527 = vmatpush.xpose.msra.mxu0 0.0
        %2528 = vmatpush.xpose.msra.mxu0 0.0
        %2529 = vmatpush.xpose.msra.mxu0 0.0
        %2530 = vmatpush.xpose.msra.mxu0 0.0
        %2531 = vmatpush.xpose.msra.mxu0 0.0
        %2532 = vmatpush.xpose.msra.mxu0 %v614
        %2533 = vmatpush.xpose.msra.mxu0 %v358
        %2534 = vmatmul.f32.gmra.mxu0 %v949
        %v2535 = vpop.f32.mrf.mxu0
        %v2536 = vadd.f32 %v2516, %v2535
        %2537 = vdwg.mxu0
        %2538 = vmatpush.xpose.msra.mxu0 0.0
        %2539 = vmatpush.xpose.msra.mxu0 0.0
        %2540 = vmatpush.xpose.msra.mxu0 0.0
        %2541 = vmatpush.xpose.msra.mxu0 0.0
        %2542 = vmatpush.xpose.msra.mxu0 0.0
        %2543 = vmatpush.xpose.msra.mxu0 0.0
        %2544 = vmatpush.xpose.msra.mxu0 0.0
        %2545 = vmatpush.xpose.msra.mxu0 0.0
        %2546 = vmatpush.xpose.msra.mxu0 0.0
        %2547 = vmatpush.xpose.msra.mxu0 0.0
        %2548 = vmatpush.xpose.msra.mxu0 0.0
        %2549 = vmatpush.xpose.msra.mxu0 0.0
        %2550 = vmatpush.xpose.msra.mxu0 0.0
        %2551 = vmatpush.xpose.msra.mxu0 0.0
        %2552 = vmatpush.xpose.msra.mxu0 %v615
        %2553 = vmatpush.xpose.msra.mxu0 %v359
        %2554 = vmatmul.f32.gmra.mxu0 %v950
        %v2555 = vpop.f32.mrf.mxu0
        %v2556 = vadd.f32 %v2536, %v2555
        %2557 = vdwg.mxu0
        %2558 = vmatpush.xpose.msra.mxu0 0.0
        %2559 = vmatpush.xpose.msra.mxu0 0.0
        %2560 = vmatpush.xpose.msra.mxu0 0.0
        %2561 = vmatpush.xpose.msra.mxu0 0.0
        %2562 = vmatpush.xpose.msra.mxu0 0.0
        %2563 = vmatpush.xpose.msra.mxu0 0.0
        %2564 = vmatpush.xpose.msra.mxu0 0.0
        %2565 = vmatpush.xpose.msra.mxu0 0.0
        %2566 = vmatpush.xpose.msra.mxu0 0.0
        %2567 = vmatpush.xpose.msra.mxu0 0.0
        %2568 = vmatpush.xpose.msra.mxu0 0.0
        %2569 = vmatpush.xpose.msra.mxu0 0.0
        %2570 = vmatpush.xpose.msra.mxu0 0.0
        %2571 = vmatpush.xpose.msra.mxu0 0.0
        %2572 = vmatpush.xpose.msra.mxu0 %v616
        %2573 = vmatpush.xpose.msra.mxu0 %v360
        %2574 = vmatmul.f32.gmra.mxu0 %v951
        %v2575 = vpop.f32.mrf.mxu0
        %v2576 = vadd.f32 %v2556, %v2575
        %2577 = vdwg.mxu0
        %2578 = vmatpush.xpose.msra.mxu0 0.0
        %2579 = vmatpush.xpose.msra.mxu0 0.0
        %2580 = vmatpush.xpose.msra.mxu0 0.0
        %2581 = vmatpush.xpose.msra.mxu0 0.0
        %2582 = vmatpush.xpose.msra.mxu0 0.0
        %2583 = vmatpush.xpose.msra.mxu0 0.0
        %2584 = vmatpush.xpose.msra.mxu0 0.0
        %2585 = vmatpush.xpose.msra.mxu0 0.0
        %2586 = vmatpush.xpose.msra.mxu0 0.0
        %2587 = vmatpush.xpose.msra.mxu0 0.0
        %2588 = vmatpush.xpose.msra.mxu0 0.0
        %2589 = vmatpush.xpose.msra.mxu0 0.0
        %2590 = vmatpush.xpose.msra.mxu0 0.0
        %2591 = vmatpush.xpose.msra.mxu0 0.0
        %2592 = vmatpush.xpose.msra.mxu0 %v617
        %2593 = vmatpush.xpose.msra.mxu0 %v361
        %2594 = vmatmul.f32.gmra.mxu0 %v954
        %v2595 = vpop.f32.mrf.mxu0
        %v2596 = vadd.f32 %v2576, %v2595
        %2597 = vdwg.mxu0
        %2598 = vmatpush.xpose.msra.mxu0 0.0
        %2599 = vmatpush.xpose.msra.mxu0 0.0
        %2600 = vmatpush.xpose.msra.mxu0 0.0
        %2601 = vmatpush.xpose.msra.mxu0 0.0
        %2602 = vmatpush.xpose.msra.mxu0 0.0
        %2603 = vmatpush.xpose.msra.mxu0 0.0
        %2604 = vmatpush.xpose.msra.mxu0 0.0
        %2605 = vmatpush.xpose.msra.mxu0 0.0
        %2606 = vmatpush.xpose.msra.mxu0 0.0
        %2607 = vmatpush.xpose.msra.mxu0 0.0
        %2608 = vmatpush.xpose.msra.mxu0 0.0
        %2609 = vmatpush.xpose.msra.mxu0 0.0
        %2610 = vmatpush.xpose.msra.mxu0 0.0
        %2611 = vmatpush.xpose.msra.mxu0 0.0
        %2612 = vmatpush.xpose.msra.mxu0 %v618
        %2613 = vmatpush.xpose.msra.mxu0 %v362
        %2614 = vmatmul.f32.gmra.mxu0 %v955
        %v2615 = vpop.f32.mrf.mxu0
        %v2616 = vadd.f32 %v2596, %v2615
        %2617 = vdwg.mxu0
        %2618 = vmatpush.xpose.msra.mxu0 0.0
        %2619 = vmatpush.xpose.msra.mxu0 0.0
        %2620 = vmatpush.xpose.msra.mxu0 0.0
        %2621 = vmatpush.xpose.msra.mxu0 0.0
        %2622 = vmatpush.xpose.msra.mxu0 0.0
        %2623 = vmatpush.xpose.msra.mxu0 0.0
        %2624 = vmatpush.xpose.msra.mxu0 0.0
        %2625 = vmatpush.xpose.msra.mxu0 0.0
        %2626 = vmatpush.xpose.msra.mxu0 0.0
        %2627 = vmatpush.xpose.msra.mxu0 0.0
        %2628 = vmatpush.xpose.msra.mxu0 0.0
        %2629 = vmatpush.xpose.msra.mxu0 0.0
        %2630 = vmatpush.xpose.msra.mxu0 0.0
        %2631 = vmatpush.xpose.msra.mxu0 0.0
        %2632 = vmatpush.xpose.msra.mxu0 %v619
        %2633 = vmatpush.xpose.msra.mxu0 %v363
        %2634 = vmatmul.f32.gmra.mxu0 %v956
        %v2635 = vpop.f32.mrf.mxu0
        %v2636 = vadd.f32 %v2616, %v2635
        %2637 = vdwg.mxu0
        %2638 = vmatpush.xpose.msra.mxu0 0.0
        %2639 = vmatpush.xpose.msra.mxu0 0.0
        %2640 = vmatpush.xpose.msra.mxu0 0.0
        %2641 = vmatpush.xpose.msra.mxu0 0.0
        %2642 = vmatpush.xpose.msra.mxu0 0.0
        %2643 = vmatpush.xpose.msra.mxu0 0.0
        %2644 = vmatpush.xpose.msra.mxu0 0.0
        %2645 = vmatpush.xpose.msra.mxu0 0.0
        %2646 = vmatpush.xpose.msra.mxu0 0.0
        %2647 = vmatpush.xpose.msra.mxu0 0.0
        %2648 = vmatpush.xpose.msra.mxu0 0.0
        %2649 = vmatpush.xpose.msra.mxu0 0.0
        %2650 = vmatpush.xpose.msra.mxu0 0.0
        %2651 = vmatpush.xpose.msra.mxu0 0.0
        %2652 = vmatpush.xpose.msra.mxu0 %v620
        %2653 = vmatpush.xpose.msra.mxu0 %v364
        %2654 = vmatmul.f32.gmra.mxu0 %v957
        %v2655 = vpop.f32.mrf.mxu0
        %v2656 = vadd.f32 %v2636, %v2655
        %2657 = vdwg.mxu0
        %2658 = vmatpush.xpose.msra.mxu0 0.0
        %2659 = vmatpush.xpose.msra.mxu0 0.0
        %2660 = vmatpush.xpose.msra.mxu0 0.0
        %2661 = vmatpush.xpose.msra.mxu0 0.0
        %2662 = vmatpush.xpose.msra.mxu0 0.0
        %2663 = vmatpush.xpose.msra.mxu0 0.0
        %2664 = vmatpush.xpose.msra.mxu0 0.0
        %2665 = vmatpush.xpose.msra.mxu0 0.0
        %2666 = vmatpush.xpose.msra.mxu0 0.0
        %2667 = vmatpush.xpose.msra.mxu0 0.0
        %2668 = vmatpush.xpose.msra.mxu0 0.0
        %2669 = vmatpush.xpose.msra.mxu0 0.0
        %2670 = vmatpush.xpose.msra.mxu0 0.0
        %2671 = vmatpush.xpose.msra.mxu0 0.0
        %2672 = vmatpush.xpose.msra.mxu0 %v621
        %2673 = vmatpush.xpose.msra.mxu0 %v365
        %2674 = vmatmul.f32.gmra.mxu0 %v958
        %v2675 = vpop.f32.mrf.mxu0
        %v2676 = vadd.f32 %v2656, %v2675
        %2677 = vdwg.mxu0
        %2678 = vmatpush.xpose.msra.mxu0 0.0
        %2679 = vmatpush.xpose.msra.mxu0 0.0
        %2680 = vmatpush.xpose.msra.mxu0 0.0
        %2681 = vmatpush.xpose.msra.mxu0 0.0
        %2682 = vmatpush.xpose.msra.mxu0 0.0
        %2683 = vmatpush.xpose.msra.mxu0 0.0
        %2684 = vmatpush.xpose.msra.mxu0 0.0
        %2685 = vmatpush.xpose.msra.mxu0 0.0
        %2686 = vmatpush.xpose.msra.mxu0 0.0
        %2687 = vmatpush.xpose.msra.mxu0 0.0
        %2688 = vmatpush.xpose.msra.mxu0 0.0
        %2689 = vmatpush.xpose.msra.mxu0 0.0
        %2690 = vmatpush.xpose.msra.mxu0 0.0
        %2691 = vmatpush.xpose.msra.mxu0 0.0
        %2692 = vmatpush.xpose.msra.mxu0 %v622
        %2693 = vmatpush.xpose.msra.mxu0 %v366
        %2694 = vmatmul.f32.gmra.mxu0 %v959
        %v2695 = vpop.f32.mrf.mxu0
        %v2696 = vadd.f32 %v2676, %v2695
        %2697 = vdwg.mxu0
        %2698 = vmatpush.xpose.msra.mxu0 0.0
        %2699 = vmatpush.xpose.msra.mxu0 0.0
        %2700 = vmatpush.xpose.msra.mxu0 0.0
        %2701 = vmatpush.xpose.msra.mxu0 0.0
        %2702 = vmatpush.xpose.msra.mxu0 0.0
        %2703 = vmatpush.xpose.msra.mxu0 0.0
        %2704 = vmatpush.xpose.msra.mxu0 0.0
        %2705 = vmatpush.xpose.msra.mxu0 0.0
        %2706 = vmatpush.xpose.msra.mxu0 0.0
        %2707 = vmatpush.xpose.msra.mxu0 0.0
        %2708 = vmatpush.xpose.msra.mxu0 0.0
        %2709 = vmatpush.xpose.msra.mxu0 0.0
        %2710 = vmatpush.xpose.msra.mxu0 0.0
        %2711 = vmatpush.xpose.msra.mxu0 0.0
        %2712 = vmatpush.xpose.msra.mxu0 %v623
        %2713 = vmatpush.xpose.msra.mxu0 %v367
        %2714 = vmatmul.f32.gmra.mxu0 %v960
        %v2715 = vpop.f32.mrf.mxu0
        %v2716 = vadd.f32 %v2696, %v2715
        %2717 = vdwg.mxu0
        %2718 = vmatpush.xpose.msra.mxu0 0.0
        %2719 = vmatpush.xpose.msra.mxu0 0.0
        %2720 = vmatpush.xpose.msra.mxu0 0.0
        %2721 = vmatpush.xpose.msra.mxu0 0.0
        %2722 = vmatpush.xpose.msra.mxu0 0.0
        %2723 = vmatpush.xpose.msra.mxu0 0.0
        %2724 = vmatpush.xpose.msra.mxu0 0.0
        %2725 = vmatpush.xpose.msra.mxu0 0.0
        %2726 = vmatpush.xpose.msra.mxu0 0.0
        %2727 = vmatpush.xpose.msra.mxu0 0.0
        %2728 = vmatpush.xpose.msra.mxu0 0.0
        %2729 = vmatpush.xpose.msra.mxu0 0.0
        %2730 = vmatpush.xpose.msra.mxu0 0.0
        %2731 = vmatpush.xpose.msra.mxu0 0.0
        %2732 = vmatpush.xpose.msra.mxu0 %v624
        %2733 = vmatpush.xpose.msra.mxu0 %v368
        %2734 = vmatmul.f32.gmra.mxu0 %v961
        %v2735 = vpop.f32.mrf.mxu0
        %v2736 = vadd.f32 %v2716, %v2735
        %2737 = vdwg.mxu0
        %2738 = vmatpush.xpose.msra.mxu0 0.0
        %2739 = vmatpush.xpose.msra.mxu0 0.0
        %2740 = vmatpush.xpose.msra.mxu0 0.0
        %2741 = vmatpush.xpose.msra.mxu0 0.0
        %2742 = vmatpush.xpose.msra.mxu0 0.0
        %2743 = vmatpush.xpose.msra.mxu0 0.0
        %2744 = vmatpush.xpose.msra.mxu0 0.0
        %2745 = vmatpush.xpose.msra.mxu0 0.0
        %2746 = vmatpush.xpose.msra.mxu0 0.0
        %2747 = vmatpush.xpose.msra.mxu0 0.0
        %2748 = vmatpush.xpose.msra.mxu0 0.0
        %2749 = vmatpush.xpose.msra.mxu0 0.0
        %2750 = vmatpush.xpose.msra.mxu0 0.0
        %2751 = vmatpush.xpose.msra.mxu0 0.0
        %2752 = vmatpush.xpose.msra.mxu0 %v625
        %2753 = vmatpush.xpose.msra.mxu0 %v369
        %2754 = vmatmul.f32.gmra.mxu0 %v964
        %v2755 = vpop.f32.mrf.mxu0
        %v2756 = vadd.f32 %v2736, %v2755
        %2757 = vdwg.mxu0
        %2758 = vmatpush.xpose.msra.mxu0 0.0
        %2759 = vmatpush.xpose.msra.mxu0 0.0
        %2760 = vmatpush.xpose.msra.mxu0 0.0
        %2761 = vmatpush.xpose.msra.mxu0 0.0
        %2762 = vmatpush.xpose.msra.mxu0 0.0
        %2763 = vmatpush.xpose.msra.mxu0 0.0
        %2764 = vmatpush.xpose.msra.mxu0 0.0
        %2765 = vmatpush.xpose.msra.mxu0 0.0
        %2766 = vmatpush.xpose.msra.mxu0 0.0
        %2767 = vmatpush.xpose.msra.mxu0 0.0
        %2768 = vmatpush.xpose.msra.mxu0 0.0
        %2769 = vmatpush.xpose.msra.mxu0 0.0
        %2770 = vmatpush.xpose.msra.mxu0 0.0
        %2771 = vmatpush.xpose.msra.mxu0 0.0
        %2772 = vmatpush.xpose.msra.mxu0 %v626
        %2773 = vmatpush.xpose.msra.mxu0 %v370
        %2774 = vmatmul.f32.gmra.mxu0 %v965
        %v2775 = vpop.f32.mrf.mxu0
        %v2776 = vadd.f32 %v2756, %v2775
        %2777 = vdwg.mxu0
        %2778 = vmatpush.xpose.msra.mxu0 0.0
        %2779 = vmatpush.xpose.msra.mxu0 0.0
        %2780 = vmatpush.xpose.msra.mxu0 0.0
        %2781 = vmatpush.xpose.msra.mxu0 0.0
        %2782 = vmatpush.xpose.msra.mxu0 0.0
        %2783 = vmatpush.xpose.msra.mxu0 0.0
        %2784 = vmatpush.xpose.msra.mxu0 0.0
        %2785 = vmatpush.xpose.msra.mxu0 0.0
        %2786 = vmatpush.xpose.msra.mxu0 0.0
        %2787 = vmatpush.xpose.msra.mxu0 0.0
        %2788 = vmatpush.xpose.msra.mxu0 0.0
        %2789 = vmatpush.xpose.msra.mxu0 0.0
        %2790 = vmatpush.xpose.msra.mxu0 0.0
        %2791 = vmatpush.xpose.msra.mxu0 0.0
        %2792 = vmatpush.xpose.msra.mxu0 %v627
        %2793 = vmatpush.xpose.msra.mxu0 %v371
        %2794 = vmatmul.f32.gmra.mxu0 %v966
        %v2795 = vpop.f32.mrf.mxu0
        %v2796 = vadd.f32 %v2776, %v2795
        %2797 = vdwg.mxu0
        %2798 = vmatpush.xpose.msra.mxu0 0.0
        %2799 = vmatpush.xpose.msra.mxu0 0.0
        %2800 = vmatpush.xpose.msra.mxu0 0.0
        %2801 = vmatpush.xpose.msra.mxu0 0.0
        %2802 = vmatpush.xpose.msra.mxu0 0.0
        %2803 = vmatpush.xpose.msra.mxu0 0.0
        %2804 = vmatpush.xpose.msra.mxu0 0.0
        %2805 = vmatpush.xpose.msra.mxu0 0.0
        %2806 = vmatpush.xpose.msra.mxu0 0.0
        %2807 = vmatpush.xpose.msra.mxu0 0.0
        %2808 = vmatpush.xpose.msra.mxu0 0.0
        %2809 = vmatpush.xpose.msra.mxu0 0.0
        %2810 = vmatpush.xpose.msra.mxu0 0.0
        %2811 = vmatpush.xpose.msra.mxu0 0.0
        %2812 = vmatpush.xpose.msra.mxu0 %v628
        %2813 = vmatpush.xpose.msra.mxu0 %v372
        %2814 = vmatmul.f32.gmra.mxu0 %v967
        %v2815 = vpop.f32.mrf.mxu0
        %v2816 = vadd.f32 %v2796, %v2815
        %2817 = vdwg.mxu0
        %2818 = vmatpush.xpose.msra.mxu0 0.0
        %2819 = vmatpush.xpose.msra.mxu0 0.0
        %2820 = vmatpush.xpose.msra.mxu0 0.0
        %2821 = vmatpush.xpose.msra.mxu0 0.0
        %2822 = vmatpush.xpose.msra.mxu0 0.0
        %2823 = vmatpush.xpose.msra.mxu0 0.0
        %2824 = vmatpush.xpose.msra.mxu0 0.0
        %2825 = vmatpush.xpose.msra.mxu0 0.0
        %2826 = vmatpush.xpose.msra.mxu0 0.0
        %2827 = vmatpush.xpose.msra.mxu0 0.0
        %2828 = vmatpush.xpose.msra.mxu0 0.0
        %2829 = vmatpush.xpose.msra.mxu0 0.0
        %2830 = vmatpush.xpose.msra.mxu0 0.0
        %2831 = vmatpush.xpose.msra.mxu0 0.0
        %2832 = vmatpush.xpose.msra.mxu0 %v629
        %2833 = vmatpush.xpose.msra.mxu0 %v373
        %2834 = vmatmul.f32.gmra.mxu0 %v968
        %v2835 = vpop.f32.mrf.mxu0
        %v2836 = vadd.f32 %v2816, %v2835
        %2837 = vdwg.mxu0
        %2838 = vmatpush.xpose.msra.mxu0 0.0
        %2839 = vmatpush.xpose.msra.mxu0 0.0
        %2840 = vmatpush.xpose.msra.mxu0 0.0
        %2841 = vmatpush.xpose.msra.mxu0 0.0
        %2842 = vmatpush.xpose.msra.mxu0 0.0
        %2843 = vmatpush.xpose.msra.mxu0 0.0
        %2844 = vmatpush.xpose.msra.mxu0 0.0
        %2845 = vmatpush.xpose.msra.mxu0 0.0
        %2846 = vmatpush.xpose.msra.mxu0 0.0
        %2847 = vmatpush.xpose.msra.mxu0 0.0
        %2848 = vmatpush.xpose.msra.mxu0 0.0
        %2849 = vmatpush.xpose.msra.mxu0 0.0
        %2850 = vmatpush.xpose.msra.mxu0 0.0
        %2851 = vmatpush.xpose.msra.mxu0 0.0
        %2852 = vmatpush.xpose.msra.mxu0 %v630
        %2853 = vmatpush.xpose.msra.mxu0 %v374
        %2854 = vmatmul.f32.gmra.mxu0 %v969
        %v2855 = vpop.f32.mrf.mxu0
        %v2856 = vadd.f32 %v2836, %v2855
        %2857 = vdwg.mxu0
        %2858 = vmatpush.xpose.msra.mxu0 0.0
        %2859 = vmatpush.xpose.msra.mxu0 0.0
        %2860 = vmatpush.xpose.msra.mxu0 0.0
        %2861 = vmatpush.xpose.msra.mxu0 0.0
        %2862 = vmatpush.xpose.msra.mxu0 0.0
        %2863 = vmatpush.xpose.msra.mxu0 0.0
        %2864 = vmatpush.xpose.msra.mxu0 0.0
        %2865 = vmatpush.xpose.msra.mxu0 0.0
        %2866 = vmatpush.xpose.msra.mxu0 0.0
        %2867 = vmatpush.xpose.msra.mxu0 0.0
        %2868 = vmatpush.xpose.msra.mxu0 0.0
        %2869 = vmatpush.xpose.msra.mxu0 0.0
        %2870 = vmatpush.xpose.msra.mxu0 0.0
        %2871 = vmatpush.xpose.msra.mxu0 0.0
        %2872 = vmatpush.xpose.msra.mxu0 %v631
        %2873 = vmatpush.xpose.msra.mxu0 %v375
        %2874 = vmatmul.f32.gmra.mxu0 %v970
        %v2875 = vpop.f32.mrf.mxu0
        %v2876 = vadd.f32 %v2856, %v2875
        %2877 = vdwg.mxu0
        %2878 = vmatpush.xpose.msra.mxu0 0.0
        %2879 = vmatpush.xpose.msra.mxu0 0.0
        %2880 = vmatpush.xpose.msra.mxu0 0.0
        %2881 = vmatpush.xpose.msra.mxu0 0.0
        %2882 = vmatpush.xpose.msra.mxu0 0.0
        %2883 = vmatpush.xpose.msra.mxu0 0.0
        %2884 = vmatpush.xpose.msra.mxu0 0.0
        %2885 = vmatpush.xpose.msra.mxu0 0.0
        %2886 = vmatpush.xpose.msra.mxu0 0.0
        %2887 = vmatpush.xpose.msra.mxu0 0.0
        %2888 = vmatpush.xpose.msra.mxu0 0.0
        %2889 = vmatpush.xpose.msra.mxu0 0.0
        %2890 = vmatpush.xpose.msra.mxu0 0.0
        %2891 = vmatpush.xpose.msra.mxu0 0.0
        %2892 = vmatpush.xpose.msra.mxu0 %v632
        %2893 = vmatpush.xpose.msra.mxu0 %v376
        %2894 = vmatmul.f32.gmra.mxu0 %v971
        %v2895 = vpop.f32.mrf.mxu0
        %v2896 = vadd.f32 %v2876, %v2895
        %2897 = vdwg.mxu0
        %2898 = vmatpush.xpose.msra.mxu0 0.0
        %2899 = vmatpush.xpose.msra.mxu0 0.0
        %2900 = vmatpush.xpose.msra.mxu0 0.0
        %2901 = vmatpush.xpose.msra.mxu0 0.0
        %2902 = vmatpush.xpose.msra.mxu0 0.0
        %2903 = vmatpush.xpose.msra.mxu0 0.0
        %2904 = vmatpush.xpose.msra.mxu0 0.0
        %2905 = vmatpush.xpose.msra.mxu0 0.0
        %2906 = vmatpush.xpose.msra.mxu0 0.0
        %2907 = vmatpush.xpose.msra.mxu0 0.0
        %2908 = vmatpush.xpose.msra.mxu0 0.0
        %2909 = vmatpush.xpose.msra.mxu0 0.0
        %2910 = vmatpush.xpose.msra.mxu0 0.0
        %2911 = vmatpush.xpose.msra.mxu0 0.0
        %2912 = vmatpush.xpose.msra.mxu0 %v633
        %2913 = vmatpush.xpose.msra.mxu0 %v377
        %2914 = vmatmul.f32.gmra.mxu0 %v974
        %v2915 = vpop.f32.mrf.mxu0
        %v2916 = vadd.f32 %v2896, %v2915
        %2917 = vdwg.mxu0
        %2918 = vmatpush.xpose.msra.mxu0 0.0
        %2919 = vmatpush.xpose.msra.mxu0 0.0
        %2920 = vmatpush.xpose.msra.mxu0 0.0
        %2921 = vmatpush.xpose.msra.mxu0 0.0
        %2922 = vmatpush.xpose.msra.mxu0 0.0
        %2923 = vmatpush.xpose.msra.mxu0 0.0
        %2924 = vmatpush.xpose.msra.mxu0 0.0
        %2925 = vmatpush.xpose.msra.mxu0 0.0
        %2926 = vmatpush.xpose.msra.mxu0 0.0
        %2927 = vmatpush.xpose.msra.mxu0 0.0
        %2928 = vmatpush.xpose.msra.mxu0 0.0
        %2929 = vmatpush.xpose.msra.mxu0 0.0
        %2930 = vmatpush.xpose.msra.mxu0 0.0
        %2931 = vmatpush.xpose.msra.mxu0 0.0
        %2932 = vmatpush.xpose.msra.mxu0 %v634
        %2933 = vmatpush.xpose.msra.mxu0 %v378
        %2934 = vmatmul.f32.gmra.mxu0 %v975
        %v2935 = vpop.f32.mrf.mxu0
        %v2936 = vadd.f32 %v2916, %v2935
        %2937 = vdwg.mxu0
        %2938 = vmatpush.xpose.msra.mxu0 0.0
        %2939 = vmatpush.xpose.msra.mxu0 0.0
        %2940 = vmatpush.xpose.msra.mxu0 0.0
        %2941 = vmatpush.xpose.msra.mxu0 0.0
        %2942 = vmatpush.xpose.msra.mxu0 0.0
        %2943 = vmatpush.xpose.msra.mxu0 0.0
        %2944 = vmatpush.xpose.msra.mxu0 0.0
        %2945 = vmatpush.xpose.msra.mxu0 0.0
        %2946 = vmatpush.xpose.msra.mxu0 0.0
        %2947 = vmatpush.xpose.msra.mxu0 0.0
        %2948 = vmatpush.xpose.msra.mxu0 0.0
        %2949 = vmatpush.xpose.msra.mxu0 0.0
        %2950 = vmatpush.xpose.msra.mxu0 0.0
        %2951 = vmatpush.xpose.msra.mxu0 0.0
        %2952 = vmatpush.xpose.msra.mxu0 %v635
        %2953 = vmatpush.xpose.msra.mxu0 %v379
        %2954 = vmatmul.f32.gmra.mxu0 %v976
        %v2955 = vpop.f32.mrf.mxu0
        %v2956 = vadd.f32 %v2936, %v2955
        %2957 = vdwg.mxu0
        %2958 = vmatpush.xpose.msra.mxu0 0.0
        %2959 = vmatpush.xpose.msra.mxu0 0.0
        %2960 = vmatpush.xpose.msra.mxu0 0.0
        %2961 = vmatpush.xpose.msra.mxu0 0.0
        %2962 = vmatpush.xpose.msra.mxu0 0.0
        %2963 = vmatpush.xpose.msra.mxu0 0.0
        %2964 = vmatpush.xpose.msra.mxu0 0.0
        %2965 = vmatpush.xpose.msra.mxu0 0.0
        %2966 = vmatpush.xpose.msra.mxu0 0.0
        %2967 = vmatpush.xpose.msra.mxu0 0.0
        %2968 = vmatpush.xpose.msra.mxu0 0.0
        %2969 = vmatpush.xpose.msra.mxu0 0.0
        %2970 = vmatpush.xpose.msra.mxu0 0.0
        %2971 = vmatpush.xpose.msra.mxu0 0.0
        %2972 = vmatpush.xpose.msra.mxu0 %v636
        %2973 = vmatpush.xpose.msra.mxu0 %v380
        %2974 = vmatmul.f32.gmra.mxu0 %v977
        %v2975 = vpop.f32.mrf.mxu0
        %v2976 = vadd.f32 %v2956, %v2975
        %2977 = vdwg.mxu0
        %2978 = vmatpush.xpose.msra.mxu0 0.0
        %2979 = vmatpush.xpose.msra.mxu0 0.0
        %2980 = vmatpush.xpose.msra.mxu0 0.0
        %2981 = vmatpush.xpose.msra.mxu0 0.0
        %2982 = vmatpush.xpose.msra.mxu0 0.0
        %2983 = vmatpush.xpose.msra.mxu0 0.0
        %2984 = vmatpush.xpose.msra.mxu0 0.0
        %2985 = vmatpush.xpose.msra.mxu0 0.0
        %2986 = vmatpush.xpose.msra.mxu0 0.0
        %2987 = vmatpush.xpose.msra.mxu0 0.0
        %2988 = vmatpush.xpose.msra.mxu0 0.0
        %2989 = vmatpush.xpose.msra.mxu0 0.0
        %2990 = vmatpush.xpose.msra.mxu0 0.0
        %2991 = vmatpush.xpose.msra.mxu0 0.0
        %2992 = vmatpush.xpose.msra.mxu0 %v637
        %2993 = vmatpush.xpose.msra.mxu0 %v381
        %2994 = vmatmul.f32.gmra.mxu0 %v978
        %v2995 = vpop.f32.mrf.mxu0
        %v2996 = vadd.f32 %v2976, %v2995
        %2997 = vdwg.mxu0
        %2998 = vmatpush.xpose.msra.mxu0 0.0
        %2999 = vmatpush.xpose.msra.mxu0 0.0
        %3000 = vmatpush.xpose.msra.mxu0 0.0
        %3001 = vmatpush.xpose.msra.mxu0 0.0
        %3002 = vmatpush.xpose.msra.mxu0 0.0
        %3003 = vmatpush.xpose.msra.mxu0 0.0
        %3004 = vmatpush.xpose.msra.mxu0 0.0
        %3005 = vmatpush.xpose.msra.mxu0 0.0
        %3006 = vmatpush.xpose.msra.mxu0 0.0
        %3007 = vmatpush.xpose.msra.mxu0 0.0
        %3008 = vmatpush.xpose.msra.mxu0 0.0
        %3009 = vmatpush.xpose.msra.mxu0 0.0
        %3010 = vmatpush.xpose.msra.mxu0 0.0
        %3011 = vmatpush.xpose.msra.mxu0 0.0
        %3012 = vmatpush.xpose.msra.mxu0 %v638
        %3013 = vmatpush.xpose.msra.mxu0 %v382
        %3014 = vmatmul.f32.gmra.mxu0 %v979
        %v3015 = vpop.f32.mrf.mxu0
        %v3016 = vadd.f32 %v2996, %v3015
        %3017 = vdwg.mxu0
        %3018 = vmatpush.xpose.msra.mxu0 0.0
        %3019 = vmatpush.xpose.msra.mxu0 0.0
        %3020 = vmatpush.xpose.msra.mxu0 0.0
        %3021 = vmatpush.xpose.msra.mxu0 0.0
        %3022 = vmatpush.xpose.msra.mxu0 0.0
        %3023 = vmatpush.xpose.msra.mxu0 0.0
        %3024 = vmatpush.xpose.msra.mxu0 0.0
        %3025 = vmatpush.xpose.msra.mxu0 0.0
        %3026 = vmatpush.xpose.msra.mxu0 0.0
        %3027 = vmatpush.xpose.msra.mxu0 0.0
        %3028 = vmatpush.xpose.msra.mxu0 0.0
        %3029 = vmatpush.xpose.msra.mxu0 0.0
        %3030 = vmatpush.xpose.msra.mxu0 0.0
        %3031 = vmatpush.xpose.msra.mxu0 0.0
        %3032 = vmatpush.xpose.msra.mxu0 %v639
        %3033 = vmatpush.xpose.msra.mxu0 %v383
        %3034 = vmatmul.f32.gmra.mxu0 %v980
        %v3035 = vpop.f32.mrf.mxu0
        %v3036 = vadd.f32 %v3016, %v3035
        %3037 = vdwg.mxu0
        %3038 = vmatpush.xpose.msra.mxu0 0.0
        %3039 = vmatpush.xpose.msra.mxu0 0.0
        %3040 = vmatpush.xpose.msra.mxu0 0.0
        %3041 = vmatpush.xpose.msra.mxu0 0.0
        %3042 = vmatpush.xpose.msra.mxu0 0.0
        %3043 = vmatpush.xpose.msra.mxu0 0.0
        %3044 = vmatpush.xpose.msra.mxu0 0.0
        %3045 = vmatpush.xpose.msra.mxu0 0.0
        %3046 = vmatpush.xpose.msra.mxu0 0.0
        %3047 = vmatpush.xpose.msra.mxu0 0.0
        %3048 = vmatpush.xpose.msra.mxu0 0.0
        %3049 = vmatpush.xpose.msra.mxu0 0.0
        %3050 = vmatpush.xpose.msra.mxu0 0.0
        %3051 = vmatpush.xpose.msra.mxu0 0.0
        %3052 = vmatpush.xpose.msra.mxu0 %v640
        %3053 = vmatpush.xpose.msra.mxu0 %v384
        %3054 = vmatmul.f32.gmra.mxu0 %v981
        %v3055 = vpop.f32.mrf.mxu0
        %v3056 = vadd.f32 %v3036, %v3055
        %3057 = vdwg.mxu0
        %3058 = vmatpush.xpose.msra.mxu0 0.0
        %3059 = vmatpush.xpose.msra.mxu0 0.0
        %3060 = vmatpush.xpose.msra.mxu0 0.0
        %3061 = vmatpush.xpose.msra.mxu0 0.0
        %3062 = vmatpush.xpose.msra.mxu0 0.0
        %3063 = vmatpush.xpose.msra.mxu0 0.0
        %3064 = vmatpush.xpose.msra.mxu0 0.0
        %3065 = vmatpush.xpose.msra.mxu0 0.0
        %3066 = vmatpush.xpose.msra.mxu0 0.0
        %3067 = vmatpush.xpose.msra.mxu0 0.0
        %3068 = vmatpush.xpose.msra.mxu0 0.0
        %3069 = vmatpush.xpose.msra.mxu0 0.0
        %3070 = vmatpush.xpose.msra.mxu0 0.0
        %3071 = vmatpush.xpose.msra.mxu0 0.0
        %3072 = vmatpush.xpose.msra.mxu0 %v641
        %3073 = vmatpush.xpose.msra.mxu0 %v385
        %3074 = vmatmul.f32.gmra.mxu0 %v984
        %v3075 = vpop.f32.mrf.mxu0
        %v3076 = vadd.f32 %v3056, %v3075
        %3077 = vdwg.mxu0
        %3078 = vmatpush.xpose.msra.mxu0 0.0
        %3079 = vmatpush.xpose.msra.mxu0 0.0
        %3080 = vmatpush.xpose.msra.mxu0 0.0
        %3081 = vmatpush.xpose.msra.mxu0 0.0
        %3082 = vmatpush.xpose.msra.mxu0 0.0
        %3083 = vmatpush.xpose.msra.mxu0 0.0
        %3084 = vmatpush.xpose.msra.mxu0 0.0
        %3085 = vmatpush.xpose.msra.mxu0 0.0
        %3086 = vmatpush.xpose.msra.mxu0 0.0
        %3087 = vmatpush.xpose.msra.mxu0 0.0
        %3088 = vmatpush.xpose.msra.mxu0 0.0
        %3089 = vmatpush.xpose.msra.mxu0 0.0
        %3090 = vmatpush.xpose.msra.mxu0 0.0
        %3091 = vmatpush.xpose.msra.mxu0 0.0
        %3092 = vmatpush.xpose.msra.mxu0 %v642
        %3093 = vmatpush.xpose.msra.mxu0 %v386
        %3094 = vmatmul.f32.gmra.mxu0 %v985
        %v3095 = vpop.f32.mrf.mxu0
        %v3096 = vadd.f32 %v3076, %v3095
        %3097 = vdwg.mxu0
        %3098 = vmatpush.xpose.msra.mxu0 0.0
        %3099 = vmatpush.xpose.msra.mxu0 0.0
        %3100 = vmatpush.xpose.msra.mxu0 0.0
        %3101 = vmatpush.xpose.msra.mxu0 0.0
        %3102 = vmatpush.xpose.msra.mxu0 0.0
        %3103 = vmatpush.xpose.msra.mxu0 0.0
        %3104 = vmatpush.xpose.msra.mxu0 0.0
        %3105 = vmatpush.xpose.msra.mxu0 0.0
        %3106 = vmatpush.xpose.msra.mxu0 0.0
        %3107 = vmatpush.xpose.msra.mxu0 0.0
        %3108 = vmatpush.xpose.msra.mxu0 0.0
        %3109 = vmatpush.xpose.msra.mxu0 0.0
        %3110 = vmatpush.xpose.msra.mxu0 0.0
        %3111 = vmatpush.xpose.msra.mxu0 0.0
        %3112 = vmatpush.xpose.msra.mxu0 %v643
        %3113 = vmatpush.xpose.msra.mxu0 %v387
        %3114 = vmatmul.f32.gmra.mxu0 %v986
        %v3115 = vpop.f32.mrf.mxu0
        %v3116 = vadd.f32 %v3096, %v3115
        %3117 = vdwg.mxu0
        %3118 = vmatpush.xpose.msra.mxu0 0.0
        %3119 = vmatpush.xpose.msra.mxu0 0.0
        %3120 = vmatpush.xpose.msra.mxu0 0.0
        %3121 = vmatpush.xpose.msra.mxu0 0.0
        %3122 = vmatpush.xpose.msra.mxu0 0.0
        %3123 = vmatpush.xpose.msra.mxu0 0.0
        %3124 = vmatpush.xpose.msra.mxu0 0.0
        %3125 = vmatpush.xpose.msra.mxu0 0.0
        %3126 = vmatpush.xpose.msra.mxu0 0.0
        %3127 = vmatpush.xpose.msra.mxu0 0.0
        %3128 = vmatpush.xpose.msra.mxu0 0.0
        %3129 = vmatpush.xpose.msra.mxu0 0.0
        %3130 = vmatpush.xpose.msra.mxu0 0.0
        %3131 = vmatpush.xpose.msra.mxu0 0.0
        %3132 = vmatpush.xpose.msra.mxu0 %v644
        %3133 = vmatpush.xpose.msra.mxu0 %v388
        %3134 = vmatmul.f32.gmra.mxu0 %v987
        %v3135 = vpop.f32.mrf.mxu0
        %v3136 = vadd.f32 %v3116, %v3135
        %3137 = vdwg.mxu0
        %3138 = vmatpush.xpose.msra.mxu0 0.0
        %3139 = vmatpush.xpose.msra.mxu0 0.0
        %3140 = vmatpush.xpose.msra.mxu0 0.0
        %3141 = vmatpush.xpose.msra.mxu0 0.0
        %3142 = vmatpush.xpose.msra.mxu0 0.0
        %3143 = vmatpush.xpose.msra.mxu0 0.0
        %3144 = vmatpush.xpose.msra.mxu0 0.0
        %3145 = vmatpush.xpose.msra.mxu0 0.0
        %3146 = vmatpush.xpose.msra.mxu0 0.0
        %3147 = vmatpush.xpose.msra.mxu0 0.0
        %3148 = vmatpush.xpose.msra.mxu0 0.0
        %3149 = vmatpush.xpose.msra.mxu0 0.0
        %3150 = vmatpush.xpose.msra.mxu0 0.0
        %3151 = vmatpush.xpose.msra.mxu0 0.0
        %3152 = vmatpush.xpose.msra.mxu0 %v645
        %3153 = vmatpush.xpose.msra.mxu0 %v389
        %3154 = vmatmul.f32.gmra.mxu0 %v988
        %v3155 = vpop.f32.mrf.mxu0
        %v3156 = vadd.f32 %v3136, %v3155
        %3157 = vdwg.mxu0
        %3158 = vmatpush.xpose.msra.mxu0 0.0
        %3159 = vmatpush.xpose.msra.mxu0 0.0
        %3160 = vmatpush.xpose.msra.mxu0 0.0
        %3161 = vmatpush.xpose.msra.mxu0 0.0
        %3162 = vmatpush.xpose.msra.mxu0 0.0
        %3163 = vmatpush.xpose.msra.mxu0 0.0
        %3164 = vmatpush.xpose.msra.mxu0 0.0
        %3165 = vmatpush.xpose.msra.mxu0 0.0
        %3166 = vmatpush.xpose.msra.mxu0 0.0
        %3167 = vmatpush.xpose.msra.mxu0 0.0
        %3168 = vmatpush.xpose.msra.mxu0 0.0
        %3169 = vmatpush.xpose.msra.mxu0 0.0
        %3170 = vmatpush.xpose.msra.mxu0 0.0
        %3171 = vmatpush.xpose.msra.mxu0 0.0
        %3172 = vmatpush.xpose.msra.mxu0 %v646
        %3173 = vmatpush.xpose.msra.mxu0 %v390
        %3174 = vmatmul.f32.gmra.mxu0 %v989
        %v3175 = vpop.f32.mrf.mxu0
        %v3176 = vadd.f32 %v3156, %v3175
        %3177 = vdwg.mxu0
        %3178 = vmatpush.xpose.msra.mxu0 0.0
        %3179 = vmatpush.xpose.msra.mxu0 0.0
        %3180 = vmatpush.xpose.msra.mxu0 0.0
        %3181 = vmatpush.xpose.msra.mxu0 0.0
        %3182 = vmatpush.xpose.msra.mxu0 0.0
        %3183 = vmatpush.xpose.msra.mxu0 0.0
        %3184 = vmatpush.xpose.msra.mxu0 0.0
        %3185 = vmatpush.xpose.msra.mxu0 0.0
        %3186 = vmatpush.xpose.msra.mxu0 0.0
        %3187 = vmatpush.xpose.msra.mxu0 0.0
        %3188 = vmatpush.xpose.msra.mxu0 0.0
        %3189 = vmatpush.xpose.msra.mxu0 0.0
        %3190 = vmatpush.xpose.msra.mxu0 0.0
        %3191 = vmatpush.xpose.msra.mxu0 0.0
        %3192 = vmatpush.xpose.msra.mxu0 %v647
        %3193 = vmatpush.xpose.msra.mxu0 %v391
        %3194 = vmatmul.f32.gmra.mxu0 %v990
        %v3195 = vpop.f32.mrf.mxu0
        %v3196 = vadd.f32 %v3176, %v3195
        %3197 = vdwg.mxu0
        %3198 = vmatpush.xpose.msra.mxu0 0.0
        %3199 = vmatpush.xpose.msra.mxu0 0.0
        %3200 = vmatpush.xpose.msra.mxu0 0.0
        %3201 = vmatpush.xpose.msra.mxu0 0.0
        %3202 = vmatpush.xpose.msra.mxu0 0.0
        %3203 = vmatpush.xpose.msra.mxu0 0.0
        %3204 = vmatpush.xpose.msra.mxu0 0.0
        %3205 = vmatpush.xpose.msra.mxu0 0.0
        %3206 = vmatpush.xpose.msra.mxu0 0.0
        %3207 = vmatpush.xpose.msra.mxu0 0.0
        %3208 = vmatpush.xpose.msra.mxu0 0.0
        %3209 = vmatpush.xpose.msra.mxu0 0.0
        %3210 = vmatpush.xpose.msra.mxu0 0.0
        %3211 = vmatpush.xpose.msra.mxu0 0.0
        %3212 = vmatpush.xpose.msra.mxu0 %v648
        %3213 = vmatpush.xpose.msra.mxu0 %v392
        %3214 = vmatmul.f32.gmra.mxu0 %v991
        %v3215 = vpop.f32.mrf.mxu0
        %v3216 = vadd.f32 %v3196, %v3215
        %3217 = vdwg.mxu0
        %3218 = vmatpush.xpose.msra.mxu0 0.0
        %3219 = vmatpush.xpose.msra.mxu0 0.0
        %3220 = vmatpush.xpose.msra.mxu0 0.0
        %3221 = vmatpush.xpose.msra.mxu0 0.0
        %3222 = vmatpush.xpose.msra.mxu0 0.0
        %3223 = vmatpush.xpose.msra.mxu0 0.0
        %3224 = vmatpush.xpose.msra.mxu0 0.0
        %3225 = vmatpush.xpose.msra.mxu0 0.0
        %3226 = vmatpush.xpose.msra.mxu0 0.0
        %3227 = vmatpush.xpose.msra.mxu0 0.0
        %3228 = vmatpush.xpose.msra.mxu0 0.0
        %3229 = vmatpush.xpose.msra.mxu0 0.0
        %3230 = vmatpush.xpose.msra.mxu0 0.0
        %3231 = vmatpush.xpose.msra.mxu0 0.0
        %3232 = vmatpush.xpose.msra.mxu0 %v649
        %3233 = vmatpush.xpose.msra.mxu0 %v393
        %3234 = vmatmul.f32.gmra.mxu0 %v994
        %v3235 = vpop.f32.mrf.mxu0
        %v3236 = vadd.f32 %v3216, %v3235
        %3237 = vdwg.mxu0
        %3238 = vmatpush.xpose.msra.mxu0 0.0
        %3239 = vmatpush.xpose.msra.mxu0 0.0
        %3240 = vmatpush.xpose.msra.mxu0 0.0
        %3241 = vmatpush.xpose.msra.mxu0 0.0
        %3242 = vmatpush.xpose.msra.mxu0 0.0
        %3243 = vmatpush.xpose.msra.mxu0 0.0
        %3244 = vmatpush.xpose.msra.mxu0 0.0
        %3245 = vmatpush.xpose.msra.mxu0 0.0
        %3246 = vmatpush.xpose.msra.mxu0 0.0
        %3247 = vmatpush.xpose.msra.mxu0 0.0
        %3248 = vmatpush.xpose.msra.mxu0 0.0
        %3249 = vmatpush.xpose.msra.mxu0 0.0
        %3250 = vmatpush.xpose.msra.mxu0 0.0
        %3251 = vmatpush.xpose.msra.mxu0 0.0
        %3252 = vmatpush.xpose.msra.mxu0 %v650
        %3253 = vmatpush.xpose.msra.mxu0 %v394
        %3254 = vmatmul.f32.gmra.mxu0 %v995
        %v3255 = vpop.f32.mrf.mxu0
        %v3256 = vadd.f32 %v3236, %v3255
        %3257 = vdwg.mxu0
        %3258 = vmatpush.xpose.msra.mxu0 0.0
        %3259 = vmatpush.xpose.msra.mxu0 0.0
        %3260 = vmatpush.xpose.msra.mxu0 0.0
        %3261 = vmatpush.xpose.msra.mxu0 0.0
        %3262 = vmatpush.xpose.msra.mxu0 0.0
        %3263 = vmatpush.xpose.msra.mxu0 0.0
        %3264 = vmatpush.xpose.msra.mxu0 0.0
        %3265 = vmatpush.xpose.msra.mxu0 0.0
        %3266 = vmatpush.xpose.msra.mxu0 0.0
        %3267 = vmatpush.xpose.msra.mxu0 0.0
        %3268 = vmatpush.xpose.msra.mxu0 0.0
        %3269 = vmatpush.xpose.msra.mxu0 0.0
        %3270 = vmatpush.xpose.msra.mxu0 0.0
        %3271 = vmatpush.xpose.msra.mxu0 0.0
        %3272 = vmatpush.xpose.msra.mxu0 %v651
        %3273 = vmatpush.xpose.msra.mxu0 %v395
        %3274 = vmatmul.f32.gmra.mxu0 %v996
        %v3275 = vpop.f32.mrf.mxu0
        %v3276 = vadd.f32 %v3256, %v3275
        %3277 = vdwg.mxu0
        %3278 = vmatpush.xpose.msra.mxu0 0.0
        %3279 = vmatpush.xpose.msra.mxu0 0.0
        %3280 = vmatpush.xpose.msra.mxu0 0.0
        %3281 = vmatpush.xpose.msra.mxu0 0.0
        %3282 = vmatpush.xpose.msra.mxu0 0.0
        %3283 = vmatpush.xpose.msra.mxu0 0.0
        %3284 = vmatpush.xpose.msra.mxu0 0.0
        %3285 = vmatpush.xpose.msra.mxu0 0.0
        %3286 = vmatpush.xpose.msra.mxu0 0.0
        %3287 = vmatpush.xpose.msra.mxu0 0.0
        %3288 = vmatpush.xpose.msra.mxu0 0.0
        %3289 = vmatpush.xpose.msra.mxu0 0.0
        %3290 = vmatpush.xpose.msra.mxu0 0.0
        %3291 = vmatpush.xpose.msra.mxu0 0.0
        %3292 = vmatpush.xpose.msra.mxu0 %v652
        %3293 = vmatpush.xpose.msra.mxu0 %v396
        %3294 = vmatmul.f32.gmra.mxu0 %v997
        %v3295 = vpop.f32.mrf.mxu0
        %v3296 = vadd.f32 %v3276, %v3295
        %3297 = vdwg.mxu0
        %3298 = vmatpush.xpose.msra.mxu0 0.0
        %3299 = vmatpush.xpose.msra.mxu0 0.0
        %3300 = vmatpush.xpose.msra.mxu0 0.0
        %3301 = vmatpush.xpose.msra.mxu0 0.0
        %3302 = vmatpush.xpose.msra.mxu0 0.0
        %3303 = vmatpush.xpose.msra.mxu0 0.0
        %3304 = vmatpush.xpose.msra.mxu0 0.0
        %3305 = vmatpush.xpose.msra.mxu0 0.0
        %3306 = vmatpush.xpose.msra.mxu0 0.0
        %3307 = vmatpush.xpose.msra.mxu0 0.0
        %3308 = vmatpush.xpose.msra.mxu0 0.0
        %3309 = vmatpush.xpose.msra.mxu0 0.0
        %3310 = vmatpush.xpose.msra.mxu0 0.0
        %3311 = vmatpush.xpose.msra.mxu0 0.0
        %3312 = vmatpush.xpose.msra.mxu0 %v653
        %3313 = vmatpush.xpose.msra.mxu0 %v397
        %3314 = vmatmul.f32.gmra.mxu0 %v998
        %v3315 = vpop.f32.mrf.mxu0
        %v3316 = vadd.f32 %v3296, %v3315
        %3317 = vdwg.mxu0
        %3318 = vmatpush.xpose.msra.mxu0 0.0
        %3319 = vmatpush.xpose.msra.mxu0 0.0
        %3320 = vmatpush.xpose.msra.mxu0 0.0
        %3321 = vmatpush.xpose.msra.mxu0 0.0
        %3322 = vmatpush.xpose.msra.mxu0 0.0
        %3323 = vmatpush.xpose.msra.mxu0 0.0
        %3324 = vmatpush.xpose.msra.mxu0 0.0
        %3325 = vmatpush.xpose.msra.mxu0 0.0
        %3326 = vmatpush.xpose.msra.mxu0 0.0
        %3327 = vmatpush.xpose.msra.mxu0 0.0
        %3328 = vmatpush.xpose.msra.mxu0 0.0
        %3329 = vmatpush.xpose.msra.mxu0 0.0
        %3330 = vmatpush.xpose.msra.mxu0 0.0
        %3331 = vmatpush.xpose.msra.mxu0 0.0
        %3332 = vmatpush.xpose.msra.mxu0 %v654
        %3333 = vmatpush.xpose.msra.mxu0 %v398
        %3334 = vmatmul.f32.gmra.mxu0 %v999
        %v3335 = vpop.f32.mrf.mxu0
        %v3336 = vadd.f32 %v3316, %v3335
        %3337 = vdwg.mxu0
        %3338 = vmatpush.xpose.msra.mxu0 0.0
        %3339 = vmatpush.xpose.msra.mxu0 0.0
        %3340 = vmatpush.xpose.msra.mxu0 0.0
        %3341 = vmatpush.xpose.msra.mxu0 0.0
        %3342 = vmatpush.xpose.msra.mxu0 0.0
        %3343 = vmatpush.xpose.msra.mxu0 0.0
        %3344 = vmatpush.xpose.msra.mxu0 0.0
        %3345 = vmatpush.xpose.msra.mxu0 0.0
        %3346 = vmatpush.xpose.msra.mxu0 0.0
        %3347 = vmatpush.xpose.msra.mxu0 0.0
        %3348 = vmatpush.xpose.msra.mxu0 0.0
        %3349 = vmatpush.xpose.msra.mxu0 0.0
        %3350 = vmatpush.xpose.msra.mxu0 0.0
        %3351 = vmatpush.xpose.msra.mxu0 0.0
        %3352 = vmatpush.xpose.msra.mxu0 %v655
        %3353 = vmatpush.xpose.msra.mxu0 %v399
        %3354 = vmatmul.f32.gmra.mxu0 %v1000
        %v3355 = vpop.f32.mrf.mxu0
        %v3356 = vadd.f32 %v3336, %v3355
        %3357 = vdwg.mxu0
        %3358 = vmatpush.xpose.msra.mxu0 0.0
        %3359 = vmatpush.xpose.msra.mxu0 0.0
        %3360 = vmatpush.xpose.msra.mxu0 0.0
        %3361 = vmatpush.xpose.msra.mxu0 0.0
        %3362 = vmatpush.xpose.msra.mxu0 0.0
        %3363 = vmatpush.xpose.msra.mxu0 0.0
        %3364 = vmatpush.xpose.msra.mxu0 0.0
        %3365 = vmatpush.xpose.msra.mxu0 0.0
        %3366 = vmatpush.xpose.msra.mxu0 0.0
        %3367 = vmatpush.xpose.msra.mxu0 0.0
        %3368 = vmatpush.xpose.msra.mxu0 0.0
        %3369 = vmatpush.xpose.msra.mxu0 0.0
        %3370 = vmatpush.xpose.msra.mxu0 0.0
        %3371 = vmatpush.xpose.msra.mxu0 0.0
        %3372 = vmatpush.xpose.msra.mxu0 %v656
        %3373 = vmatpush.xpose.msra.mxu0 %v400
        %3374 = vmatmul.f32.gmra.mxu0 %v1001
        %v3375 = vpop.f32.mrf.mxu0
        %v3376 = vadd.f32 %v3356, %v3375
        %3377 = vdwg.mxu0
        %3378 = vmatpush.xpose.msra.mxu0 0.0
        %3379 = vmatpush.xpose.msra.mxu0 0.0
        %3380 = vmatpush.xpose.msra.mxu0 0.0
        %3381 = vmatpush.xpose.msra.mxu0 0.0
        %3382 = vmatpush.xpose.msra.mxu0 0.0
        %3383 = vmatpush.xpose.msra.mxu0 0.0
        %3384 = vmatpush.xpose.msra.mxu0 0.0
        %3385 = vmatpush.xpose.msra.mxu0 0.0
        %3386 = vmatpush.xpose.msra.mxu0 0.0
        %3387 = vmatpush.xpose.msra.mxu0 0.0
        %3388 = vmatpush.xpose.msra.mxu0 0.0
        %3389 = vmatpush.xpose.msra.mxu0 0.0
        %3390 = vmatpush.xpose.msra.mxu0 0.0
        %3391 = vmatpush.xpose.msra.mxu0 0.0
        %3392 = vmatpush.xpose.msra.mxu0 %v657
        %3393 = vmatpush.xpose.msra.mxu0 %v401
        %3394 = vmatmul.f32.gmra.mxu0 %v1004
        %v3395 = vpop.f32.mrf.mxu0
        %v3396 = vadd.f32 %v3376, %v3395
        %3397 = vdwg.mxu0
        %3398 = vmatpush.xpose.msra.mxu0 0.0
        %3399 = vmatpush.xpose.msra.mxu0 0.0
        %3400 = vmatpush.xpose.msra.mxu0 0.0
        %3401 = vmatpush.xpose.msra.mxu0 0.0
        %3402 = vmatpush.xpose.msra.mxu0 0.0
        %3403 = vmatpush.xpose.msra.mxu0 0.0
        %3404 = vmatpush.xpose.msra.mxu0 0.0
        %3405 = vmatpush.xpose.msra.mxu0 0.0
        %3406 = vmatpush.xpose.msra.mxu0 0.0
        %3407 = vmatpush.xpose.msra.mxu0 0.0
        %3408 = vmatpush.xpose.msra.mxu0 0.0
        %3409 = vmatpush.xpose.msra.mxu0 0.0
        %3410 = vmatpush.xpose.msra.mxu0 0.0
        %3411 = vmatpush.xpose.msra.mxu0 0.0
        %3412 = vmatpush.xpose.msra.mxu0 %v658
        %3413 = vmatpush.xpose.msra.mxu0 %v402
        %3414 = vmatmul.f32.gmra.mxu0 %v1005
        %v3415 = vpop.f32.mrf.mxu0
        %v3416 = vadd.f32 %v3396, %v3415
        %3417 = vdwg.mxu0
        %3418 = vmatpush.xpose.msra.mxu0 0.0
        %3419 = vmatpush.xpose.msra.mxu0 0.0
        %3420 = vmatpush.xpose.msra.mxu0 0.0
        %3421 = vmatpush.xpose.msra.mxu0 0.0
        %3422 = vmatpush.xpose.msra.mxu0 0.0
        %3423 = vmatpush.xpose.msra.mxu0 0.0
        %3424 = vmatpush.xpose.msra.mxu0 0.0
        %3425 = vmatpush.xpose.msra.mxu0 0.0
        %3426 = vmatpush.xpose.msra.mxu0 0.0
        %3427 = vmatpush.xpose.msra.mxu0 0.0
        %3428 = vmatpush.xpose.msra.mxu0 0.0
        %3429 = vmatpush.xpose.msra.mxu0 0.0
        %3430 = vmatpush.xpose.msra.mxu0 0.0
        %3431 = vmatpush.xpose.msra.mxu0 0.0
        %3432 = vmatpush.xpose.msra.mxu0 %v659
        %3433 = vmatpush.xpose.msra.mxu0 %v403
        %3434 = vmatmul.f32.gmra.mxu0 %v1006
        %v3435 = vpop.f32.mrf.mxu0
        %v3436 = vadd.f32 %v3416, %v3435
        %3437 = vdwg.mxu0
        %3438 = vmatpush.xpose.msra.mxu0 0.0
        %3439 = vmatpush.xpose.msra.mxu0 0.0
        %3440 = vmatpush.xpose.msra.mxu0 0.0
        %3441 = vmatpush.xpose.msra.mxu0 0.0
        %3442 = vmatpush.xpose.msra.mxu0 0.0
        %3443 = vmatpush.xpose.msra.mxu0 0.0
        %3444 = vmatpush.xpose.msra.mxu0 0.0
        %3445 = vmatpush.xpose.msra.mxu0 0.0
        %3446 = vmatpush.xpose.msra.mxu0 0.0
        %3447 = vmatpush.xpose.msra.mxu0 0.0
        %3448 = vmatpush.xpose.msra.mxu0 0.0
        %3449 = vmatpush.xpose.msra.mxu0 0.0
        %3450 = vmatpush.xpose.msra.mxu0 0.0
        %3451 = vmatpush.xpose.msra.mxu0 0.0
        %3452 = vmatpush.xpose.msra.mxu0 %v660
        %3453 = vmatpush.xpose.msra.mxu0 %v404
        %3454 = vmatmul.f32.gmra.mxu0 %v1007
        %v3455 = vpop.f32.mrf.mxu0
        %v3456 = vadd.f32 %v3436, %v3455
        %3457 = vdwg.mxu0
        %3458 = vmatpush.xpose.msra.mxu0 0.0
        %3459 = vmatpush.xpose.msra.mxu0 0.0
        %3460 = vmatpush.xpose.msra.mxu0 0.0
        %3461 = vmatpush.xpose.msra.mxu0 0.0
        %3462 = vmatpush.xpose.msra.mxu0 0.0
        %3463 = vmatpush.xpose.msra.mxu0 0.0
        %3464 = vmatpush.xpose.msra.mxu0 0.0
        %3465 = vmatpush.xpose.msra.mxu0 0.0
        %3466 = vmatpush.xpose.msra.mxu0 0.0
        %3467 = vmatpush.xpose.msra.mxu0 0.0
        %3468 = vmatpush.xpose.msra.mxu0 0.0
        %3469 = vmatpush.xpose.msra.mxu0 0.0
        %3470 = vmatpush.xpose.msra.mxu0 0.0
        %3471 = vmatpush.xpose.msra.mxu0 0.0
        %3472 = vmatpush.xpose.msra.mxu0 %v661
        %3473 = vmatpush.xpose.msra.mxu0 %v405
        %3474 = vmatmul.f32.gmra.mxu0 %v1008
        %v3475 = vpop.f32.mrf.mxu0
        %v3476 = vadd.f32 %v3456, %v3475
        %3477 = vdwg.mxu0
        %3478 = vmatpush.xpose.msra.mxu0 0.0
        %3479 = vmatpush.xpose.msra.mxu0 0.0
        %3480 = vmatpush.xpose.msra.mxu0 0.0
        %3481 = vmatpush.xpose.msra.mxu0 0.0
        %3482 = vmatpush.xpose.msra.mxu0 0.0
        %3483 = vmatpush.xpose.msra.mxu0 0.0
        %3484 = vmatpush.xpose.msra.mxu0 0.0
        %3485 = vmatpush.xpose.msra.mxu0 0.0
        %3486 = vmatpush.xpose.msra.mxu0 0.0
        %3487 = vmatpush.xpose.msra.mxu0 0.0
        %3488 = vmatpush.xpose.msra.mxu0 0.0
        %3489 = vmatpush.xpose.msra.mxu0 0.0
        %3490 = vmatpush.xpose.msra.mxu0 0.0
        %3491 = vmatpush.xpose.msra.mxu0 0.0
        %3492 = vmatpush.xpose.msra.mxu0 %v662
        %3493 = vmatpush.xpose.msra.mxu0 %v406
        %3494 = vmatmul.f32.gmra.mxu0 %v1009
        %v3495 = vpop.f32.mrf.mxu0
        %v3496 = vadd.f32 %v3476, %v3495
        %3497 = vdwg.mxu0
        %3498 = vmatpush.xpose.msra.mxu0 0.0
        %3499 = vmatpush.xpose.msra.mxu0 0.0
        %3500 = vmatpush.xpose.msra.mxu0 0.0
        %3501 = vmatpush.xpose.msra.mxu0 0.0
        %3502 = vmatpush.xpose.msra.mxu0 0.0
        %3503 = vmatpush.xpose.msra.mxu0 0.0
        %3504 = vmatpush.xpose.msra.mxu0 0.0
        %3505 = vmatpush.xpose.msra.mxu0 0.0
        %3506 = vmatpush.xpose.msra.mxu0 0.0
        %3507 = vmatpush.xpose.msra.mxu0 0.0
        %3508 = vmatpush.xpose.msra.mxu0 0.0
        %3509 = vmatpush.xpose.msra.mxu0 0.0
        %3510 = vmatpush.xpose.msra.mxu0 0.0
        %3511 = vmatpush.xpose.msra.mxu0 0.0
        %3512 = vmatpush.xpose.msra.mxu0 %v663
        %3513 = vmatpush.xpose.msra.mxu0 %v407
        %3514 = vmatmul.f32.gmra.mxu0 %v1010
        %v3515 = vpop.f32.mrf.mxu0
        %v3516 = vadd.f32 %v3496, %v3515
        %3517 = vdwg.mxu0
        %3518 = vmatpush.xpose.msra.mxu0 0.0
        %3519 = vmatpush.xpose.msra.mxu0 0.0
        %3520 = vmatpush.xpose.msra.mxu0 0.0
        %3521 = vmatpush.xpose.msra.mxu0 0.0
        %3522 = vmatpush.xpose.msra.mxu0 0.0
        %3523 = vmatpush.xpose.msra.mxu0 0.0
        %3524 = vmatpush.xpose.msra.mxu0 0.0
        %3525 = vmatpush.xpose.msra.mxu0 0.0
        %3526 = vmatpush.xpose.msra.mxu0 0.0
        %3527 = vmatpush.xpose.msra.mxu0 0.0
        %3528 = vmatpush.xpose.msra.mxu0 0.0
        %3529 = vmatpush.xpose.msra.mxu0 0.0
        %3530 = vmatpush.xpose.msra.mxu0 0.0
        %3531 = vmatpush.xpose.msra.mxu0 0.0
        %3532 = vmatpush.xpose.msra.mxu0 %v664
        %3533 = vmatpush.xpose.msra.mxu0 %v408
        %3534 = vmatmul.f32.gmra.mxu0 %v1011
        %v3535 = vpop.f32.mrf.mxu0
        %v3536 = vadd.f32 %v3516, %v3535
        %3537 = vdwg.mxu0
        %3538 = vmatpush.xpose.msra.mxu0 0.0
        %3539 = vmatpush.xpose.msra.mxu0 0.0
        %3540 = vmatpush.xpose.msra.mxu0 0.0
        %3541 = vmatpush.xpose.msra.mxu0 0.0
        %3542 = vmatpush.xpose.msra.mxu0 0.0
        %3543 = vmatpush.xpose.msra.mxu0 0.0
        %3544 = vmatpush.xpose.msra.mxu0 0.0
        %3545 = vmatpush.xpose.msra.mxu0 0.0
        %3546 = vmatpush.xpose.msra.mxu0 0.0
        %3547 = vmatpush.xpose.msra.mxu0 0.0
        %3548 = vmatpush.xpose.msra.mxu0 0.0
        %3549 = vmatpush.xpose.msra.mxu0 0.0
        %3550 = vmatpush.xpose.msra.mxu0 0.0
        %3551 = vmatpush.xpose.msra.mxu0 0.0
        %3552 = vmatpush.xpose.msra.mxu0 %v665
        %3553 = vmatpush.xpose.msra.mxu0 %v409
        %3554 = vmatmul.f32.gmra.mxu0 %v1014
        %v3555 = vpop.f32.mrf.mxu0
        %v3556 = vadd.f32 %v3536, %v3555
        %3557 = vdwg.mxu0
        %3558 = vmatpush.xpose.msra.mxu0 0.0
        %3559 = vmatpush.xpose.msra.mxu0 0.0
        %3560 = vmatpush.xpose.msra.mxu0 0.0
        %3561 = vmatpush.xpose.msra.mxu0 0.0
        %3562 = vmatpush.xpose.msra.mxu0 0.0
        %3563 = vmatpush.xpose.msra.mxu0 0.0
        %3564 = vmatpush.xpose.msra.mxu0 0.0
        %3565 = vmatpush.xpose.msra.mxu0 0.0
        %3566 = vmatpush.xpose.msra.mxu0 0.0
        %3567 = vmatpush.xpose.msra.mxu0 0.0
        %3568 = vmatpush.xpose.msra.mxu0 0.0
        %3569 = vmatpush.xpose.msra.mxu0 0.0
        %3570 = vmatpush.xpose.msra.mxu0 0.0
        %3571 = vmatpush.xpose.msra.mxu0 0.0
        %3572 = vmatpush.xpose.msra.mxu0 %v666
        %3573 = vmatpush.xpose.msra.mxu0 %v410
        %3574 = vmatmul.f32.gmra.mxu0 %v1015
        %v3575 = vpop.f32.mrf.mxu0
        %v3576 = vadd.f32 %v3556, %v3575
        %3577 = vdwg.mxu0
        %3578 = vmatpush.xpose.msra.mxu0 0.0
        %3579 = vmatpush.xpose.msra.mxu0 0.0
        %3580 = vmatpush.xpose.msra.mxu0 0.0
        %3581 = vmatpush.xpose.msra.mxu0 0.0
        %3582 = vmatpush.xpose.msra.mxu0 0.0
        %3583 = vmatpush.xpose.msra.mxu0 0.0
        %3584 = vmatpush.xpose.msra.mxu0 0.0
        %3585 = vmatpush.xpose.msra.mxu0 0.0
        %3586 = vmatpush.xpose.msra.mxu0 0.0
        %3587 = vmatpush.xpose.msra.mxu0 0.0
        %3588 = vmatpush.xpose.msra.mxu0 0.0
        %3589 = vmatpush.xpose.msra.mxu0 0.0
        %3590 = vmatpush.xpose.msra.mxu0 0.0
        %3591 = vmatpush.xpose.msra.mxu0 0.0
        %3592 = vmatpush.xpose.msra.mxu0 %v667
        %3593 = vmatpush.xpose.msra.mxu0 %v411
        %3594 = vmatmul.f32.gmra.mxu0 %v1016
        %v3595 = vpop.f32.mrf.mxu0
        %v3596 = vadd.f32 %v3576, %v3595
        %3597 = vdwg.mxu0
        %3598 = vmatpush.xpose.msra.mxu0 0.0
        %3599 = vmatpush.xpose.msra.mxu0 0.0
        %3600 = vmatpush.xpose.msra.mxu0 0.0
        %3601 = vmatpush.xpose.msra.mxu0 0.0
        %3602 = vmatpush.xpose.msra.mxu0 0.0
        %3603 = vmatpush.xpose.msra.mxu0 0.0
        %3604 = vmatpush.xpose.msra.mxu0 0.0
        %3605 = vmatpush.xpose.msra.mxu0 0.0
        %3606 = vmatpush.xpose.msra.mxu0 0.0
        %3607 = vmatpush.xpose.msra.mxu0 0.0
        %3608 = vmatpush.xpose.msra.mxu0 0.0
        %3609 = vmatpush.xpose.msra.mxu0 0.0
        %3610 = vmatpush.xpose.msra.mxu0 0.0
        %3611 = vmatpush.xpose.msra.mxu0 0.0
        %3612 = vmatpush.xpose.msra.mxu0 %v668
        %3613 = vmatpush.xpose.msra.mxu0 %v412
        %3614 = vmatmul.f32.gmra.mxu0 %v1017
        %v3615 = vpop.f32.mrf.mxu0
        %v3616 = vadd.f32 %v3596, %v3615
        %3617 = vdwg.mxu0
        %3618 = vmatpush.xpose.msra.mxu0 0.0
        %3619 = vmatpush.xpose.msra.mxu0 0.0
        %3620 = vmatpush.xpose.msra.mxu0 0.0
        %3621 = vmatpush.xpose.msra.mxu0 0.0
        %3622 = vmatpush.xpose.msra.mxu0 0.0
        %3623 = vmatpush.xpose.msra.mxu0 0.0
        %3624 = vmatpush.xpose.msra.mxu0 0.0
        %3625 = vmatpush.xpose.msra.mxu0 0.0
        %3626 = vmatpush.xpose.msra.mxu0 0.0
        %3627 = vmatpush.xpose.msra.mxu0 0.0
        %3628 = vmatpush.xpose.msra.mxu0 0.0
        %3629 = vmatpush.xpose.msra.mxu0 0.0
        %3630 = vmatpush.xpose.msra.mxu0 0.0
        %3631 = vmatpush.xpose.msra.mxu0 0.0
        %3632 = vmatpush.xpose.msra.mxu0 %v669
        %3633 = vmatpush.xpose.msra.mxu0 %v413
        %3634 = vmatmul.f32.gmra.mxu0 %v1018
        %v3635 = vpop.f32.mrf.mxu0
        %v3636 = vadd.f32 %v3616, %v3635
        %3637 = vdwg.mxu0
        %3638 = vmatpush.xpose.msra.mxu0 0.0
        %3639 = vmatpush.xpose.msra.mxu0 0.0
        %3640 = vmatpush.xpose.msra.mxu0 0.0
        %3641 = vmatpush.xpose.msra.mxu0 0.0
        %3642 = vmatpush.xpose.msra.mxu0 0.0
        %3643 = vmatpush.xpose.msra.mxu0 0.0
        %3644 = vmatpush.xpose.msra.mxu0 0.0
        %3645 = vmatpush.xpose.msra.mxu0 0.0
        %3646 = vmatpush.xpose.msra.mxu0 0.0
        %3647 = vmatpush.xpose.msra.mxu0 0.0
        %3648 = vmatpush.xpose.msra.mxu0 0.0
        %3649 = vmatpush.xpose.msra.mxu0 0.0
        %3650 = vmatpush.xpose.msra.mxu0 0.0
        %3651 = vmatpush.xpose.msra.mxu0 0.0
        %3652 = vmatpush.xpose.msra.mxu0 %v670
        %3653 = vmatpush.xpose.msra.mxu0 %v414
        %3654 = vmatmul.f32.gmra.mxu0 %v1019
        %v3655 = vpop.f32.mrf.mxu0
        %v3656 = vadd.f32 %v3636, %v3655
        %3657 = vdwg.mxu0
        %3658 = vmatpush.xpose.msra.mxu0 0.0
        %3659 = vmatpush.xpose.msra.mxu0 0.0
        %3660 = vmatpush.xpose.msra.mxu0 0.0
        %3661 = vmatpush.xpose.msra.mxu0 0.0
        %3662 = vmatpush.xpose.msra.mxu0 0.0
        %3663 = vmatpush.xpose.msra.mxu0 0.0
        %3664 = vmatpush.xpose.msra.mxu0 0.0
        %3665 = vmatpush.xpose.msra.mxu0 0.0
        %3666 = vmatpush.xpose.msra.mxu0 0.0
        %3667 = vmatpush.xpose.msra.mxu0 0.0
        %3668 = vmatpush.xpose.msra.mxu0 0.0
        %3669 = vmatpush.xpose.msra.mxu0 0.0
        %3670 = vmatpush.xpose.msra.mxu0 0.0
        %3671 = vmatpush.xpose.msra.mxu0 0.0
        %3672 = vmatpush.xpose.msra.mxu0 %v671
        %3673 = vmatpush.xpose.msra.mxu0 %v415
        %3674 = vmatmul.f32.gmra.mxu0 %v1020
        %v3675 = vpop.f32.mrf.mxu0
        %v3676 = vadd.f32 %v3656, %v3675
        %3677 = vdwg.mxu0
        %3678 = vmatpush.xpose.msra.mxu0 0.0
        %3679 = vmatpush.xpose.msra.mxu0 0.0
        %3680 = vmatpush.xpose.msra.mxu0 0.0
        %3681 = vmatpush.xpose.msra.mxu0 0.0
        %3682 = vmatpush.xpose.msra.mxu0 0.0
        %3683 = vmatpush.xpose.msra.mxu0 0.0
        %3684 = vmatpush.xpose.msra.mxu0 0.0
        %3685 = vmatpush.xpose.msra.mxu0 0.0
        %3686 = vmatpush.xpose.msra.mxu0 0.0
        %3687 = vmatpush.xpose.msra.mxu0 0.0
        %3688 = vmatpush.xpose.msra.mxu0 0.0
        %3689 = vmatpush.xpose.msra.mxu0 0.0
        %3690 = vmatpush.xpose.msra.mxu0 0.0
        %3691 = vmatpush.xpose.msra.mxu0 0.0
        %3692 = vmatpush.xpose.msra.mxu0 %v672
        %3693 = vmatpush.xpose.msra.mxu0 %v416
        %3694 = vmatmul.f32.gmra.mxu0 %v1021
        %v3695 = vpop.f32.mrf.mxu0
        %v3696 = vadd.f32 %v3676, %v3695
        %3697 = vdwg.mxu0
        %3698 = vmatpush.xpose.msra.mxu0 0.0
        %3699 = vmatpush.xpose.msra.mxu0 0.0
        %3700 = vmatpush.xpose.msra.mxu0 0.0
        %3701 = vmatpush.xpose.msra.mxu0 0.0
        %3702 = vmatpush.xpose.msra.mxu0 0.0
        %3703 = vmatpush.xpose.msra.mxu0 0.0
        %3704 = vmatpush.xpose.msra.mxu0 0.0
        %3705 = vmatpush.xpose.msra.mxu0 0.0
        %3706 = vmatpush.xpose.msra.mxu0 0.0
        %3707 = vmatpush.xpose.msra.mxu0 0.0
        %3708 = vmatpush.xpose.msra.mxu0 0.0
        %3709 = vmatpush.xpose.msra.mxu0 0.0
        %3710 = vmatpush.xpose.msra.mxu0 0.0
        %3711 = vmatpush.xpose.msra.mxu0 0.0
        %3712 = vmatpush.xpose.msra.mxu0 %v673
        %3713 = vmatpush.xpose.msra.mxu0 %v417
        %3714 = vmatmul.f32.gmra.mxu0 %v1024
        %v3715 = vpop.f32.mrf.mxu0
        %v3716 = vadd.f32 %v3696, %v3715
        %3717 = vdwg.mxu0
        %3718 = vmatpush.xpose.msra.mxu0 0.0
        %3719 = vmatpush.xpose.msra.mxu0 0.0
        %3720 = vmatpush.xpose.msra.mxu0 0.0
        %3721 = vmatpush.xpose.msra.mxu0 0.0
        %3722 = vmatpush.xpose.msra.mxu0 0.0
        %3723 = vmatpush.xpose.msra.mxu0 0.0
        %3724 = vmatpush.xpose.msra.mxu0 0.0
        %3725 = vmatpush.xpose.msra.mxu0 0.0
        %3726 = vmatpush.xpose.msra.mxu0 0.0
        %3727 = vmatpush.xpose.msra.mxu0 0.0
        %3728 = vmatpush.xpose.msra.mxu0 0.0
        %3729 = vmatpush.xpose.msra.mxu0 0.0
        %3730 = vmatpush.xpose.msra.mxu0 0.0
        %3731 = vmatpush.xpose.msra.mxu0 0.0
        %3732 = vmatpush.xpose.msra.mxu0 %v674
        %3733 = vmatpush.xpose.msra.mxu0 %v418
        %3734 = vmatmul.f32.gmra.mxu0 %v1025
        %v3735 = vpop.f32.mrf.mxu0
        %v3736 = vadd.f32 %v3716, %v3735
        %3737 = vdwg.mxu0
        %3738 = vmatpush.xpose.msra.mxu0 0.0
        %3739 = vmatpush.xpose.msra.mxu0 0.0
        %3740 = vmatpush.xpose.msra.mxu0 0.0
        %3741 = vmatpush.xpose.msra.mxu0 0.0
        %3742 = vmatpush.xpose.msra.mxu0 0.0
        %3743 = vmatpush.xpose.msra.mxu0 0.0
        %3744 = vmatpush.xpose.msra.mxu0 0.0
        %3745 = vmatpush.xpose.msra.mxu0 0.0
        %3746 = vmatpush.xpose.msra.mxu0 0.0
        %3747 = vmatpush.xpose.msra.mxu0 0.0
        %3748 = vmatpush.xpose.msra.mxu0 0.0
        %3749 = vmatpush.xpose.msra.mxu0 0.0
        %3750 = vmatpush.xpose.msra.mxu0 0.0
        %3751 = vmatpush.xpose.msra.mxu0 0.0
        %3752 = vmatpush.xpose.msra.mxu0 %v675
        %3753 = vmatpush.xpose.msra.mxu0 %v419
        %3754 = vmatmul.f32.gmra.mxu0 %v1026
        %v3755 = vpop.f32.mrf.mxu0
        %v3756 = vadd.f32 %v3736, %v3755
        %3757 = vdwg.mxu0
        %3758 = vmatpush.xpose.msra.mxu0 0.0
        %3759 = vmatpush.xpose.msra.mxu0 0.0
        %3760 = vmatpush.xpose.msra.mxu0 0.0
        %3761 = vmatpush.xpose.msra.mxu0 0.0
        %3762 = vmatpush.xpose.msra.mxu0 0.0
        %3763 = vmatpush.xpose.msra.mxu0 0.0
        %3764 = vmatpush.xpose.msra.mxu0 0.0
        %3765 = vmatpush.xpose.msra.mxu0 0.0
        %3766 = vmatpush.xpose.msra.mxu0 0.0
        %3767 = vmatpush.xpose.msra.mxu0 0.0
        %3768 = vmatpush.xpose.msra.mxu0 0.0
        %3769 = vmatpush.xpose.msra.mxu0 0.0
        %3770 = vmatpush.xpose.msra.mxu0 0.0
        %3771 = vmatpush.xpose.msra.mxu0 0.0
        %3772 = vmatpush.xpose.msra.mxu0 %v676
        %3773 = vmatpush.xpose.msra.mxu0 %v420
        %3774 = vmatmul.f32.gmra.mxu0 %v1027
        %v3775 = vpop.f32.mrf.mxu0
        %v3776 = vadd.f32 %v3756, %v3775
        %3777 = vdwg.mxu0
        %3778 = vmatpush.xpose.msra.mxu0 0.0
        %3779 = vmatpush.xpose.msra.mxu0 0.0
        %3780 = vmatpush.xpose.msra.mxu0 0.0
        %3781 = vmatpush.xpose.msra.mxu0 0.0
        %3782 = vmatpush.xpose.msra.mxu0 0.0
        %3783 = vmatpush.xpose.msra.mxu0 0.0
        %3784 = vmatpush.xpose.msra.mxu0 0.0
        %3785 = vmatpush.xpose.msra.mxu0 0.0
        %3786 = vmatpush.xpose.msra.mxu0 0.0
        %3787 = vmatpush.xpose.msra.mxu0 0.0
        %3788 = vmatpush.xpose.msra.mxu0 0.0
        %3789 = vmatpush.xpose.msra.mxu0 0.0
        %3790 = vmatpush.xpose.msra.mxu0 0.0
        %3791 = vmatpush.xpose.msra.mxu0 0.0
        %3792 = vmatpush.xpose.msra.mxu0 %v677
        %3793 = vmatpush.xpose.msra.mxu0 %v421
        %3794 = vmatmul.f32.gmra.mxu0 %v1028
        %v3795 = vpop.f32.mrf.mxu0
        %v3796 = vadd.f32 %v3776, %v3795
        %3797 = vdwg.mxu0
        %3798 = vmatpush.xpose.msra.mxu0 0.0
        %3799 = vmatpush.xpose.msra.mxu0 0.0
        %3800 = vmatpush.xpose.msra.mxu0 0.0
        %3801 = vmatpush.xpose.msra.mxu0 0.0
        %3802 = vmatpush.xpose.msra.mxu0 0.0
        %3803 = vmatpush.xpose.msra.mxu0 0.0
        %3804 = vmatpush.xpose.msra.mxu0 0.0
        %3805 = vmatpush.xpose.msra.mxu0 0.0
        %3806 = vmatpush.xpose.msra.mxu0 0.0
        %3807 = vmatpush.xpose.msra.mxu0 0.0
        %3808 = vmatpush.xpose.msra.mxu0 0.0
        %3809 = vmatpush.xpose.msra.mxu0 0.0
        %3810 = vmatpush.xpose.msra.mxu0 0.0
        %3811 = vmatpush.xpose.msra.mxu0 0.0
        %3812 = vmatpush.xpose.msra.mxu0 %v678
        %3813 = vmatpush.xpose.msra.mxu0 %v422
        %3814 = vmatmul.f32.gmra.mxu0 %v1029
        %v3815 = vpop.f32.mrf.mxu0
        %v3816 = vadd.f32 %v3796, %v3815
        %3817 = vdwg.mxu0
        %3818 = vmatpush.xpose.msra.mxu0 0.0
        %3819 = vmatpush.xpose.msra.mxu0 0.0
        %3820 = vmatpush.xpose.msra.mxu0 0.0
        %3821 = vmatpush.xpose.msra.mxu0 0.0
        %3822 = vmatpush.xpose.msra.mxu0 0.0
        %3823 = vmatpush.xpose.msra.mxu0 0.0
        %3824 = vmatpush.xpose.msra.mxu0 0.0
        %3825 = vmatpush.xpose.msra.mxu0 0.0
        %3826 = vmatpush.xpose.msra.mxu0 0.0
        %3827 = vmatpush.xpose.msra.mxu0 0.0
        %3828 = vmatpush.xpose.msra.mxu0 0.0
        %3829 = vmatpush.xpose.msra.mxu0 0.0
        %3830 = vmatpush.xpose.msra.mxu0 0.0
        %3831 = vmatpush.xpose.msra.mxu0 0.0
        %3832 = vmatpush.xpose.msra.mxu0 %v679
        %3833 = vmatpush.xpose.msra.mxu0 %v423
        %3834 = vmatmul.f32.gmra.mxu0 %v1030
        %v3835 = vpop.f32.mrf.mxu0
        %v3836 = vadd.f32 %v3816, %v3835
        %3837 = vdwg.mxu0
        %3838 = vmatpush.xpose.msra.mxu0 0.0
        %3839 = vmatpush.xpose.msra.mxu0 0.0
        %3840 = vmatpush.xpose.msra.mxu0 0.0
        %3841 = vmatpush.xpose.msra.mxu0 0.0
        %3842 = vmatpush.xpose.msra.mxu0 0.0
        %3843 = vmatpush.xpose.msra.mxu0 0.0
        %3844 = vmatpush.xpose.msra.mxu0 0.0
        %3845 = vmatpush.xpose.msra.mxu0 0.0
        %3846 = vmatpush.xpose.msra.mxu0 0.0
        %3847 = vmatpush.xpose.msra.mxu0 0.0
        %3848 = vmatpush.xpose.msra.mxu0 0.0
        %3849 = vmatpush.xpose.msra.mxu0 0.0
        %3850 = vmatpush.xpose.msra.mxu0 0.0
        %3851 = vmatpush.xpose.msra.mxu0 0.0
        %3852 = vmatpush.xpose.msra.mxu0 %v680
        %3853 = vmatpush.xpose.msra.mxu0 %v424
        %3854 = vmatmul.f32.gmra.mxu0 %v1031
        %v3855 = vpop.f32.mrf.mxu0
        %v3856 = vadd.f32 %v3836, %v3855
        %3857 = vdwg.mxu0
        %3858 = vmatpush.xpose.msra.mxu0 0.0
        %3859 = vmatpush.xpose.msra.mxu0 0.0
        %3860 = vmatpush.xpose.msra.mxu0 0.0
        %3861 = vmatpush.xpose.msra.mxu0 0.0
        %3862 = vmatpush.xpose.msra.mxu0 0.0
        %3863 = vmatpush.xpose.msra.mxu0 0.0
        %3864 = vmatpush.xpose.msra.mxu0 0.0
        %3865 = vmatpush.xpose.msra.mxu0 0.0
        %3866 = vmatpush.xpose.msra.mxu0 0.0
        %3867 = vmatpush.xpose.msra.mxu0 0.0
        %3868 = vmatpush.xpose.msra.mxu0 0.0
        %3869 = vmatpush.xpose.msra.mxu0 0.0
        %3870 = vmatpush.xpose.msra.mxu0 0.0
        %3871 = vmatpush.xpose.msra.mxu0 0.0
        %3872 = vmatpush.xpose.msra.mxu0 %v681
        %3873 = vmatpush.xpose.msra.mxu0 %v425
        %3874 = vmatmul.f32.gmra.mxu0 %v1034
        %v3875 = vpop.f32.mrf.mxu0
        %v3876 = vadd.f32 %v3856, %v3875
        %3877 = vdwg.mxu0
        %3878 = vmatpush.xpose.msra.mxu0 0.0
        %3879 = vmatpush.xpose.msra.mxu0 0.0
        %3880 = vmatpush.xpose.msra.mxu0 0.0
        %3881 = vmatpush.xpose.msra.mxu0 0.0
        %3882 = vmatpush.xpose.msra.mxu0 0.0
        %3883 = vmatpush.xpose.msra.mxu0 0.0
        %3884 = vmatpush.xpose.msra.mxu0 0.0
        %3885 = vmatpush.xpose.msra.mxu0 0.0
        %3886 = vmatpush.xpose.msra.mxu0 0.0
        %3887 = vmatpush.xpose.msra.mxu0 0.0
        %3888 = vmatpush.xpose.msra.mxu0 0.0
        %3889 = vmatpush.xpose.msra.mxu0 0.0
        %3890 = vmatpush.xpose.msra.mxu0 0.0
        %3891 = vmatpush.xpose.msra.mxu0 0.0
        %3892 = vmatpush.xpose.msra.mxu0 %v682
        %3893 = vmatpush.xpose.msra.mxu0 %v426
        %3894 = vmatmul.f32.gmra.mxu0 %v1035
        %v3895 = vpop.f32.mrf.mxu0
        %v3896 = vadd.f32 %v3876, %v3895
        %3897 = vdwg.mxu0
        %3898 = vmatpush.xpose.msra.mxu0 0.0
        %3899 = vmatpush.xpose.msra.mxu0 0.0
        %3900 = vmatpush.xpose.msra.mxu0 0.0
        %3901 = vmatpush.xpose.msra.mxu0 0.0
        %3902 = vmatpush.xpose.msra.mxu0 0.0
        %3903 = vmatpush.xpose.msra.mxu0 0.0
        %3904 = vmatpush.xpose.msra.mxu0 0.0
        %3905 = vmatpush.xpose.msra.mxu0 0.0
        %3906 = vmatpush.xpose.msra.mxu0 0.0
        %3907 = vmatpush.xpose.msra.mxu0 0.0
        %3908 = vmatpush.xpose.msra.mxu0 0.0
        %3909 = vmatpush.xpose.msra.mxu0 0.0
        %3910 = vmatpush.xpose.msra.mxu0 0.0
        %3911 = vmatpush.xpose.msra.mxu0 0.0
        %3912 = vmatpush.xpose.msra.mxu0 %v683
        %3913 = vmatpush.xpose.msra.mxu0 %v427
        %3914 = vmatmul.f32.gmra.mxu0 %v1036
        %v3915 = vpop.f32.mrf.mxu0
        %v3916 = vadd.f32 %v3896, %v3915
        %3917 = vdwg.mxu0
        %3918 = vmatpush.xpose.msra.mxu0 0.0
        %3919 = vmatpush.xpose.msra.mxu0 0.0
        %3920 = vmatpush.xpose.msra.mxu0 0.0
        %3921 = vmatpush.xpose.msra.mxu0 0.0
        %3922 = vmatpush.xpose.msra.mxu0 0.0
        %3923 = vmatpush.xpose.msra.mxu0 0.0
        %3924 = vmatpush.xpose.msra.mxu0 0.0
        %3925 = vmatpush.xpose.msra.mxu0 0.0
        %3926 = vmatpush.xpose.msra.mxu0 0.0
        %3927 = vmatpush.xpose.msra.mxu0 0.0
        %3928 = vmatpush.xpose.msra.mxu0 0.0
        %3929 = vmatpush.xpose.msra.mxu0 0.0
        %3930 = vmatpush.xpose.msra.mxu0 0.0
        %3931 = vmatpush.xpose.msra.mxu0 0.0
        %3932 = vmatpush.xpose.msra.mxu0 %v684
        %3933 = vmatpush.xpose.msra.mxu0 %v428
        %3934 = vmatmul.f32.gmra.mxu0 %v1037
        %v3935 = vpop.f32.mrf.mxu0
        %v3936 = vadd.f32 %v3916, %v3935
        %3937 = vdwg.mxu0
        %3938 = vmatpush.xpose.msra.mxu0 0.0
        %3939 = vmatpush.xpose.msra.mxu0 0.0
        %3940 = vmatpush.xpose.msra.mxu0 0.0
        %3941 = vmatpush.xpose.msra.mxu0 0.0
        %3942 = vmatpush.xpose.msra.mxu0 0.0
        %3943 = vmatpush.xpose.msra.mxu0 0.0
        %3944 = vmatpush.xpose.msra.mxu0 0.0
        %3945 = vmatpush.xpose.msra.mxu0 0.0
        %3946 = vmatpush.xpose.msra.mxu0 0.0
        %3947 = vmatpush.xpose.msra.mxu0 0.0
        %3948 = vmatpush.xpose.msra.mxu0 0.0
        %3949 = vmatpush.xpose.msra.mxu0 0.0
        %3950 = vmatpush.xpose.msra.mxu0 0.0
        %3951 = vmatpush.xpose.msra.mxu0 0.0
        %3952 = vmatpush.xpose.msra.mxu0 %v685
        %3953 = vmatpush.xpose.msra.mxu0 %v429
        %3954 = vmatmul.f32.gmra.mxu0 %v1038
        %v3955 = vpop.f32.mrf.mxu0
        %v3956 = vadd.f32 %v3936, %v3955
        %3957 = vdwg.mxu0
        %3958 = vmatpush.xpose.msra.mxu0 0.0
        %3959 = vmatpush.xpose.msra.mxu0 0.0
        %3960 = vmatpush.xpose.msra.mxu0 0.0
        %3961 = vmatpush.xpose.msra.mxu0 0.0
        %3962 = vmatpush.xpose.msra.mxu0 0.0
        %3963 = vmatpush.xpose.msra.mxu0 0.0
        %3964 = vmatpush.xpose.msra.mxu0 0.0
        %3965 = vmatpush.xpose.msra.mxu0 0.0
        %3966 = vmatpush.xpose.msra.mxu0 0.0
        %3967 = vmatpush.xpose.msra.mxu0 0.0
        %3968 = vmatpush.xpose.msra.mxu0 0.0
        %3969 = vmatpush.xpose.msra.mxu0 0.0
        %3970 = vmatpush.xpose.msra.mxu0 0.0
        %3971 = vmatpush.xpose.msra.mxu0 0.0
        %3972 = vmatpush.xpose.msra.mxu0 %v686
        %3973 = vmatpush.xpose.msra.mxu0 %v430
        %3974 = vmatmul.f32.gmra.mxu0 %v1039
        %v3975 = vpop.f32.mrf.mxu0
        %v3976 = vadd.f32 %v3956, %v3975
        %3977 = vdwg.mxu0
        %3978 = vmatpush.xpose.msra.mxu0 0.0
        %3979 = vmatpush.xpose.msra.mxu0 0.0
        %3980 = vmatpush.xpose.msra.mxu0 0.0
        %3981 = vmatpush.xpose.msra.mxu0 0.0
        %3982 = vmatpush.xpose.msra.mxu0 0.0
        %3983 = vmatpush.xpose.msra.mxu0 0.0
        %3984 = vmatpush.xpose.msra.mxu0 0.0
        %3985 = vmatpush.xpose.msra.mxu0 0.0
        %3986 = vmatpush.xpose.msra.mxu0 0.0
        %3987 = vmatpush.xpose.msra.mxu0 0.0
        %3988 = vmatpush.xpose.msra.mxu0 0.0
        %3989 = vmatpush.xpose.msra.mxu0 0.0
        %3990 = vmatpush.xpose.msra.mxu0 0.0
        %3991 = vmatpush.xpose.msra.mxu0 0.0
        %3992 = vmatpush.xpose.msra.mxu0 %v687
        %3993 = vmatpush.xpose.msra.mxu0 %v431
        %3994 = vmatmul.f32.gmra.mxu0 %v1040
        %v3995 = vpop.f32.mrf.mxu0
        %v3996 = vadd.f32 %v3976, %v3995
        %3997 = vdwg.mxu0
        %3998 = vmatpush.xpose.msra.mxu0 0.0
        %3999 = vmatpush.xpose.msra.mxu0 0.0
        %4000 = vmatpush.xpose.msra.mxu0 0.0
        %4001 = vmatpush.xpose.msra.mxu0 0.0
        %4002 = vmatpush.xpose.msra.mxu0 0.0
        %4003 = vmatpush.xpose.msra.mxu0 0.0
        %4004 = vmatpush.xpose.msra.mxu0 0.0
        %4005 = vmatpush.xpose.msra.mxu0 0.0
        %4006 = vmatpush.xpose.msra.mxu0 0.0
        %4007 = vmatpush.xpose.msra.mxu0 0.0
        %4008 = vmatpush.xpose.msra.mxu0 0.0
        %4009 = vmatpush.xpose.msra.mxu0 0.0
        %4010 = vmatpush.xpose.msra.mxu0 0.0
        %4011 = vmatpush.xpose.msra.mxu0 0.0
        %4012 = vmatpush.xpose.msra.mxu0 %v688
        %4013 = vmatpush.xpose.msra.mxu0 %v432
        %4014 = vmatmul.f32.gmra.mxu0 %v1041
        %v4015 = vpop.f32.mrf.mxu0
        %v4016 = vadd.f32 %v3996, %v4015
        %4017 = vdwg.mxu0
        %4018 = vmatpush.xpose.msra.mxu0 0.0
        %4019 = vmatpush.xpose.msra.mxu0 0.0
        %4020 = vmatpush.xpose.msra.mxu0 0.0
        %4021 = vmatpush.xpose.msra.mxu0 0.0
        %4022 = vmatpush.xpose.msra.mxu0 0.0
        %4023 = vmatpush.xpose.msra.mxu0 0.0
        %4024 = vmatpush.xpose.msra.mxu0 0.0
        %4025 = vmatpush.xpose.msra.mxu0 0.0
        %4026 = vmatpush.xpose.msra.mxu0 0.0
        %4027 = vmatpush.xpose.msra.mxu0 0.0
        %4028 = vmatpush.xpose.msra.mxu0 0.0
        %4029 = vmatpush.xpose.msra.mxu0 0.0
        %4030 = vmatpush.xpose.msra.mxu0 0.0
        %4031 = vmatpush.xpose.msra.mxu0 0.0
        %4032 = vmatpush.xpose.msra.mxu0 %v689
        %4033 = vmatpush.xpose.msra.mxu0 %v433
        %4034 = vmatmul.f32.gmra.mxu0 %v1044
        %v4035 = vpop.f32.mrf.mxu0
        %v4036 = vadd.f32 %v4016, %v4035
        %4037 = vdwg.mxu0
        %4038 = vmatpush.xpose.msra.mxu0 0.0
        %4039 = vmatpush.xpose.msra.mxu0 0.0
        %4040 = vmatpush.xpose.msra.mxu0 0.0
        %4041 = vmatpush.xpose.msra.mxu0 0.0
        %4042 = vmatpush.xpose.msra.mxu0 0.0
        %4043 = vmatpush.xpose.msra.mxu0 0.0
        %4044 = vmatpush.xpose.msra.mxu0 0.0
        %4045 = vmatpush.xpose.msra.mxu0 0.0
        %4046 = vmatpush.xpose.msra.mxu0 0.0
        %4047 = vmatpush.xpose.msra.mxu0 0.0
        %4048 = vmatpush.xpose.msra.mxu0 0.0
        %4049 = vmatpush.xpose.msra.mxu0 0.0
        %4050 = vmatpush.xpose.msra.mxu0 0.0
        %4051 = vmatpush.xpose.msra.mxu0 0.0
        %4052 = vmatpush.xpose.msra.mxu0 %v690
        %4053 = vmatpush.xpose.msra.mxu0 %v434
        %4054 = vmatmul.f32.gmra.mxu0 %v1045
        %v4055 = vpop.f32.mrf.mxu0
        %v4056 = vadd.f32 %v4036, %v4055
        %4057 = vdwg.mxu0
        %4058 = vmatpush.xpose.msra.mxu0 0.0
        %4059 = vmatpush.xpose.msra.mxu0 0.0
        %4060 = vmatpush.xpose.msra.mxu0 0.0
        %4061 = vmatpush.xpose.msra.mxu0 0.0
        %4062 = vmatpush.xpose.msra.mxu0 0.0
        %4063 = vmatpush.xpose.msra.mxu0 0.0
        %4064 = vmatpush.xpose.msra.mxu0 0.0
        %4065 = vmatpush.xpose.msra.mxu0 0.0
        %4066 = vmatpush.xpose.msra.mxu0 0.0
        %4067 = vmatpush.xpose.msra.mxu0 0.0
        %4068 = vmatpush.xpose.msra.mxu0 0.0
        %4069 = vmatpush.xpose.msra.mxu0 0.0
        %4070 = vmatpush.xpose.msra.mxu0 0.0
        %4071 = vmatpush.xpose.msra.mxu0 0.0
        %4072 = vmatpush.xpose.msra.mxu0 %v691
        %4073 = vmatpush.xpose.msra.mxu0 %v435
        %4074 = vmatmul.f32.gmra.mxu0 %v1046
        %v4075 = vpop.f32.mrf.mxu0
        %v4076 = vadd.f32 %v4056, %v4075
        %4077 = vdwg.mxu0
        %4078 = vmatpush.xpose.msra.mxu0 0.0
        %4079 = vmatpush.xpose.msra.mxu0 0.0
        %4080 = vmatpush.xpose.msra.mxu0 0.0
        %4081 = vmatpush.xpose.msra.mxu0 0.0
        %4082 = vmatpush.xpose.msra.mxu0 0.0
        %4083 = vmatpush.xpose.msra.mxu0 0.0
        %4084 = vmatpush.xpose.msra.mxu0 0.0
        %4085 = vmatpush.xpose.msra.mxu0 0.0
        %4086 = vmatpush.xpose.msra.mxu0 0.0
        %4087 = vmatpush.xpose.msra.mxu0 0.0
        %4088 = vmatpush.xpose.msra.mxu0 0.0
        %4089 = vmatpush.xpose.msra.mxu0 0.0
        %4090 = vmatpush.xpose.msra.mxu0 0.0
        %4091 = vmatpush.xpose.msra.mxu0 0.0
        %4092 = vmatpush.xpose.msra.mxu0 %v692
        %4093 = vmatpush.xpose.msra.mxu0 %v436
        %4094 = vmatmul.f32.gmra.mxu0 %v1047
        %v4095 = vpop.f32.mrf.mxu0
        %v4096 = vadd.f32 %v4076, %v4095
        %4097 = vdwg.mxu0
        %4098 = vmatpush.xpose.msra.mxu0 0.0
        %4099 = vmatpush.xpose.msra.mxu0 0.0
        %4100 = vmatpush.xpose.msra.mxu0 0.0
        %4101 = vmatpush.xpose.msra.mxu0 0.0
        %4102 = vmatpush.xpose.msra.mxu0 0.0
        %4103 = vmatpush.xpose.msra.mxu0 0.0
        %4104 = vmatpush.xpose.msra.mxu0 0.0
        %4105 = vmatpush.xpose.msra.mxu0 0.0
        %4106 = vmatpush.xpose.msra.mxu0 0.0
        %4107 = vmatpush.xpose.msra.mxu0 0.0
        %4108 = vmatpush.xpose.msra.mxu0 0.0
        %4109 = vmatpush.xpose.msra.mxu0 0.0
        %4110 = vmatpush.xpose.msra.mxu0 0.0
        %4111 = vmatpush.xpose.msra.mxu0 0.0
        %4112 = vmatpush.xpose.msra.mxu0 %v693
        %4113 = vmatpush.xpose.msra.mxu0 %v437
        %4114 = vmatmul.f32.gmra.mxu0 %v1048
        %v4115 = vpop.f32.mrf.mxu0
        %v4116 = vadd.f32 %v4096, %v4115
        %4117 = vdwg.mxu0
        %4118 = vmatpush.xpose.msra.mxu0 0.0
        %4119 = vmatpush.xpose.msra.mxu0 0.0
        %4120 = vmatpush.xpose.msra.mxu0 0.0
        %4121 = vmatpush.xpose.msra.mxu0 0.0
        %4122 = vmatpush.xpose.msra.mxu0 0.0
        %4123 = vmatpush.xpose.msra.mxu0 0.0
        %4124 = vmatpush.xpose.msra.mxu0 0.0
        %4125 = vmatpush.xpose.msra.mxu0 0.0
        %4126 = vmatpush.xpose.msra.mxu0 0.0
        %4127 = vmatpush.xpose.msra.mxu0 0.0
        %4128 = vmatpush.xpose.msra.mxu0 0.0
        %4129 = vmatpush.xpose.msra.mxu0 0.0
        %4130 = vmatpush.xpose.msra.mxu0 0.0
        %4131 = vmatpush.xpose.msra.mxu0 0.0
        %4132 = vmatpush.xpose.msra.mxu0 %v694
        %4133 = vmatpush.xpose.msra.mxu0 %v438
        %4134 = vmatmul.f32.gmra.mxu0 %v1049
        %v4135 = vpop.f32.mrf.mxu0
        %v4136 = vadd.f32 %v4116, %v4135
        %4137 = vdwg.mxu0
        %4138 = vmatpush.xpose.msra.mxu0 0.0
        %4139 = vmatpush.xpose.msra.mxu0 0.0
        %4140 = vmatpush.xpose.msra.mxu0 0.0
        %4141 = vmatpush.xpose.msra.mxu0 0.0
        %4142 = vmatpush.xpose.msra.mxu0 0.0
        %4143 = vmatpush.xpose.msra.mxu0 0.0
        %4144 = vmatpush.xpose.msra.mxu0 0.0
        %4145 = vmatpush.xpose.msra.mxu0 0.0
        %4146 = vmatpush.xpose.msra.mxu0 0.0
        %4147 = vmatpush.xpose.msra.mxu0 0.0
        %4148 = vmatpush.xpose.msra.mxu0 0.0
        %4149 = vmatpush.xpose.msra.mxu0 0.0
        %4150 = vmatpush.xpose.msra.mxu0 0.0
        %4151 = vmatpush.xpose.msra.mxu0 0.0
        %4152 = vmatpush.xpose.msra.mxu0 %v695
        %4153 = vmatpush.xpose.msra.mxu0 %v439
        %4154 = vmatmul.f32.gmra.mxu0 %v1050
        %v4155 = vpop.f32.mrf.mxu0
        %v4156 = vadd.f32 %v4136, %v4155
        %4157 = vdwg.mxu0
        %4158 = vmatpush.xpose.msra.mxu0 0.0
        %4159 = vmatpush.xpose.msra.mxu0 0.0
        %4160 = vmatpush.xpose.msra.mxu0 0.0
        %4161 = vmatpush.xpose.msra.mxu0 0.0
        %4162 = vmatpush.xpose.msra.mxu0 0.0
        %4163 = vmatpush.xpose.msra.mxu0 0.0
        %4164 = vmatpush.xpose.msra.mxu0 0.0
        %4165 = vmatpush.xpose.msra.mxu0 0.0
        %4166 = vmatpush.xpose.msra.mxu0 0.0
        %4167 = vmatpush.xpose.msra.mxu0 0.0
        %4168 = vmatpush.xpose.msra.mxu0 0.0
        %4169 = vmatpush.xpose.msra.mxu0 0.0
        %4170 = vmatpush.xpose.msra.mxu0 0.0
        %4171 = vmatpush.xpose.msra.mxu0 0.0
        %4172 = vmatpush.xpose.msra.mxu0 %v696
        %4173 = vmatpush.xpose.msra.mxu0 %v440
        %4174 = vmatmul.f32.gmra.mxu0 %v1051
        %v4175 = vpop.f32.mrf.mxu0
        %v4176 = vadd.f32 %v4156, %v4175
        %4177 = vdwg.mxu0
        %4178 = vmatpush.xpose.msra.mxu0 0.0
        %4179 = vmatpush.xpose.msra.mxu0 0.0
        %4180 = vmatpush.xpose.msra.mxu0 0.0
        %4181 = vmatpush.xpose.msra.mxu0 0.0
        %4182 = vmatpush.xpose.msra.mxu0 0.0
        %4183 = vmatpush.xpose.msra.mxu0 0.0
        %4184 = vmatpush.xpose.msra.mxu0 0.0
        %4185 = vmatpush.xpose.msra.mxu0 0.0
        %4186 = vmatpush.xpose.msra.mxu0 0.0
        %4187 = vmatpush.xpose.msra.mxu0 0.0
        %4188 = vmatpush.xpose.msra.mxu0 0.0
        %4189 = vmatpush.xpose.msra.mxu0 0.0
        %4190 = vmatpush.xpose.msra.mxu0 0.0
        %4191 = vmatpush.xpose.msra.mxu0 0.0
        %4192 = vmatpush.xpose.msra.mxu0 %v697
        %4193 = vmatpush.xpose.msra.mxu0 %v441
        %4194 = vmatmul.f32.gmra.mxu0 %v1054
        %v4195 = vpop.f32.mrf.mxu0
        %v4196 = vadd.f32 %v4176, %v4195
        %4197 = vdwg.mxu0
        %4198 = vmatpush.xpose.msra.mxu0 0.0
        %4199 = vmatpush.xpose.msra.mxu0 0.0
        %4200 = vmatpush.xpose.msra.mxu0 0.0
        %4201 = vmatpush.xpose.msra.mxu0 0.0
        %4202 = vmatpush.xpose.msra.mxu0 0.0
        %4203 = vmatpush.xpose.msra.mxu0 0.0
        %4204 = vmatpush.xpose.msra.mxu0 0.0
        %4205 = vmatpush.xpose.msra.mxu0 0.0
        %4206 = vmatpush.xpose.msra.mxu0 0.0
        %4207 = vmatpush.xpose.msra.mxu0 0.0
        %4208 = vmatpush.xpose.msra.mxu0 0.0
        %4209 = vmatpush.xpose.msra.mxu0 0.0
        %4210 = vmatpush.xpose.msra.mxu0 0.0
        %4211 = vmatpush.xpose.msra.mxu0 0.0
        %4212 = vmatpush.xpose.msra.mxu0 %v698
        %4213 = vmatpush.xpose.msra.mxu0 %v442
        %4214 = vmatmul.f32.gmra.mxu0 %v1055
        %v4215 = vpop.f32.mrf.mxu0
        %v4216 = vadd.f32 %v4196, %v4215
        %4217 = vdwg.mxu0
        %4218 = vmatpush.xpose.msra.mxu0 0.0
        %4219 = vmatpush.xpose.msra.mxu0 0.0
        %4220 = vmatpush.xpose.msra.mxu0 0.0
        %4221 = vmatpush.xpose.msra.mxu0 0.0
        %4222 = vmatpush.xpose.msra.mxu0 0.0
        %4223 = vmatpush.xpose.msra.mxu0 0.0
        %4224 = vmatpush.xpose.msra.mxu0 0.0
        %4225 = vmatpush.xpose.msra.mxu0 0.0
        %4226 = vmatpush.xpose.msra.mxu0 0.0
        %4227 = vmatpush.xpose.msra.mxu0 0.0
        %4228 = vmatpush.xpose.msra.mxu0 0.0
        %4229 = vmatpush.xpose.msra.mxu0 0.0
        %4230 = vmatpush.xpose.msra.mxu0 0.0
        %4231 = vmatpush.xpose.msra.mxu0 0.0
        %4232 = vmatpush.xpose.msra.mxu0 %v699
        %4233 = vmatpush.xpose.msra.mxu0 %v443
        %4234 = vmatmul.f32.gmra.mxu0 %v1056
        %v4235 = vpop.f32.mrf.mxu0
        %v4236 = vadd.f32 %v4216, %v4235
        %4237 = vdwg.mxu0
        %4238 = vmatpush.xpose.msra.mxu0 0.0
        %4239 = vmatpush.xpose.msra.mxu0 0.0
        %4240 = vmatpush.xpose.msra.mxu0 0.0
        %4241 = vmatpush.xpose.msra.mxu0 0.0
        %4242 = vmatpush.xpose.msra.mxu0 0.0
        %4243 = vmatpush.xpose.msra.mxu0 0.0
        %4244 = vmatpush.xpose.msra.mxu0 0.0
        %4245 = vmatpush.xpose.msra.mxu0 0.0
        %4246 = vmatpush.xpose.msra.mxu0 0.0
        %4247 = vmatpush.xpose.msra.mxu0 0.0
        %4248 = vmatpush.xpose.msra.mxu0 0.0
        %4249 = vmatpush.xpose.msra.mxu0 0.0
        %4250 = vmatpush.xpose.msra.mxu0 0.0
        %4251 = vmatpush.xpose.msra.mxu0 0.0
        %4252 = vmatpush.xpose.msra.mxu0 %v700
        %4253 = vmatpush.xpose.msra.mxu0 %v444
        %4254 = vmatmul.f32.gmra.mxu0 %v1057
        %v4255 = vpop.f32.mrf.mxu0
        %v4256 = vadd.f32 %v4236, %v4255
        %4257 = vdwg.mxu0
        %4258 = vmatpush.xpose.msra.mxu0 0.0
        %4259 = vmatpush.xpose.msra.mxu0 0.0
        %4260 = vmatpush.xpose.msra.mxu0 0.0
        %4261 = vmatpush.xpose.msra.mxu0 0.0
        %4262 = vmatpush.xpose.msra.mxu0 0.0
        %4263 = vmatpush.xpose.msra.mxu0 0.0
        %4264 = vmatpush.xpose.msra.mxu0 0.0
        %4265 = vmatpush.xpose.msra.mxu0 0.0
        %4266 = vmatpush.xpose.msra.mxu0 0.0
        %4267 = vmatpush.xpose.msra.mxu0 0.0
        %4268 = vmatpush.xpose.msra.mxu0 0.0
        %4269 = vmatpush.xpose.msra.mxu0 0.0
        %4270 = vmatpush.xpose.msra.mxu0 0.0
        %4271 = vmatpush.xpose.msra.mxu0 0.0
        %4272 = vmatpush.xpose.msra.mxu0 %v701
        %4273 = vmatpush.xpose.msra.mxu0 %v445
        %4274 = vmatmul.f32.gmra.mxu0 %v1058
        %v4275 = vpop.f32.mrf.mxu0
        %v4276 = vadd.f32 %v4256, %v4275
        %4277 = vdwg.mxu0
        %4278 = vmatpush.xpose.msra.mxu0 0.0
        %4279 = vmatpush.xpose.msra.mxu0 0.0
        %4280 = vmatpush.xpose.msra.mxu0 0.0
        %4281 = vmatpush.xpose.msra.mxu0 0.0
        %4282 = vmatpush.xpose.msra.mxu0 0.0
        %4283 = vmatpush.xpose.msra.mxu0 0.0
        %4284 = vmatpush.xpose.msra.mxu0 0.0
        %4285 = vmatpush.xpose.msra.mxu0 0.0
        %4286 = vmatpush.xpose.msra.mxu0 0.0
        %4287 = vmatpush.xpose.msra.mxu0 0.0
        %4288 = vmatpush.xpose.msra.mxu0 0.0
        %4289 = vmatpush.xpose.msra.mxu0 0.0
        %4290 = vmatpush.xpose.msra.mxu0 0.0
        %4291 = vmatpush.xpose.msra.mxu0 0.0
        %4292 = vmatpush.xpose.msra.mxu0 %v702
        %4293 = vmatpush.xpose.msra.mxu0 %v446
        %4294 = vmatmul.f32.gmra.mxu0 %v1059
        %v4295 = vpop.f32.mrf.mxu0
        %v4296 = vadd.f32 %v4276, %v4295
        %4297 = vdwg.mxu0
        %4298 = vmatpush.xpose.msra.mxu0 0.0
        %4299 = vmatpush.xpose.msra.mxu0 0.0
        %4300 = vmatpush.xpose.msra.mxu0 0.0
        %4301 = vmatpush.xpose.msra.mxu0 0.0
        %4302 = vmatpush.xpose.msra.mxu0 0.0
        %4303 = vmatpush.xpose.msra.mxu0 0.0
        %4304 = vmatpush.xpose.msra.mxu0 0.0
        %4305 = vmatpush.xpose.msra.mxu0 0.0
        %4306 = vmatpush.xpose.msra.mxu0 0.0
        %4307 = vmatpush.xpose.msra.mxu0 0.0
        %4308 = vmatpush.xpose.msra.mxu0 0.0
        %4309 = vmatpush.xpose.msra.mxu0 0.0
        %4310 = vmatpush.xpose.msra.mxu0 0.0
        %4311 = vmatpush.xpose.msra.mxu0 0.0
        %4312 = vmatpush.xpose.msra.mxu0 %v703
        %4313 = vmatpush.xpose.msra.mxu0 %v447
        %4314 = vmatmul.f32.gmra.mxu0 %v1060
        %v4315 = vpop.f32.mrf.mxu0
        %v4316 = vadd.f32 %v4296, %v4315
        %4317 = vdwg.mxu0
        %4318 = vmatpush.xpose.msra.mxu0 0.0
        %4319 = vmatpush.xpose.msra.mxu0 0.0
        %4320 = vmatpush.xpose.msra.mxu0 0.0
        %4321 = vmatpush.xpose.msra.mxu0 0.0
        %4322 = vmatpush.xpose.msra.mxu0 0.0
        %4323 = vmatpush.xpose.msra.mxu0 0.0
        %4324 = vmatpush.xpose.msra.mxu0 0.0
        %4325 = vmatpush.xpose.msra.mxu0 0.0
        %4326 = vmatpush.xpose.msra.mxu0 0.0
        %4327 = vmatpush.xpose.msra.mxu0 0.0
        %4328 = vmatpush.xpose.msra.mxu0 0.0
        %4329 = vmatpush.xpose.msra.mxu0 0.0
        %4330 = vmatpush.xpose.msra.mxu0 0.0
        %4331 = vmatpush.xpose.msra.mxu0 0.0
        %4332 = vmatpush.xpose.msra.mxu0 %v704
        %4333 = vmatpush.xpose.msra.mxu0 %v448
        %4334 = vmatmul.f32.gmra.mxu0 %v1061
        %v4335 = vpop.f32.mrf.mxu0
        %v4336 = vadd.f32 %v4316, %v4335
        %4337 = vdwg.mxu0
        %4338 = vmatpush.xpose.msra.mxu0 0.0
        %4339 = vmatpush.xpose.msra.mxu0 0.0
        %4340 = vmatpush.xpose.msra.mxu0 0.0
        %4341 = vmatpush.xpose.msra.mxu0 0.0
        %4342 = vmatpush.xpose.msra.mxu0 0.0
        %4343 = vmatpush.xpose.msra.mxu0 0.0
        %4344 = vmatpush.xpose.msra.mxu0 0.0
        %4345 = vmatpush.xpose.msra.mxu0 0.0
        %4346 = vmatpush.xpose.msra.mxu0 0.0
        %4347 = vmatpush.xpose.msra.mxu0 0.0
        %4348 = vmatpush.xpose.msra.mxu0 0.0
        %4349 = vmatpush.xpose.msra.mxu0 0.0
        %4350 = vmatpush.xpose.msra.mxu0 0.0
        %4351 = vmatpush.xpose.msra.mxu0 0.0
        %4352 = vmatpush.xpose.msra.mxu0 %v705
        %4353 = vmatpush.xpose.msra.mxu0 %v449
        %4354 = vmatmul.f32.gmra.mxu0 %v1064
        %v4355 = vpop.f32.mrf.mxu0
        %v4356 = vadd.f32 %v4336, %v4355
        %4357 = vdwg.mxu0
        %4358 = vmatpush.xpose.msra.mxu0 0.0
        %4359 = vmatpush.xpose.msra.mxu0 0.0
        %4360 = vmatpush.xpose.msra.mxu0 0.0
        %4361 = vmatpush.xpose.msra.mxu0 0.0
        %4362 = vmatpush.xpose.msra.mxu0 0.0
        %4363 = vmatpush.xpose.msra.mxu0 0.0
        %4364 = vmatpush.xpose.msra.mxu0 0.0
        %4365 = vmatpush.xpose.msra.mxu0 0.0
        %4366 = vmatpush.xpose.msra.mxu0 0.0
        %4367 = vmatpush.xpose.msra.mxu0 0.0
        %4368 = vmatpush.xpose.msra.mxu0 0.0
        %4369 = vmatpush.xpose.msra.mxu0 0.0
        %4370 = vmatpush.xpose.msra.mxu0 0.0
        %4371 = vmatpush.xpose.msra.mxu0 0.0
        %4372 = vmatpush.xpose.msra.mxu0 %v706
        %4373 = vmatpush.xpose.msra.mxu0 %v450
        %4374 = vmatmul.f32.gmra.mxu0 %v1065
        %v4375 = vpop.f32.mrf.mxu0
        %v4376 = vadd.f32 %v4356, %v4375
        %4377 = vdwg.mxu0
        %4378 = vmatpush.xpose.msra.mxu0 0.0
        %4379 = vmatpush.xpose.msra.mxu0 0.0
        %4380 = vmatpush.xpose.msra.mxu0 0.0
        %4381 = vmatpush.xpose.msra.mxu0 0.0
        %4382 = vmatpush.xpose.msra.mxu0 0.0
        %4383 = vmatpush.xpose.msra.mxu0 0.0
        %4384 = vmatpush.xpose.msra.mxu0 0.0
        %4385 = vmatpush.xpose.msra.mxu0 0.0
        %4386 = vmatpush.xpose.msra.mxu0 0.0
        %4387 = vmatpush.xpose.msra.mxu0 0.0
        %4388 = vmatpush.xpose.msra.mxu0 0.0
        %4389 = vmatpush.xpose.msra.mxu0 0.0
        %4390 = vmatpush.xpose.msra.mxu0 0.0
        %4391 = vmatpush.xpose.msra.mxu0 0.0
        %4392 = vmatpush.xpose.msra.mxu0 %v707
        %4393 = vmatpush.xpose.msra.mxu0 %v451
        %4394 = vmatmul.f32.gmra.mxu0 %v1066
        %v4395 = vpop.f32.mrf.mxu0
        %v4396 = vadd.f32 %v4376, %v4395
        %4397 = vdwg.mxu0
        %4398 = vmatpush.xpose.msra.mxu0 0.0
        %4399 = vmatpush.xpose.msra.mxu0 0.0
        %4400 = vmatpush.xpose.msra.mxu0 0.0
        %4401 = vmatpush.xpose.msra.mxu0 0.0
        %4402 = vmatpush.xpose.msra.mxu0 0.0
        %4403 = vmatpush.xpose.msra.mxu0 0.0
        %4404 = vmatpush.xpose.msra.mxu0 0.0
        %4405 = vmatpush.xpose.msra.mxu0 0.0
        %4406 = vmatpush.xpose.msra.mxu0 0.0
        %4407 = vmatpush.xpose.msra.mxu0 0.0
        %4408 = vmatpush.xpose.msra.mxu0 0.0
        %4409 = vmatpush.xpose.msra.mxu0 0.0
        %4410 = vmatpush.xpose.msra.mxu0 0.0
        %4411 = vmatpush.xpose.msra.mxu0 0.0
        %4412 = vmatpush.xpose.msra.mxu0 %v708
        %4413 = vmatpush.xpose.msra.mxu0 %v452
        %4414 = vmatmul.f32.gmra.mxu0 %v1067
        %v4415 = vpop.f32.mrf.mxu0
        %v4416 = vadd.f32 %v4396, %v4415
        %4417 = vdwg.mxu0
        %4418 = vmatpush.xpose.msra.mxu0 0.0
        %4419 = vmatpush.xpose.msra.mxu0 0.0
        %4420 = vmatpush.xpose.msra.mxu0 0.0
        %4421 = vmatpush.xpose.msra.mxu0 0.0
        %4422 = vmatpush.xpose.msra.mxu0 0.0
        %4423 = vmatpush.xpose.msra.mxu0 0.0
        %4424 = vmatpush.xpose.msra.mxu0 0.0
        %4425 = vmatpush.xpose.msra.mxu0 0.0
        %4426 = vmatpush.xpose.msra.mxu0 0.0
        %4427 = vmatpush.xpose.msra.mxu0 0.0
        %4428 = vmatpush.xpose.msra.mxu0 0.0
        %4429 = vmatpush.xpose.msra.mxu0 0.0
        %4430 = vmatpush.xpose.msra.mxu0 0.0
        %4431 = vmatpush.xpose.msra.mxu0 0.0
        %4432 = vmatpush.xpose.msra.mxu0 %v709
        %4433 = vmatpush.xpose.msra.mxu0 %v453
        %4434 = vmatmul.f32.gmra.mxu0 %v1068
        %v4435 = vpop.f32.mrf.mxu0
        %v4436 = vadd.f32 %v4416, %v4435
        %4437 = vdwg.mxu0
        %4438 = vmatpush.xpose.msra.mxu0 0.0
        %4439 = vmatpush.xpose.msra.mxu0 0.0
        %4440 = vmatpush.xpose.msra.mxu0 0.0
        %4441 = vmatpush.xpose.msra.mxu0 0.0
        %4442 = vmatpush.xpose.msra.mxu0 0.0
        %4443 = vmatpush.xpose.msra.mxu0 0.0
        %4444 = vmatpush.xpose.msra.mxu0 0.0
        %4445 = vmatpush.xpose.msra.mxu0 0.0
        %4446 = vmatpush.xpose.msra.mxu0 0.0
        %4447 = vmatpush.xpose.msra.mxu0 0.0
        %4448 = vmatpush.xpose.msra.mxu0 0.0
        %4449 = vmatpush.xpose.msra.mxu0 0.0
        %4450 = vmatpush.xpose.msra.mxu0 0.0
        %4451 = vmatpush.xpose.msra.mxu0 0.0
        %4452 = vmatpush.xpose.msra.mxu0 %v710
        %4453 = vmatpush.xpose.msra.mxu0 %v454
        %4454 = vmatmul.f32.gmra.mxu0 %v1069
        %v4455 = vpop.f32.mrf.mxu0
        %v4456 = vadd.f32 %v4436, %v4455
        %4457 = vdwg.mxu0
        %4458 = vmatpush.xpose.msra.mxu0 0.0
        %4459 = vmatpush.xpose.msra.mxu0 0.0
        %4460 = vmatpush.xpose.msra.mxu0 0.0
        %4461 = vmatpush.xpose.msra.mxu0 0.0
        %4462 = vmatpush.xpose.msra.mxu0 0.0
        %4463 = vmatpush.xpose.msra.mxu0 0.0
        %4464 = vmatpush.xpose.msra.mxu0 0.0
        %4465 = vmatpush.xpose.msra.mxu0 0.0
        %4466 = vmatpush.xpose.msra.mxu0 0.0
        %4467 = vmatpush.xpose.msra.mxu0 0.0
        %4468 = vmatpush.xpose.msra.mxu0 0.0
        %4469 = vmatpush.xpose.msra.mxu0 0.0
        %4470 = vmatpush.xpose.msra.mxu0 0.0
        %4471 = vmatpush.xpose.msra.mxu0 0.0
        %4472 = vmatpush.xpose.msra.mxu0 %v711
        %4473 = vmatpush.xpose.msra.mxu0 %v455
        %4474 = vmatmul.f32.gmra.mxu0 %v1070
        %v4475 = vpop.f32.mrf.mxu0
        %v4476 = vadd.f32 %v4456, %v4475
        %4477 = vdwg.mxu0
        %4478 = vmatpush.xpose.msra.mxu0 0.0
        %4479 = vmatpush.xpose.msra.mxu0 0.0
        %4480 = vmatpush.xpose.msra.mxu0 0.0
        %4481 = vmatpush.xpose.msra.mxu0 0.0
        %4482 = vmatpush.xpose.msra.mxu0 0.0
        %4483 = vmatpush.xpose.msra.mxu0 0.0
        %4484 = vmatpush.xpose.msra.mxu0 0.0
        %4485 = vmatpush.xpose.msra.mxu0 0.0
        %4486 = vmatpush.xpose.msra.mxu0 0.0
        %4487 = vmatpush.xpose.msra.mxu0 0.0
        %4488 = vmatpush.xpose.msra.mxu0 0.0
        %4489 = vmatpush.xpose.msra.mxu0 0.0
        %4490 = vmatpush.xpose.msra.mxu0 0.0
        %4491 = vmatpush.xpose.msra.mxu0 0.0
        %4492 = vmatpush.xpose.msra.mxu0 %v712
        %4493 = vmatpush.xpose.msra.mxu0 %v456
        %4494 = vmatmul.f32.gmra.mxu0 %v1071
        %v4495 = vpop.f32.mrf.mxu0
        %v4496 = vadd.f32 %v4476, %v4495
        %4497 = vdwg.mxu0
        %4498 = vmatpush.xpose.msra.mxu0 0.0
        %4499 = vmatpush.xpose.msra.mxu0 0.0
        %4500 = vmatpush.xpose.msra.mxu0 0.0
        %4501 = vmatpush.xpose.msra.mxu0 0.0
        %4502 = vmatpush.xpose.msra.mxu0 0.0
        %4503 = vmatpush.xpose.msra.mxu0 0.0
        %4504 = vmatpush.xpose.msra.mxu0 0.0
        %4505 = vmatpush.xpose.msra.mxu0 0.0
        %4506 = vmatpush.xpose.msra.mxu0 0.0
        %4507 = vmatpush.xpose.msra.mxu0 0.0
        %4508 = vmatpush.xpose.msra.mxu0 0.0
        %4509 = vmatpush.xpose.msra.mxu0 0.0
        %4510 = vmatpush.xpose.msra.mxu0 0.0
        %4511 = vmatpush.xpose.msra.mxu0 0.0
        %4512 = vmatpush.xpose.msra.mxu0 %v713
        %4513 = vmatpush.xpose.msra.mxu0 %v457
        %4514 = vmatmul.f32.gmra.mxu0 %v1074
        %v4515 = vpop.f32.mrf.mxu0
        %v4516 = vadd.f32 %v4496, %v4515
        %4517 = vdwg.mxu0
        %4518 = vmatpush.xpose.msra.mxu0 0.0
        %4519 = vmatpush.xpose.msra.mxu0 0.0
        %4520 = vmatpush.xpose.msra.mxu0 0.0
        %4521 = vmatpush.xpose.msra.mxu0 0.0
        %4522 = vmatpush.xpose.msra.mxu0 0.0
        %4523 = vmatpush.xpose.msra.mxu0 0.0
        %4524 = vmatpush.xpose.msra.mxu0 0.0
        %4525 = vmatpush.xpose.msra.mxu0 0.0
        %4526 = vmatpush.xpose.msra.mxu0 0.0
        %4527 = vmatpush.xpose.msra.mxu0 0.0
        %4528 = vmatpush.xpose.msra.mxu0 0.0
        %4529 = vmatpush.xpose.msra.mxu0 0.0
        %4530 = vmatpush.xpose.msra.mxu0 0.0
        %4531 = vmatpush.xpose.msra.mxu0 0.0
        %4532 = vmatpush.xpose.msra.mxu0 %v714
        %4533 = vmatpush.xpose.msra.mxu0 %v458
        %4534 = vmatmul.f32.gmra.mxu0 %v1075
        %v4535 = vpop.f32.mrf.mxu0
        %v4536 = vadd.f32 %v4516, %v4535
        %4537 = vdwg.mxu0
        %4538 = vmatpush.xpose.msra.mxu0 0.0
        %4539 = vmatpush.xpose.msra.mxu0 0.0
        %4540 = vmatpush.xpose.msra.mxu0 0.0
        %4541 = vmatpush.xpose.msra.mxu0 0.0
        %4542 = vmatpush.xpose.msra.mxu0 0.0
        %4543 = vmatpush.xpose.msra.mxu0 0.0
        %4544 = vmatpush.xpose.msra.mxu0 0.0
        %4545 = vmatpush.xpose.msra.mxu0 0.0
        %4546 = vmatpush.xpose.msra.mxu0 0.0
        %4547 = vmatpush.xpose.msra.mxu0 0.0
        %4548 = vmatpush.xpose.msra.mxu0 0.0
        %4549 = vmatpush.xpose.msra.mxu0 0.0
        %4550 = vmatpush.xpose.msra.mxu0 0.0
        %4551 = vmatpush.xpose.msra.mxu0 0.0
        %4552 = vmatpush.xpose.msra.mxu0 %v715
        %4553 = vmatpush.xpose.msra.mxu0 %v459
        %4554 = vmatmul.f32.gmra.mxu0 %v1076
        %v4555 = vpop.f32.mrf.mxu0
        %v4556 = vadd.f32 %v4536, %v4555
        %4557 = vdwg.mxu0
        %4558 = vmatpush.xpose.msra.mxu0 0.0
        %4559 = vmatpush.xpose.msra.mxu0 0.0
        %4560 = vmatpush.xpose.msra.mxu0 0.0
        %4561 = vmatpush.xpose.msra.mxu0 0.0
        %4562 = vmatpush.xpose.msra.mxu0 0.0
        %4563 = vmatpush.xpose.msra.mxu0 0.0
        %4564 = vmatpush.xpose.msra.mxu0 0.0
        %4565 = vmatpush.xpose.msra.mxu0 0.0
        %4566 = vmatpush.xpose.msra.mxu0 0.0
        %4567 = vmatpush.xpose.msra.mxu0 0.0
        %4568 = vmatpush.xpose.msra.mxu0 0.0
        %4569 = vmatpush.xpose.msra.mxu0 0.0
        %4570 = vmatpush.xpose.msra.mxu0 0.0
        %4571 = vmatpush.xpose.msra.mxu0 0.0
        %4572 = vmatpush.xpose.msra.mxu0 %v716
        %4573 = vmatpush.xpose.msra.mxu0 %v460
        %4574 = vmatmul.f32.gmra.mxu0 %v1077
        %v4575 = vpop.f32.mrf.mxu0
        %v4576 = vadd.f32 %v4556, %v4575
        %4577 = vdwg.mxu0
        %4578 = vmatpush.xpose.msra.mxu0 0.0
        %4579 = vmatpush.xpose.msra.mxu0 0.0
        %4580 = vmatpush.xpose.msra.mxu0 0.0
        %4581 = vmatpush.xpose.msra.mxu0 0.0
        %4582 = vmatpush.xpose.msra.mxu0 0.0
        %4583 = vmatpush.xpose.msra.mxu0 0.0
        %4584 = vmatpush.xpose.msra.mxu0 0.0
        %4585 = vmatpush.xpose.msra.mxu0 0.0
        %4586 = vmatpush.xpose.msra.mxu0 0.0
        %4587 = vmatpush.xpose.msra.mxu0 0.0
        %4588 = vmatpush.xpose.msra.mxu0 0.0
        %4589 = vmatpush.xpose.msra.mxu0 0.0
        %4590 = vmatpush.xpose.msra.mxu0 0.0
        %4591 = vmatpush.xpose.msra.mxu0 0.0
        %4592 = vmatpush.xpose.msra.mxu0 %v717
        %4593 = vmatpush.xpose.msra.mxu0 %v461
        %4594 = vmatmul.f32.gmra.mxu0 %v1078
        %v4595 = vpop.f32.mrf.mxu0
        %v4596 = vadd.f32 %v4576, %v4595
        %4597 = vdwg.mxu0
        %4598 = vmatpush.xpose.msra.mxu0 0.0
        %4599 = vmatpush.xpose.msra.mxu0 0.0
        %4600 = vmatpush.xpose.msra.mxu0 0.0
        %4601 = vmatpush.xpose.msra.mxu0 0.0
        %4602 = vmatpush.xpose.msra.mxu0 0.0
        %4603 = vmatpush.xpose.msra.mxu0 0.0
        %4604 = vmatpush.xpose.msra.mxu0 0.0
        %4605 = vmatpush.xpose.msra.mxu0 0.0
        %4606 = vmatpush.xpose.msra.mxu0 0.0
        %4607 = vmatpush.xpose.msra.mxu0 0.0
        %4608 = vmatpush.xpose.msra.mxu0 0.0
        %4609 = vmatpush.xpose.msra.mxu0 0.0
        %4610 = vmatpush.xpose.msra.mxu0 0.0
        %4611 = vmatpush.xpose.msra.mxu0 0.0
        %4612 = vmatpush.xpose.msra.mxu0 %v718
        %4613 = vmatpush.xpose.msra.mxu0 %v462
        %4614 = vmatmul.f32.gmra.mxu0 %v1079
        %v4615 = vpop.f32.mrf.mxu0
        %v4616 = vadd.f32 %v4596, %v4615
        %4617 = vdwg.mxu0
        %4618 = vmatpush.xpose.msra.mxu0 0.0
        %4619 = vmatpush.xpose.msra.mxu0 0.0
        %4620 = vmatpush.xpose.msra.mxu0 0.0
        %4621 = vmatpush.xpose.msra.mxu0 0.0
        %4622 = vmatpush.xpose.msra.mxu0 0.0
        %4623 = vmatpush.xpose.msra.mxu0 0.0
        %4624 = vmatpush.xpose.msra.mxu0 0.0
        %4625 = vmatpush.xpose.msra.mxu0 0.0
        %4626 = vmatpush.xpose.msra.mxu0 0.0
        %4627 = vmatpush.xpose.msra.mxu0 0.0
        %4628 = vmatpush.xpose.msra.mxu0 0.0
        %4629 = vmatpush.xpose.msra.mxu0 0.0
        %4630 = vmatpush.xpose.msra.mxu0 0.0
        %4631 = vmatpush.xpose.msra.mxu0 0.0
        %4632 = vmatpush.xpose.msra.mxu0 %v719
        %4633 = vmatpush.xpose.msra.mxu0 %v463
        %4634 = vmatmul.f32.gmra.mxu0 %v1080
        %v4635 = vpop.f32.mrf.mxu0
        %v4636 = vadd.f32 %v4616, %v4635
        %4637 = vdwg.mxu0
        %4638 = vmatpush.xpose.msra.mxu0 0.0
        %4639 = vmatpush.xpose.msra.mxu0 0.0
        %4640 = vmatpush.xpose.msra.mxu0 0.0
        %4641 = vmatpush.xpose.msra.mxu0 0.0
        %4642 = vmatpush.xpose.msra.mxu0 0.0
        %4643 = vmatpush.xpose.msra.mxu0 0.0
        %4644 = vmatpush.xpose.msra.mxu0 0.0
        %4645 = vmatpush.xpose.msra.mxu0 0.0
        %4646 = vmatpush.xpose.msra.mxu0 0.0
        %4647 = vmatpush.xpose.msra.mxu0 0.0
        %4648 = vmatpush.xpose.msra.mxu0 0.0
        %4649 = vmatpush.xpose.msra.mxu0 0.0
        %4650 = vmatpush.xpose.msra.mxu0 0.0
        %4651 = vmatpush.xpose.msra.mxu0 0.0
        %4652 = vmatpush.xpose.msra.mxu0 %v720
        %4653 = vmatpush.xpose.msra.mxu0 %v464
        %4654 = vmatmul.f32.gmra.mxu0 %v1081
        %v4655 = vpop.f32.mrf.mxu0
        %v4656 = vadd.f32 %v4636, %v4655
        %4657 = vdwg.mxu0
        %4658 = vmatpush.xpose.msra.mxu0 0.0
        %4659 = vmatpush.xpose.msra.mxu0 0.0
        %4660 = vmatpush.xpose.msra.mxu0 0.0
        %4661 = vmatpush.xpose.msra.mxu0 0.0
        %4662 = vmatpush.xpose.msra.mxu0 0.0
        %4663 = vmatpush.xpose.msra.mxu0 0.0
        %4664 = vmatpush.xpose.msra.mxu0 0.0
        %4665 = vmatpush.xpose.msra.mxu0 0.0
        %4666 = vmatpush.xpose.msra.mxu0 0.0
        %4667 = vmatpush.xpose.msra.mxu0 0.0
        %4668 = vmatpush.xpose.msra.mxu0 0.0
        %4669 = vmatpush.xpose.msra.mxu0 0.0
        %4670 = vmatpush.xpose.msra.mxu0 0.0
        %4671 = vmatpush.xpose.msra.mxu0 0.0
        %4672 = vmatpush.xpose.msra.mxu0 %v721
        %4673 = vmatpush.xpose.msra.mxu0 %v465
        %4674 = vmatmul.f32.gmra.mxu0 %v1084
        %v4675 = vpop.f32.mrf.mxu0
        %v4676 = vadd.f32 %v4656, %v4675
        %4677 = vdwg.mxu0
        %4678 = vmatpush.xpose.msra.mxu0 0.0
        %4679 = vmatpush.xpose.msra.mxu0 0.0
        %4680 = vmatpush.xpose.msra.mxu0 0.0
        %4681 = vmatpush.xpose.msra.mxu0 0.0
        %4682 = vmatpush.xpose.msra.mxu0 0.0
        %4683 = vmatpush.xpose.msra.mxu0 0.0
        %4684 = vmatpush.xpose.msra.mxu0 0.0
        %4685 = vmatpush.xpose.msra.mxu0 0.0
        %4686 = vmatpush.xpose.msra.mxu0 0.0
        %4687 = vmatpush.xpose.msra.mxu0 0.0
        %4688 = vmatpush.xpose.msra.mxu0 0.0
        %4689 = vmatpush.xpose.msra.mxu0 0.0
        %4690 = vmatpush.xpose.msra.mxu0 0.0
        %4691 = vmatpush.xpose.msra.mxu0 0.0
        %4692 = vmatpush.xpose.msra.mxu0 %v722
        %4693 = vmatpush.xpose.msra.mxu0 %v466
        %4694 = vmatmul.f32.gmra.mxu0 %v1085
        %v4695 = vpop.f32.mrf.mxu0
        %v4696 = vadd.f32 %v4676, %v4695
        %4697 = vdwg.mxu0
        %4698 = vmatpush.xpose.msra.mxu0 0.0
        %4699 = vmatpush.xpose.msra.mxu0 0.0
        %4700 = vmatpush.xpose.msra.mxu0 0.0
        %4701 = vmatpush.xpose.msra.mxu0 0.0
        %4702 = vmatpush.xpose.msra.mxu0 0.0
        %4703 = vmatpush.xpose.msra.mxu0 0.0
        %4704 = vmatpush.xpose.msra.mxu0 0.0
        %4705 = vmatpush.xpose.msra.mxu0 0.0
        %4706 = vmatpush.xpose.msra.mxu0 0.0
        %4707 = vmatpush.xpose.msra.mxu0 0.0
        %4708 = vmatpush.xpose.msra.mxu0 0.0
        %4709 = vmatpush.xpose.msra.mxu0 0.0
        %4710 = vmatpush.xpose.msra.mxu0 0.0
        %4711 = vmatpush.xpose.msra.mxu0 0.0
        %4712 = vmatpush.xpose.msra.mxu0 %v723
        %4713 = vmatpush.xpose.msra.mxu0 %v467
        %4714 = vmatmul.f32.gmra.mxu0 %v1086
        %v4715 = vpop.f32.mrf.mxu0
        %v4716 = vadd.f32 %v4696, %v4715
        %4717 = vdwg.mxu0
        %4718 = vmatpush.xpose.msra.mxu0 0.0
        %4719 = vmatpush.xpose.msra.mxu0 0.0
        %4720 = vmatpush.xpose.msra.mxu0 0.0
        %4721 = vmatpush.xpose.msra.mxu0 0.0
        %4722 = vmatpush.xpose.msra.mxu0 0.0
        %4723 = vmatpush.xpose.msra.mxu0 0.0
        %4724 = vmatpush.xpose.msra.mxu0 0.0
        %4725 = vmatpush.xpose.msra.mxu0 0.0
        %4726 = vmatpush.xpose.msra.mxu0 0.0
        %4727 = vmatpush.xpose.msra.mxu0 0.0
        %4728 = vmatpush.xpose.msra.mxu0 0.0
        %4729 = vmatpush.xpose.msra.mxu0 0.0
        %4730 = vmatpush.xpose.msra.mxu0 0.0
        %4731 = vmatpush.xpose.msra.mxu0 0.0
        %4732 = vmatpush.xpose.msra.mxu0 %v724
        %4733 = vmatpush.xpose.msra.mxu0 %v468
        %4734 = vmatmul.f32.gmra.mxu0 %v1087
        %v4735 = vpop.f32.mrf.mxu0
        %v4736 = vadd.f32 %v4716, %v4735
        %4737 = vdwg.mxu0
        %4738 = vmatpush.xpose.msra.mxu0 0.0
        %4739 = vmatpush.xpose.msra.mxu0 0.0
        %4740 = vmatpush.xpose.msra.mxu0 0.0
        %4741 = vmatpush.xpose.msra.mxu0 0.0
        %4742 = vmatpush.xpose.msra.mxu0 0.0
        %4743 = vmatpush.xpose.msra.mxu0 0.0
        %4744 = vmatpush.xpose.msra.mxu0 0.0
        %4745 = vmatpush.xpose.msra.mxu0 0.0
        %4746 = vmatpush.xpose.msra.mxu0 0.0
        %4747 = vmatpush.xpose.msra.mxu0 0.0
        %4748 = vmatpush.xpose.msra.mxu0 0.0
        %4749 = vmatpush.xpose.msra.mxu0 0.0
        %4750 = vmatpush.xpose.msra.mxu0 0.0
        %4751 = vmatpush.xpose.msra.mxu0 0.0
        %4752 = vmatpush.xpose.msra.mxu0 %v725
        %4753 = vmatpush.xpose.msra.mxu0 %v469
        %4754 = vmatmul.f32.gmra.mxu0 %v1088
        %v4755 = vpop.f32.mrf.mxu0
        %v4756 = vadd.f32 %v4736, %v4755
        %4757 = vdwg.mxu0
        %4758 = vmatpush.xpose.msra.mxu0 0.0
        %4759 = vmatpush.xpose.msra.mxu0 0.0
        %4760 = vmatpush.xpose.msra.mxu0 0.0
        %4761 = vmatpush.xpose.msra.mxu0 0.0
        %4762 = vmatpush.xpose.msra.mxu0 0.0
        %4763 = vmatpush.xpose.msra.mxu0 0.0
        %4764 = vmatpush.xpose.msra.mxu0 0.0
        %4765 = vmatpush.xpose.msra.mxu0 0.0
        %4766 = vmatpush.xpose.msra.mxu0 0.0
        %4767 = vmatpush.xpose.msra.mxu0 0.0
        %4768 = vmatpush.xpose.msra.mxu0 0.0
        %4769 = vmatpush.xpose.msra.mxu0 0.0
        %4770 = vmatpush.xpose.msra.mxu0 0.0
        %4771 = vmatpush.xpose.msra.mxu0 0.0
        %4772 = vmatpush.xpose.msra.mxu0 %v726
        %4773 = vmatpush.xpose.msra.mxu0 %v470
        %4774 = vmatmul.f32.gmra.mxu0 %v1089
        %v4775 = vpop.f32.mrf.mxu0
        %v4776 = vadd.f32 %v4756, %v4775
        %4777 = vdwg.mxu0
        %4778 = vmatpush.xpose.msra.mxu0 0.0
        %4779 = vmatpush.xpose.msra.mxu0 0.0
        %4780 = vmatpush.xpose.msra.mxu0 0.0
        %4781 = vmatpush.xpose.msra.mxu0 0.0
        %4782 = vmatpush.xpose.msra.mxu0 0.0
        %4783 = vmatpush.xpose.msra.mxu0 0.0
        %4784 = vmatpush.xpose.msra.mxu0 0.0
        %4785 = vmatpush.xpose.msra.mxu0 0.0
        %4786 = vmatpush.xpose.msra.mxu0 0.0
        %4787 = vmatpush.xpose.msra.mxu0 0.0
        %4788 = vmatpush.xpose.msra.mxu0 0.0
        %4789 = vmatpush.xpose.msra.mxu0 0.0
        %4790 = vmatpush.xpose.msra.mxu0 0.0
        %4791 = vmatpush.xpose.msra.mxu0 0.0
        %4792 = vmatpush.xpose.msra.mxu0 %v727
        %4793 = vmatpush.xpose.msra.mxu0 %v471
        %4794 = vmatmul.f32.gmra.mxu0 %v1090
        %v4795 = vpop.f32.mrf.mxu0
        %v4796 = vadd.f32 %v4776, %v4795
        %4797 = vdwg.mxu0
        %4798 = vmatpush.xpose.msra.mxu0 0.0
        %4799 = vmatpush.xpose.msra.mxu0 0.0
        %4800 = vmatpush.xpose.msra.mxu0 0.0
        %4801 = vmatpush.xpose.msra.mxu0 0.0
        %4802 = vmatpush.xpose.msra.mxu0 0.0
        %4803 = vmatpush.xpose.msra.mxu0 0.0
        %4804 = vmatpush.xpose.msra.mxu0 0.0
        %4805 = vmatpush.xpose.msra.mxu0 0.0
        %4806 = vmatpush.xpose.msra.mxu0 0.0
        %4807 = vmatpush.xpose.msra.mxu0 0.0
        %4808 = vmatpush.xpose.msra.mxu0 0.0
        %4809 = vmatpush.xpose.msra.mxu0 0.0
        %4810 = vmatpush.xpose.msra.mxu0 0.0
        %4811 = vmatpush.xpose.msra.mxu0 0.0
        %4812 = vmatpush.xpose.msra.mxu0 %v728
        %4813 = vmatpush.xpose.msra.mxu0 %v472
        %4814 = vmatmul.f32.gmra.mxu0 %v1091
        %v4815 = vpop.f32.mrf.mxu0
        %v4816 = vadd.f32 %v4796, %v4815
        %4817 = vdwg.mxu0
        %4818 = vmatpush.xpose.msra.mxu0 0.0
        %4819 = vmatpush.xpose.msra.mxu0 0.0
        %4820 = vmatpush.xpose.msra.mxu0 0.0
        %4821 = vmatpush.xpose.msra.mxu0 0.0
        %4822 = vmatpush.xpose.msra.mxu0 0.0
        %4823 = vmatpush.xpose.msra.mxu0 0.0
        %4824 = vmatpush.xpose.msra.mxu0 0.0
        %4825 = vmatpush.xpose.msra.mxu0 0.0
        %4826 = vmatpush.xpose.msra.mxu0 0.0
        %4827 = vmatpush.xpose.msra.mxu0 0.0
        %4828 = vmatpush.xpose.msra.mxu0 0.0
        %4829 = vmatpush.xpose.msra.mxu0 0.0
        %4830 = vmatpush.xpose.msra.mxu0 0.0
        %4831 = vmatpush.xpose.msra.mxu0 0.0
        %4832 = vmatpush.xpose.msra.mxu0 %v729
        %4833 = vmatpush.xpose.msra.mxu0 %v473
        %4834 = vmatmul.f32.gmra.mxu0 %v1094
        %v4835 = vpop.f32.mrf.mxu0
        %v4836 = vadd.f32 %v4816, %v4835
        %4837 = vdwg.mxu0
        %4838 = vmatpush.xpose.msra.mxu0 0.0
        %4839 = vmatpush.xpose.msra.mxu0 0.0
        %4840 = vmatpush.xpose.msra.mxu0 0.0
        %4841 = vmatpush.xpose.msra.mxu0 0.0
        %4842 = vmatpush.xpose.msra.mxu0 0.0
        %4843 = vmatpush.xpose.msra.mxu0 0.0
        %4844 = vmatpush.xpose.msra.mxu0 0.0
        %4845 = vmatpush.xpose.msra.mxu0 0.0
        %4846 = vmatpush.xpose.msra.mxu0 0.0
        %4847 = vmatpush.xpose.msra.mxu0 0.0
        %4848 = vmatpush.xpose.msra.mxu0 0.0
        %4849 = vmatpush.xpose.msra.mxu0 0.0
        %4850 = vmatpush.xpose.msra.mxu0 0.0
        %4851 = vmatpush.xpose.msra.mxu0 0.0
        %4852 = vmatpush.xpose.msra.mxu0 %v730
        %4853 = vmatpush.xpose.msra.mxu0 %v474
        %4854 = vmatmul.f32.gmra.mxu0 %v1095
        %v4855 = vpop.f32.mrf.mxu0
        %v4856 = vadd.f32 %v4836, %v4855
        %4857 = vdwg.mxu0
        %4858 = vmatpush.xpose.msra.mxu0 0.0
        %4859 = vmatpush.xpose.msra.mxu0 0.0
        %4860 = vmatpush.xpose.msra.mxu0 0.0
        %4861 = vmatpush.xpose.msra.mxu0 0.0
        %4862 = vmatpush.xpose.msra.mxu0 0.0
        %4863 = vmatpush.xpose.msra.mxu0 0.0
        %4864 = vmatpush.xpose.msra.mxu0 0.0
        %4865 = vmatpush.xpose.msra.mxu0 0.0
        %4866 = vmatpush.xpose.msra.mxu0 0.0
        %4867 = vmatpush.xpose.msra.mxu0 0.0
        %4868 = vmatpush.xpose.msra.mxu0 0.0
        %4869 = vmatpush.xpose.msra.mxu0 0.0
        %4870 = vmatpush.xpose.msra.mxu0 0.0
        %4871 = vmatpush.xpose.msra.mxu0 0.0
        %4872 = vmatpush.xpose.msra.mxu0 %v731
        %4873 = vmatpush.xpose.msra.mxu0 %v475
        %4874 = vmatmul.f32.gmra.mxu0 %v1096
        %v4875 = vpop.f32.mrf.mxu0
        %v4876 = vadd.f32 %v4856, %v4875
        %4877 = vdwg.mxu0
        %4878 = vmatpush.xpose.msra.mxu0 0.0
        %4879 = vmatpush.xpose.msra.mxu0 0.0
        %4880 = vmatpush.xpose.msra.mxu0 0.0
        %4881 = vmatpush.xpose.msra.mxu0 0.0
        %4882 = vmatpush.xpose.msra.mxu0 0.0
        %4883 = vmatpush.xpose.msra.mxu0 0.0
        %4884 = vmatpush.xpose.msra.mxu0 0.0
        %4885 = vmatpush.xpose.msra.mxu0 0.0
        %4886 = vmatpush.xpose.msra.mxu0 0.0
        %4887 = vmatpush.xpose.msra.mxu0 0.0
        %4888 = vmatpush.xpose.msra.mxu0 0.0
        %4889 = vmatpush.xpose.msra.mxu0 0.0
        %4890 = vmatpush.xpose.msra.mxu0 0.0
        %4891 = vmatpush.xpose.msra.mxu0 0.0
        %4892 = vmatpush.xpose.msra.mxu0 %v732
        %4893 = vmatpush.xpose.msra.mxu0 %v476
        %4894 = vmatmul.f32.gmra.mxu0 %v1097
        %v4895 = vpop.f32.mrf.mxu0
        %v4896 = vadd.f32 %v4876, %v4895
        %4897 = vdwg.mxu0
        %4898 = vmatpush.xpose.msra.mxu0 0.0
        %4899 = vmatpush.xpose.msra.mxu0 0.0
        %4900 = vmatpush.xpose.msra.mxu0 0.0
        %4901 = vmatpush.xpose.msra.mxu0 0.0
        %4902 = vmatpush.xpose.msra.mxu0 0.0
        %4903 = vmatpush.xpose.msra.mxu0 0.0
        %4904 = vmatpush.xpose.msra.mxu0 0.0
        %4905 = vmatpush.xpose.msra.mxu0 0.0
        %4906 = vmatpush.xpose.msra.mxu0 0.0
        %4907 = vmatpush.xpose.msra.mxu0 0.0
        %4908 = vmatpush.xpose.msra.mxu0 0.0
        %4909 = vmatpush.xpose.msra.mxu0 0.0
        %4910 = vmatpush.xpose.msra.mxu0 0.0
        %4911 = vmatpush.xpose.msra.mxu0 0.0
        %4912 = vmatpush.xpose.msra.mxu0 %v733
        %4913 = vmatpush.xpose.msra.mxu0 %v477
        %4914 = vmatmul.f32.gmra.mxu0 %v1098
        %v4915 = vpop.f32.mrf.mxu0
        %v4916 = vadd.f32 %v4896, %v4915
        %4917 = vdwg.mxu0
        %4918 = vmatpush.xpose.msra.mxu0 0.0
        %4919 = vmatpush.xpose.msra.mxu0 0.0
        %4920 = vmatpush.xpose.msra.mxu0 0.0
        %4921 = vmatpush.xpose.msra.mxu0 0.0
        %4922 = vmatpush.xpose.msra.mxu0 0.0
        %4923 = vmatpush.xpose.msra.mxu0 0.0
        %4924 = vmatpush.xpose.msra.mxu0 0.0
        %4925 = vmatpush.xpose.msra.mxu0 0.0
        %4926 = vmatpush.xpose.msra.mxu0 0.0
        %4927 = vmatpush.xpose.msra.mxu0 0.0
        %4928 = vmatpush.xpose.msra.mxu0 0.0
        %4929 = vmatpush.xpose.msra.mxu0 0.0
        %4930 = vmatpush.xpose.msra.mxu0 0.0
        %4931 = vmatpush.xpose.msra.mxu0 0.0
        %4932 = vmatpush.xpose.msra.mxu0 %v734
        %4933 = vmatpush.xpose.msra.mxu0 %v478
        %4934 = vmatmul.f32.gmra.mxu0 %v1099
        %v4935 = vpop.f32.mrf.mxu0
        %v4936 = vadd.f32 %v4916, %v4935
        %4937 = vdwg.mxu0
        %4938 = vmatpush.xpose.msra.mxu0 0.0
        %4939 = vmatpush.xpose.msra.mxu0 0.0
        %4940 = vmatpush.xpose.msra.mxu0 0.0
        %4941 = vmatpush.xpose.msra.mxu0 0.0
        %4942 = vmatpush.xpose.msra.mxu0 0.0
        %4943 = vmatpush.xpose.msra.mxu0 0.0
        %4944 = vmatpush.xpose.msra.mxu0 0.0
        %4945 = vmatpush.xpose.msra.mxu0 0.0
        %4946 = vmatpush.xpose.msra.mxu0 0.0
        %4947 = vmatpush.xpose.msra.mxu0 0.0
        %4948 = vmatpush.xpose.msra.mxu0 0.0
        %4949 = vmatpush.xpose.msra.mxu0 0.0
        %4950 = vmatpush.xpose.msra.mxu0 0.0
        %4951 = vmatpush.xpose.msra.mxu0 0.0
        %4952 = vmatpush.xpose.msra.mxu0 %v735
        %4953 = vmatpush.xpose.msra.mxu0 %v479
        %4954 = vmatmul.f32.gmra.mxu0 %v1100
        %v4955 = vpop.f32.mrf.mxu0
        %v4956 = vadd.f32 %v4936, %v4955
        %4957 = vdwg.mxu0
        %4958 = vmatpush.xpose.msra.mxu0 0.0
        %4959 = vmatpush.xpose.msra.mxu0 0.0
        %4960 = vmatpush.xpose.msra.mxu0 0.0
        %4961 = vmatpush.xpose.msra.mxu0 0.0
        %4962 = vmatpush.xpose.msra.mxu0 0.0
        %4963 = vmatpush.xpose.msra.mxu0 0.0
        %4964 = vmatpush.xpose.msra.mxu0 0.0
        %4965 = vmatpush.xpose.msra.mxu0 0.0
        %4966 = vmatpush.xpose.msra.mxu0 0.0
        %4967 = vmatpush.xpose.msra.mxu0 0.0
        %4968 = vmatpush.xpose.msra.mxu0 0.0
        %4969 = vmatpush.xpose.msra.mxu0 0.0
        %4970 = vmatpush.xpose.msra.mxu0 0.0
        %4971 = vmatpush.xpose.msra.mxu0 0.0
        %4972 = vmatpush.xpose.msra.mxu0 %v736
        %4973 = vmatpush.xpose.msra.mxu0 %v480
        %4974 = vmatmul.f32.gmra.mxu0 %v1101
        %v4975 = vpop.f32.mrf.mxu0
        %v4976 = vadd.f32 %v4956, %v4975
        %4977 = vdwg.mxu0
        %4978 = vmatpush.xpose.msra.mxu0 0.0
        %4979 = vmatpush.xpose.msra.mxu0 0.0
        %4980 = vmatpush.xpose.msra.mxu0 0.0
        %4981 = vmatpush.xpose.msra.mxu0 0.0
        %4982 = vmatpush.xpose.msra.mxu0 0.0
        %4983 = vmatpush.xpose.msra.mxu0 0.0
        %4984 = vmatpush.xpose.msra.mxu0 0.0
        %4985 = vmatpush.xpose.msra.mxu0 0.0
        %4986 = vmatpush.xpose.msra.mxu0 0.0
        %4987 = vmatpush.xpose.msra.mxu0 0.0
        %4988 = vmatpush.xpose.msra.mxu0 0.0
        %4989 = vmatpush.xpose.msra.mxu0 0.0
        %4990 = vmatpush.xpose.msra.mxu0 0.0
        %4991 = vmatpush.xpose.msra.mxu0 0.0
        %4992 = vmatpush.xpose.msra.mxu0 %v737
        %4993 = vmatpush.xpose.msra.mxu0 %v481
        %4994 = vmatmul.f32.gmra.mxu0 %v1104
        %v4995 = vpop.f32.mrf.mxu0
        %v4996 = vadd.f32 %v4976, %v4995
        %4997 = vdwg.mxu0
        %4998 = vmatpush.xpose.msra.mxu0 0.0
        %4999 = vmatpush.xpose.msra.mxu0 0.0
        %5000 = vmatpush.xpose.msra.mxu0 0.0
        %5001 = vmatpush.xpose.msra.mxu0 0.0
        %5002 = vmatpush.xpose.msra.mxu0 0.0
        %5003 = vmatpush.xpose.msra.mxu0 0.0
        %5004 = vmatpush.xpose.msra.mxu0 0.0
        %5005 = vmatpush.xpose.msra.mxu0 0.0
        %5006 = vmatpush.xpose.msra.mxu0 0.0
        %5007 = vmatpush.xpose.msra.mxu0 0.0
        %5008 = vmatpush.xpose.msra.mxu0 0.0
        %5009 = vmatpush.xpose.msra.mxu0 0.0
        %5010 = vmatpush.xpose.msra.mxu0 0.0
        %5011 = vmatpush.xpose.msra.mxu0 0.0
        %5012 = vmatpush.xpose.msra.mxu0 %v738
        %5013 = vmatpush.xpose.msra.mxu0 %v482
        %5014 = vmatmul.f32.gmra.mxu0 %v1105
        %v5015 = vpop.f32.mrf.mxu0
        %v5016 = vadd.f32 %v4996, %v5015
        %5017 = vdwg.mxu0
        %5018 = vmatpush.xpose.msra.mxu0 0.0
        %5019 = vmatpush.xpose.msra.mxu0 0.0
        %5020 = vmatpush.xpose.msra.mxu0 0.0
        %5021 = vmatpush.xpose.msra.mxu0 0.0
        %5022 = vmatpush.xpose.msra.mxu0 0.0
        %5023 = vmatpush.xpose.msra.mxu0 0.0
        %5024 = vmatpush.xpose.msra.mxu0 0.0
        %5025 = vmatpush.xpose.msra.mxu0 0.0
        %5026 = vmatpush.xpose.msra.mxu0 0.0
        %5027 = vmatpush.xpose.msra.mxu0 0.0
        %5028 = vmatpush.xpose.msra.mxu0 0.0
        %5029 = vmatpush.xpose.msra.mxu0 0.0
        %5030 = vmatpush.xpose.msra.mxu0 0.0
        %5031 = vmatpush.xpose.msra.mxu0 0.0
        %5032 = vmatpush.xpose.msra.mxu0 %v739
        %5033 = vmatpush.xpose.msra.mxu0 %v483
        %5034 = vmatmul.f32.gmra.mxu0 %v1106
        %v5035 = vpop.f32.mrf.mxu0
        %v5036 = vadd.f32 %v5016, %v5035
        %5037 = vdwg.mxu0
        %5038 = vmatpush.xpose.msra.mxu0 0.0
        %5039 = vmatpush.xpose.msra.mxu0 0.0
        %5040 = vmatpush.xpose.msra.mxu0 0.0
        %5041 = vmatpush.xpose.msra.mxu0 0.0
        %5042 = vmatpush.xpose.msra.mxu0 0.0
        %5043 = vmatpush.xpose.msra.mxu0 0.0
        %5044 = vmatpush.xpose.msra.mxu0 0.0
        %5045 = vmatpush.xpose.msra.mxu0 0.0
        %5046 = vmatpush.xpose.msra.mxu0 0.0
        %5047 = vmatpush.xpose.msra.mxu0 0.0
        %5048 = vmatpush.xpose.msra.mxu0 0.0
        %5049 = vmatpush.xpose.msra.mxu0 0.0
        %5050 = vmatpush.xpose.msra.mxu0 0.0
        %5051 = vmatpush.xpose.msra.mxu0 0.0
        %5052 = vmatpush.xpose.msra.mxu0 %v740
        %5053 = vmatpush.xpose.msra.mxu0 %v484
        %5054 = vmatmul.f32.gmra.mxu0 %v1107
        %v5055 = vpop.f32.mrf.mxu0
        %v5056 = vadd.f32 %v5036, %v5055
        %5057 = vdwg.mxu0
        %5058 = vmatpush.xpose.msra.mxu0 0.0
        %5059 = vmatpush.xpose.msra.mxu0 0.0
        %5060 = vmatpush.xpose.msra.mxu0 0.0
        %5061 = vmatpush.xpose.msra.mxu0 0.0
        %5062 = vmatpush.xpose.msra.mxu0 0.0
        %5063 = vmatpush.xpose.msra.mxu0 0.0
        %5064 = vmatpush.xpose.msra.mxu0 0.0
        %5065 = vmatpush.xpose.msra.mxu0 0.0
        %5066 = vmatpush.xpose.msra.mxu0 0.0
        %5067 = vmatpush.xpose.msra.mxu0 0.0
        %5068 = vmatpush.xpose.msra.mxu0 0.0
        %5069 = vmatpush.xpose.msra.mxu0 0.0
        %5070 = vmatpush.xpose.msra.mxu0 0.0
        %5071 = vmatpush.xpose.msra.mxu0 0.0
        %5072 = vmatpush.xpose.msra.mxu0 %v741
        %5073 = vmatpush.xpose.msra.mxu0 %v485
        %5074 = vmatmul.f32.gmra.mxu0 %v1108
        %v5075 = vpop.f32.mrf.mxu0
        %v5076 = vadd.f32 %v5056, %v5075
        %5077 = vdwg.mxu0
        %5078 = vmatpush.xpose.msra.mxu0 0.0
        %5079 = vmatpush.xpose.msra.mxu0 0.0
        %5080 = vmatpush.xpose.msra.mxu0 0.0
        %5081 = vmatpush.xpose.msra.mxu0 0.0
        %5082 = vmatpush.xpose.msra.mxu0 0.0
        %5083 = vmatpush.xpose.msra.mxu0 0.0
        %5084 = vmatpush.xpose.msra.mxu0 0.0
        %5085 = vmatpush.xpose.msra.mxu0 0.0
        %5086 = vmatpush.xpose.msra.mxu0 0.0
        %5087 = vmatpush.xpose.msra.mxu0 0.0
        %5088 = vmatpush.xpose.msra.mxu0 0.0
        %5089 = vmatpush.xpose.msra.mxu0 0.0
        %5090 = vmatpush.xpose.msra.mxu0 0.0
        %5091 = vmatpush.xpose.msra.mxu0 0.0
        %5092 = vmatpush.xpose.msra.mxu0 %v742
        %5093 = vmatpush.xpose.msra.mxu0 %v486
        %5094 = vmatmul.f32.gmra.mxu0 %v1109
        %v5095 = vpop.f32.mrf.mxu0
        %v5096 = vadd.f32 %v5076, %v5095
        %5097 = vdwg.mxu0
        %5098 = vmatpush.xpose.msra.mxu0 0.0
        %5099 = vmatpush.xpose.msra.mxu0 0.0
        %5100 = vmatpush.xpose.msra.mxu0 0.0
        %5101 = vmatpush.xpose.msra.mxu0 0.0
        %5102 = vmatpush.xpose.msra.mxu0 0.0
        %5103 = vmatpush.xpose.msra.mxu0 0.0
        %5104 = vmatpush.xpose.msra.mxu0 0.0
        %5105 = vmatpush.xpose.msra.mxu0 0.0
        %5106 = vmatpush.xpose.msra.mxu0 0.0
        %5107 = vmatpush.xpose.msra.mxu0 0.0
        %5108 = vmatpush.xpose.msra.mxu0 0.0
        %5109 = vmatpush.xpose.msra.mxu0 0.0
        %5110 = vmatpush.xpose.msra.mxu0 0.0
        %5111 = vmatpush.xpose.msra.mxu0 0.0
        %5112 = vmatpush.xpose.msra.mxu0 %v743
        %5113 = vmatpush.xpose.msra.mxu0 %v487
        %5114 = vmatmul.f32.gmra.mxu0 %v1110
        %v5115 = vpop.f32.mrf.mxu0
        %v5116 = vadd.f32 %v5096, %v5115
        %5117 = vdwg.mxu0
        %5118 = vmatpush.xpose.msra.mxu0 0.0
        %5119 = vmatpush.xpose.msra.mxu0 0.0
        %5120 = vmatpush.xpose.msra.mxu0 0.0
        %5121 = vmatpush.xpose.msra.mxu0 0.0
        %5122 = vmatpush.xpose.msra.mxu0 0.0
        %5123 = vmatpush.xpose.msra.mxu0 0.0
        %5124 = vmatpush.xpose.msra.mxu0 0.0
        %5125 = vmatpush.xpose.msra.mxu0 0.0
        %5126 = vmatpush.xpose.msra.mxu0 0.0
        %5127 = vmatpush.xpose.msra.mxu0 0.0
        %5128 = vmatpush.xpose.msra.mxu0 0.0
        %5129 = vmatpush.xpose.msra.mxu0 0.0
        %5130 = vmatpush.xpose.msra.mxu0 0.0
        %5131 = vmatpush.xpose.msra.mxu0 0.0
        %5132 = vmatpush.xpose.msra.mxu0 %v744
        %5133 = vmatpush.xpose.msra.mxu0 %v488
        %5134 = vmatmul.f32.gmra.mxu0 %v1111
        %v5135 = vpop.f32.mrf.mxu0
        %v5136 = vadd.f32 %v5116, %v5135
        %5137 = vdwg.mxu0
        %5138 = vmatpush.xpose.msra.mxu0 0.0
        %5139 = vmatpush.xpose.msra.mxu0 0.0
        %5140 = vmatpush.xpose.msra.mxu0 0.0
        %5141 = vmatpush.xpose.msra.mxu0 0.0
        %5142 = vmatpush.xpose.msra.mxu0 0.0
        %5143 = vmatpush.xpose.msra.mxu0 0.0
        %5144 = vmatpush.xpose.msra.mxu0 0.0
        %5145 = vmatpush.xpose.msra.mxu0 0.0
        %5146 = vmatpush.xpose.msra.mxu0 0.0
        %5147 = vmatpush.xpose.msra.mxu0 0.0
        %5148 = vmatpush.xpose.msra.mxu0 0.0
        %5149 = vmatpush.xpose.msra.mxu0 0.0
        %5150 = vmatpush.xpose.msra.mxu0 0.0
        %5151 = vmatpush.xpose.msra.mxu0 0.0
        %5152 = vmatpush.xpose.msra.mxu0 %v745
        %5153 = vmatpush.xpose.msra.mxu0 %v489
        %5154 = vmatmul.f32.gmra.mxu0 %v1114
        %v5155 = vpop.f32.mrf.mxu0
        %v5156 = vadd.f32 %v5136, %v5155
        %5157 = vdwg.mxu0
        %5158 = vmatpush.xpose.msra.mxu0 0.0
        %5159 = vmatpush.xpose.msra.mxu0 0.0
        %5160 = vmatpush.xpose.msra.mxu0 0.0
        %5161 = vmatpush.xpose.msra.mxu0 0.0
        %5162 = vmatpush.xpose.msra.mxu0 0.0
        %5163 = vmatpush.xpose.msra.mxu0 0.0
        %5164 = vmatpush.xpose.msra.mxu0 0.0
        %5165 = vmatpush.xpose.msra.mxu0 0.0
        %5166 = vmatpush.xpose.msra.mxu0 0.0
        %5167 = vmatpush.xpose.msra.mxu0 0.0
        %5168 = vmatpush.xpose.msra.mxu0 0.0
        %5169 = vmatpush.xpose.msra.mxu0 0.0
        %5170 = vmatpush.xpose.msra.mxu0 0.0
        %5171 = vmatpush.xpose.msra.mxu0 0.0
        %5172 = vmatpush.xpose.msra.mxu0 %v746
        %5173 = vmatpush.xpose.msra.mxu0 %v490
        %5174 = vmatmul.f32.gmra.mxu0 %v1115
        %v5175 = vpop.f32.mrf.mxu0
        %v5176 = vadd.f32 %v5156, %v5175
        %5177 = vdwg.mxu0
        %5178 = vmatpush.xpose.msra.mxu0 0.0
        %5179 = vmatpush.xpose.msra.mxu0 0.0
        %5180 = vmatpush.xpose.msra.mxu0 0.0
        %5181 = vmatpush.xpose.msra.mxu0 0.0
        %5182 = vmatpush.xpose.msra.mxu0 0.0
        %5183 = vmatpush.xpose.msra.mxu0 0.0
        %5184 = vmatpush.xpose.msra.mxu0 0.0
        %5185 = vmatpush.xpose.msra.mxu0 0.0
        %5186 = vmatpush.xpose.msra.mxu0 0.0
        %5187 = vmatpush.xpose.msra.mxu0 0.0
        %5188 = vmatpush.xpose.msra.mxu0 0.0
        %5189 = vmatpush.xpose.msra.mxu0 0.0
        %5190 = vmatpush.xpose.msra.mxu0 0.0
        %5191 = vmatpush.xpose.msra.mxu0 0.0
        %5192 = vmatpush.xpose.msra.mxu0 %v747
        %5193 = vmatpush.xpose.msra.mxu0 %v491
        %5194 = vmatmul.f32.gmra.mxu0 %v1116
        %v5195 = vpop.f32.mrf.mxu0
        %v5196 = vadd.f32 %v5176, %v5195
        %5197 = vdwg.mxu0
        %5198 = vmatpush.xpose.msra.mxu0 0.0
        %5199 = vmatpush.xpose.msra.mxu0 0.0
        %5200 = vmatpush.xpose.msra.mxu0 0.0
        %5201 = vmatpush.xpose.msra.mxu0 0.0
        %5202 = vmatpush.xpose.msra.mxu0 0.0
        %5203 = vmatpush.xpose.msra.mxu0 0.0
        %5204 = vmatpush.xpose.msra.mxu0 0.0
        %5205 = vmatpush.xpose.msra.mxu0 0.0
        %5206 = vmatpush.xpose.msra.mxu0 0.0
        %5207 = vmatpush.xpose.msra.mxu0 0.0
        %5208 = vmatpush.xpose.msra.mxu0 0.0
        %5209 = vmatpush.xpose.msra.mxu0 0.0
        %5210 = vmatpush.xpose.msra.mxu0 0.0
        %5211 = vmatpush.xpose.msra.mxu0 0.0
        %5212 = vmatpush.xpose.msra.mxu0 %v748
        %5213 = vmatpush.xpose.msra.mxu0 %v492
        %5214 = vmatmul.f32.gmra.mxu0 %v1117
        %v5215 = vpop.f32.mrf.mxu0
        %v5216 = vadd.f32 %v5196, %v5215
        %5217 = vdwg.mxu0
        %5218 = vmatpush.xpose.msra.mxu0 0.0
        %5219 = vmatpush.xpose.msra.mxu0 0.0
        %5220 = vmatpush.xpose.msra.mxu0 0.0
        %5221 = vmatpush.xpose.msra.mxu0 0.0
        %5222 = vmatpush.xpose.msra.mxu0 0.0
        %5223 = vmatpush.xpose.msra.mxu0 0.0
        %5224 = vmatpush.xpose.msra.mxu0 0.0
        %5225 = vmatpush.xpose.msra.mxu0 0.0
        %5226 = vmatpush.xpose.msra.mxu0 0.0
        %5227 = vmatpush.xpose.msra.mxu0 0.0
        %5228 = vmatpush.xpose.msra.mxu0 0.0
        %5229 = vmatpush.xpose.msra.mxu0 0.0
        %5230 = vmatpush.xpose.msra.mxu0 0.0
        %5231 = vmatpush.xpose.msra.mxu0 0.0
        %5232 = vmatpush.xpose.msra.mxu0 %v749
        %5233 = vmatpush.xpose.msra.mxu0 %v493
        %5234 = vmatmul.f32.gmra.mxu0 %v1118
        %v5235 = vpop.f32.mrf.mxu0
        %v5236 = vadd.f32 %v5216, %v5235
        %5237 = vdwg.mxu0
        %5238 = vmatpush.xpose.msra.mxu0 0.0
        %5239 = vmatpush.xpose.msra.mxu0 0.0
        %5240 = vmatpush.xpose.msra.mxu0 0.0
        %5241 = vmatpush.xpose.msra.mxu0 0.0
        %5242 = vmatpush.xpose.msra.mxu0 0.0
        %5243 = vmatpush.xpose.msra.mxu0 0.0
        %5244 = vmatpush.xpose.msra.mxu0 0.0
        %5245 = vmatpush.xpose.msra.mxu0 0.0
        %5246 = vmatpush.xpose.msra.mxu0 0.0
        %5247 = vmatpush.xpose.msra.mxu0 0.0
        %5248 = vmatpush.xpose.msra.mxu0 0.0
        %5249 = vmatpush.xpose.msra.mxu0 0.0
        %5250 = vmatpush.xpose.msra.mxu0 0.0
        %5251 = vmatpush.xpose.msra.mxu0 0.0
        %5252 = vmatpush.xpose.msra.mxu0 %v750
        %5253 = vmatpush.xpose.msra.mxu0 %v494
        %5254 = vmatmul.f32.gmra.mxu0 %v1119
        %v5255 = vpop.f32.mrf.mxu0
        %v5256 = vadd.f32 %v5236, %v5255
        %5257 = vdwg.mxu0
        %5258 = vmatpush.xpose.msra.mxu0 0.0
        %5259 = vmatpush.xpose.msra.mxu0 0.0
        %5260 = vmatpush.xpose.msra.mxu0 0.0
        %5261 = vmatpush.xpose.msra.mxu0 0.0
        %5262 = vmatpush.xpose.msra.mxu0 0.0
        %5263 = vmatpush.xpose.msra.mxu0 0.0
        %5264 = vmatpush.xpose.msra.mxu0 0.0
        %5265 = vmatpush.xpose.msra.mxu0 0.0
        %5266 = vmatpush.xpose.msra.mxu0 0.0
        %5267 = vmatpush.xpose.msra.mxu0 0.0
        %5268 = vmatpush.xpose.msra.mxu0 0.0
        %5269 = vmatpush.xpose.msra.mxu0 0.0
        %5270 = vmatpush.xpose.msra.mxu0 0.0
        %5271 = vmatpush.xpose.msra.mxu0 0.0
        %5272 = vmatpush.xpose.msra.mxu0 %v751
        %5273 = vmatpush.xpose.msra.mxu0 %v495
        %5274 = vmatmul.f32.gmra.mxu0 %v1120
        %v5275 = vpop.f32.mrf.mxu0
        %v5276 = vadd.f32 %v5256, %v5275
        %5277 = vdwg.mxu0
        %5278 = vmatpush.xpose.msra.mxu0 0.0
        %5279 = vmatpush.xpose.msra.mxu0 0.0
        %5280 = vmatpush.xpose.msra.mxu0 0.0
        %5281 = vmatpush.xpose.msra.mxu0 0.0
        %5282 = vmatpush.xpose.msra.mxu0 0.0
        %5283 = vmatpush.xpose.msra.mxu0 0.0
        %5284 = vmatpush.xpose.msra.mxu0 0.0
        %5285 = vmatpush.xpose.msra.mxu0 0.0
        %5286 = vmatpush.xpose.msra.mxu0 0.0
        %5287 = vmatpush.xpose.msra.mxu0 0.0
        %5288 = vmatpush.xpose.msra.mxu0 0.0
        %5289 = vmatpush.xpose.msra.mxu0 0.0
        %5290 = vmatpush.xpose.msra.mxu0 0.0
        %5291 = vmatpush.xpose.msra.mxu0 0.0
        %5292 = vmatpush.xpose.msra.mxu0 %v752
        %5293 = vmatpush.xpose.msra.mxu0 %v496
        %5294 = vmatmul.f32.gmra.mxu0 %v1121
        %v5295 = vpop.f32.mrf.mxu0
        %v5296 = vadd.f32 %v5276, %v5295
        %5297 = vdwg.mxu0
        %5298 = vmatpush.xpose.msra.mxu0 0.0
        %5299 = vmatpush.xpose.msra.mxu0 0.0
        %5300 = vmatpush.xpose.msra.mxu0 0.0
        %5301 = vmatpush.xpose.msra.mxu0 0.0
        %5302 = vmatpush.xpose.msra.mxu0 0.0
        %5303 = vmatpush.xpose.msra.mxu0 0.0
        %5304 = vmatpush.xpose.msra.mxu0 0.0
        %5305 = vmatpush.xpose.msra.mxu0 0.0
        %5306 = vmatpush.xpose.msra.mxu0 0.0
        %5307 = vmatpush.xpose.msra.mxu0 0.0
        %5308 = vmatpush.xpose.msra.mxu0 0.0
        %5309 = vmatpush.xpose.msra.mxu0 0.0
        %5310 = vmatpush.xpose.msra.mxu0 0.0
        %5311 = vmatpush.xpose.msra.mxu0 0.0
        %5312 = vmatpush.xpose.msra.mxu0 %v753
        %5313 = vmatpush.xpose.msra.mxu0 %v497
        %5314 = vmatmul.f32.gmra.mxu0 %v1124
        %v5315 = vpop.f32.mrf.mxu0
        %v5316 = vadd.f32 %v5296, %v5315
        %5317 = vdwg.mxu0
        %5318 = vmatpush.xpose.msra.mxu0 0.0
        %5319 = vmatpush.xpose.msra.mxu0 0.0
        %5320 = vmatpush.xpose.msra.mxu0 0.0
        %5321 = vmatpush.xpose.msra.mxu0 0.0
        %5322 = vmatpush.xpose.msra.mxu0 0.0
        %5323 = vmatpush.xpose.msra.mxu0 0.0
        %5324 = vmatpush.xpose.msra.mxu0 0.0
        %5325 = vmatpush.xpose.msra.mxu0 0.0
        %5326 = vmatpush.xpose.msra.mxu0 0.0
        %5327 = vmatpush.xpose.msra.mxu0 0.0
        %5328 = vmatpush.xpose.msra.mxu0 0.0
        %5329 = vmatpush.xpose.msra.mxu0 0.0
        %5330 = vmatpush.xpose.msra.mxu0 0.0
        %5331 = vmatpush.xpose.msra.mxu0 0.0
        %5332 = vmatpush.xpose.msra.mxu0 %v754
        %5333 = vmatpush.xpose.msra.mxu0 %v498
        %5334 = vmatmul.f32.gmra.mxu0 %v1125
        %v5335 = vpop.f32.mrf.mxu0
        %v5336 = vadd.f32 %v5316, %v5335
        %5337 = vdwg.mxu0
        %5338 = vmatpush.xpose.msra.mxu0 0.0
        %5339 = vmatpush.xpose.msra.mxu0 0.0
        %5340 = vmatpush.xpose.msra.mxu0 0.0
        %5341 = vmatpush.xpose.msra.mxu0 0.0
        %5342 = vmatpush.xpose.msra.mxu0 0.0
        %5343 = vmatpush.xpose.msra.mxu0 0.0
        %5344 = vmatpush.xpose.msra.mxu0 0.0
        %5345 = vmatpush.xpose.msra.mxu0 0.0
        %5346 = vmatpush.xpose.msra.mxu0 0.0
        %5347 = vmatpush.xpose.msra.mxu0 0.0
        %5348 = vmatpush.xpose.msra.mxu0 0.0
        %5349 = vmatpush.xpose.msra.mxu0 0.0
        %5350 = vmatpush.xpose.msra.mxu0 0.0
        %5351 = vmatpush.xpose.msra.mxu0 0.0
        %5352 = vmatpush.xpose.msra.mxu0 %v755
        %5353 = vmatpush.xpose.msra.mxu0 %v499
        %5354 = vmatmul.f32.gmra.mxu0 %v1126
        %v5355 = vpop.f32.mrf.mxu0
        %v5356 = vadd.f32 %v5336, %v5355
        %5357 = vdwg.mxu0
        %5358 = vmatpush.xpose.msra.mxu0 0.0
        %5359 = vmatpush.xpose.msra.mxu0 0.0
        %5360 = vmatpush.xpose.msra.mxu0 0.0
        %5361 = vmatpush.xpose.msra.mxu0 0.0
        %5362 = vmatpush.xpose.msra.mxu0 0.0
        %5363 = vmatpush.xpose.msra.mxu0 0.0
        %5364 = vmatpush.xpose.msra.mxu0 0.0
        %5365 = vmatpush.xpose.msra.mxu0 0.0
        %5366 = vmatpush.xpose.msra.mxu0 0.0
        %5367 = vmatpush.xpose.msra.mxu0 0.0
        %5368 = vmatpush.xpose.msra.mxu0 0.0
        %5369 = vmatpush.xpose.msra.mxu0 0.0
        %5370 = vmatpush.xpose.msra.mxu0 0.0
        %5371 = vmatpush.xpose.msra.mxu0 0.0
        %5372 = vmatpush.xpose.msra.mxu0 %v756
        %5373 = vmatpush.xpose.msra.mxu0 %v500
        %5374 = vmatmul.f32.gmra.mxu0 %v1127
        %v5375 = vpop.f32.mrf.mxu0
        %v5376 = vadd.f32 %v5356, %v5375
        %5377 = vdwg.mxu0
        %5378 = vmatpush.xpose.msra.mxu0 0.0
        %5379 = vmatpush.xpose.msra.mxu0 0.0
        %5380 = vmatpush.xpose.msra.mxu0 0.0
        %5381 = vmatpush.xpose.msra.mxu0 0.0
        %5382 = vmatpush.xpose.msra.mxu0 0.0
        %5383 = vmatpush.xpose.msra.mxu0 0.0
        %5384 = vmatpush.xpose.msra.mxu0 0.0
        %5385 = vmatpush.xpose.msra.mxu0 0.0
        %5386 = vmatpush.xpose.msra.mxu0 0.0
        %5387 = vmatpush.xpose.msra.mxu0 0.0
        %5388 = vmatpush.xpose.msra.mxu0 0.0
        %5389 = vmatpush.xpose.msra.mxu0 0.0
        %5390 = vmatpush.xpose.msra.mxu0 0.0
        %5391 = vmatpush.xpose.msra.mxu0 0.0
        %5392 = vmatpush.xpose.msra.mxu0 %v757
        %5393 = vmatpush.xpose.msra.mxu0 %v501
        %5394 = vmatmul.f32.gmra.mxu0 %v1128
        %v5395 = vpop.f32.mrf.mxu0
        %v5396 = vadd.f32 %v5376, %v5395
        %5397 = vdwg.mxu0
        %5398 = vmatpush.xpose.msra.mxu0 0.0
        %5399 = vmatpush.xpose.msra.mxu0 0.0
        %5400 = vmatpush.xpose.msra.mxu0 0.0
        %5401 = vmatpush.xpose.msra.mxu0 0.0
        %5402 = vmatpush.xpose.msra.mxu0 0.0
        %5403 = vmatpush.xpose.msra.mxu0 0.0
        %5404 = vmatpush.xpose.msra.mxu0 0.0
        %5405 = vmatpush.xpose.msra.mxu0 0.0
        %5406 = vmatpush.xpose.msra.mxu0 0.0
        %5407 = vmatpush.xpose.msra.mxu0 0.0
        %5408 = vmatpush.xpose.msra.mxu0 0.0
        %5409 = vmatpush.xpose.msra.mxu0 0.0
        %5410 = vmatpush.xpose.msra.mxu0 0.0
        %5411 = vmatpush.xpose.msra.mxu0 0.0
        %5412 = vmatpush.xpose.msra.mxu0 %v758
        %5413 = vmatpush.xpose.msra.mxu0 %v502
        %5414 = vmatmul.f32.gmra.mxu0 %v1129
        %v5415 = vpop.f32.mrf.mxu0
        %v5416 = vadd.f32 %v5396, %v5415
        %5417 = vdwg.mxu0
        %5418 = vmatpush.xpose.msra.mxu0 0.0
        %5419 = vmatpush.xpose.msra.mxu0 0.0
        %5420 = vmatpush.xpose.msra.mxu0 0.0
        %5421 = vmatpush.xpose.msra.mxu0 0.0
        %5422 = vmatpush.xpose.msra.mxu0 0.0
        %5423 = vmatpush.xpose.msra.mxu0 0.0
        %5424 = vmatpush.xpose.msra.mxu0 0.0
        %5425 = vmatpush.xpose.msra.mxu0 0.0
        %5426 = vmatpush.xpose.msra.mxu0 0.0
        %5427 = vmatpush.xpose.msra.mxu0 0.0
        %5428 = vmatpush.xpose.msra.mxu0 0.0
        %5429 = vmatpush.xpose.msra.mxu0 0.0
        %5430 = vmatpush.xpose.msra.mxu0 0.0
        %5431 = vmatpush.xpose.msra.mxu0 0.0
        %5432 = vmatpush.xpose.msra.mxu0 %v759
        %5433 = vmatpush.xpose.msra.mxu0 %v503
        %5434 = vmatmul.f32.gmra.mxu0 %v1130
        %v5435 = vpop.f32.mrf.mxu0
        %v5436 = vadd.f32 %v5416, %v5435
        %5437 = vdwg.mxu0
        %5438 = vmatpush.xpose.msra.mxu0 0.0
        %5439 = vmatpush.xpose.msra.mxu0 0.0
        %5440 = vmatpush.xpose.msra.mxu0 0.0
        %5441 = vmatpush.xpose.msra.mxu0 0.0
        %5442 = vmatpush.xpose.msra.mxu0 0.0
        %5443 = vmatpush.xpose.msra.mxu0 0.0
        %5444 = vmatpush.xpose.msra.mxu0 0.0
        %5445 = vmatpush.xpose.msra.mxu0 0.0
        %5446 = vmatpush.xpose.msra.mxu0 0.0
        %5447 = vmatpush.xpose.msra.mxu0 0.0
        %5448 = vmatpush.xpose.msra.mxu0 0.0
        %5449 = vmatpush.xpose.msra.mxu0 0.0
        %5450 = vmatpush.xpose.msra.mxu0 0.0
        %5451 = vmatpush.xpose.msra.mxu0 0.0
        %5452 = vmatpush.xpose.msra.mxu0 %v760
        %5453 = vmatpush.xpose.msra.mxu0 %v504
        %5454 = vmatmul.f32.gmra.mxu0 %v1131
        %v5455 = vpop.f32.mrf.mxu0
        %v5456 = vadd.f32 %v5436, %v5455
        %5457 = vdwg.mxu0
        %5458 = vmatpush.xpose.msra.mxu0 0.0
        %5459 = vmatpush.xpose.msra.mxu0 0.0
        %5460 = vmatpush.xpose.msra.mxu0 0.0
        %5461 = vmatpush.xpose.msra.mxu0 0.0
        %5462 = vmatpush.xpose.msra.mxu0 0.0
        %5463 = vmatpush.xpose.msra.mxu0 0.0
        %5464 = vmatpush.xpose.msra.mxu0 0.0
        %5465 = vmatpush.xpose.msra.mxu0 0.0
        %5466 = vmatpush.xpose.msra.mxu0 0.0
        %5467 = vmatpush.xpose.msra.mxu0 0.0
        %5468 = vmatpush.xpose.msra.mxu0 0.0
        %5469 = vmatpush.xpose.msra.mxu0 0.0
        %5470 = vmatpush.xpose.msra.mxu0 0.0
        %5471 = vmatpush.xpose.msra.mxu0 0.0
        %5472 = vmatpush.xpose.msra.mxu0 %v761
        %5473 = vmatpush.xpose.msra.mxu0 %v505
        %5474 = vmatmul.f32.gmra.mxu0 %v1134
        %v5475 = vpop.f32.mrf.mxu0
        %v5476 = vadd.f32 %v5456, %v5475
        %5477 = vdwg.mxu0
        %5478 = vmatpush.xpose.msra.mxu0 0.0
        %5479 = vmatpush.xpose.msra.mxu0 0.0
        %5480 = vmatpush.xpose.msra.mxu0 0.0
        %5481 = vmatpush.xpose.msra.mxu0 0.0
        %5482 = vmatpush.xpose.msra.mxu0 0.0
        %5483 = vmatpush.xpose.msra.mxu0 0.0
        %5484 = vmatpush.xpose.msra.mxu0 0.0
        %5485 = vmatpush.xpose.msra.mxu0 0.0
        %5486 = vmatpush.xpose.msra.mxu0 0.0
        %5487 = vmatpush.xpose.msra.mxu0 0.0
        %5488 = vmatpush.xpose.msra.mxu0 0.0
        %5489 = vmatpush.xpose.msra.mxu0 0.0
        %5490 = vmatpush.xpose.msra.mxu0 0.0
        %5491 = vmatpush.xpose.msra.mxu0 0.0
        %5492 = vmatpush.xpose.msra.mxu0 %v762
        %5493 = vmatpush.xpose.msra.mxu0 %v506
        %5494 = vmatmul.f32.gmra.mxu0 %v1135
        %v5495 = vpop.f32.mrf.mxu0
        %v5496 = vadd.f32 %v5476, %v5495
        %5497 = vdwg.mxu0
        %5498 = vmatpush.xpose.msra.mxu0 0.0
        %5499 = vmatpush.xpose.msra.mxu0 0.0
        %5500 = vmatpush.xpose.msra.mxu0 0.0
        %5501 = vmatpush.xpose.msra.mxu0 0.0
        %5502 = vmatpush.xpose.msra.mxu0 0.0
        %5503 = vmatpush.xpose.msra.mxu0 0.0
        %5504 = vmatpush.xpose.msra.mxu0 0.0
        %5505 = vmatpush.xpose.msra.mxu0 0.0
        %5506 = vmatpush.xpose.msra.mxu0 0.0
        %5507 = vmatpush.xpose.msra.mxu0 0.0
        %5508 = vmatpush.xpose.msra.mxu0 0.0
        %5509 = vmatpush.xpose.msra.mxu0 0.0
        %5510 = vmatpush.xpose.msra.mxu0 0.0
        %5511 = vmatpush.xpose.msra.mxu0 0.0
        %5512 = vmatpush.xpose.msra.mxu0 %v763
        %5513 = vmatpush.xpose.msra.mxu0 %v507
        %5514 = vmatmul.f32.gmra.mxu0 %v1136
        %v5515 = vpop.f32.mrf.mxu0
        %v5516 = vadd.f32 %v5496, %v5515
        %5517 = vdwg.mxu0
        %5518 = vmatpush.xpose.msra.mxu0 0.0
        %5519 = vmatpush.xpose.msra.mxu0 0.0
        %5520 = vmatpush.xpose.msra.mxu0 0.0
        %5521 = vmatpush.xpose.msra.mxu0 0.0
        %5522 = vmatpush.xpose.msra.mxu0 0.0
        %5523 = vmatpush.xpose.msra.mxu0 0.0
        %5524 = vmatpush.xpose.msra.mxu0 0.0
        %5525 = vmatpush.xpose.msra.mxu0 0.0
        %5526 = vmatpush.xpose.msra.mxu0 0.0
        %5527 = vmatpush.xpose.msra.mxu0 0.0
        %5528 = vmatpush.xpose.msra.mxu0 0.0
        %5529 = vmatpush.xpose.msra.mxu0 0.0
        %5530 = vmatpush.xpose.msra.mxu0 0.0
        %5531 = vmatpush.xpose.msra.mxu0 0.0
        %5532 = vmatpush.xpose.msra.mxu0 %v764
        %5533 = vmatpush.xpose.msra.mxu0 %v508
        %5534 = vmatmul.f32.gmra.mxu0 %v1137
        %v5535 = vpop.f32.mrf.mxu0
        %v5536 = vadd.f32 %v5516, %v5535
        %5537 = vdwg.mxu0
        %5538 = vmatpush.xpose.msra.mxu0 0.0
        %5539 = vmatpush.xpose.msra.mxu0 0.0
        %5540 = vmatpush.xpose.msra.mxu0 0.0
        %5541 = vmatpush.xpose.msra.mxu0 0.0
        %5542 = vmatpush.xpose.msra.mxu0 0.0
        %5543 = vmatpush.xpose.msra.mxu0 0.0
        %5544 = vmatpush.xpose.msra.mxu0 0.0
        %5545 = vmatpush.xpose.msra.mxu0 0.0
        %5546 = vmatpush.xpose.msra.mxu0 0.0
        %5547 = vmatpush.xpose.msra.mxu0 0.0
        %5548 = vmatpush.xpose.msra.mxu0 0.0
        %5549 = vmatpush.xpose.msra.mxu0 0.0
        %5550 = vmatpush.xpose.msra.mxu0 0.0
        %5551 = vmatpush.xpose.msra.mxu0 0.0
        %5552 = vmatpush.xpose.msra.mxu0 %v765
        %5553 = vmatpush.xpose.msra.mxu0 %v509
        %5554 = vmatmul.f32.gmra.mxu0 %v1138
        %v5555 = vpop.f32.mrf.mxu0
        %v5556 = vadd.f32 %v5536, %v5555
        %5557 = vdwg.mxu0
        %5558 = vmatpush.xpose.msra.mxu0 0.0
        %5559 = vmatpush.xpose.msra.mxu0 0.0
        %5560 = vmatpush.xpose.msra.mxu0 0.0
        %5561 = vmatpush.xpose.msra.mxu0 0.0
        %5562 = vmatpush.xpose.msra.mxu0 0.0
        %5563 = vmatpush.xpose.msra.mxu0 0.0
        %5564 = vmatpush.xpose.msra.mxu0 0.0
        %5565 = vmatpush.xpose.msra.mxu0 0.0
        %5566 = vmatpush.xpose.msra.mxu0 0.0
        %5567 = vmatpush.xpose.msra.mxu0 0.0
        %5568 = vmatpush.xpose.msra.mxu0 0.0
        %5569 = vmatpush.xpose.msra.mxu0 0.0
        %5570 = vmatpush.xpose.msra.mxu0 0.0
        %5571 = vmatpush.xpose.msra.mxu0 0.0
        %5572 = vmatpush.xpose.msra.mxu0 %v766
        %5573 = vmatpush.xpose.msra.mxu0 %v510
        %5574 = vmatmul.f32.gmra.mxu0 %v1139
        %v5575 = vpop.f32.mrf.mxu0
        %v5576 = vadd.f32 %v5556, %v5575
        %5577 = vdwg.mxu0
        %5578 = vmatpush.xpose.msra.mxu0 0.0
        %5579 = vmatpush.xpose.msra.mxu0 0.0
        %5580 = vmatpush.xpose.msra.mxu0 0.0
        %5581 = vmatpush.xpose.msra.mxu0 0.0
        %5582 = vmatpush.xpose.msra.mxu0 0.0
        %5583 = vmatpush.xpose.msra.mxu0 0.0
        %5584 = vmatpush.xpose.msra.mxu0 0.0
        %5585 = vmatpush.xpose.msra.mxu0 0.0
        %5586 = vmatpush.xpose.msra.mxu0 0.0
        %5587 = vmatpush.xpose.msra.mxu0 0.0
        %5588 = vmatpush.xpose.msra.mxu0 0.0
        %5589 = vmatpush.xpose.msra.mxu0 0.0
        %5590 = vmatpush.xpose.msra.mxu0 0.0
        %5591 = vmatpush.xpose.msra.mxu0 0.0
        %5592 = vmatpush.xpose.msra.mxu0 %v767
        %5593 = vmatpush.xpose.msra.mxu0 %v511
        %5594 = vmatmul.f32.gmra.mxu0 %v1140
        %v5595 = vpop.f32.mrf.mxu0
        %v5596 = vadd.f32 %v5576, %v5595
        %5597 = vdwg.mxu0
        %5598 = vmatpush.xpose.msra.mxu0 0.0
        %5599 = vmatpush.xpose.msra.mxu0 0.0
        %5600 = vmatpush.xpose.msra.mxu0 0.0
        %5601 = vmatpush.xpose.msra.mxu0 0.0
        %5602 = vmatpush.xpose.msra.mxu0 0.0
        %5603 = vmatpush.xpose.msra.mxu0 0.0
        %5604 = vmatpush.xpose.msra.mxu0 0.0
        %5605 = vmatpush.xpose.msra.mxu0 0.0
        %5606 = vmatpush.xpose.msra.mxu0 0.0
        %5607 = vmatpush.xpose.msra.mxu0 0.0
        %5608 = vmatpush.xpose.msra.mxu0 0.0
        %5609 = vmatpush.xpose.msra.mxu0 0.0
        %5610 = vmatpush.xpose.msra.mxu0 0.0
        %5611 = vmatpush.xpose.msra.mxu0 0.0
        %5612 = vmatpush.xpose.msra.mxu0 %v768
        %5613 = vmatpush.xpose.msra.mxu0 %v512
        %5614 = vmatmul.f32.gmra.mxu0 %v1141
        %v5615 = vpop.f32.mrf.mxu0
        %v5616 = vadd.f32 %v5596, %v5615
        %5617 = vdwg.mxu0
        %5618 = vmatpush.xpose.msra.mxu0 0.0
        %5619 = vmatpush.xpose.msra.mxu0 0.0
        %5620 = vmatpush.xpose.msra.mxu0 0.0
        %5621 = vmatpush.xpose.msra.mxu0 0.0
        %5622 = vmatpush.xpose.msra.mxu0 0.0
        %5623 = vmatpush.xpose.msra.mxu0 0.0
        %5624 = vmatpush.xpose.msra.mxu0 0.0
        %5625 = vmatpush.xpose.msra.mxu0 0.0
        %5626 = vmatpush.xpose.msra.mxu0 0.0
        %5627 = vmatpush.xpose.msra.mxu0 0.0
        %5628 = vmatpush.xpose.msra.mxu0 0.0
        %5629 = vmatpush.xpose.msra.mxu0 0.0
        %5630 = vmatpush.xpose.msra.mxu0 0.0
        %5631 = vmatpush.xpose.msra.mxu0 0.0
        %5632 = vmatpush.xpose.msra.mxu0 %v769
        %5633 = vmatpush.xpose.msra.mxu0 %v513
        %5634 = vmatmul.f32.gmra.mxu0 %v1144
        %v5635 = vpop.f32.mrf.mxu0
        %v5636 = vadd.f32 %v5616, %v5635
        %5637 = vdwg.mxu0
        %5638 = vmatpush.xpose.msra.mxu0 0.0
        %5639 = vmatpush.xpose.msra.mxu0 0.0
        %5640 = vmatpush.xpose.msra.mxu0 0.0
        %5641 = vmatpush.xpose.msra.mxu0 0.0
        %5642 = vmatpush.xpose.msra.mxu0 0.0
        %5643 = vmatpush.xpose.msra.mxu0 0.0
        %5644 = vmatpush.xpose.msra.mxu0 0.0
        %5645 = vmatpush.xpose.msra.mxu0 0.0
        %5646 = vmatpush.xpose.msra.mxu0 0.0
        %5647 = vmatpush.xpose.msra.mxu0 0.0
        %5648 = vmatpush.xpose.msra.mxu0 0.0
        %5649 = vmatpush.xpose.msra.mxu0 0.0
        %5650 = vmatpush.xpose.msra.mxu0 0.0
        %5651 = vmatpush.xpose.msra.mxu0 0.0
        %5652 = vmatpush.xpose.msra.mxu0 %v770
        %5653 = vmatpush.xpose.msra.mxu0 %v514
        %5654 = vmatmul.f32.gmra.mxu0 %v1145
        %v5655 = vpop.f32.mrf.mxu0
        %v5656 = vadd.f32 %v5636, %v5655
        %5657 = vdwg.mxu0
        %5658 = vmatpush.xpose.msra.mxu0 0.0
        %5659 = vmatpush.xpose.msra.mxu0 0.0
        %5660 = vmatpush.xpose.msra.mxu0 0.0
        %5661 = vmatpush.xpose.msra.mxu0 0.0
        %5662 = vmatpush.xpose.msra.mxu0 0.0
        %5663 = vmatpush.xpose.msra.mxu0 0.0
        %5664 = vmatpush.xpose.msra.mxu0 0.0
        %5665 = vmatpush.xpose.msra.mxu0 0.0
        %5666 = vmatpush.xpose.msra.mxu0 0.0
        %5667 = vmatpush.xpose.msra.mxu0 0.0
        %5668 = vmatpush.xpose.msra.mxu0 0.0
        %5669 = vmatpush.xpose.msra.mxu0 0.0
        %5670 = vmatpush.xpose.msra.mxu0 0.0
        %5671 = vmatpush.xpose.msra.mxu0 0.0
        %5672 = vmatpush.xpose.msra.mxu0 %v771
        %5673 = vmatpush.xpose.msra.mxu0 %v515
        %5674 = vmatmul.f32.gmra.mxu0 %v1146
        %v5675 = vpop.f32.mrf.mxu0
        %v5676 = vadd.f32 %v5656, %v5675
        %5677 = vdwg.mxu0
        %5678 = vmatpush.xpose.msra.mxu0 0.0
        %5679 = vmatpush.xpose.msra.mxu0 0.0
        %5680 = vmatpush.xpose.msra.mxu0 0.0
        %5681 = vmatpush.xpose.msra.mxu0 0.0
        %5682 = vmatpush.xpose.msra.mxu0 0.0
        %5683 = vmatpush.xpose.msra.mxu0 0.0
        %5684 = vmatpush.xpose.msra.mxu0 0.0
        %5685 = vmatpush.xpose.msra.mxu0 0.0
        %5686 = vmatpush.xpose.msra.mxu0 0.0
        %5687 = vmatpush.xpose.msra.mxu0 0.0
        %5688 = vmatpush.xpose.msra.mxu0 0.0
        %5689 = vmatpush.xpose.msra.mxu0 0.0
        %5690 = vmatpush.xpose.msra.mxu0 0.0
        %5691 = vmatpush.xpose.msra.mxu0 0.0
        %5692 = vmatpush.xpose.msra.mxu0 %v772
        %5693 = vmatpush.xpose.msra.mxu0 %v516
        %5694 = vmatmul.f32.gmra.mxu0 %v1147
        %v5695 = vpop.f32.mrf.mxu0
        %v5696 = vadd.f32 %v5676, %v5695
        %5697 = vdwg.mxu0
        %5698 = vmatpush.xpose.msra.mxu0 0.0
        %5699 = vmatpush.xpose.msra.mxu0 0.0
        %5700 = vmatpush.xpose.msra.mxu0 0.0
        %5701 = vmatpush.xpose.msra.mxu0 0.0
        %5702 = vmatpush.xpose.msra.mxu0 0.0
        %5703 = vmatpush.xpose.msra.mxu0 0.0
        %5704 = vmatpush.xpose.msra.mxu0 0.0
        %5705 = vmatpush.xpose.msra.mxu0 0.0
        %5706 = vmatpush.xpose.msra.mxu0 0.0
        %5707 = vmatpush.xpose.msra.mxu0 0.0
        %5708 = vmatpush.xpose.msra.mxu0 0.0
        %5709 = vmatpush.xpose.msra.mxu0 0.0
        %5710 = vmatpush.xpose.msra.mxu0 0.0
        %5711 = vmatpush.xpose.msra.mxu0 0.0
        %5712 = vmatpush.xpose.msra.mxu0 %v773
        %5713 = vmatpush.xpose.msra.mxu0 %v517
        %5714 = vmatmul.f32.gmra.mxu0 %v1148
        %v5715 = vpop.f32.mrf.mxu0
        %v5716 = vadd.f32 %v5696, %v5715
        %5717 = vdwg.mxu0
        %5718 = vmatpush.xpose.msra.mxu0 0.0
        %5719 = vmatpush.xpose.msra.mxu0 0.0
        %5720 = vmatpush.xpose.msra.mxu0 0.0
        %5721 = vmatpush.xpose.msra.mxu0 0.0
        %5722 = vmatpush.xpose.msra.mxu0 0.0
        %5723 = vmatpush.xpose.msra.mxu0 0.0
        %5724 = vmatpush.xpose.msra.mxu0 0.0
        %5725 = vmatpush.xpose.msra.mxu0 0.0
        %5726 = vmatpush.xpose.msra.mxu0 0.0
        %5727 = vmatpush.xpose.msra.mxu0 0.0
        %5728 = vmatpush.xpose.msra.mxu0 0.0
        %5729 = vmatpush.xpose.msra.mxu0 0.0
        %5730 = vmatpush.xpose.msra.mxu0 0.0
        %5731 = vmatpush.xpose.msra.mxu0 0.0
        %5732 = vmatpush.xpose.msra.mxu0 %v774
        %5733 = vmatpush.xpose.msra.mxu0 %v518
        %5734 = vmatmul.f32.gmra.mxu0 %v1149
        %v5735 = vpop.f32.mrf.mxu0
        %v5736 = vadd.f32 %v5716, %v5735
        %5737 = vdwg.mxu0
        %5738 = vmatpush.xpose.msra.mxu0 0.0
        %5739 = vmatpush.xpose.msra.mxu0 0.0
        %5740 = vmatpush.xpose.msra.mxu0 0.0
        %5741 = vmatpush.xpose.msra.mxu0 0.0
        %5742 = vmatpush.xpose.msra.mxu0 0.0
        %5743 = vmatpush.xpose.msra.mxu0 0.0
        %5744 = vmatpush.xpose.msra.mxu0 0.0
        %5745 = vmatpush.xpose.msra.mxu0 0.0
        %5746 = vmatpush.xpose.msra.mxu0 0.0
        %5747 = vmatpush.xpose.msra.mxu0 0.0
        %5748 = vmatpush.xpose.msra.mxu0 0.0
        %5749 = vmatpush.xpose.msra.mxu0 0.0
        %5750 = vmatpush.xpose.msra.mxu0 0.0
        %5751 = vmatpush.xpose.msra.mxu0 0.0
        %5752 = vmatpush.xpose.msra.mxu0 %v775
        %5753 = vmatpush.xpose.msra.mxu0 %v519
        %5754 = vmatmul.f32.gmra.mxu0 %v1150
        %v5755 = vpop.f32.mrf.mxu0
        %v5756 = vadd.f32 %v5736, %v5755
        %5757 = vdwg.mxu0
        %5758 = vmatpush.xpose.msra.mxu0 0.0
        %5759 = vmatpush.xpose.msra.mxu0 0.0
        %5760 = vmatpush.xpose.msra.mxu0 0.0
        %5761 = vmatpush.xpose.msra.mxu0 0.0
        %5762 = vmatpush.xpose.msra.mxu0 0.0
        %5763 = vmatpush.xpose.msra.mxu0 0.0
        %5764 = vmatpush.xpose.msra.mxu0 0.0
        %5765 = vmatpush.xpose.msra.mxu0 0.0
        %5766 = vmatpush.xpose.msra.mxu0 0.0
        %5767 = vmatpush.xpose.msra.mxu0 0.0
        %5768 = vmatpush.xpose.msra.mxu0 0.0
        %5769 = vmatpush.xpose.msra.mxu0 0.0
        %5770 = vmatpush.xpose.msra.mxu0 0.0
        %5771 = vmatpush.xpose.msra.mxu0 0.0
        %5772 = vmatpush.xpose.msra.mxu0 %v776
        %5773 = vmatpush.xpose.msra.mxu0 %v520
        %5774 = vmatmul.f32.gmra.mxu0 %v1151
        %v5775 = vpop.f32.mrf.mxu0
        %v5776 = vadd.f32 %v5756, %v5775
        %5777 = vdwg.mxu0
        %5778 = vmatpush.xpose.msra.mxu0 0.0
        %5779 = vmatpush.xpose.msra.mxu0 0.0
        %5780 = vmatpush.xpose.msra.mxu0 0.0
        %5781 = vmatpush.xpose.msra.mxu0 0.0
        %5782 = vmatpush.xpose.msra.mxu0 0.0
        %5783 = vmatpush.xpose.msra.mxu0 0.0
        %5784 = vmatpush.xpose.msra.mxu0 0.0
        %5785 = vmatpush.xpose.msra.mxu0 0.0
        %5786 = vmatpush.xpose.msra.mxu0 0.0
        %5787 = vmatpush.xpose.msra.mxu0 0.0
        %5788 = vmatpush.xpose.msra.mxu0 0.0
        %5789 = vmatpush.xpose.msra.mxu0 0.0
        %5790 = vmatpush.xpose.msra.mxu0 0.0
        %5791 = vmatpush.xpose.msra.mxu0 0.0
        %5792 = vmatpush.xpose.msra.mxu0 %v777
        %5793 = vmatpush.xpose.msra.mxu0 %v521
        %5794 = vmatmul.f32.gmra.mxu0 %v1154
        %v5795 = vpop.f32.mrf.mxu0
        %v5796 = vadd.f32 %v5776, %v5795
        %5797 = vdwg.mxu0
        %5798 = vmatpush.xpose.msra.mxu0 0.0
        %5799 = vmatpush.xpose.msra.mxu0 0.0
        %5800 = vmatpush.xpose.msra.mxu0 0.0
        %5801 = vmatpush.xpose.msra.mxu0 0.0
        %5802 = vmatpush.xpose.msra.mxu0 0.0
        %5803 = vmatpush.xpose.msra.mxu0 0.0
        %5804 = vmatpush.xpose.msra.mxu0 0.0
        %5805 = vmatpush.xpose.msra.mxu0 0.0
        %5806 = vmatpush.xpose.msra.mxu0 0.0
        %5807 = vmatpush.xpose.msra.mxu0 0.0
        %5808 = vmatpush.xpose.msra.mxu0 0.0
        %5809 = vmatpush.xpose.msra.mxu0 0.0
        %5810 = vmatpush.xpose.msra.mxu0 0.0
        %5811 = vmatpush.xpose.msra.mxu0 0.0
        %5812 = vmatpush.xpose.msra.mxu0 %v778
        %5813 = vmatpush.xpose.msra.mxu0 %v522
        %5814 = vmatmul.f32.gmra.mxu0 %v1155
        %v5815 = vpop.f32.mrf.mxu0
        %v5816 = vadd.f32 %v5796, %v5815
        %5817 = vdwg.mxu0
        %5818 = vmatpush.xpose.msra.mxu0 0.0
        %5819 = vmatpush.xpose.msra.mxu0 0.0
        %5820 = vmatpush.xpose.msra.mxu0 0.0
        %5821 = vmatpush.xpose.msra.mxu0 0.0
        %5822 = vmatpush.xpose.msra.mxu0 0.0
        %5823 = vmatpush.xpose.msra.mxu0 0.0
        %5824 = vmatpush.xpose.msra.mxu0 0.0
        %5825 = vmatpush.xpose.msra.mxu0 0.0
        %5826 = vmatpush.xpose.msra.mxu0 0.0
        %5827 = vmatpush.xpose.msra.mxu0 0.0
        %5828 = vmatpush.xpose.msra.mxu0 0.0
        %5829 = vmatpush.xpose.msra.mxu0 0.0
        %5830 = vmatpush.xpose.msra.mxu0 0.0
        %5831 = vmatpush.xpose.msra.mxu0 0.0
        %5832 = vmatpush.xpose.msra.mxu0 %v779
        %5833 = vmatpush.xpose.msra.mxu0 %v523
        %5834 = vmatmul.f32.gmra.mxu0 %v1156
        %v5835 = vpop.f32.mrf.mxu0
        %v5836 = vadd.f32 %v5816, %v5835
        %5837 = vdwg.mxu0
        %5838 = vmatpush.xpose.msra.mxu0 0.0
        %5839 = vmatpush.xpose.msra.mxu0 0.0
        %5840 = vmatpush.xpose.msra.mxu0 0.0
        %5841 = vmatpush.xpose.msra.mxu0 0.0
        %5842 = vmatpush.xpose.msra.mxu0 0.0
        %5843 = vmatpush.xpose.msra.mxu0 0.0
        %5844 = vmatpush.xpose.msra.mxu0 0.0
        %5845 = vmatpush.xpose.msra.mxu0 0.0
        %5846 = vmatpush.xpose.msra.mxu0 0.0
        %5847 = vmatpush.xpose.msra.mxu0 0.0
        %5848 = vmatpush.xpose.msra.mxu0 0.0
        %5849 = vmatpush.xpose.msra.mxu0 0.0
        %5850 = vmatpush.xpose.msra.mxu0 0.0
        %5851 = vmatpush.xpose.msra.mxu0 0.0
        %5852 = vmatpush.xpose.msra.mxu0 %v780
        %5853 = vmatpush.xpose.msra.mxu0 %v524
        %5854 = vmatmul.f32.gmra.mxu0 %v1157
        %v5855 = vpop.f32.mrf.mxu0
        %v5856 = vadd.f32 %v5836, %v5855
        %5857 = vdwg.mxu0
        %5858 = vmatpush.xpose.msra.mxu0 0.0
        %5859 = vmatpush.xpose.msra.mxu0 0.0
        %5860 = vmatpush.xpose.msra.mxu0 0.0
        %5861 = vmatpush.xpose.msra.mxu0 0.0
        %5862 = vmatpush.xpose.msra.mxu0 0.0
        %5863 = vmatpush.xpose.msra.mxu0 0.0
        %5864 = vmatpush.xpose.msra.mxu0 0.0
        %5865 = vmatpush.xpose.msra.mxu0 0.0
        %5866 = vmatpush.xpose.msra.mxu0 0.0
        %5867 = vmatpush.xpose.msra.mxu0 0.0
        %5868 = vmatpush.xpose.msra.mxu0 0.0
        %5869 = vmatpush.xpose.msra.mxu0 0.0
        %5870 = vmatpush.xpose.msra.mxu0 0.0
        %5871 = vmatpush.xpose.msra.mxu0 0.0
        %5872 = vmatpush.xpose.msra.mxu0 %v781
        %5873 = vmatpush.xpose.msra.mxu0 %v525
        %5874 = vmatmul.f32.gmra.mxu0 %v1158
        %v5875 = vpop.f32.mrf.mxu0
        %v5876 = vadd.f32 %v5856, %v5875
        %5877 = vdwg.mxu0
        %5878 = vmatpush.xpose.msra.mxu0 0.0
        %5879 = vmatpush.xpose.msra.mxu0 0.0
        %5880 = vmatpush.xpose.msra.mxu0 0.0
        %5881 = vmatpush.xpose.msra.mxu0 0.0
        %5882 = vmatpush.xpose.msra.mxu0 0.0
        %5883 = vmatpush.xpose.msra.mxu0 0.0
        %5884 = vmatpush.xpose.msra.mxu0 0.0
        %5885 = vmatpush.xpose.msra.mxu0 0.0
        %5886 = vmatpush.xpose.msra.mxu0 0.0
        %5887 = vmatpush.xpose.msra.mxu0 0.0
        %5888 = vmatpush.xpose.msra.mxu0 0.0
        %5889 = vmatpush.xpose.msra.mxu0 0.0
        %5890 = vmatpush.xpose.msra.mxu0 0.0
        %5891 = vmatpush.xpose.msra.mxu0 0.0
        %5892 = vmatpush.xpose.msra.mxu0 %v782
        %5893 = vmatpush.xpose.msra.mxu0 %v526
        %5894 = vmatmul.f32.gmra.mxu0 %v1159
        %v5895 = vpop.f32.mrf.mxu0
        %v5896 = vadd.f32 %v5876, %v5895
        %5897 = vdwg.mxu0
        %5898 = vmatpush.xpose.msra.mxu0 0.0
        %5899 = vmatpush.xpose.msra.mxu0 0.0
        %5900 = vmatpush.xpose.msra.mxu0 0.0
        %5901 = vmatpush.xpose.msra.mxu0 0.0
        %5902 = vmatpush.xpose.msra.mxu0 0.0
        %5903 = vmatpush.xpose.msra.mxu0 0.0
        %5904 = vmatpush.xpose.msra.mxu0 0.0
        %5905 = vmatpush.xpose.msra.mxu0 0.0
        %5906 = vmatpush.xpose.msra.mxu0 0.0
        %5907 = vmatpush.xpose.msra.mxu0 0.0
        %5908 = vmatpush.xpose.msra.mxu0 0.0
        %5909 = vmatpush.xpose.msra.mxu0 0.0
        %5910 = vmatpush.xpose.msra.mxu0 0.0
        %5911 = vmatpush.xpose.msra.mxu0 0.0
        %5912 = vmatpush.xpose.msra.mxu0 %v783
        %5913 = vmatpush.xpose.msra.mxu0 %v527
        %5914 = vmatmul.f32.gmra.mxu0 %v1160
        %v5915 = vpop.f32.mrf.mxu0
        %v5916 = vadd.f32 %v5896, %v5915
        %5917 = vdwg.mxu0
        %5918 = vmatpush.xpose.msra.mxu0 0.0
        %5919 = vmatpush.xpose.msra.mxu0 0.0
        %5920 = vmatpush.xpose.msra.mxu0 0.0
        %5921 = vmatpush.xpose.msra.mxu0 0.0
        %5922 = vmatpush.xpose.msra.mxu0 0.0
        %5923 = vmatpush.xpose.msra.mxu0 0.0
        %5924 = vmatpush.xpose.msra.mxu0 0.0
        %5925 = vmatpush.xpose.msra.mxu0 0.0
        %5926 = vmatpush.xpose.msra.mxu0 0.0
        %5927 = vmatpush.xpose.msra.mxu0 0.0
        %5928 = vmatpush.xpose.msra.mxu0 0.0
        %5929 = vmatpush.xpose.msra.mxu0 0.0
        %5930 = vmatpush.xpose.msra.mxu0 0.0
        %5931 = vmatpush.xpose.msra.mxu0 0.0
        %5932 = vmatpush.xpose.msra.mxu0 %v784
        %5933 = vmatpush.xpose.msra.mxu0 %v528
        %5934 = vmatmul.f32.gmra.mxu0 %v1161
        %v5935 = vpop.f32.mrf.mxu0
        %v5936 = vadd.f32 %v5916, %v5935
        %5937 = vdwg.mxu0
        %5938 = vmatpush.xpose.msra.mxu0 0.0
        %5939 = vmatpush.xpose.msra.mxu0 0.0
        %5940 = vmatpush.xpose.msra.mxu0 0.0
        %5941 = vmatpush.xpose.msra.mxu0 0.0
        %5942 = vmatpush.xpose.msra.mxu0 0.0
        %5943 = vmatpush.xpose.msra.mxu0 0.0
        %5944 = vmatpush.xpose.msra.mxu0 0.0
        %5945 = vmatpush.xpose.msra.mxu0 0.0
        %5946 = vmatpush.xpose.msra.mxu0 0.0
        %5947 = vmatpush.xpose.msra.mxu0 0.0
        %5948 = vmatpush.xpose.msra.mxu0 0.0
        %5949 = vmatpush.xpose.msra.mxu0 0.0
        %5950 = vmatpush.xpose.msra.mxu0 0.0
        %5951 = vmatpush.xpose.msra.mxu0 0.0
        %5952 = vmatpush.xpose.msra.mxu0 %v785
        %5953 = vmatpush.xpose.msra.mxu0 %v529
        %5954 = vmatmul.f32.gmra.mxu0 %v1164
        %v5955 = vpop.f32.mrf.mxu0
        %v5956 = vadd.f32 %v5936, %v5955
        %5957 = vdwg.mxu0
        %5958 = vmatpush.xpose.msra.mxu0 0.0
        %5959 = vmatpush.xpose.msra.mxu0 0.0
        %5960 = vmatpush.xpose.msra.mxu0 0.0
        %5961 = vmatpush.xpose.msra.mxu0 0.0
        %5962 = vmatpush.xpose.msra.mxu0 0.0
        %5963 = vmatpush.xpose.msra.mxu0 0.0
        %5964 = vmatpush.xpose.msra.mxu0 0.0
        %5965 = vmatpush.xpose.msra.mxu0 0.0
        %5966 = vmatpush.xpose.msra.mxu0 0.0
        %5967 = vmatpush.xpose.msra.mxu0 0.0
        %5968 = vmatpush.xpose.msra.mxu0 0.0
        %5969 = vmatpush.xpose.msra.mxu0 0.0
        %5970 = vmatpush.xpose.msra.mxu0 0.0
        %5971 = vmatpush.xpose.msra.mxu0 0.0
        %5972 = vmatpush.xpose.msra.mxu0 %v786
        %5973 = vmatpush.xpose.msra.mxu0 %v530
        %5974 = vmatmul.f32.gmra.mxu0 %v1165
        %v5975 = vpop.f32.mrf.mxu0
        %v5976 = vadd.f32 %v5956, %v5975
        %5977 = vdwg.mxu0
        %5978 = vmatpush.xpose.msra.mxu0 0.0
        %5979 = vmatpush.xpose.msra.mxu0 0.0
        %5980 = vmatpush.xpose.msra.mxu0 0.0
        %5981 = vmatpush.xpose.msra.mxu0 0.0
        %5982 = vmatpush.xpose.msra.mxu0 0.0
        %5983 = vmatpush.xpose.msra.mxu0 0.0
        %5984 = vmatpush.xpose.msra.mxu0 0.0
        %5985 = vmatpush.xpose.msra.mxu0 0.0
        %5986 = vmatpush.xpose.msra.mxu0 0.0
        %5987 = vmatpush.xpose.msra.mxu0 0.0
        %5988 = vmatpush.xpose.msra.mxu0 0.0
        %5989 = vmatpush.xpose.msra.mxu0 0.0
        %5990 = vmatpush.xpose.msra.mxu0 0.0
        %5991 = vmatpush.xpose.msra.mxu0 0.0
        %5992 = vmatpush.xpose.msra.mxu0 %v787
        %5993 = vmatpush.xpose.msra.mxu0 %v531
        %5994 = vmatmul.f32.gmra.mxu0 %v1166
        %v5995 = vpop.f32.mrf.mxu0
        %v5996 = vadd.f32 %v5976, %v5995
        %5997 = vdwg.mxu0
        %5998 = vmatpush.xpose.msra.mxu0 0.0
        %5999 = vmatpush.xpose.msra.mxu0 0.0
        %6000 = vmatpush.xpose.msra.mxu0 0.0
        %6001 = vmatpush.xpose.msra.mxu0 0.0
        %6002 = vmatpush.xpose.msra.mxu0 0.0
        %6003 = vmatpush.xpose.msra.mxu0 0.0
        %6004 = vmatpush.xpose.msra.mxu0 0.0
        %6005 = vmatpush.xpose.msra.mxu0 0.0
        %6006 = vmatpush.xpose.msra.mxu0 0.0
        %6007 = vmatpush.xpose.msra.mxu0 0.0
        %6008 = vmatpush.xpose.msra.mxu0 0.0
        %6009 = vmatpush.xpose.msra.mxu0 0.0
        %6010 = vmatpush.xpose.msra.mxu0 0.0
        %6011 = vmatpush.xpose.msra.mxu0 0.0
        %6012 = vmatpush.xpose.msra.mxu0 %v788
        %6013 = vmatpush.xpose.msra.mxu0 %v532
        %6014 = vmatmul.f32.gmra.mxu0 %v1167
        %v6015 = vpop.f32.mrf.mxu0
        %v6016 = vadd.f32 %v5996, %v6015
        %6017 = vdwg.mxu0
        %6018 = vmatpush.xpose.msra.mxu0 0.0
        %6019 = vmatpush.xpose.msra.mxu0 0.0
        %6020 = vmatpush.xpose.msra.mxu0 0.0
        %6021 = vmatpush.xpose.msra.mxu0 0.0
        %6022 = vmatpush.xpose.msra.mxu0 0.0
        %6023 = vmatpush.xpose.msra.mxu0 0.0
        %6024 = vmatpush.xpose.msra.mxu0 0.0
        %6025 = vmatpush.xpose.msra.mxu0 0.0
        %6026 = vmatpush.xpose.msra.mxu0 0.0
        %6027 = vmatpush.xpose.msra.mxu0 0.0
        %6028 = vmatpush.xpose.msra.mxu0 0.0
        %6029 = vmatpush.xpose.msra.mxu0 0.0
        %6030 = vmatpush.xpose.msra.mxu0 0.0
        %6031 = vmatpush.xpose.msra.mxu0 0.0
        %6032 = vmatpush.xpose.msra.mxu0 %v789
        %6033 = vmatpush.xpose.msra.mxu0 %v533
        %6034 = vmatmul.f32.gmra.mxu0 %v1168
        %v6035 = vpop.f32.mrf.mxu0
        %v6036 = vadd.f32 %v6016, %v6035
        %6037 = vdwg.mxu0
        %6038 = vmatpush.xpose.msra.mxu0 0.0
        %6039 = vmatpush.xpose.msra.mxu0 0.0
        %6040 = vmatpush.xpose.msra.mxu0 0.0
        %6041 = vmatpush.xpose.msra.mxu0 0.0
        %6042 = vmatpush.xpose.msra.mxu0 0.0
        %6043 = vmatpush.xpose.msra.mxu0 0.0
        %6044 = vmatpush.xpose.msra.mxu0 0.0
        %6045 = vmatpush.xpose.msra.mxu0 0.0
        %6046 = vmatpush.xpose.msra.mxu0 0.0
        %6047 = vmatpush.xpose.msra.mxu0 0.0
        %6048 = vmatpush.xpose.msra.mxu0 0.0
        %6049 = vmatpush.xpose.msra.mxu0 0.0
        %6050 = vmatpush.xpose.msra.mxu0 0.0
        %6051 = vmatpush.xpose.msra.mxu0 0.0
        %6052 = vmatpush.xpose.msra.mxu0 %v790
        %6053 = vmatpush.xpose.msra.mxu0 %v534
        %6054 = vmatmul.f32.gmra.mxu0 %v1169
        %v6055 = vpop.f32.mrf.mxu0
        %v6056 = vadd.f32 %v6036, %v6055
        %6057 = vdwg.mxu0
        %6058 = vmatpush.xpose.msra.mxu0 0.0
        %6059 = vmatpush.xpose.msra.mxu0 0.0
        %6060 = vmatpush.xpose.msra.mxu0 0.0
        %6061 = vmatpush.xpose.msra.mxu0 0.0
        %6062 = vmatpush.xpose.msra.mxu0 0.0
        %6063 = vmatpush.xpose.msra.mxu0 0.0
        %6064 = vmatpush.xpose.msra.mxu0 0.0
        %6065 = vmatpush.xpose.msra.mxu0 0.0
        %6066 = vmatpush.xpose.msra.mxu0 0.0
        %6067 = vmatpush.xpose.msra.mxu0 0.0
        %6068 = vmatpush.xpose.msra.mxu0 0.0
        %6069 = vmatpush.xpose.msra.mxu0 0.0
        %6070 = vmatpush.xpose.msra.mxu0 0.0
        %6071 = vmatpush.xpose.msra.mxu0 0.0
        %6072 = vmatpush.xpose.msra.mxu0 %v791
        %6073 = vmatpush.xpose.msra.mxu0 %v535
        %6074 = vmatmul.f32.gmra.mxu0 %v1170
        %v6075 = vpop.f32.mrf.mxu0
        %v6076 = vadd.f32 %v6056, %v6075
        %6077 = vdwg.mxu0
        %6078 = vmatpush.xpose.msra.mxu0 0.0
        %6079 = vmatpush.xpose.msra.mxu0 0.0
        %6080 = vmatpush.xpose.msra.mxu0 0.0
        %6081 = vmatpush.xpose.msra.mxu0 0.0
        %6082 = vmatpush.xpose.msra.mxu0 0.0
        %6083 = vmatpush.xpose.msra.mxu0 0.0
        %6084 = vmatpush.xpose.msra.mxu0 0.0
        %6085 = vmatpush.xpose.msra.mxu0 0.0
        %6086 = vmatpush.xpose.msra.mxu0 0.0
        %6087 = vmatpush.xpose.msra.mxu0 0.0
        %6088 = vmatpush.xpose.msra.mxu0 0.0
        %6089 = vmatpush.xpose.msra.mxu0 0.0
        %6090 = vmatpush.xpose.msra.mxu0 0.0
        %6091 = vmatpush.xpose.msra.mxu0 0.0
        %6092 = vmatpush.xpose.msra.mxu0 %v792
        %6093 = vmatpush.xpose.msra.mxu0 %v536
        %6094 = vmatmul.f32.gmra.mxu0 %v1171
        %v6095 = vpop.f32.mrf.mxu0
        %v6096 = vadd.f32 %v6076, %v6095
        %6097 = vdwg.mxu0
        %6098 = vmatpush.xpose.msra.mxu0 0.0
        %6099 = vmatpush.xpose.msra.mxu0 0.0
        %6100 = vmatpush.xpose.msra.mxu0 0.0
        %6101 = vmatpush.xpose.msra.mxu0 0.0
        %6102 = vmatpush.xpose.msra.mxu0 0.0
        %6103 = vmatpush.xpose.msra.mxu0 0.0
        %6104 = vmatpush.xpose.msra.mxu0 0.0
        %6105 = vmatpush.xpose.msra.mxu0 0.0
        %6106 = vmatpush.xpose.msra.mxu0 0.0
        %6107 = vmatpush.xpose.msra.mxu0 0.0
        %6108 = vmatpush.xpose.msra.mxu0 0.0
        %6109 = vmatpush.xpose.msra.mxu0 0.0
        %6110 = vmatpush.xpose.msra.mxu0 0.0
        %6111 = vmatpush.xpose.msra.mxu0 0.0
        %6112 = vmatpush.xpose.msra.mxu0 %v793
        %6113 = vmatpush.xpose.msra.mxu0 %v537
        %6114 = vmatmul.f32.gmra.mxu0 %v1174
        %v6115 = vpop.f32.mrf.mxu0
        %v6116 = vadd.f32 %v6096, %v6115
        %6117 = vdwg.mxu0
        %6118 = vmatpush.xpose.msra.mxu0 0.0
        %6119 = vmatpush.xpose.msra.mxu0 0.0
        %6120 = vmatpush.xpose.msra.mxu0 0.0
        %6121 = vmatpush.xpose.msra.mxu0 0.0
        %6122 = vmatpush.xpose.msra.mxu0 0.0
        %6123 = vmatpush.xpose.msra.mxu0 0.0
        %6124 = vmatpush.xpose.msra.mxu0 0.0
        %6125 = vmatpush.xpose.msra.mxu0 0.0
        %6126 = vmatpush.xpose.msra.mxu0 0.0
        %6127 = vmatpush.xpose.msra.mxu0 0.0
        %6128 = vmatpush.xpose.msra.mxu0 0.0
        %6129 = vmatpush.xpose.msra.mxu0 0.0
        %6130 = vmatpush.xpose.msra.mxu0 0.0
        %6131 = vmatpush.xpose.msra.mxu0 0.0
        %6132 = vmatpush.xpose.msra.mxu0 %v794
        %6133 = vmatpush.xpose.msra.mxu0 %v538
        %6134 = vmatmul.f32.gmra.mxu0 %v1175
        %v6135 = vpop.f32.mrf.mxu0
        %v6136 = vadd.f32 %v6116, %v6135
        %6137 = vdwg.mxu0
        %6138 = vmatpush.xpose.msra.mxu0 0.0
        %6139 = vmatpush.xpose.msra.mxu0 0.0
        %6140 = vmatpush.xpose.msra.mxu0 0.0
        %6141 = vmatpush.xpose.msra.mxu0 0.0
        %6142 = vmatpush.xpose.msra.mxu0 0.0
        %6143 = vmatpush.xpose.msra.mxu0 0.0
        %6144 = vmatpush.xpose.msra.mxu0 0.0
        %6145 = vmatpush.xpose.msra.mxu0 0.0
        %6146 = vmatpush.xpose.msra.mxu0 0.0
        %6147 = vmatpush.xpose.msra.mxu0 0.0
        %6148 = vmatpush.xpose.msra.mxu0 0.0
        %6149 = vmatpush.xpose.msra.mxu0 0.0
        %6150 = vmatpush.xpose.msra.mxu0 0.0
        %6151 = vmatpush.xpose.msra.mxu0 0.0
        %6152 = vmatpush.xpose.msra.mxu0 %v795
        %6153 = vmatpush.xpose.msra.mxu0 %v539
        %6154 = vmatmul.f32.gmra.mxu0 %v1176
        %v6155 = vpop.f32.mrf.mxu0
        %v6156 = vadd.f32 %v6136, %v6155
        %6157 = vdwg.mxu0
        %6158 = vmatpush.xpose.msra.mxu0 0.0
        %6159 = vmatpush.xpose.msra.mxu0 0.0
        %6160 = vmatpush.xpose.msra.mxu0 0.0
        %6161 = vmatpush.xpose.msra.mxu0 0.0
        %6162 = vmatpush.xpose.msra.mxu0 0.0
        %6163 = vmatpush.xpose.msra.mxu0 0.0
        %6164 = vmatpush.xpose.msra.mxu0 0.0
        %6165 = vmatpush.xpose.msra.mxu0 0.0
        %6166 = vmatpush.xpose.msra.mxu0 0.0
        %6167 = vmatpush.xpose.msra.mxu0 0.0
        %6168 = vmatpush.xpose.msra.mxu0 0.0
        %6169 = vmatpush.xpose.msra.mxu0 0.0
        %6170 = vmatpush.xpose.msra.mxu0 0.0
        %6171 = vmatpush.xpose.msra.mxu0 0.0
        %6172 = vmatpush.xpose.msra.mxu0 %v796
        %6173 = vmatpush.xpose.msra.mxu0 %v540
        %6174 = vmatmul.f32.gmra.mxu0 %v1177
        %v6175 = vpop.f32.mrf.mxu0
        %v6176 = vadd.f32 %v6156, %v6175
        %6177 = vdwg.mxu0
        %6178 = vmatpush.xpose.msra.mxu0 0.0
        %6179 = vmatpush.xpose.msra.mxu0 0.0
        %6180 = vmatpush.xpose.msra.mxu0 0.0
        %6181 = vmatpush.xpose.msra.mxu0 0.0
        %6182 = vmatpush.xpose.msra.mxu0 0.0
        %6183 = vmatpush.xpose.msra.mxu0 0.0
        %6184 = vmatpush.xpose.msra.mxu0 0.0
        %6185 = vmatpush.xpose.msra.mxu0 0.0
        %6186 = vmatpush.xpose.msra.mxu0 0.0
        %6187 = vmatpush.xpose.msra.mxu0 0.0
        %6188 = vmatpush.xpose.msra.mxu0 0.0
        %6189 = vmatpush.xpose.msra.mxu0 0.0
        %6190 = vmatpush.xpose.msra.mxu0 0.0
        %6191 = vmatpush.xpose.msra.mxu0 0.0
        %6192 = vmatpush.xpose.msra.mxu0 %v797
        %6193 = vmatpush.xpose.msra.mxu0 %v541
        %6194 = vmatmul.f32.gmra.mxu0 %v1178
        %v6195 = vpop.f32.mrf.mxu0
        %v6196 = vadd.f32 %v6176, %v6195
        %6197 = vdwg.mxu0
        %6198 = vmatpush.xpose.msra.mxu0 0.0
        %6199 = vmatpush.xpose.msra.mxu0 0.0
        %6200 = vmatpush.xpose.msra.mxu0 0.0
        %6201 = vmatpush.xpose.msra.mxu0 0.0
        %6202 = vmatpush.xpose.msra.mxu0 0.0
        %6203 = vmatpush.xpose.msra.mxu0 0.0
        %6204 = vmatpush.xpose.msra.mxu0 0.0
        %6205 = vmatpush.xpose.msra.mxu0 0.0
        %6206 = vmatpush.xpose.msra.mxu0 0.0
        %6207 = vmatpush.xpose.msra.mxu0 0.0
        %6208 = vmatpush.xpose.msra.mxu0 0.0
        %6209 = vmatpush.xpose.msra.mxu0 0.0
        %6210 = vmatpush.xpose.msra.mxu0 0.0
        %6211 = vmatpush.xpose.msra.mxu0 0.0
        %6212 = vmatpush.xpose.msra.mxu0 %v798
        %6213 = vmatpush.xpose.msra.mxu0 %v542
        %6214 = vmatmul.f32.gmra.mxu0 %v1179
        %v6215 = vpop.f32.mrf.mxu0
        %v6216 = vadd.f32 %v6196, %v6215
        %6217 = vdwg.mxu0
        %6218 = vmatpush.xpose.msra.mxu0 0.0
        %6219 = vmatpush.xpose.msra.mxu0 0.0
        %6220 = vmatpush.xpose.msra.mxu0 0.0
        %6221 = vmatpush.xpose.msra.mxu0 0.0
        %6222 = vmatpush.xpose.msra.mxu0 0.0
        %6223 = vmatpush.xpose.msra.mxu0 0.0
        %6224 = vmatpush.xpose.msra.mxu0 0.0
        %6225 = vmatpush.xpose.msra.mxu0 0.0
        %6226 = vmatpush.xpose.msra.mxu0 0.0
        %6227 = vmatpush.xpose.msra.mxu0 0.0
        %6228 = vmatpush.xpose.msra.mxu0 0.0
        %6229 = vmatpush.xpose.msra.mxu0 0.0
        %6230 = vmatpush.xpose.msra.mxu0 0.0
        %6231 = vmatpush.xpose.msra.mxu0 0.0
        %6232 = vmatpush.xpose.msra.mxu0 %v799
        %6233 = vmatpush.xpose.msra.mxu0 %v543
        %6234 = vmatmul.f32.gmra.mxu0 %v1180
        %v6235 = vpop.f32.mrf.mxu0
        %v6236 = vadd.f32 %v6216, %v6235
        %6237 = vdwg.mxu0
        %6238 = vmatpush.xpose.msra.mxu0 0.0
        %6239 = vmatpush.xpose.msra.mxu0 0.0
        %6240 = vmatpush.xpose.msra.mxu0 0.0
        %6241 = vmatpush.xpose.msra.mxu0 0.0
        %6242 = vmatpush.xpose.msra.mxu0 0.0
        %6243 = vmatpush.xpose.msra.mxu0 0.0
        %6244 = vmatpush.xpose.msra.mxu0 0.0
        %6245 = vmatpush.xpose.msra.mxu0 0.0
        %6246 = vmatpush.xpose.msra.mxu0 0.0
        %6247 = vmatpush.xpose.msra.mxu0 0.0
        %6248 = vmatpush.xpose.msra.mxu0 0.0
        %6249 = vmatpush.xpose.msra.mxu0 0.0
        %6250 = vmatpush.xpose.msra.mxu0 0.0
        %6251 = vmatpush.xpose.msra.mxu0 0.0
        %6252 = vmatpush.xpose.msra.mxu0 %v800
        %6253 = vmatpush.xpose.msra.mxu0 %v544
        %6254 = vmatmul.f32.gmra.mxu0 %v1181
        %v6255 = vpop.f32.mrf.mxu0
        %v6256 = vadd.f32 %v6236, %v6255
        %6257 = vdwg.mxu0
        %6258 = vmatpush.xpose.msra.mxu0 0.0
        %6259 = vmatpush.xpose.msra.mxu0 0.0
        %6260 = vmatpush.xpose.msra.mxu0 0.0
        %6261 = vmatpush.xpose.msra.mxu0 0.0
        %6262 = vmatpush.xpose.msra.mxu0 0.0
        %6263 = vmatpush.xpose.msra.mxu0 0.0
        %6264 = vmatpush.xpose.msra.mxu0 0.0
        %6265 = vmatpush.xpose.msra.mxu0 0.0
        %6266 = vmatpush.xpose.msra.mxu0 0.0
        %6267 = vmatpush.xpose.msra.mxu0 0.0
        %6268 = vmatpush.xpose.msra.mxu0 0.0
        %6269 = vmatpush.xpose.msra.mxu0 0.0
        %6270 = vmatpush.xpose.msra.mxu0 0.0
        %6271 = vmatpush.xpose.msra.mxu0 0.0
        %6272 = vmatpush.xpose.msra.mxu0 %v801
        %6273 = vmatpush.xpose.msra.mxu0 %v545
        %6274 = vmatmul.f32.gmra.mxu0 %v1184
        %v6275 = vpop.f32.mrf.mxu0
        %v6276 = vadd.f32 %v6256, %v6275
        %6277 = vdwg.mxu0
        %6278 = vmatpush.xpose.msra.mxu0 0.0
        %6279 = vmatpush.xpose.msra.mxu0 0.0
        %6280 = vmatpush.xpose.msra.mxu0 0.0
        %6281 = vmatpush.xpose.msra.mxu0 0.0
        %6282 = vmatpush.xpose.msra.mxu0 0.0
        %6283 = vmatpush.xpose.msra.mxu0 0.0
        %6284 = vmatpush.xpose.msra.mxu0 0.0
        %6285 = vmatpush.xpose.msra.mxu0 0.0
        %6286 = vmatpush.xpose.msra.mxu0 0.0
        %6287 = vmatpush.xpose.msra.mxu0 0.0
        %6288 = vmatpush.xpose.msra.mxu0 0.0
        %6289 = vmatpush.xpose.msra.mxu0 0.0
        %6290 = vmatpush.xpose.msra.mxu0 0.0
        %6291 = vmatpush.xpose.msra.mxu0 0.0
        %6292 = vmatpush.xpose.msra.mxu0 %v802
        %6293 = vmatpush.xpose.msra.mxu0 %v546
        %6294 = vmatmul.f32.gmra.mxu0 %v1185
        %v6295 = vpop.f32.mrf.mxu0
        %v6296 = vadd.f32 %v6276, %v6295
        %6297 = vdwg.mxu0
        %6298 = vmatpush.xpose.msra.mxu0 0.0
        %6299 = vmatpush.xpose.msra.mxu0 0.0
        %6300 = vmatpush.xpose.msra.mxu0 0.0
        %6301 = vmatpush.xpose.msra.mxu0 0.0
        %6302 = vmatpush.xpose.msra.mxu0 0.0
        %6303 = vmatpush.xpose.msra.mxu0 0.0
        %6304 = vmatpush.xpose.msra.mxu0 0.0
        %6305 = vmatpush.xpose.msra.mxu0 0.0
        %6306 = vmatpush.xpose.msra.mxu0 0.0
        %6307 = vmatpush.xpose.msra.mxu0 0.0
        %6308 = vmatpush.xpose.msra.mxu0 0.0
        %6309 = vmatpush.xpose.msra.mxu0 0.0
        %6310 = vmatpush.xpose.msra.mxu0 0.0
        %6311 = vmatpush.xpose.msra.mxu0 0.0
        %6312 = vmatpush.xpose.msra.mxu0 %v803
        %6313 = vmatpush.xpose.msra.mxu0 %v547
        %6314 = vmatmul.f32.gmra.mxu0 %v1186
        %v6315 = vpop.f32.mrf.mxu0
        %v6316 = vadd.f32 %v6296, %v6315
        %6317 = vdwg.mxu0
        %6318 = vmatpush.xpose.msra.mxu0 0.0
        %6319 = vmatpush.xpose.msra.mxu0 0.0
        %6320 = vmatpush.xpose.msra.mxu0 0.0
        %6321 = vmatpush.xpose.msra.mxu0 0.0
        %6322 = vmatpush.xpose.msra.mxu0 0.0
        %6323 = vmatpush.xpose.msra.mxu0 0.0
        %6324 = vmatpush.xpose.msra.mxu0 0.0
        %6325 = vmatpush.xpose.msra.mxu0 0.0
        %6326 = vmatpush.xpose.msra.mxu0 0.0
        %6327 = vmatpush.xpose.msra.mxu0 0.0
        %6328 = vmatpush.xpose.msra.mxu0 0.0
        %6329 = vmatpush.xpose.msra.mxu0 0.0
        %6330 = vmatpush.xpose.msra.mxu0 0.0
        %6331 = vmatpush.xpose.msra.mxu0 0.0
        %6332 = vmatpush.xpose.msra.mxu0 %v804
        %6333 = vmatpush.xpose.msra.mxu0 %v548
        %6334 = vmatmul.f32.gmra.mxu0 %v1187
        %v6335 = vpop.f32.mrf.mxu0
        %v6336 = vadd.f32 %v6316, %v6335
        %6337 = vdwg.mxu0
        %6338 = vmatpush.xpose.msra.mxu0 0.0
        %6339 = vmatpush.xpose.msra.mxu0 0.0
        %6340 = vmatpush.xpose.msra.mxu0 0.0
        %6341 = vmatpush.xpose.msra.mxu0 0.0
        %6342 = vmatpush.xpose.msra.mxu0 0.0
        %6343 = vmatpush.xpose.msra.mxu0 0.0
        %6344 = vmatpush.xpose.msra.mxu0 0.0
        %6345 = vmatpush.xpose.msra.mxu0 0.0
        %6346 = vmatpush.xpose.msra.mxu0 0.0
        %6347 = vmatpush.xpose.msra.mxu0 0.0
        %6348 = vmatpush.xpose.msra.mxu0 0.0
        %6349 = vmatpush.xpose.msra.mxu0 0.0
        %6350 = vmatpush.xpose.msra.mxu0 0.0
        %6351 = vmatpush.xpose.msra.mxu0 0.0
        %6352 = vmatpush.xpose.msra.mxu0 %v805
        %6353 = vmatpush.xpose.msra.mxu0 %v549
        %6354 = vmatmul.f32.gmra.mxu0 %v1188
        %v6355 = vpop.f32.mrf.mxu0
        %v6356 = vadd.f32 %v6336, %v6355
        %6357 = vdwg.mxu0
        %6358 = vmatpush.xpose.msra.mxu0 0.0
        %6359 = vmatpush.xpose.msra.mxu0 0.0
        %6360 = vmatpush.xpose.msra.mxu0 0.0
        %6361 = vmatpush.xpose.msra.mxu0 0.0
        %6362 = vmatpush.xpose.msra.mxu0 0.0
        %6363 = vmatpush.xpose.msra.mxu0 0.0
        %6364 = vmatpush.xpose.msra.mxu0 0.0
        %6365 = vmatpush.xpose.msra.mxu0 0.0
        %6366 = vmatpush.xpose.msra.mxu0 0.0
        %6367 = vmatpush.xpose.msra.mxu0 0.0
        %6368 = vmatpush.xpose.msra.mxu0 0.0
        %6369 = vmatpush.xpose.msra.mxu0 0.0
        %6370 = vmatpush.xpose.msra.mxu0 0.0
        %6371 = vmatpush.xpose.msra.mxu0 0.0
        %6372 = vmatpush.xpose.msra.mxu0 %v806
        %6373 = vmatpush.xpose.msra.mxu0 %v550
        %6374 = vmatmul.f32.gmra.mxu0 %v1189
        %v6375 = vpop.f32.mrf.mxu0
        %v6376 = vadd.f32 %v6356, %v6375
        %6377 = vdwg.mxu0
        %6378 = vmatpush.xpose.msra.mxu0 0.0
        %6379 = vmatpush.xpose.msra.mxu0 0.0
        %6380 = vmatpush.xpose.msra.mxu0 0.0
        %6381 = vmatpush.xpose.msra.mxu0 0.0
        %6382 = vmatpush.xpose.msra.mxu0 0.0
        %6383 = vmatpush.xpose.msra.mxu0 0.0
        %6384 = vmatpush.xpose.msra.mxu0 0.0
        %6385 = vmatpush.xpose.msra.mxu0 0.0
        %6386 = vmatpush.xpose.msra.mxu0 0.0
        %6387 = vmatpush.xpose.msra.mxu0 0.0
        %6388 = vmatpush.xpose.msra.mxu0 0.0
        %6389 = vmatpush.xpose.msra.mxu0 0.0
        %6390 = vmatpush.xpose.msra.mxu0 0.0
        %6391 = vmatpush.xpose.msra.mxu0 0.0
        %6392 = vmatpush.xpose.msra.mxu0 %v807
        %6393 = vmatpush.xpose.msra.mxu0 %v551
        %6394 = vmatmul.f32.gmra.mxu0 %v1190
        %v6395 = vpop.f32.mrf.mxu0
        %v6396 = vadd.f32 %v6376, %v6395
        %6397 = vdwg.mxu0
        %6398 = vmatpush.xpose.msra.mxu0 0.0
        %6399 = vmatpush.xpose.msra.mxu0 0.0
        %6400 = vmatpush.xpose.msra.mxu0 0.0
        %6401 = vmatpush.xpose.msra.mxu0 0.0
        %6402 = vmatpush.xpose.msra.mxu0 0.0
        %6403 = vmatpush.xpose.msra.mxu0 0.0
        %6404 = vmatpush.xpose.msra.mxu0 0.0
        %6405 = vmatpush.xpose.msra.mxu0 0.0
        %6406 = vmatpush.xpose.msra.mxu0 0.0
        %6407 = vmatpush.xpose.msra.mxu0 0.0
        %6408 = vmatpush.xpose.msra.mxu0 0.0
        %6409 = vmatpush.xpose.msra.mxu0 0.0
        %6410 = vmatpush.xpose.msra.mxu0 0.0
        %6411 = vmatpush.xpose.msra.mxu0 0.0
        %6412 = vmatpush.xpose.msra.mxu0 %v808
        %6413 = vmatpush.xpose.msra.mxu0 %v552
        %6414 = vmatmul.f32.gmra.mxu0 %v1191
        %v6415 = vpop.f32.mrf.mxu0
        %v6416 = vadd.f32 %v6396, %v6415
        %6417 = vdwg.mxu0
        %6418 = vmatpush.xpose.msra.mxu0 0.0
        %6419 = vmatpush.xpose.msra.mxu0 0.0
        %6420 = vmatpush.xpose.msra.mxu0 0.0
        %6421 = vmatpush.xpose.msra.mxu0 0.0
        %6422 = vmatpush.xpose.msra.mxu0 0.0
        %6423 = vmatpush.xpose.msra.mxu0 0.0
        %6424 = vmatpush.xpose.msra.mxu0 0.0
        %6425 = vmatpush.xpose.msra.mxu0 0.0
        %6426 = vmatpush.xpose.msra.mxu0 0.0
        %6427 = vmatpush.xpose.msra.mxu0 0.0
        %6428 = vmatpush.xpose.msra.mxu0 0.0
        %6429 = vmatpush.xpose.msra.mxu0 0.0
        %6430 = vmatpush.xpose.msra.mxu0 0.0
        %6431 = vmatpush.xpose.msra.mxu0 0.0
        %6432 = vmatpush.xpose.msra.mxu0 %v809
        %6433 = vmatpush.xpose.msra.mxu0 %v553
        %6434 = vmatmul.f32.gmra.mxu0 %v1194
        %v6435 = vpop.f32.mrf.mxu0
        %v6436 = vadd.f32 %v6416, %v6435
        %6437 = vdwg.mxu0
        %6438 = vmatpush.xpose.msra.mxu0 0.0
        %6439 = vmatpush.xpose.msra.mxu0 0.0
        %6440 = vmatpush.xpose.msra.mxu0 0.0
        %6441 = vmatpush.xpose.msra.mxu0 0.0
        %6442 = vmatpush.xpose.msra.mxu0 0.0
        %6443 = vmatpush.xpose.msra.mxu0 0.0
        %6444 = vmatpush.xpose.msra.mxu0 0.0
        %6445 = vmatpush.xpose.msra.mxu0 0.0
        %6446 = vmatpush.xpose.msra.mxu0 0.0
        %6447 = vmatpush.xpose.msra.mxu0 0.0
        %6448 = vmatpush.xpose.msra.mxu0 0.0
        %6449 = vmatpush.xpose.msra.mxu0 0.0
        %6450 = vmatpush.xpose.msra.mxu0 0.0
        %6451 = vmatpush.xpose.msra.mxu0 0.0
        %6452 = vmatpush.xpose.msra.mxu0 %v810
        %6453 = vmatpush.xpose.msra.mxu0 %v554
        %6454 = vmatmul.f32.gmra.mxu0 %v1195
        %v6455 = vpop.f32.mrf.mxu0
        %v6456 = vadd.f32 %v6436, %v6455
        %6457 = vdwg.mxu0
        %6458 = vmatpush.xpose.msra.mxu0 0.0
        %6459 = vmatpush.xpose.msra.mxu0 0.0
        %6460 = vmatpush.xpose.msra.mxu0 0.0
        %6461 = vmatpush.xpose.msra.mxu0 0.0
        %6462 = vmatpush.xpose.msra.mxu0 0.0
        %6463 = vmatpush.xpose.msra.mxu0 0.0
        %6464 = vmatpush.xpose.msra.mxu0 0.0
        %6465 = vmatpush.xpose.msra.mxu0 0.0
        %6466 = vmatpush.xpose.msra.mxu0 0.0
        %6467 = vmatpush.xpose.msra.mxu0 0.0
        %6468 = vmatpush.xpose.msra.mxu0 0.0
        %6469 = vmatpush.xpose.msra.mxu0 0.0
        %6470 = vmatpush.xpose.msra.mxu0 0.0
        %6471 = vmatpush.xpose.msra.mxu0 0.0
        %6472 = vmatpush.xpose.msra.mxu0 %v811
        %6473 = vmatpush.xpose.msra.mxu0 %v555
        %6474 = vmatmul.f32.gmra.mxu0 %v1196
        %v6475 = vpop.f32.mrf.mxu0
        %v6476 = vadd.f32 %v6456, %v6475
        %6477 = vdwg.mxu0
        %6478 = vmatpush.xpose.msra.mxu0 0.0
        %6479 = vmatpush.xpose.msra.mxu0 0.0
        %6480 = vmatpush.xpose.msra.mxu0 0.0
        %6481 = vmatpush.xpose.msra.mxu0 0.0
        %6482 = vmatpush.xpose.msra.mxu0 0.0
        %6483 = vmatpush.xpose.msra.mxu0 0.0
        %6484 = vmatpush.xpose.msra.mxu0 0.0
        %6485 = vmatpush.xpose.msra.mxu0 0.0
        %6486 = vmatpush.xpose.msra.mxu0 0.0
        %6487 = vmatpush.xpose.msra.mxu0 0.0
        %6488 = vmatpush.xpose.msra.mxu0 0.0
        %6489 = vmatpush.xpose.msra.mxu0 0.0
        %6490 = vmatpush.xpose.msra.mxu0 0.0
        %6491 = vmatpush.xpose.msra.mxu0 0.0
        %6492 = vmatpush.xpose.msra.mxu0 %v812
        %6493 = vmatpush.xpose.msra.mxu0 %v556
        %6494 = vmatmul.f32.gmra.mxu0 %v1197
        %v6495 = vpop.f32.mrf.mxu0
        %v6496 = vadd.f32 %v6476, %v6495
        %6497 = vdwg.mxu0
        %6498 = vmatpush.xpose.msra.mxu0 0.0
        %6499 = vmatpush.xpose.msra.mxu0 0.0
        %6500 = vmatpush.xpose.msra.mxu0 0.0
        %6501 = vmatpush.xpose.msra.mxu0 0.0
        %6502 = vmatpush.xpose.msra.mxu0 0.0
        %6503 = vmatpush.xpose.msra.mxu0 0.0
        %6504 = vmatpush.xpose.msra.mxu0 0.0
        %6505 = vmatpush.xpose.msra.mxu0 0.0
        %6506 = vmatpush.xpose.msra.mxu0 0.0
        %6507 = vmatpush.xpose.msra.mxu0 0.0
        %6508 = vmatpush.xpose.msra.mxu0 0.0
        %6509 = vmatpush.xpose.msra.mxu0 0.0
        %6510 = vmatpush.xpose.msra.mxu0 0.0
        %6511 = vmatpush.xpose.msra.mxu0 0.0
        %6512 = vmatpush.xpose.msra.mxu0 %v813
        %6513 = vmatpush.xpose.msra.mxu0 %v557
        %6514 = vmatmul.f32.gmra.mxu0 %v1198
        %v6515 = vpop.f32.mrf.mxu0
        %v6516 = vadd.f32 %v6496, %v6515
        %6517 = vdwg.mxu0
        %6518 = vmatpush.xpose.msra.mxu0 0.0
        %6519 = vmatpush.xpose.msra.mxu0 0.0
        %6520 = vmatpush.xpose.msra.mxu0 0.0
        %6521 = vmatpush.xpose.msra.mxu0 0.0
        %6522 = vmatpush.xpose.msra.mxu0 0.0
        %6523 = vmatpush.xpose.msra.mxu0 0.0
        %6524 = vmatpush.xpose.msra.mxu0 0.0
        %6525 = vmatpush.xpose.msra.mxu0 0.0
        %6526 = vmatpush.xpose.msra.mxu0 0.0
        %6527 = vmatpush.xpose.msra.mxu0 0.0
        %6528 = vmatpush.xpose.msra.mxu0 0.0
        %6529 = vmatpush.xpose.msra.mxu0 0.0
        %6530 = vmatpush.xpose.msra.mxu0 0.0
        %6531 = vmatpush.xpose.msra.mxu0 0.0
        %6532 = vmatpush.xpose.msra.mxu0 %v814
        %6533 = vmatpush.xpose.msra.mxu0 %v558
        %6534 = vmatmul.f32.gmra.mxu0 %v1199
        %v6535 = vpop.f32.mrf.mxu0
        %v6536 = vadd.f32 %v6516, %v6535
        %6537 = vdwg.mxu0
        %6538 = vmatpush.xpose.msra.mxu0 0.0
        %6539 = vmatpush.xpose.msra.mxu0 0.0
        %6540 = vmatpush.xpose.msra.mxu0 0.0
        %6541 = vmatpush.xpose.msra.mxu0 0.0
        %6542 = vmatpush.xpose.msra.mxu0 0.0
        %6543 = vmatpush.xpose.msra.mxu0 0.0
        %6544 = vmatpush.xpose.msra.mxu0 0.0
        %6545 = vmatpush.xpose.msra.mxu0 0.0
        %6546 = vmatpush.xpose.msra.mxu0 0.0
        %6547 = vmatpush.xpose.msra.mxu0 0.0
        %6548 = vmatpush.xpose.msra.mxu0 0.0
        %6549 = vmatpush.xpose.msra.mxu0 0.0
        %6550 = vmatpush.xpose.msra.mxu0 0.0
        %6551 = vmatpush.xpose.msra.mxu0 0.0
        %6552 = vmatpush.xpose.msra.mxu0 %v815
        %6553 = vmatpush.xpose.msra.mxu0 %v559
        %6554 = vmatmul.f32.gmra.mxu0 %v1200
        %v6555 = vpop.f32.mrf.mxu0
        %v6556 = vadd.f32 %v6536, %v6555
        %6557 = vdwg.mxu0
        %6558 = vmatpush.xpose.msra.mxu0 0.0
        %6559 = vmatpush.xpose.msra.mxu0 0.0
        %6560 = vmatpush.xpose.msra.mxu0 0.0
        %6561 = vmatpush.xpose.msra.mxu0 0.0
        %6562 = vmatpush.xpose.msra.mxu0 0.0
        %6563 = vmatpush.xpose.msra.mxu0 0.0
        %6564 = vmatpush.xpose.msra.mxu0 0.0
        %6565 = vmatpush.xpose.msra.mxu0 0.0
        %6566 = vmatpush.xpose.msra.mxu0 0.0
        %6567 = vmatpush.xpose.msra.mxu0 0.0
        %6568 = vmatpush.xpose.msra.mxu0 0.0
        %6569 = vmatpush.xpose.msra.mxu0 0.0
        %6570 = vmatpush.xpose.msra.mxu0 0.0
        %6571 = vmatpush.xpose.msra.mxu0 0.0
        %6572 = vmatpush.xpose.msra.mxu0 %v816
        %6573 = vmatpush.xpose.msra.mxu0 %v560
        %6574 = vmatmul.f32.gmra.mxu0 %v1201
        %v6575 = vpop.f32.mrf.mxu0
        %v6576 = vadd.f32 %v6556, %v6575
        %6577 = vdwg.mxu0
        %v6578 = vadd.f32 %v240, %v6576
        %vm6579 = vcmask 74752
        %6580 = vst.msk [vmem:[%s227] sm:$0x3] %vm6579, %v6578
        %s6581 = sand.u32 %s102, 1
        %s6582 = scalar_lea.sflag [#allocation4], %s6581
        %s6583 = sand.u32 %s102, 1
        %s6584 = smul.addr %s6583, 2
        %s6585 = scalar_lea.vmem [#allocation7], %s6584
        // Predicated region
        $region41: #{tpu_custom_call.1} parent=27 // pred_check
          %p6586 = pneg %p112
        $region42: #{tpu_custom_call.1} parent=27 // pred_check_branch
          %6588 = sbr.rel (%p6586) target = $region44
        $region43: #{tpu_custom_call.1} parent=27 // pred_region
          %6590 = vsyncadd %s6582, 0
          %s6591 = smul.addr %s26, 2
          %s6592 = scalar_lea.hbm %s2, %s6591
          %s6594 = sshll.u32 %s6585, 4
          %s6595 = int_to_ptr.vmem [resolvable:$true] %s6594
          %s6596 = sshll.u32 %s6592, 4
          %s6597 = int_to_ptr.hbm [resolvable:$true] %s6596
          %6599 = dma.vmem_to_hbm [thread:$0]  %s6595, 32, %s6597, %s6582
        $region44: #{tpu_custom_call.1} parent=27 // pred_fallthru
          _
      $region28: #{tpu_custom_call.1} parent=5 // pred_fallthru
        _
      %p6600 = scmp.le.s32.totalorder 2, %s17
      // Predicated region
      $region45: #{tpu_custom_call.1} parent=5 // pred_check
        %p6601 = pneg %p6600
      $region46: #{tpu_custom_call.1} parent=5 // pred_check_branch
        %6603 = sbr.rel (%p6601) target = $region48
      $region47: #{tpu_custom_call.1} parent=5 // pred_region
        %s6604 = ssub.s32 %s17, 2
        // Predicated region
        $region49: #{tpu_custom_call.1} parent=47 // pred_check
          %p6605 = pneg %p118
        $region50: #{tpu_custom_call.1} parent=47 // pred_check_branch
          %6607 = sbr.rel (%p6605) target = $region52
        $region51: #{tpu_custom_call.1} parent=47 // pred_region
          %s6608 = sand.u32 %s103, 1
          %s6609 = scalar_lea.sflag [#allocation4], %s6608
          %s6610 = sand.u32 %s103, 1
          %s6611 = smul.addr %s6610, 2
          %s6612 = scalar_lea.vmem [#allocation7], %s6611
          %6614 = dma.done %s6609, 32
        $region52: #{tpu_custom_call.1} parent=47 // pred_fallthru
          _
      $region48: #{tpu_custom_call.1} parent=5 // pred_fallthru
        _
    $region6: #{tpu_custom_call.1} parent=1 // loop_footer
      %s21 = sadd.s32 1, %s17
    $region7: #{tpu_custom_call.1} parent=1 // loop_footer_branch
      %16 = sbr.rel target = $region3
    $region8: #{tpu_custom_call.1} parent=1 // loop_exit
      _
    %6615 = vsyncpa [#allocation3], 1
    %s6616 = scalar_lea.sflag [#allocation3], 1
    %6617 = vsyncpa %s6616, 1
    %6618 = vsyncpa [#allocation6], 1
    %s6619 = scalar_lea.sflag [#allocation6], 1
    %6620 = vsyncpa %s6619, 1
    %6621 = vsyncpa [#allocation4], 1
    %s6622 = scalar_lea.sflag [#allocation4], 1
    %6623 = vsyncpa %s6622, 1

</llo_original>
